<compile_context>
chip_gen: v6e
topology: v6e:2x2x1
jax: 0.10.0
libtpu: 0.0.40
codegen_flags: <defaults>
</compile_context>

<pallas_src>
import jax
import jax.numpy as jnp
from jax.experimental import pallas as pl
from jax.experimental.pallas import tpu as pltpu


# ----------------------------- Pallas kernel -------------------------------

def _conv_pool_relu_kernel(p_ref, w_ref, b_ref, o_ref):
    """Fused conv(3x3, stride 2) + bias + MaxPool2d(2) + ReLU for one image.

    p_ref : (1, K, 4*Mp) bf16  im2col patches, 4 pool corners concatenated
                               along the last (lane) axis in Mp-wide blocks
    w_ref : (Cout, K)    bf16  conv weight, K rows ordered (kh, kw, cin)
    b_ref : (Cout, 1)    f32   conv bias
    o_ref : (1, Cout, M) bf16  pooled+ReLU output, M = Hp*Wp (lane-dense)
    """
    M = o_ref.shape[2]
    Mp = p_ref.shape[2] // 4
    # One long MXU stream instead of four short matmuls (f32 accumulation).
    m4 = jnp.dot(w_ref[...], p_ref[0], preferred_element_type=jnp.float32)
    # MaxPool2d(2) == elementwise max over the four corner blocks.
    m = jnp.maximum(
        jnp.maximum(m4[:, 0 * Mp:0 * Mp + M], m4[:, 1 * Mp:1 * Mp + M]),
        jnp.maximum(m4[:, 2 * Mp:2 * Mp + M], m4[:, 3 * Mp:3 * Mp + M]))
    # Bias is constant within each 2x2 window -> add once, after the max.
    o_ref[0] = jnp.maximum(m + b_ref[...], 0.0).astype(o_ref.dtype)


# ------------------------------ layout glue ---------------------------------

def _all_corner_patches(x_nchw, Hp, Wp, Mp):
    """Transposed im2col patches for all 4 pool corners, concatenated along M.

    Returns (N, 9*C, 4*Mp) bf16 where block c (= dr*2+dc) at lanes
    [c*Mp, c*Mp+Hp*Wp) holds
      out[n, (kh*3+kw)*C + ch, c*Mp + hp*Wp + wp]
        = x[n, ch, 4*hp + 2*dr + kh, 4*wp + 2*dc + kw]
    i.e. the patch of conv position (2*hp+dr, 2*wp+dc) — exactly the positions
    MaxPool2d(2) (floor mode) consumes; discarded odd conv rows/cols are never
    computed.  Lanes [c*Mp+Hp*Wp, (c+1)*Mp) are zero padding (dropped by the
    kernel's slices).  Cast to bf16 happens BEFORE the 36 strided slices.
    """
    N, C, H, W = x_nchw.shape
    M = Hp * Wp
    x = x_nchw.astype(jnp.bfloat16)
    corners = []
    for (dr, dc) in ((0, 0), (0, 1), (1, 0), (1, 1)):
        taps = []
        for kh in range(3):
            for kw in range(3):
                h0 = 2 * dr + kh
                w0 = 2 * dc + kw
                taps.append(x[:, :,
                              h0:h0 + 4 * (Hp - 1) + 1:4,
                              w0:w0 + 4 * (Wp - 1) + 1:4])
        p = jnp.stack(taps, axis=1).reshape(N, 9 * C, M)   # (N, 9C, Hp*Wp)
        if Mp > M:
            p = jnp.pad(p, ((0, 0), (0, 0), (0, Mp - M)))
        corners.append(p)
    return jnp.concatenate(corners, axis=-1)               # (N, 9C, 4*Mp)


# --------------------------- fused layer wrapper -----------------------------

def conv3x3s2_pool2_relu(x_nchw, w_oihw, bias):
    """Conv2d(Cin, Cout, 3, stride=2) -> MaxPool2d(2) -> ReLU. NCHW in/out."""
    N, Cin, H, W = x_nchw.shape
    Cout = w_oihw.shape[0]
    Ho = (H - 3) // 2 + 1
    Wo = (W - 3) // 2 + 1
    Hp, Wp = Ho // 2, Wo // 2
    K, M = 9 * Cin, Hp * Wp

    # Pad the per-corner lane block to a multiple of 128 only when the extra
    # HBM bytes are negligible (<5%): keeps the in-kernel corner slices
    # tile-aligned on the big layer without bloating the small one.
    Mp = ((M + 127) // 128) * 128
    if (Mp - M) * 20 > M:
        Mp = M

    patches = _all_corner_patches(x_nchw, Hp, Wp, Mp)       # (N, K, 4*Mp) bf16
    # (Cout, K) with K ordered (kh, kw, cin) to match the patch rows.
    w_t = jnp.transpose(w_oihw, (0, 2, 3, 1)).reshape(Cout, K).astype(jnp.bfloat16)
    b_t = bias.astype(jnp.float32).reshape(Cout, 1)

    flops = 2 * N * Cout * K * 4 * Mp
    bytes_accessed = (patches.size * 2 + w_t.size * 2 + b_t.size * 4
                      + N * Cout * M * 2)

    out = pl.pallas_call(
        _conv_pool_relu_kernel,
        out_shape=jax.ShapeDtypeStruct((N, Cout, M), jnp.bfloat16),
        grid=(N,),
        in_specs=[pl.BlockSpec((1, K, 4 * Mp), lambda n: (n, 0, 0)),
                  pl.BlockSpec((Cout, K), lambda n: (0, 0)),
                  pl.BlockSpec((Cout, 1), lambda n: (0, 0))],
        out_specs=pl.BlockSpec((1, Cout, M), lambda n: (n, 0, 0)),
        compiler_params=pltpu.CompilerParams(
            dimension_semantics=("parallel",)),
        cost_estimate=pl.CostEstimate(flops=flops, transcendentals=0,
                                      bytes_accessed=bytes_accessed),
    )(patches, w_t, b_t)
    return out.reshape(N, Cout, Hp, Wp)                     # NCHW, metadata-only


# ------------------------------- model --------------------------------------

def init_params(num_labels, key):
    ks = jax.random.split(key, 8)

    def conv_init(kw, kb, cout, cin):
        fan_in = cin * 9
        w = jax.random.normal(kw, (cout, cin, 3, 3), jnp.float32) / (fan_in ** 0.5)
        b = jax.random.normal(kb, (cout,), jnp.float32) * 0.01
        return (w, b)

    return {
        "conv1": conv_init(ks[0], ks[1], 64, 1),
        "conv2": conv_init(ks[2], ks[3], 32, 64),
        "conv3": conv_init(ks[4], ks[5], 16, 32),
        "linear": (
            jax.random.normal(ks[6], (num_labels, 144), jnp.float32) / (144.0 ** 0.5),
            jax.random.normal(ks[7], (num_labels,), jnp.float32) * 0.01,
        ),
    }


def mlp_classic_forward(x_nchw, params):
    # Stages 1 and 2: fused Pallas conv+pool+ReLU, bf16 activations in HBM.
    x = conv3x3s2_pool2_relu(x_nchw, *params["conv1"])      # (N, 64, 55, 55)
    x = conv3x3s2_pool2_relu(x, *params["conv2"])           # (N, 32, 13, 13)

    # Stage 3 + Flatten + Linear in plain XLA (per perf review): ~0.4 MFLOP
    # with a 9-wide output lane dim — a dedicated Pallas launch plus an HBM
    # patch round-trip costs more than the math itself.
    w3, b3 = params["conv3"]
    y = jax.lax.conv_general_dilated(
        x.astype(jnp.float32), w3, window_strides=(2, 2), padding="VALID",
        dimension_numbers=("NCHW", "OIHW", "NCHW"))
    y = y + b3[None, :, None, None]
    y = jax.lax.reduce_window(y, -jnp.inf, jax.lax.max,
                              (1, 1, 2, 2), (1, 1, 2, 2), "VALID")
    y = jnp.maximum(y, 0.0)                                  # (N, 16, 3, 3)
    flat = y.reshape(y.shape[0], -1)                         # == nn.Flatten (NCHW)
    lw, lb = params["linear"]
    return flat @ lw.T + lb


# ------------------------------ reference ------------------------------------

def reference_forward(x_nchw, params):
    def conv(x, w, b):
        y = jax.lax.conv_general_dilated(
            x, w, window_strides=(2, 2), padding="VALID",
            dimension_numbers=("NCHW", "OIHW", "NCHW"))
        return y + b[None, :, None, None]

    def maxpool(x):
        return jax.lax.reduce_window(x, -jnp.inf, jax.lax.max,
                                     (1, 1, 2, 2), (1, 1, 2, 2), "VALID")

    x = x_nchw
    for name in ("conv1", "conv2", "conv3"):
        w, b = params[name]
        x = jnp.maximum(maxpool(conv(x, w, b)), 0.0)
    flat = x.reshape(x.shape[0], -1)
    lw, lb = params["linear"]
    return flat @ lw.T + lb


# -------------------------------- main ---------------------------------------

if __name__ == "__main__":
    num_labels = 10
    key = jax.random.PRNGKey(0)
    kx, kp = jax.random.split(key)

    # 1-channel 224x224 input — the size implied by Linear(144, num_labels)
    # after the three conv(stride2)+pool(2) stages.
    x = jax.random.normal(kx, (2, 1, 224, 224), jnp.float32)
    params = init_params(num_labels, kp)

    fwd = jax.jit(mlp_classic_forward)
    out = jax.block_until_ready(fwd(x, params))
    assert out.shape == (2, num_labels), out.shape

    ref = reference_forward(x, params)
    max_err = float(jnp.max(jnp.abs(out - ref)))
    assert jnp.allclose(out, ref, rtol=5e-2, atol=5e-2), f"max err {max_err}"

    print("KERNEL_OK")
</pallas_src>

<mosaic_0001>
module attributes {stable_mosaic.version = 11 : i64} {
  func.func @_conv_pool_relu_kernel(%arg0: i32, %arg1: memref<1x9x12288xbf16, #tpu.memory_space<vmem>>, %arg2: memref<64x9xbf16, #tpu.memory_space<vmem>>, %arg3: memref<64x1xf32, #tpu.memory_space<vmem>>, %arg4: memref<1x64x3025xbf16, #tpu.memory_space<vmem>>) attributes {dimension_semantics = [#tpu.dimension_semantics<parallel>], iteration_bounds = array<i64: 2>, scalar_prefetch = 0 : i64, scratch_operands = 0 : i64, tpu.core_type = #tpu.core_type<tc>, window_params = [{transform_indices = @transform_0, window_bounds = array<i64: 1, 9, 12288>}, {pipeline_mode = #tpu.pipeline_mode<synchronous>, transform_indices = @transform_1, window_bounds = array<i64: 64, 9>}, {pipeline_mode = #tpu.pipeline_mode<synchronous>, transform_indices = @transform_2, window_bounds = array<i64: 64, 1>}, {transform_indices = @transform_3, window_bounds = array<i64: 1, 64, 3025>}]} {
    %c0 = arith.constant 0 : index
    %c0_0 = arith.constant 0 : index
    %0 = vector.load %arg2[%c0, %c0_0] : memref<64x9xbf16, #tpu.memory_space<vmem>>, vector<64x9xbf16>
    %c0_1 = arith.constant 0 : index
    %c0_2 = arith.constant 0 : index
    %c0_3 = arith.constant 0 : index
    %1 = vector.load %arg1[%c0_1, %c0_2, %c0_3] : memref<1x9x12288xbf16, #tpu.memory_space<vmem>>, vector<1x9x12288xbf16>
    %2 = vector.shape_cast %1 : vector<1x9x12288xbf16> to vector<9x12288xbf16>
    %cst = arith.constant dense<0.000000e+00> : vector<64x12288xf32>
    %3 = tpu.matmul %0, %2, %cst {dimension_numbers = #tpu.dot_dimension_numbers<[1], [0], [0], [1], [0, 0, 1, 1], [], []>} : vector<64x9xbf16>, vector<9x12288xbf16>, vector<64x12288xf32> -> vector<64x12288xf32>
    %4 = vector.extract_strided_slice %3 {offsets = [0, 0], sizes = [64, 3025], strides = [1, 1]} : vector<64x12288xf32> to vector<64x3025xf32>
    %5 = vector.extract_strided_slice %3 {offsets = [0, 3072], sizes = [64, 3025], strides = [1, 1]} : vector<64x12288xf32> to vector<64x3025xf32>
    %6 = arith.maximumf %4, %5 : vector<64x3025xf32>
    %7 = vector.extract_strided_slice %3 {offsets = [0, 6144], sizes = [64, 3025], strides = [1, 1]} : vector<64x12288xf32> to vector<64x3025xf32>
    %8 = vector.extract_strided_slice %3 {offsets = [0, 9216], sizes = [64, 3025], strides = [1, 1]} : vector<64x12288xf32> to vector<64x3025xf32>
    %9 = arith.maximumf %7, %8 : vector<64x3025xf32>
    %10 = arith.maximumf %6, %9 : vector<64x3025xf32>
    %c0_4 = arith.constant 0 : index
    %c0_5 = arith.constant 0 : index
    %11 = vector.load %arg3[%c0_4, %c0_5] : memref<64x1xf32, #tpu.memory_space<vmem>>, vector<64x1xf32>
    %12 = vector.broadcast %11 : vector<64x1xf32> to vector<64x3025xf32>
    %13 = arith.addf %10, %12 : vector<64x3025xf32>
    %cst_6 = arith.constant 0.000000e+00 : f32
    %14 = vector.broadcast %cst_6 : f32 to vector<64x3025xf32>
    %15 = arith.maximumf %13, %14 : vector<64x3025xf32>
    %16 = arith.truncf %15 : vector<64x3025xf32> to vector<64x3025xbf16>
    %c0_7 = arith.constant 0 : index
    %c0_8 = arith.constant 0 : index
    %c0_9 = arith.constant 0 : index
    %17 = vector.load %arg4[%c0_7, %c0_8, %c0_9] : memref<1x64x3025xbf16, #tpu.memory_space<vmem>>, vector<1x64x3025xbf16>
    %18 = vector.shape_cast %17 : vector<1x64x3025xbf16> to vector<64x3025xbf16>
    %19 = vector.shape_cast %16 : vector<64x3025xbf16> to vector<1x64x3025xbf16>
    tpu.vector_store %arg4[%c0_7, %c0_8, %c0_9], %19 {strides = array<i32>} : memref<1x64x3025xbf16, #tpu.memory_space<vmem>>, vector<1x64x3025xbf16>,
    return
  }
  func.func @transform_0(%arg0: i32) -> (i32, i32, i32) {
    %c0_i32 = arith.constant 0 : i32
    %c0_i32_0 = arith.constant 0 : i32
    %c0_i32_1 = arith.constant 0 : i32
    return %arg0, %c0_i32, %c0_i32_0 : i32, i32, i32
  }
  func.func @transform_1(%arg0: i32) -> (i32, i32) {
    %c0_i32 = arith.constant 0 : i32
    %c0_i32_0 = arith.constant 0 : i32
    %c0_i32_1 = arith.constant 0 : i32
    return %c0_i32, %c0_i32_0 : i32, i32
  }
  func.func @transform_2(%arg0: i32) -> (i32, i32) {
    %c0_i32 = arith.constant 0 : i32
    %c0_i32_0 = arith.constant 0 : i32
    %c0_i32_1 = arith.constant 0 : i32
    return %c0_i32, %c0_i32_0 : i32, i32
  }
  func.func @transform_3(%arg0: i32) -> (i32, i32, i32) {
    %c0_i32 = arith.constant 0 : i32
    %c0_i32_0 = arith.constant 0 : i32
    %c0_i32_1 = arith.constant 0 : i32
    return %arg0, %c0_i32, %c0_i32_0 : i32, i32, i32
  }
}

module attributes {stable_mosaic.version = 11 : i64} {
  func.func @_conv_pool_relu_kernel(%arg0: i32, %arg1: memref<1x576x676xbf16, #tpu.memory_space<vmem>>, %arg2: memref<32x576xbf16, #tpu.memory_space<vmem>>, %arg3: memref<32x1xf32, #tpu.memory_space<vmem>>, %arg4: memref<1x32x169xbf16, #tpu.memory_space<vmem>>) attributes {dimension_semantics = [#tpu.dimension_semantics<parallel>], iteration_bounds = array<i64: 2>, scalar_prefetch = 0 : i64, scratch_operands = 0 : i64, tpu.core_type = #tpu.core_type<tc>, window_params = [{transform_indices = @transform_0, window_bounds = array<i64: 1, 576, 676>}, {pipeline_mode = #tpu.pipeline_mode<synchronous>, transform_indices = @transform_1, window_bounds = array<i64: 32, 576>}, {pipeline_mode = #tpu.pipeline_mode<synchronous>, transform_indices = @transform_2, window_bounds = array<i64: 32, 1>}, {transform_indices = @transform_3, window_bounds = array<i64: 1, 32, 169>}]} {
    %c0 = arith.constant 0 : index
    %c0_0 = arith.constant 0 : index
    %0 = vector.load %arg2[%c0, %c0_0] : memref<32x576xbf16, #tpu.memory_space<vmem>>, vector<32x576xbf16>
    %c0_1 = arith.constant 0 : index
    %c0_2 = arith.constant 0 : index
    %c0_3 = arith.constant 0 : index
    %1 = vector.load %arg1[%c0_1, %c0_2, %c0_3] : memref<1x576x676xbf16, #tpu.memory_space<vmem>>, vector<1x576x676xbf16>
    %2 = vector.shape_cast %1 : vector<1x576x676xbf16> to vector<576x676xbf16>
    %cst = arith.constant dense<0.000000e+00> : vector<32x676xf32>
    %3 = tpu.matmul %0, %2, %cst {dimension_numbers = #tpu.dot_dimension_numbers<[1], [0], [0], [1], [0, 0, 1, 1], [], []>} : vector<32x576xbf16>, vector<576x676xbf16>, vector<32x676xf32> -> vector<32x676xf32>
    %4 = vector.extract_strided_slice %3 {offsets = [0, 0], sizes = [32, 169], strides = [1, 1]} : vector<32x676xf32> to vector<32x169xf32>
    %5 = vector.extract_strided_slice %3 {offsets = [0, 169], sizes = [32, 169], strides = [1, 1]} : vector<32x676xf32> to vector<32x169xf32>
    %6 = arith.maximumf %4, %5 : vector<32x169xf32>
    %7 = vector.extract_strided_slice %3 {offsets = [0, 338], sizes = [32, 169], strides = [1, 1]} : vector<32x676xf32> to vector<32x169xf32>
    %8 = vector.extract_strided_slice %3 {offsets = [0, 507], sizes = [32, 169], strides = [1, 1]} : vector<32x676xf32> to vector<32x169xf32>
    %9 = arith.maximumf %7, %8 : vector<32x169xf32>
    %10 = arith.maximumf %6, %9 : vector<32x169xf32>
    %c0_4 = arith.constant 0 : index
    %c0_5 = arith.constant 0 : index
    %11 = vector.load %arg3[%c0_4, %c0_5] : memref<32x1xf32, #tpu.memory_space<vmem>>, vector<32x1xf32>
    %12 = vector.broadcast %11 : vector<32x1xf32> to vector<32x169xf32>
    %13 = arith.addf %10, %12 : vector<32x169xf32>
    %cst_6 = arith.constant 0.000000e+00 : f32
    %14 = vector.broadcast %cst_6 : f32 to vector<32x169xf32>
    %15 = arith.maximumf %13, %14 : vector<32x169xf32>
    %16 = arith.truncf %15 : vector<32x169xf32> to vector<32x169xbf16>
    %c0_7 = arith.constant 0 : index
    %c0_8 = arith.constant 0 : index
    %c0_9 = arith.constant 0 : index
    %17 = vector.load %arg4[%c0_7, %c0_8, %c0_9] : memref<1x32x169xbf16, #tpu.memory_space<vmem>>, vector<1x32x169xbf16>
    %18 = vector.shape_cast %17 : vector<1x32x169xbf16> to vector<32x169xbf16>
    %19 = vector.shape_cast %16 : vector<32x169xbf16> to vector<1x32x169xbf16>
    tpu.vector_store %arg4[%c0_7, %c0_8, %c0_9], %19 {strides = array<i32>} : memref<1x32x169xbf16, #tpu.memory_space<vmem>>, vector<1x32x169xbf16>,
    return
  }
  func.func @transform_0(%arg0: i32) -> (i32, i32, i32) {
    %c0_i32 = arith.constant 0 : i32
    %c0_i32_0 = arith.constant 0 : i32
    %c0_i32_1 = arith.constant 0 : i32
    return %arg0, %c0_i32, %c0_i32_0 : i32, i32, i32
  }
  func.func @transform_1(%arg0: i32) -> (i32, i32) {
    %c0_i32 = arith.constant 0 : i32
    %c0_i32_0 = arith.constant 0 : i32
    %c0_i32_1 = arith.constant 0 : i32
    return %c0_i32, %c0_i32_0 : i32, i32
  }
  func.func @transform_2(%arg0: i32) -> (i32, i32) {
    %c0_i32 = arith.constant 0 : i32
    %c0_i32_0 = arith.constant 0 : i32
    %c0_i32_1 = arith.constant 0 : i32
    return %c0_i32, %c0_i32_0 : i32, i32
  }
  func.func @transform_3(%arg0: i32) -> (i32, i32, i32) {
    %c0_i32 = arith.constant 0 : i32
    %c0_i32_0 = arith.constant 0 : i32
    %c0_i32_1 = arith.constant 0 : i32
    return %arg0, %c0_i32, %c0_i32_0 : i32, i32, i32
  }
}

</mosaic_0001>

<llo_original>
// kernel: mlp_classic_forward.2
$region0: #{mlp_classic_forward.2}
  #allocation0 [shape = 'u32[]', space=smem, size = 0x4, offset = 0x4, fixed_abs, tag = 'smem constant byte address 0x4 - core index']
  #allocation1 [shape = 'u32[144,128]{1,0:T(1,128)}', space=vmem, size = 0x12000, scoped, tag = 'internal scratch']
  %s0 = inlined_call_operand.vmem [shape: bf16[2,9,12288], index: 0, kind: input, shape index: {}]
  %s1 = inlined_call_operand.vmem [shape: bf16[64,9], index: 1, kind: input, shape index: {}]
  %s2 = inlined_call_operand.vmem [shape: f32[64,1], index: 2, kind: input, shape index: {}]
  %s3 = inlined_call_operand.vmem [shape: bf16[2,64,3025], index: 3, kind: output, shape index: {}]
  %s4 = sld [smem:[#allocation0]]
  $region45: #{mlp_classic_forward.2} parent=0
    _
  %s6 = ssub.s32 1, %s4
  %s7 = scalar_select 0, %s6, %s4
  loop: start=0, step=1, limit=4
  $region2: #{mlp_classic_forward.2} parent=0 // loop_pre_header
    _
  $region3: #{mlp_classic_forward.2} parent=0 // loop_header
    %s9 = sphi 0, %s13
    %p10 = scmp.ge.s32.totalorder %s9, 4
    %s19 = sphi 0, %s21
    %s22 = sphi 0, %s19
    %s23 = sphi 0, %s22
    %s39 = sphi 0, %s23
    %s43 = sphi 0, %s43
    %s45 = sphi 0, %s43
    %s46 = sphi 0, %s45
    %s60 = sphi 0, %s46
    %s64 = sphi 0, %s64
    %s66 = sphi 0, %s64
    %s67 = sphi 0, %s66
    %s81 = sphi 0, %s67
    %s87 = sphi 0, %s89
    %s90 = sphi 0, %s87
    %s91 = sphi 0, %s90
    %s107 = sphi 0, %s91
  $region4: #{mlp_classic_forward.2} parent=0 // loop_header_branch
    %12 = sbr.rel (%p10) target = $region8
  $region5: #{mlp_classic_forward.2} parent=0 // loop_body
    %s14 = ssub.s32 %s9, 1
    %s15 = ssub.s32 %s9, 2
    %s16 = sadd.s32 %s9, 1
    %s17 = ssub.s32 %s9, %s16
    %p18 = scmp.eq.s32.totalorder %s17, 0
    %s20 = sadd.s32 %s19, 1
    %s21 = scalar_select %p18, %s19, %s20
    %p24 = pneg %p18
    %p25 = scmp.eq.s32.totalorder %s9, 1
    %p26 = por %p24, %p25
    %p27 = scmp.ne.s32.totalorder %s19, %s22
    %p28 = scmp.eq.s32.totalorder %s9, 0
    %p29 = por %p27, %p28
    %p30 = scmp.ne.s32.totalorder %s19, %s22
    %p31 = scmp.eq.s32.totalorder %s14, 1
    %p32 = por %p30, %p31
    %p33 = scmp.ne.s32.totalorder %s22, %s23
    %p34 = scmp.eq.s32.totalorder %s14, 0
    %p35 = por %p33, %p34
    %p36 = scmp.ne.s32.totalorder %s22, %s23
    %p37 = scmp.eq.s32.totalorder %s15, 1
    %p38 = por %p36, %p37
    %p40 = scmp.ne.s32.totalorder %s23, %s39
    %p41 = scmp.eq.s32.totalorder %s15, 0
    %p42 = por %p40, %p41
    %s44 = sadd.s32 %s43, 1
    %p47 = scmp.eq.s32.totalorder %s9, 1
    %p48 = scmp.ne.s32.totalorder %s43, %s45
    %p49 = scmp.eq.s32.totalorder %s9, 0
    %p50 = por %p48, %p49
    %p51 = scmp.ne.s32.totalorder %s43, %s45
    %p52 = scmp.eq.s32.totalorder %s14, 1
    %p53 = por %p51, %p52
    %p54 = scmp.ne.s32.totalorder %s45, %s46
    %p55 = scmp.eq.s32.totalorder %s14, 0
    %p56 = por %p54, %p55
    %p57 = scmp.ne.s32.totalorder %s45, %s46
    %p58 = scmp.eq.s32.totalorder %s15, 1
    %p59 = por %p57, %p58
    %p61 = scmp.ne.s32.totalorder %s46, %s60
    %p62 = scmp.eq.s32.totalorder %s15, 0
    %p63 = por %p61, %p62
    %s65 = sadd.s32 %s64, 1
    %p68 = scmp.eq.s32.totalorder %s9, 1
    %p69 = scmp.ne.s32.totalorder %s64, %s66
    %p70 = scmp.eq.s32.totalorder %s9, 0
    %p71 = por %p69, %p70
    %p72 = scmp.ne.s32.totalorder %s64, %s66
    %p73 = scmp.eq.s32.totalorder %s14, 1
    %p74 = por %p72, %p73
    %p75 = scmp.ne.s32.totalorder %s66, %s67
    %p76 = scmp.eq.s32.totalorder %s14, 0
    %p77 = por %p75, %p76
    %p78 = scmp.ne.s32.totalorder %s66, %s67
    %p79 = scmp.eq.s32.totalorder %s15, 1
    %p80 = por %p78, %p79
    %p82 = scmp.ne.s32.totalorder %s67, %s81
    %p83 = scmp.eq.s32.totalorder %s15, 0
    %p84 = por %p82, %p83
    %s85 = ssub.s32 %s9, %s16
    %p86 = scmp.eq.s32.totalorder %s85, 0
    %s88 = sadd.s32 %s87, 1
    %s89 = scalar_select %p86, %s87, %s88
    %p92 = pneg %p86
    %p93 = scmp.eq.s32.totalorder %s9, 1
    %p94 = por %p92, %p93
    %p95 = scmp.ne.s32.totalorder %s87, %s90
    %p96 = scmp.eq.s32.totalorder %s9, 0
    %p97 = por %p95, %p96
    %p98 = scmp.ne.s32.totalorder %s87, %s90
    %p99 = scmp.eq.s32.totalorder %s14, 1
    %p100 = por %p98, %p99
    %p101 = scmp.ne.s32.totalorder %s90, %s91
    %p102 = scmp.eq.s32.totalorder %s14, 0
    %p103 = por %p101, %p102
    %p104 = scmp.ne.s32.totalorder %s90, %s91
    %p105 = scmp.eq.s32.totalorder %s15, 1
    %p106 = por %p104, %p105
    %p108 = scmp.ne.s32.totalorder %s91, %s107
    %p109 = scmp.eq.s32.totalorder %s15, 0
    %p110 = por %p108, %p109
    %p111 = scmp.le.s32.totalorder 1, %s9
    %p112 = scmp.lt.s32.totalorder %s9, 3
    %p113 = pnand %p111, %p112
    %p114 = pneg %p113
    // Predicated region
    $region9: #{mlp_classic_forward.2} parent=5 // pred_check
      _
    $region10: #{mlp_classic_forward.2} parent=5 // pred_check_branch
      %116 = sbr.rel (%p113) target = $region12
    $region11: #{mlp_classic_forward.2} parent=5 // pred_region
      %s117 = ssub.s32 %s9, 1
      // Predicated region
      $region13: #{mlp_classic_forward.2} parent=11 // pred_check
        %p118 = pneg %p56
      $region14: #{mlp_classic_forward.2} parent=11 // pred_check_branch
        %120 = sbr.rel (%p118) target = $region16
      $region15: #{mlp_classic_forward.2} parent=11 // pred_region
        _
      $region16: #{mlp_classic_forward.2} parent=11 // pred_fallthru
        _
      // Predicated region
      $region17: #{mlp_classic_forward.2} parent=11 // pred_check
        %p121 = pneg %p77
      $region18: #{mlp_classic_forward.2} parent=11 // pred_check_branch
        %123 = sbr.rel (%p121) target = $region20
      $region19: #{mlp_classic_forward.2} parent=11 // pred_region
        _
      $region20: #{mlp_classic_forward.2} parent=11 // pred_fallthru
        _
    $region12: #{mlp_classic_forward.2} parent=5 // pred_fallthru
      _
    %p124 = scmp.lt.s32.totalorder %s9, 2
    // Predicated region
    $region21: #{mlp_classic_forward.2} parent=5 // pred_check
      %p125 = pneg %p124
    $region22: #{mlp_classic_forward.2} parent=5 // pred_check_branch
      %127 = sbr.rel (%p125) target = $region24
    $region23: #{mlp_classic_forward.2} parent=5 // pred_region
      // Predicated region
      $region25: #{mlp_classic_forward.2} parent=23 // pred_check
        %p128 = pneg %p29
      $region26: #{mlp_classic_forward.2} parent=23 // pred_check_branch
        %130 = sbr.rel (%p128) target = $region28
      $region27: #{mlp_classic_forward.2} parent=23 // pred_region
        %p131 = scmp.lt.s32.totalorder %s9, 1
        %s132 = scalar_select %p131, %s9, 1
        %s133 = smul.addr %s132, 192
        %s134 = smul.addr %s133, 4
        %s135 = scalar_lea.vmem %s0, %s134
      $region28: #{mlp_classic_forward.2} parent=23 // pred_fallthru
        _
    $region24: #{mlp_classic_forward.2} parent=5 // pred_fallthru
      _
    %p136 = scmp.le.s32.totalorder 1, %s9
    %p137 = scmp.lt.s32.totalorder %s9, 3
    %p138 = pnand %p136, %p137
    %p139 = pneg %p138
    // Predicated region
    $region29: #{mlp_classic_forward.2} parent=5 // pred_check
      _
    $region30: #{mlp_classic_forward.2} parent=5 // pred_check_branch
      %141 = sbr.rel (%p138) target = $region32
    $region31: #{mlp_classic_forward.2} parent=5 // pred_region
      %s142 = ssub.s32 %s9, 1
      %p143 = scmp.lt.s32.totalorder %s14, 1
      %s144 = scalar_select %p143, %s14, 1
      %s145 = smul.addr %s144, 192
      %s146 = smul.addr %s145, 4
      %s147 = scalar_lea.vmem %s0, %s146
      %p148 = pneg %p35
      %p149 = pneg %p32
      %p150 = pneg %p56
      %p151 = pneg %p53
      %p152 = pneg %p77
      %p153 = pneg %p74
      %p154 = pneg %p103
      %p155 = pneg %p100
      %p156 = scmp.lt.s32.totalorder %s14, 1
      %s157 = scalar_select %p156, %s14, 1
      %s158 = smul.addr %s157, 192
      %s159 = smul.addr %s158, 4
      %s160 = scalar_lea.vmem %s3, %s159
      %p161 = scmp.lt.s32.totalorder %s14, 1
      %s162 = scalar_select %p161, %s14, 1
      %s163 = smul.addr %s162, 192
      %s164 = smul.addr %s163, 4
      %s165 = scalar_lea.vmem %s0, %s164
      %p166 = scmp.lt.s32.totalorder %s14, 1
      %s167 = scalar_select %p166, %s14, 1
      %s168 = smul.addr %s167, 192
      %s169 = smul.addr %s168, 4
      %s170 = scalar_lea.vmem %s3, %s169
      %v172 = vld [vmem:[%s1] sm:$0xf]
      %v173 = vld [vmem:[%s1 + $0x4] sm:$0xf]
      %v174 = vld [vmem:[%s1 + $0x8] sm:$0xf]
      %v175 = vld [vmem:[%s1 + $0xc] sm:$0xf]
      %v176 = vld [vmem:[%s1 + $0x10] sm:$0xf]
      %v177 = vld [vmem:[%s1 + $0x14] sm:$0xf]
      %v178 = vld [vmem:[%s1 + $0x18] sm:$0xf]
      %v179 = vld [vmem:[%s1 + $0x1c] sm:$0xf]
      %v180 = vld [vmem:[%s165] sm:$0xff]
      %v181 = vld [vmem:[%s165 + $0x8] sm:$0xff]
      %v182 = vld [vmem:[%s165 + $0x10] sm:$0xff]
      %v183 = vld [vmem:[%s165 + $0x18] sm:$0xff]
      %v184 = vld [vmem:[%s165 + $0x20] sm:$0xff]
      %v185 = vld [vmem:[%s165 + $0x28] sm:$0xff]
      %v186 = vld [vmem:[%s165 + $0x30] sm:$0xff]
      %v187 = vld [vmem:[%s165 + $0x38] sm:$0xff]
      %v188 = vld [vmem:[%s165 + $0x40] sm:$0xff]
      %v189 = vld [vmem:[%s165 + $0x48] sm:$0xff]
      %v190 = vld [vmem:[%s165 + $0x50] sm:$0xff]
      %v191 = vld [vmem:[%s165 + $0x58] sm:$0xff]
      %v192 = vld [vmem:[%s165 + $0x60] sm:$0xff]
      %v193 = vld [vmem:[%s165 + $0x68] sm:$0xff]
      %v194 = vld [vmem:[%s165 + $0x70] sm:$0xff]
      %v195 = vld [vmem:[%s165 + $0x78] sm:$0xff]
      %v196 = vld [vmem:[%s165 + $0x80] sm:$0xff]
      %v197 = vld [vmem:[%s165 + $0x88] sm:$0xff]
      %v198 = vld [vmem:[%s165 + $0x90] sm:$0xff]
      %v199 = vld [vmem:[%s165 + $0x98] sm:$0xff]
      %v200 = vld [vmem:[%s165 + $0xa0] sm:$0xff]
      %v201 = vld [vmem:[%s165 + $0xa8] sm:$0xff]
      %v202 = vld [vmem:[%s165 + $0xb0] sm:$0xff]
      %v203 = vld [vmem:[%s165 + $0xb8] sm:$0xff]
      %v204 = vld [vmem:[%s165 + $0xc0] sm:$0xff]
      %v205 = vld [vmem:[%s165 + $0xc8] sm:$0xff]
      %v206 = vld [vmem:[%s165 + $0xd0] sm:$0xff]
      %v207 = vld [vmem:[%s165 + $0xd8] sm:$0xff]
      %v208 = vld [vmem:[%s165 + $0xe0] sm:$0xff]
      %v209 = vld [vmem:[%s165 + $0xe8] sm:$0xff]
      %v210 = vld [vmem:[%s165 + $0xf0] sm:$0xff]
      %v211 = vld [vmem:[%s165 + $0xf8] sm:$0xff]
      %v212 = vld [vmem:[%s165 + $0x100] sm:$0xff]
      %v213 = vld [vmem:[%s165 + $0x108] sm:$0xff]
      %v214 = vld [vmem:[%s165 + $0x110] sm:$0xff]
      %v215 = vld [vmem:[%s165 + $0x118] sm:$0xff]
      %v216 = vld [vmem:[%s165 + $0x120] sm:$0xff]
      %v217 = vld [vmem:[%s165 + $0x128] sm:$0xff]
      %v218 = vld [vmem:[%s165 + $0x130] sm:$0xff]
      %v219 = vld [vmem:[%s165 + $0x138] sm:$0xff]
      %v220 = vld [vmem:[%s165 + $0x140] sm:$0xff]
      %v221 = vld [vmem:[%s165 + $0x148] sm:$0xff]
      %v222 = vld [vmem:[%s165 + $0x150] sm:$0xff]
      %v223 = vld [vmem:[%s165 + $0x158] sm:$0xff]
      %v224 = vld [vmem:[%s165 + $0x160] sm:$0xff]
      %v225 = vld [vmem:[%s165 + $0x168] sm:$0xff]
      %v226 = vld [vmem:[%s165 + $0x170] sm:$0xff]
      %v227 = vld [vmem:[%s165 + $0x178] sm:$0xff]
      %v228 = vld [vmem:[%s165 + $0x180] sm:$0x11]
      %v229 = vld [vmem:[%s165 + $0x188] sm:$0x11]
      %v230 = vld [vmem:[%s165 + $0x190] sm:$0x11]
      %v231 = vld [vmem:[%s165 + $0x198] sm:$0x11]
      %v232 = vld [vmem:[%s165 + $0x1a0] sm:$0x11]
      %v233 = vld [vmem:[%s165 + $0x1a8] sm:$0x11]
      %v234 = vld [vmem:[%s165 + $0x1b0] sm:$0x11]
      %v235 = vld [vmem:[%s165 + $0x1b8] sm:$0x11]
      %v236 = vld [vmem:[%s165 + $0x1c0] sm:$0x11]
      %v237 = vld [vmem:[%s165 + $0x1c8] sm:$0x11]
      %v238 = vld [vmem:[%s165 + $0x1d0] sm:$0x11]
      %v239 = vld [vmem:[%s165 + $0x1d8] sm:$0x11]
      %v240 = vld [vmem:[%s165 + $0x1e0] sm:$0x11]
      %v241 = vld [vmem:[%s165 + $0x1e8] sm:$0x11]
      %v242 = vld [vmem:[%s165 + $0x1f0] sm:$0x11]
      %v243 = vld [vmem:[%s165 + $0x1f8] sm:$0x11]
      %v244 = vld [vmem:[%s165 + $0x200] sm:$0x11]
      %v245 = vld [vmem:[%s165 + $0x208] sm:$0x11]
      %v246 = vld [vmem:[%s165 + $0x210] sm:$0x11]
      %v247 = vld [vmem:[%s165 + $0x218] sm:$0x11]
      %v248 = vld [vmem:[%s165 + $0x220] sm:$0x11]
      %v249 = vld [vmem:[%s165 + $0x228] sm:$0x11]
      %v250 = vld [vmem:[%s165 + $0x230] sm:$0x11]
      %v251 = vld [vmem:[%s165 + $0x238] sm:$0x11]
      %v252 = vld [vmem:[%s165 + $0x240] sm:$0x11]
      %v253 = vld [vmem:[%s165 + $0x248] sm:$0x11]
      %v254 = vld [vmem:[%s165 + $0x250] sm:$0x11]
      %v255 = vld [vmem:[%s165 + $0x258] sm:$0x11]
      %v256 = vld [vmem:[%s165 + $0x260] sm:$0x11]
      %v257 = vld [vmem:[%s165 + $0x268] sm:$0x11]
      %v258 = vld [vmem:[%s165 + $0x270] sm:$0x11]
      %v259 = vld [vmem:[%s165 + $0x278] sm:$0x11]
      %v260 = vld [vmem:[%s165 + $0x280] sm:$0x11]
      %v261 = vld [vmem:[%s165 + $0x288] sm:$0x11]
      %v262 = vld [vmem:[%s165 + $0x290] sm:$0x11]
      %v263 = vld [vmem:[%s165 + $0x298] sm:$0x11]
      %v264 = vld [vmem:[%s165 + $0x2a0] sm:$0x11]
      %v265 = vld [vmem:[%s165 + $0x2a8] sm:$0x11]
      %v266 = vld [vmem:[%s165 + $0x2b0] sm:$0x11]
      %v267 = vld [vmem:[%s165 + $0x2b8] sm:$0x11]
      %v268 = vld [vmem:[%s165 + $0x2c0] sm:$0x11]
      %v269 = vld [vmem:[%s165 + $0x2c8] sm:$0x11]
      %v270 = vld [vmem:[%s165 + $0x2d0] sm:$0x11]
      %v271 = vld [vmem:[%s165 + $0x2d8] sm:$0x11]
      %v272 = vld [vmem:[%s165 + $0x2e0] sm:$0x11]
      %v273 = vld [vmem:[%s165 + $0x2e8] sm:$0x11]
      %v274 = vld [vmem:[%s165 + $0x2f0] sm:$0x11]
      %v275 = vld [vmem:[%s165 + $0x2f8] sm:$0x11]
      %v284 = vunpack.c.l.b16 %v172
      %v285 = vunpack.c.l.b16 %v173
      %v286 = vunpack.c.l.b16 %v174
      %v287 = vunpack.c.l.b16 %v175
      %v288 = vunpack.c.l.b16 %v176
      %v289 = vunpack.c.l.b16 %v177
      %v290 = vunpack.c.l.b16 %v178
      %v291 = vunpack.c.l.b16 %v179
      %v292 = vpack.c.b16 %v285, %v284
      %v293 = vpack.c.b16 %v287, %v286
      %v294 = vpack.c.b16 %v289, %v288
      %v295 = vpack.c.b16 %v291, %v290
      %v392 = vunpack.c.l.b16 %v180
      %v393 = vunpack.c.h.b16 %v180
      %v394 = vunpack.c.l.b16 %v181
      %v395 = vunpack.c.h.b16 %v181
      %v396 = vunpack.c.l.b16 %v182
      %v397 = vunpack.c.h.b16 %v182
      %v398 = vunpack.c.l.b16 %v183
      %v399 = vunpack.c.h.b16 %v183
      %v400 = vunpack.c.l.b16 %v184
      %v401 = vunpack.c.h.b16 %v184
      %v402 = vunpack.c.l.b16 %v185
      %v403 = vunpack.c.h.b16 %v185
      %v404 = vunpack.c.l.b16 %v186
      %v405 = vunpack.c.h.b16 %v186
      %v406 = vunpack.c.l.b16 %v187
      %v407 = vunpack.c.h.b16 %v187
      %v408 = vunpack.c.l.b16 %v188
      %v409 = vunpack.c.h.b16 %v188
      %v410 = vunpack.c.l.b16 %v189
      %v411 = vunpack.c.h.b16 %v189
      %v412 = vunpack.c.l.b16 %v190
      %v413 = vunpack.c.h.b16 %v190
      %v414 = vunpack.c.l.b16 %v191
      %v415 = vunpack.c.h.b16 %v191
      %v416 = vunpack.c.l.b16 %v192
      %v417 = vunpack.c.h.b16 %v192
      %v418 = vunpack.c.l.b16 %v193
      %v419 = vunpack.c.h.b16 %v193
      %v420 = vunpack.c.l.b16 %v194
      %v421 = vunpack.c.h.b16 %v194
      %v422 = vunpack.c.l.b16 %v195
      %v423 = vunpack.c.h.b16 %v195
      %v424 = vunpack.c.l.b16 %v196
      %v425 = vunpack.c.h.b16 %v196
      %v426 = vunpack.c.l.b16 %v197
      %v427 = vunpack.c.h.b16 %v197
      %v428 = vunpack.c.l.b16 %v198
      %v429 = vunpack.c.h.b16 %v198
      %v430 = vunpack.c.l.b16 %v199
      %v431 = vunpack.c.h.b16 %v199
      %v432 = vunpack.c.l.b16 %v200
      %v433 = vunpack.c.h.b16 %v200
      %v434 = vunpack.c.l.b16 %v201
      %v435 = vunpack.c.h.b16 %v201
      %v436 = vunpack.c.l.b16 %v202
      %v437 = vunpack.c.h.b16 %v202
      %v438 = vunpack.c.l.b16 %v203
      %v439 = vunpack.c.h.b16 %v203
      %v440 = vunpack.c.l.b16 %v204
      %v441 = vunpack.c.h.b16 %v204
      %v442 = vunpack.c.l.b16 %v205
      %v443 = vunpack.c.h.b16 %v205
      %v444 = vunpack.c.l.b16 %v206
      %v445 = vunpack.c.h.b16 %v206
      %v446 = vunpack.c.l.b16 %v207
      %v447 = vunpack.c.h.b16 %v207
      %v448 = vunpack.c.l.b16 %v208
      %v449 = vunpack.c.h.b16 %v208
      %v450 = vunpack.c.l.b16 %v209
      %v451 = vunpack.c.h.b16 %v209
      %v452 = vunpack.c.l.b16 %v210
      %v453 = vunpack.c.h.b16 %v210
      %v454 = vunpack.c.l.b16 %v211
      %v455 = vunpack.c.h.b16 %v211
      %v456 = vunpack.c.l.b16 %v212
      %v457 = vunpack.c.h.b16 %v212
      %v458 = vunpack.c.l.b16 %v213
      %v459 = vunpack.c.h.b16 %v213
      %v460 = vunpack.c.l.b16 %v214
      %v461 = vunpack.c.h.b16 %v214
      %v462 = vunpack.c.l.b16 %v215
      %v463 = vunpack.c.h.b16 %v215
      %v464 = vunpack.c.l.b16 %v216
      %v465 = vunpack.c.h.b16 %v216
      %v466 = vunpack.c.l.b16 %v217
      %v467 = vunpack.c.h.b16 %v217
      %v468 = vunpack.c.l.b16 %v218
      %v469 = vunpack.c.h.b16 %v218
      %v470 = vunpack.c.l.b16 %v219
      %v471 = vunpack.c.h.b16 %v219
      %v472 = vunpack.c.l.b16 %v220
      %v473 = vunpack.c.h.b16 %v220
      %v474 = vunpack.c.l.b16 %v221
      %v475 = vunpack.c.h.b16 %v221
      %v476 = vunpack.c.l.b16 %v222
      %v477 = vunpack.c.h.b16 %v222
      %v478 = vunpack.c.l.b16 %v223
      %v479 = vunpack.c.h.b16 %v223
      %v480 = vunpack.c.l.b16 %v224
      %v481 = vunpack.c.h.b16 %v224
      %v482 = vunpack.c.l.b16 %v225
      %v483 = vunpack.c.h.b16 %v225
      %v484 = vunpack.c.l.b16 %v226
      %v485 = vunpack.c.h.b16 %v226
      %v486 = vunpack.c.l.b16 %v227
      %v487 = vunpack.c.h.b16 %v227
      %v488 = vunpack.c.l.b16 %v228
      %v489 = vunpack.c.h.b16 %v228
      %v490 = vunpack.c.l.b16 %v229
      %v491 = vunpack.c.h.b16 %v229
      %v492 = vunpack.c.l.b16 %v230
      %v493 = vunpack.c.h.b16 %v230
      %v494 = vunpack.c.l.b16 %v231
      %v495 = vunpack.c.h.b16 %v231
      %v496 = vunpack.c.l.b16 %v232
      %v497 = vunpack.c.h.b16 %v232
      %v498 = vunpack.c.l.b16 %v233
      %v499 = vunpack.c.h.b16 %v233
      %v500 = vunpack.c.l.b16 %v234
      %v501 = vunpack.c.h.b16 %v234
      %v502 = vunpack.c.l.b16 %v235
      %v503 = vunpack.c.h.b16 %v235
      %v504 = vunpack.c.l.b16 %v236
      %v505 = vunpack.c.h.b16 %v236
      %v506 = vunpack.c.l.b16 %v237
      %v507 = vunpack.c.h.b16 %v237
      %v508 = vunpack.c.l.b16 %v238
      %v509 = vunpack.c.h.b16 %v238
      %v510 = vunpack.c.l.b16 %v239
      %v511 = vunpack.c.h.b16 %v239
      %v512 = vunpack.c.l.b16 %v240
      %v513 = vunpack.c.h.b16 %v240
      %v514 = vunpack.c.l.b16 %v241
      %v515 = vunpack.c.h.b16 %v241
      %v516 = vunpack.c.l.b16 %v242
      %v517 = vunpack.c.h.b16 %v242
      %v518 = vunpack.c.l.b16 %v243
      %v519 = vunpack.c.h.b16 %v243
      %v520 = vunpack.c.l.b16 %v244
      %v521 = vunpack.c.h.b16 %v244
      %v522 = vunpack.c.l.b16 %v245
      %v523 = vunpack.c.h.b16 %v245
      %v524 = vunpack.c.l.b16 %v246
      %v525 = vunpack.c.h.b16 %v246
      %v526 = vunpack.c.l.b16 %v247
      %v527 = vunpack.c.h.b16 %v247
      %v528 = vunpack.c.l.b16 %v248
      %v529 = vunpack.c.h.b16 %v248
      %v530 = vunpack.c.l.b16 %v249
      %v531 = vunpack.c.h.b16 %v249
      %v532 = vunpack.c.l.b16 %v250
      %v533 = vunpack.c.h.b16 %v250
      %v534 = vunpack.c.l.b16 %v251
      %v535 = vunpack.c.h.b16 %v251
      %v536 = vunpack.c.l.b16 %v252
      %v537 = vunpack.c.h.b16 %v252
      %v538 = vunpack.c.l.b16 %v253
      %v539 = vunpack.c.h.b16 %v253
      %v540 = vunpack.c.l.b16 %v254
      %v541 = vunpack.c.h.b16 %v254
      %v542 = vunpack.c.l.b16 %v255
      %v543 = vunpack.c.h.b16 %v255
      %v544 = vunpack.c.l.b16 %v256
      %v545 = vunpack.c.h.b16 %v256
      %v546 = vunpack.c.l.b16 %v257
      %v547 = vunpack.c.h.b16 %v257
      %v548 = vunpack.c.l.b16 %v258
      %v549 = vunpack.c.h.b16 %v258
      %v550 = vunpack.c.l.b16 %v259
      %v551 = vunpack.c.h.b16 %v259
      %v552 = vunpack.c.l.b16 %v260
      %v553 = vunpack.c.h.b16 %v260
      %v554 = vunpack.c.l.b16 %v261
      %v555 = vunpack.c.h.b16 %v261
      %v556 = vunpack.c.l.b16 %v262
      %v557 = vunpack.c.h.b16 %v262
      %v558 = vunpack.c.l.b16 %v263
      %v559 = vunpack.c.h.b16 %v263
      %v560 = vunpack.c.l.b16 %v264
      %v561 = vunpack.c.h.b16 %v264
      %v562 = vunpack.c.l.b16 %v265
      %v563 = vunpack.c.h.b16 %v265
      %v564 = vunpack.c.l.b16 %v266
      %v565 = vunpack.c.h.b16 %v266
      %v566 = vunpack.c.l.b16 %v267
      %v567 = vunpack.c.h.b16 %v267
      %v568 = vunpack.c.l.b16 %v268
      %v569 = vunpack.c.h.b16 %v268
      %v570 = vunpack.c.l.b16 %v269
      %v571 = vunpack.c.h.b16 %v269
      %v572 = vunpack.c.l.b16 %v270
      %v573 = vunpack.c.h.b16 %v270
      %v574 = vunpack.c.l.b16 %v271
      %v575 = vunpack.c.h.b16 %v271
      %v576 = vunpack.c.l.b16 %v272
      %v577 = vunpack.c.h.b16 %v272
      %v578 = vunpack.c.l.b16 %v273
      %v579 = vunpack.c.h.b16 %v273
      %v580 = vunpack.c.l.b16 %v274
      %v581 = vunpack.c.h.b16 %v274
      %v582 = vunpack.c.l.b16 %v275
      %v583 = vunpack.c.h.b16 %v275
      %v584 = vpack.c.b16 %v488, %v392
      %v585 = vpack.c.b16 %v489, %v393
      %v586 = vpack.c.b16 %v490, %v394
      %v587 = vpack.c.b16 %v491, %v395
      %v588 = vpack.c.b16 %v492, %v396
      %v589 = vpack.c.b16 %v493, %v397
      %v590 = vpack.c.b16 %v494, %v398
      %v591 = vpack.c.b16 %v495, %v399
      %v592 = vpack.c.b16 %v496, %v400
      %v593 = vpack.c.b16 %v497, %v401
      %v594 = vpack.c.b16 %v498, %v402
      %v595 = vpack.c.b16 %v499, %v403
      %v596 = vpack.c.b16 %v500, %v404
      %v597 = vpack.c.b16 %v501, %v405
      %v598 = vpack.c.b16 %v502, %v406
      %v599 = vpack.c.b16 %v503, %v407
      %v600 = vpack.c.b16 %v504, %v408
      %v601 = vpack.c.b16 %v505, %v409
      %v602 = vpack.c.b16 %v506, %v410
      %v603 = vpack.c.b16 %v507, %v411
      %v604 = vpack.c.b16 %v508, %v412
      %v605 = vpack.c.b16 %v509, %v413
      %v606 = vpack.c.b16 %v510, %v414
      %v607 = vpack.c.b16 %v511, %v415
      %v608 = vpack.c.b16 %v512, %v416
      %v609 = vpack.c.b16 %v513, %v417
      %v610 = vpack.c.b16 %v514, %v418
      %v611 = vpack.c.b16 %v515, %v419
      %v612 = vpack.c.b16 %v516, %v420
      %v613 = vpack.c.b16 %v517, %v421
      %v614 = vpack.c.b16 %v518, %v422
      %v615 = vpack.c.b16 %v519, %v423
      %v616 = vpack.c.b16 %v520, %v424
      %v617 = vpack.c.b16 %v521, %v425
      %v618 = vpack.c.b16 %v522, %v426
      %v619 = vpack.c.b16 %v523, %v427
      %v620 = vpack.c.b16 %v524, %v428
      %v621 = vpack.c.b16 %v525, %v429
      %v622 = vpack.c.b16 %v526, %v430
      %v623 = vpack.c.b16 %v527, %v431
      %v624 = vpack.c.b16 %v528, %v432
      %v625 = vpack.c.b16 %v529, %v433
      %v626 = vpack.c.b16 %v530, %v434
      %v627 = vpack.c.b16 %v531, %v435
      %v628 = vpack.c.b16 %v532, %v436
      %v629 = vpack.c.b16 %v533, %v437
      %v630 = vpack.c.b16 %v534, %v438
      %v631 = vpack.c.b16 %v535, %v439
      %v632 = vpack.c.b16 %v536, %v440
      %v633 = vpack.c.b16 %v537, %v441
      %v634 = vpack.c.b16 %v538, %v442
      %v635 = vpack.c.b16 %v539, %v443
      %v636 = vpack.c.b16 %v540, %v444
      %v637 = vpack.c.b16 %v541, %v445
      %v638 = vpack.c.b16 %v542, %v446
      %v639 = vpack.c.b16 %v543, %v447
      %v640 = vpack.c.b16 %v544, %v448
      %v641 = vpack.c.b16 %v545, %v449
      %v642 = vpack.c.b16 %v546, %v450
      %v643 = vpack.c.b16 %v547, %v451
      %v644 = vpack.c.b16 %v548, %v452
      %v645 = vpack.c.b16 %v549, %v453
      %v646 = vpack.c.b16 %v550, %v454
      %v647 = vpack.c.b16 %v551, %v455
      %v648 = vpack.c.b16 %v552, %v456
      %v649 = vpack.c.b16 %v553, %v457
      %v650 = vpack.c.b16 %v554, %v458
      %v651 = vpack.c.b16 %v555, %v459
      %v652 = vpack.c.b16 %v556, %v460
      %v653 = vpack.c.b16 %v557, %v461
      %v654 = vpack.c.b16 %v558, %v462
      %v655 = vpack.c.b16 %v559, %v463
      %v656 = vpack.c.b16 %v560, %v464
      %v657 = vpack.c.b16 %v561, %v465
      %v658 = vpack.c.b16 %v562, %v466
      %v659 = vpack.c.b16 %v563, %v467
      %v660 = vpack.c.b16 %v564, %v468
      %v661 = vpack.c.b16 %v565, %v469
      %v662 = vpack.c.b16 %v566, %v470
      %v663 = vpack.c.b16 %v567, %v471
      %v664 = vpack.c.b16 %v568, %v472
      %v665 = vpack.c.b16 %v569, %v473
      %v666 = vpack.c.b16 %v570, %v474
      %v667 = vpack.c.b16 %v571, %v475
      %v668 = vpack.c.b16 %v572, %v476
      %v669 = vpack.c.b16 %v573, %v477
      %v670 = vpack.c.b16 %v574, %v478
      %v671 = vpack.c.b16 %v575, %v479
      %v672 = vpack.c.b16 %v576, %v480
      %v673 = vpack.c.b16 %v577, %v481
      %v674 = vpack.c.b16 %v578, %v482
      %v675 = vpack.c.b16 %v579, %v483
      %v676 = vpack.c.b16 %v580, %v484
      %v677 = vpack.c.b16 %v581, %v485
      %v678 = vpack.c.b16 %v582, %v486
      %v679 = vpack.c.b16 %v583, %v487
      %vm680 = vcmask 72704
      %v682 = vsel %vm680, %v292, 0
      %v685 = vsel %vm680, %v293, 0
      %v688 = vsel %vm680, %v294, 0
      %v691 = vsel %vm680, %v295, 0
      %vm693 = vcmask 1043456
      %vm694 = vcmask 1044480
      %v695 = vsel %vm693, 4294967295, 65535
      %v696 = vsel %vm694, %v695, 0
      %v698 = vand.u32 %v584, %v696
      %v701 = vand.u32 %v585, %v696
      %v704 = vand.u32 %v586, %v696
      %v707 = vand.u32 %v587, %v696
      %v710 = vand.u32 %v588, %v696
      %v713 = vand.u32 %v589, %v696
      %v716 = vand.u32 %v590, %v696
      %v719 = vand.u32 %v591, %v696
      %v722 = vand.u32 %v592, %v696
      %v725 = vand.u32 %v593, %v696
      %v728 = vand.u32 %v594, %v696
      %v731 = vand.u32 %v595, %v696
      %v734 = vand.u32 %v596, %v696
      %v737 = vand.u32 %v597, %v696
      %v740 = vand.u32 %v598, %v696
      %v743 = vand.u32 %v599, %v696
      %v746 = vand.u32 %v600, %v696
      %v749 = vand.u32 %v601, %v696
      %v752 = vand.u32 %v602, %v696
      %v755 = vand.u32 %v603, %v696
      %v758 = vand.u32 %v604, %v696
      %v761 = vand.u32 %v605, %v696
      %v764 = vand.u32 %v606, %v696
      %v767 = vand.u32 %v607, %v696
      %v770 = vand.u32 %v608, %v696
      %v773 = vand.u32 %v609, %v696
      %v776 = vand.u32 %v610, %v696
      %v779 = vand.u32 %v611, %v696
      %v782 = vand.u32 %v612, %v696
      %v785 = vand.u32 %v613, %v696
      %v788 = vand.u32 %v614, %v696
      %v791 = vand.u32 %v615, %v696
      %v794 = vand.u32 %v616, %v696
      %v797 = vand.u32 %v617, %v696
      %v800 = vand.u32 %v618, %v696
      %v803 = vand.u32 %v619, %v696
      %v806 = vand.u32 %v620, %v696
      %v809 = vand.u32 %v621, %v696
      %v812 = vand.u32 %v622, %v696
      %v815 = vand.u32 %v623, %v696
      %v818 = vand.u32 %v624, %v696
      %v821 = vand.u32 %v625, %v696
      %v824 = vand.u32 %v626, %v696
      %v827 = vand.u32 %v627, %v696
      %v830 = vand.u32 %v628, %v696
      %v833 = vand.u32 %v629, %v696
      %v836 = vand.u32 %v630, %v696
      %v839 = vand.u32 %v631, %v696
      %v842 = vand.u32 %v632, %v696
      %v845 = vand.u32 %v633, %v696
      %v848 = vand.u32 %v634, %v696
      %v851 = vand.u32 %v635, %v696
      %v854 = vand.u32 %v636, %v696
      %v857 = vand.u32 %v637, %v696
      %v860 = vand.u32 %v638, %v696
      %v863 = vand.u32 %v639, %v696
      %v866 = vand.u32 %v640, %v696
      %v869 = vand.u32 %v641, %v696
      %v872 = vand.u32 %v642, %v696
      %v875 = vand.u32 %v643, %v696
      %v878 = vand.u32 %v644, %v696
      %v881 = vand.u32 %v645, %v696
      %v884 = vand.u32 %v646, %v696
      %v887 = vand.u32 %v647, %v696
      %v890 = vand.u32 %v648, %v696
      %v893 = vand.u32 %v649, %v696
      %v896 = vand.u32 %v650, %v696
      %v899 = vand.u32 %v651, %v696
      %v902 = vand.u32 %v652, %v696
      %v905 = vand.u32 %v653, %v696
      %v908 = vand.u32 %v654, %v696
      %v911 = vand.u32 %v655, %v696
      %v914 = vand.u32 %v656, %v696
      %v917 = vand.u32 %v657, %v696
      %v920 = vand.u32 %v658, %v696
      %v923 = vand.u32 %v659, %v696
      %v926 = vand.u32 %v660, %v696
      %v929 = vand.u32 %v661, %v696
      %v932 = vand.u32 %v662, %v696
      %v935 = vand.u32 %v663, %v696
      %v938 = vand.u32 %v664, %v696
      %v941 = vand.u32 %v665, %v696
      %v944 = vand.u32 %v666, %v696
      %v947 = vand.u32 %v667, %v696
      %v950 = vand.u32 %v668, %v696
      %v953 = vand.u32 %v669, %v696
      %v956 = vand.u32 %v670, %v696
      %v959 = vand.u32 %v671, %v696
      %v962 = vand.u32 %v672, %v696
      %v965 = vand.u32 %v673, %v696
      %v968 = vand.u32 %v674, %v696
      %v971 = vand.u32 %v675, %v696
      %v974 = vand.u32 %v676, %v696
      %v977 = vand.u32 %v677, %v696
      %v980 = vand.u32 %v678, %v696
      %v983 = vand.u32 %v679, %v696
      %985 = vmatprep.subr.bf16.mxu0 0
      %986 = vmatpush1.bf16.msra.mxu0 0
      %987 = vmatprep.subr.bf16.mxu0 0
      %988 = vmatpush1.bf16.msra.mxu0 0
      %989 = vmatprep.subr.bf16.mxu0 0
      %990 = vmatpush1.bf16.msra.mxu0 0
      %991 = vmatprep.subr.bf16.mxu0 0
      %992 = vmatpush1.bf16.msra.mxu0 0
      %993 = vmatprep.subr.bf16.mxu0 0
      %994 = vmatpush1.bf16.msra.mxu0 0
      %995 = vmatprep.subr.bf16.mxu0 0
      %996 = vmatpush1.bf16.msra.mxu0 0
      %997 = vmatprep.subr.bf16.mxu0 0
      %998 = vmatpush1.bf16.msra.mxu0 0
      %999 = vmatprep.subr.bf16.mxu0 %v701
      %1000 = vmatpush1.bf16.msra.mxu0 %v698
      %1001 = vmatprep.subr.bf16.mxu0 0
      %1002 = vmatpush2.bf16.msra.mxu0 0
      %1003 = vmatprep.subr.bf16.mxu0 0
      %1004 = vmatpush2.bf16.msra.mxu0 0
      %1005 = vmatprep.subr.bf16.mxu0 0
      %1006 = vmatpush2.bf16.msra.mxu0 0
      %1007 = vmatprep.subr.bf16.mxu0 0
      %1008 = vmatpush2.bf16.msra.mxu0 0
      %1009 = vmatprep.subr.bf16.mxu0 0
      %1010 = vmatpush2.bf16.msra.mxu0 0
      %1011 = vmatprep.subr.bf16.mxu0 0
      %1012 = vmatpush2.bf16.msra.mxu0 0
      %1013 = vmatprep.subr.bf16.mxu0 0
      %1014 = vmatpush2.bf16.msra.mxu0 0
      %1015 = vmatprep.subr.bf16.mxu0 0
      %1016 = vmatpush2.bf16.msra.mxu0 0
      %1017 = vmatprep.mubr.bf16.mxu0 0
      %1018 = vmatmul.mubr.bf16.gmra.mxu0 %v682
      %v1019 = vpop.f32.mrf.mxu0
      %v1020 = vadd.f32 0.0, %v1019
      %v1021 = vpop.f32.mrf.mxu0
      %v1022 = vadd.f32 0.0, %v1021
      %v1023 = vpop.f32.mrf.mxu0
      %v1024 = vadd.f32 0.0, %v1023
      %v1025 = vpop.f32.mrf.mxu0
      %v1026 = vadd.f32 0.0, %v1025
      %1027 = vmatprep.mubr.bf16.mxu0 0
      %1028 = vmatmul.mubr.bf16.gmra.mxu0 %v685
      %v1029 = vpop.f32.mrf.mxu0
      %v1030 = vadd.f32 0.0, %v1029
      %v1031 = vpop.f32.mrf.mxu0
      %v1032 = vadd.f32 0.0, %v1031
      %v1033 = vpop.f32.mrf.mxu0
      %v1034 = vadd.f32 0.0, %v1033
      %v1035 = vpop.f32.mrf.mxu0
      %v1036 = vadd.f32 0.0, %v1035
      %1037 = vmatprep.mubr.bf16.mxu0 0
      %1038 = vmatmul.mubr.bf16.gmra.mxu0 %v688
      %v1039 = vpop.f32.mrf.mxu0
      %v1040 = vadd.f32 0.0, %v1039
      %v1041 = vpop.f32.mrf.mxu0
      %v1042 = vadd.f32 0.0, %v1041
      %v1043 = vpop.f32.mrf.mxu0
      %v1044 = vadd.f32 0.0, %v1043
      %v1045 = vpop.f32.mrf.mxu0
      %v1046 = vadd.f32 0.0, %v1045
      %1047 = vmatprep.mubr.bf16.mxu0 0
      %1048 = vmatmul.mubr.bf16.gmra.mxu0 %v691
      %v1049 = vpop.f32.mrf.mxu0
      %v1050 = vadd.f32 0.0, %v1049
      %v1051 = vpop.f32.mrf.mxu0
      %v1052 = vadd.f32 0.0, %v1051
      %v1053 = vpop.f32.mrf.mxu0
      %v1054 = vadd.f32 0.0, %v1053
      %v1055 = vpop.f32.mrf.mxu0
      %v1056 = vadd.f32 0.0, %v1055
      %1057 = vdwg.mxu0
      %1058 = vmatprep.subr.bf16.mxu0 0
      %1059 = vmatpush1.bf16.msra.mxu0 0
      %1060 = vmatprep.subr.bf16.mxu0 0
      %1061 = vmatpush1.bf16.msra.mxu0 0
      %1062 = vmatprep.subr.bf16.mxu0 0
      %1063 = vmatpush1.bf16.msra.mxu0 0
      %1064 = vmatprep.subr.bf16.mxu0 0
      %1065 = vmatpush1.bf16.msra.mxu0 0
      %1066 = vmatprep.subr.bf16.mxu0 0
      %1067 = vmatpush1.bf16.msra.mxu0 0
      %1068 = vmatprep.subr.bf16.mxu0 0
      %1069 = vmatpush1.bf16.msra.mxu0 0
      %1070 = vmatprep.subr.bf16.mxu0 0
      %1071 = vmatpush1.bf16.msra.mxu0 0
      %1072 = vmatprep.subr.bf16.mxu0 %v707
      %1073 = vmatpush1.bf16.msra.mxu0 %v704
      %1074 = vmatprep.subr.bf16.mxu0 0
      %1075 = vmatpush2.bf16.msra.mxu0 0
      %1076 = vmatprep.subr.bf16.mxu0 0
      %1077 = vmatpush2.bf16.msra.mxu0 0
      %1078 = vmatprep.subr.bf16.mxu0 0
      %1079 = vmatpush2.bf16.msra.mxu0 0
      %1080 = vmatprep.subr.bf16.mxu0 0
      %1081 = vmatpush2.bf16.msra.mxu0 0
      %1082 = vmatprep.subr.bf16.mxu0 0
      %1083 = vmatpush2.bf16.msra.mxu0 0
      %1084 = vmatprep.subr.bf16.mxu0 0
      %1085 = vmatpush2.bf16.msra.mxu0 0
      %1086 = vmatprep.subr.bf16.mxu0 0
      %1087 = vmatpush2.bf16.msra.mxu0 0
      %1088 = vmatprep.subr.bf16.mxu0 0
      %1089 = vmatpush2.bf16.msra.mxu0 0
      %1090 = vmatprep.mubr.bf16.mxu0 0
      %1091 = vmatmul.mubr.bf16.gmra.mxu0 %v682
      %v1092 = vpop.f32.mrf.mxu0
      %v1093 = vadd.f32 0.0, %v1092
      %v1094 = vpop.f32.mrf.mxu0
      %v1095 = vadd.f32 0.0, %v1094
      %v1096 = vpop.f32.mrf.mxu0
      %v1097 = vadd.f32 0.0, %v1096
      %v1098 = vpop.f32.mrf.mxu0
      %v1099 = vadd.f32 0.0, %v1098
      %1100 = vmatprep.mubr.bf16.mxu0 0
      %1101 = vmatmul.mubr.bf16.gmra.mxu0 %v685
      %v1102 = vpop.f32.mrf.mxu0
      %v1103 = vadd.f32 0.0, %v1102
      %v1104 = vpop.f32.mrf.mxu0
      %v1105 = vadd.f32 0.0, %v1104
      %v1106 = vpop.f32.mrf.mxu0
      %v1107 = vadd.f32 0.0, %v1106
      %v1108 = vpop.f32.mrf.mxu0
      %v1109 = vadd.f32 0.0, %v1108
      %1110 = vmatprep.mubr.bf16.mxu0 0
      %1111 = vmatmul.mubr.bf16.gmra.mxu0 %v688
      %v1112 = vpop.f32.mrf.mxu0
      %v1113 = vadd.f32 0.0, %v1112
      %v1114 = vpop.f32.mrf.mxu0
      %v1115 = vadd.f32 0.0, %v1114
      %v1116 = vpop.f32.mrf.mxu0
      %v1117 = vadd.f32 0.0, %v1116
      %v1118 = vpop.f32.mrf.mxu0
      %v1119 = vadd.f32 0.0, %v1118
      %1120 = vmatprep.mubr.bf16.mxu0 0
      %1121 = vmatmul.mubr.bf16.gmra.mxu0 %v691
      %v1122 = vpop.f32.mrf.mxu0
      %v1123 = vadd.f32 0.0, %v1122
      %v1124 = vpop.f32.mrf.mxu0
      %v1125 = vadd.f32 0.0, %v1124
      %v1126 = vpop.f32.mrf.mxu0
      %v1127 = vadd.f32 0.0, %v1126
      %v1128 = vpop.f32.mrf.mxu0
      %v1129 = vadd.f32 0.0, %v1128
      %1130 = vdwg.mxu0
      %1131 = vmatprep.subr.bf16.mxu0 0
      %1132 = vmatpush1.bf16.msra.mxu0 0
      %1133 = vmatprep.subr.bf16.mxu0 0
      %1134 = vmatpush1.bf16.msra.mxu0 0
      %1135 = vmatprep.subr.bf16.mxu0 0
      %1136 = vmatpush1.bf16.msra.mxu0 0
      %1137 = vmatprep.subr.bf16.mxu0 0
      %1138 = vmatpush1.bf16.msra.mxu0 0
      %1139 = vmatprep.subr.bf16.mxu0 0
      %1140 = vmatpush1.bf16.msra.mxu0 0
      %1141 = vmatprep.subr.bf16.mxu0 0
      %1142 = vmatpush1.bf16.msra.mxu0 0
      %1143 = vmatprep.subr.bf16.mxu0 0
      %1144 = vmatpush1.bf16.msra.mxu0 0
      %1145 = vmatprep.subr.bf16.mxu0 %v713
      %1146 = vmatpush1.bf16.msra.mxu0 %v710
      %1147 = vmatprep.subr.bf16.mxu0 0
      %1148 = vmatpush2.bf16.msra.mxu0 0
      %1149 = vmatprep.subr.bf16.mxu0 0
      %1150 = vmatpush2.bf16.msra.mxu0 0
      %1151 = vmatprep.subr.bf16.mxu0 0
      %1152 = vmatpush2.bf16.msra.mxu0 0
      %1153 = vmatprep.subr.bf16.mxu0 0
      %1154 = vmatpush2.bf16.msra.mxu0 0
      %1155 = vmatprep.subr.bf16.mxu0 0
      %1156 = vmatpush2.bf16.msra.mxu0 0
      %1157 = vmatprep.subr.bf16.mxu0 0
      %1158 = vmatpush2.bf16.msra.mxu0 0
      %1159 = vmatprep.subr.bf16.mxu0 0
      %1160 = vmatpush2.bf16.msra.mxu0 0
      %1161 = vmatprep.subr.bf16.mxu0 0
      %1162 = vmatpush2.bf16.msra.mxu0 0
      %1163 = vmatprep.mubr.bf16.mxu0 0
      %1164 = vmatmul.mubr.bf16.gmra.mxu0 %v682
      %v1165 = vpop.f32.mrf.mxu0
      %v1166 = vadd.f32 0.0, %v1165
      %v1167 = vpop.f32.mrf.mxu0
      %v1168 = vadd.f32 0.0, %v1167
      %v1169 = vpop.f32.mrf.mxu0
      %v1170 = vadd.f32 0.0, %v1169
      %v1171 = vpop.f32.mrf.mxu0
      %v1172 = vadd.f32 0.0, %v1171
      %1173 = vmatprep.mubr.bf16.mxu0 0
      %1174 = vmatmul.mubr.bf16.gmra.mxu0 %v685
      %v1175 = vpop.f32.mrf.mxu0
      %v1176 = vadd.f32 0.0, %v1175
      %v1177 = vpop.f32.mrf.mxu0
      %v1178 = vadd.f32 0.0, %v1177
      %v1179 = vpop.f32.mrf.mxu0
      %v1180 = vadd.f32 0.0, %v1179
      %v1181 = vpop.f32.mrf.mxu0
      %v1182 = vadd.f32 0.0, %v1181
      %1183 = vmatprep.mubr.bf16.mxu0 0
      %1184 = vmatmul.mubr.bf16.gmra.mxu0 %v688
      %v1185 = vpop.f32.mrf.mxu0
      %v1186 = vadd.f32 0.0, %v1185
      %v1187 = vpop.f32.mrf.mxu0
      %v1188 = vadd.f32 0.0, %v1187
      %v1189 = vpop.f32.mrf.mxu0
      %v1190 = vadd.f32 0.0, %v1189
      %v1191 = vpop.f32.mrf.mxu0
      %v1192 = vadd.f32 0.0, %v1191
      %1193 = vmatprep.mubr.bf16.mxu0 0
      %1194 = vmatmul.mubr.bf16.gmra.mxu0 %v691
      %v1195 = vpop.f32.mrf.mxu0
      %v1196 = vadd.f32 0.0, %v1195
      %v1197 = vpop.f32.mrf.mxu0
      %v1198 = vadd.f32 0.0, %v1197
      %v1199 = vpop.f32.mrf.mxu0
      %v1200 = vadd.f32 0.0, %v1199
      %v1201 = vpop.f32.mrf.mxu0
      %v1202 = vadd.f32 0.0, %v1201
      %1203 = vdwg.mxu0
      %1204 = vmatprep.subr.bf16.mxu0 0
      %1205 = vmatpush1.bf16.msra.mxu0 0
      %1206 = vmatprep.subr.bf16.mxu0 0
      %1207 = vmatpush1.bf16.msra.mxu0 0
      %1208 = vmatprep.subr.bf16.mxu0 0
      %1209 = vmatpush1.bf16.msra.mxu0 0
      %1210 = vmatprep.subr.bf16.mxu0 0
      %1211 = vmatpush1.bf16.msra.mxu0 0
      %1212 = vmatprep.subr.bf16.mxu0 0
      %1213 = vmatpush1.bf16.msra.mxu0 0
      %1214 = vmatprep.subr.bf16.mxu0 0
      %1215 = vmatpush1.bf16.msra.mxu0 0
      %1216 = vmatprep.subr.bf16.mxu0 0
      %1217 = vmatpush1.bf16.msra.mxu0 0
      %1218 = vmatprep.subr.bf16.mxu0 %v719
      %1219 = vmatpush1.bf16.msra.mxu0 %v716
      %1220 = vmatprep.subr.bf16.mxu0 0
      %1221 = vmatpush2.bf16.msra.mxu0 0
      %1222 = vmatprep.subr.bf16.mxu0 0
      %1223 = vmatpush2.bf16.msra.mxu0 0
      %1224 = vmatprep.subr.bf16.mxu0 0
      %1225 = vmatpush2.bf16.msra.mxu0 0
      %1226 = vmatprep.subr.bf16.mxu0 0
      %1227 = vmatpush2.bf16.msra.mxu0 0
      %1228 = vmatprep.subr.bf16.mxu0 0
      %1229 = vmatpush2.bf16.msra.mxu0 0
      %1230 = vmatprep.subr.bf16.mxu0 0
      %1231 = vmatpush2.bf16.msra.mxu0 0
      %1232 = vmatprep.subr.bf16.mxu0 0
      %1233 = vmatpush2.bf16.msra.mxu0 0
      %1234 = vmatprep.subr.bf16.mxu0 0
      %1235 = vmatpush2.bf16.msra.mxu0 0
      %1236 = vmatprep.mubr.bf16.mxu0 0
      %1237 = vmatmul.mubr.bf16.gmra.mxu0 %v682
      %v1238 = vpop.f32.mrf.mxu0
      %v1239 = vadd.f32 0.0, %v1238
      %v1240 = vpop.f32.mrf.mxu0
      %v1241 = vadd.f32 0.0, %v1240
      %v1242 = vpop.f32.mrf.mxu0
      %v1243 = vadd.f32 0.0, %v1242
      %v1244 = vpop.f32.mrf.mxu0
      %v1245 = vadd.f32 0.0, %v1244
      %1246 = vmatprep.mubr.bf16.mxu0 0
      %1247 = vmatmul.mubr.bf16.gmra.mxu0 %v685
      %v1248 = vpop.f32.mrf.mxu0
      %v1249 = vadd.f32 0.0, %v1248
      %v1250 = vpop.f32.mrf.mxu0
      %v1251 = vadd.f32 0.0, %v1250
      %v1252 = vpop.f32.mrf.mxu0
      %v1253 = vadd.f32 0.0, %v1252
      %v1254 = vpop.f32.mrf.mxu0
      %v1255 = vadd.f32 0.0, %v1254
      %1256 = vmatprep.mubr.bf16.mxu0 0
      %1257 = vmatmul.mubr.bf16.gmra.mxu0 %v688
      %v1258 = vpop.f32.mrf.mxu0
      %v1259 = vadd.f32 0.0, %v1258
      %v1260 = vpop.f32.mrf.mxu0
      %v1261 = vadd.f32 0.0, %v1260
      %v1262 = vpop.f32.mrf.mxu0
      %v1263 = vadd.f32 0.0, %v1262
      %v1264 = vpop.f32.mrf.mxu0
      %v1265 = vadd.f32 0.0, %v1264
      %1266 = vmatprep.mubr.bf16.mxu0 0
      %1267 = vmatmul.mubr.bf16.gmra.mxu0 %v691
      %v1268 = vpop.f32.mrf.mxu0
      %v1269 = vadd.f32 0.0, %v1268
      %v1270 = vpop.f32.mrf.mxu0
      %v1271 = vadd.f32 0.0, %v1270
      %v1272 = vpop.f32.mrf.mxu0
      %v1273 = vadd.f32 0.0, %v1272
      %v1274 = vpop.f32.mrf.mxu0
      %v1275 = vadd.f32 0.0, %v1274
      %1276 = vdwg.mxu0
      %1277 = vmatprep.subr.bf16.mxu0 0
      %1278 = vmatpush1.bf16.msra.mxu0 0
      %1279 = vmatprep.subr.bf16.mxu0 0
      %1280 = vmatpush1.bf16.msra.mxu0 0
      %1281 = vmatprep.subr.bf16.mxu0 0
      %1282 = vmatpush1.bf16.msra.mxu0 0
      %1283 = vmatprep.subr.bf16.mxu0 0
      %1284 = vmatpush1.bf16.msra.mxu0 0
      %1285 = vmatprep.subr.bf16.mxu0 0
      %1286 = vmatpush1.bf16.msra.mxu0 0
      %1287 = vmatprep.subr.bf16.mxu0 0
      %1288 = vmatpush1.bf16.msra.mxu0 0
      %1289 = vmatprep.subr.bf16.mxu0 0
      %1290 = vmatpush1.bf16.msra.mxu0 0
      %1291 = vmatprep.subr.bf16.mxu0 %v725
      %1292 = vmatpush1.bf16.msra.mxu0 %v722
      %1293 = vmatprep.subr.bf16.mxu0 0
      %1294 = vmatpush2.bf16.msra.mxu0 0
      %1295 = vmatprep.subr.bf16.mxu0 0
      %1296 = vmatpush2.bf16.msra.mxu0 0
      %1297 = vmatprep.subr.bf16.mxu0 0
      %1298 = vmatpush2.bf16.msra.mxu0 0
      %1299 = vmatprep.subr.bf16.mxu0 0
      %1300 = vmatpush2.bf16.msra.mxu0 0
      %1301 = vmatprep.subr.bf16.mxu0 0
      %1302 = vmatpush2.bf16.msra.mxu0 0
      %1303 = vmatprep.subr.bf16.mxu0 0
      %1304 = vmatpush2.bf16.msra.mxu0 0
      %1305 = vmatprep.subr.bf16.mxu0 0
      %1306 = vmatpush2.bf16.msra.mxu0 0
      %1307 = vmatprep.subr.bf16.mxu0 0
      %1308 = vmatpush2.bf16.msra.mxu0 0
      %1309 = vmatprep.mubr.bf16.mxu0 0
      %1310 = vmatmul.mubr.bf16.gmra.mxu0 %v682
      %v1311 = vpop.f32.mrf.mxu0
      %v1312 = vadd.f32 0.0, %v1311
      %v1313 = vpop.f32.mrf.mxu0
      %v1314 = vadd.f32 0.0, %v1313
      %v1315 = vpop.f32.mrf.mxu0
      %v1316 = vadd.f32 0.0, %v1315
      %v1317 = vpop.f32.mrf.mxu0
      %v1318 = vadd.f32 0.0, %v1317
      %1319 = vmatprep.mubr.bf16.mxu0 0
      %1320 = vmatmul.mubr.bf16.gmra.mxu0 %v685
      %v1321 = vpop.f32.mrf.mxu0
      %v1322 = vadd.f32 0.0, %v1321
      %v1323 = vpop.f32.mrf.mxu0
      %v1324 = vadd.f32 0.0, %v1323
      %v1325 = vpop.f32.mrf.mxu0
      %v1326 = vadd.f32 0.0, %v1325
      %v1327 = vpop.f32.mrf.mxu0
      %v1328 = vadd.f32 0.0, %v1327
      %1329 = vmatprep.mubr.bf16.mxu0 0
      %1330 = vmatmul.mubr.bf16.gmra.mxu0 %v688
      %v1331 = vpop.f32.mrf.mxu0
      %v1332 = vadd.f32 0.0, %v1331
      %v1333 = vpop.f32.mrf.mxu0
      %v1334 = vadd.f32 0.0, %v1333
      %v1335 = vpop.f32.mrf.mxu0
      %v1336 = vadd.f32 0.0, %v1335
      %v1337 = vpop.f32.mrf.mxu0
      %v1338 = vadd.f32 0.0, %v1337
      %1339 = vmatprep.mubr.bf16.mxu0 0
      %1340 = vmatmul.mubr.bf16.gmra.mxu0 %v691
      %v1341 = vpop.f32.mrf.mxu0
      %v1342 = vadd.f32 0.0, %v1341
      %v1343 = vpop.f32.mrf.mxu0
      %v1344 = vadd.f32 0.0, %v1343
      %v1345 = vpop.f32.mrf.mxu0
      %v1346 = vadd.f32 0.0, %v1345
      %v1347 = vpop.f32.mrf.mxu0
      %v1348 = vadd.f32 0.0, %v1347
      %1349 = vdwg.mxu0
      %1350 = vmatprep.subr.bf16.mxu0 0
      %1351 = vmatpush1.bf16.msra.mxu0 0
      %1352 = vmatprep.subr.bf16.mxu0 0
      %1353 = vmatpush1.bf16.msra.mxu0 0
      %1354 = vmatprep.subr.bf16.mxu0 0
      %1355 = vmatpush1.bf16.msra.mxu0 0
      %1356 = vmatprep.subr.bf16.mxu0 0
      %1357 = vmatpush1.bf16.msra.mxu0 0
      %1358 = vmatprep.subr.bf16.mxu0 0
      %1359 = vmatpush1.bf16.msra.mxu0 0
      %1360 = vmatprep.subr.bf16.mxu0 0
      %1361 = vmatpush1.bf16.msra.mxu0 0
      %1362 = vmatprep.subr.bf16.mxu0 0
      %1363 = vmatpush1.bf16.msra.mxu0 0
      %1364 = vmatprep.subr.bf16.mxu0 %v731
      %1365 = vmatpush1.bf16.msra.mxu0 %v728
      %1366 = vmatprep.subr.bf16.mxu0 0
      %1367 = vmatpush2.bf16.msra.mxu0 0
      %1368 = vmatprep.subr.bf16.mxu0 0
      %1369 = vmatpush2.bf16.msra.mxu0 0
      %1370 = vmatprep.subr.bf16.mxu0 0
      %1371 = vmatpush2.bf16.msra.mxu0 0
      %1372 = vmatprep.subr.bf16.mxu0 0
      %1373 = vmatpush2.bf16.msra.mxu0 0
      %1374 = vmatprep.subr.bf16.mxu0 0
      %1375 = vmatpush2.bf16.msra.mxu0 0
      %1376 = vmatprep.subr.bf16.mxu0 0
      %1377 = vmatpush2.bf16.msra.mxu0 0
      %1378 = vmatprep.subr.bf16.mxu0 0
      %1379 = vmatpush2.bf16.msra.mxu0 0
      %1380 = vmatprep.subr.bf16.mxu0 0
      %1381 = vmatpush2.bf16.msra.mxu0 0
      %1382 = vmatprep.mubr.bf16.mxu0 0
      %1383 = vmatmul.mubr.bf16.gmra.mxu0 %v682
      %v1384 = vpop.f32.mrf.mxu0
      %v1385 = vadd.f32 0.0, %v1384
      %v1386 = vpop.f32.mrf.mxu0
      %v1387 = vadd.f32 0.0, %v1386
      %v1388 = vpop.f32.mrf.mxu0
      %v1389 = vadd.f32 0.0, %v1388
      %v1390 = vpop.f32.mrf.mxu0
      %v1391 = vadd.f32 0.0, %v1390
      %1392 = vmatprep.mubr.bf16.mxu0 0
      %1393 = vmatmul.mubr.bf16.gmra.mxu0 %v685
      %v1394 = vpop.f32.mrf.mxu0
      %v1395 = vadd.f32 0.0, %v1394
      %v1396 = vpop.f32.mrf.mxu0
      %v1397 = vadd.f32 0.0, %v1396
      %v1398 = vpop.f32.mrf.mxu0
      %v1399 = vadd.f32 0.0, %v1398
      %v1400 = vpop.f32.mrf.mxu0
      %v1401 = vadd.f32 0.0, %v1400
      %1402 = vmatprep.mubr.bf16.mxu0 0
      %1403 = vmatmul.mubr.bf16.gmra.mxu0 %v688
      %v1404 = vpop.f32.mrf.mxu0
      %v1405 = vadd.f32 0.0, %v1404
      %v1406 = vpop.f32.mrf.mxu0
      %v1407 = vadd.f32 0.0, %v1406
      %v1408 = vpop.f32.mrf.mxu0
      %v1409 = vadd.f32 0.0, %v1408
      %v1410 = vpop.f32.mrf.mxu0
      %v1411 = vadd.f32 0.0, %v1410
      %1412 = vmatprep.mubr.bf16.mxu0 0
      %1413 = vmatmul.mubr.bf16.gmra.mxu0 %v691
      %v1414 = vpop.f32.mrf.mxu0
      %v1415 = vadd.f32 0.0, %v1414
      %v1416 = vpop.f32.mrf.mxu0
      %v1417 = vadd.f32 0.0, %v1416
      %v1418 = vpop.f32.mrf.mxu0
      %v1419 = vadd.f32 0.0, %v1418
      %v1420 = vpop.f32.mrf.mxu0
      %v1421 = vadd.f32 0.0, %v1420
      %1422 = vdwg.mxu0
      %1423 = vmatprep.subr.bf16.mxu0 0
      %1424 = vmatpush1.bf16.msra.mxu0 0
      %1425 = vmatprep.subr.bf16.mxu0 0
      %1426 = vmatpush1.bf16.msra.mxu0 0
      %1427 = vmatprep.subr.bf16.mxu0 0
      %1428 = vmatpush1.bf16.msra.mxu0 0
      %1429 = vmatprep.subr.bf16.mxu0 0
      %1430 = vmatpush1.bf16.msra.mxu0 0
      %1431 = vmatprep.subr.bf16.mxu0 0
      %1432 = vmatpush1.bf16.msra.mxu0 0
      %1433 = vmatprep.subr.bf16.mxu0 0
      %1434 = vmatpush1.bf16.msra.mxu0 0
      %1435 = vmatprep.subr.bf16.mxu0 0
      %1436 = vmatpush1.bf16.msra.mxu0 0
      %1437 = vmatprep.subr.bf16.mxu0 %v737
      %1438 = vmatpush1.bf16.msra.mxu0 %v734
      %1439 = vmatprep.subr.bf16.mxu0 0
      %1440 = vmatpush2.bf16.msra.mxu0 0
      %1441 = vmatprep.subr.bf16.mxu0 0
      %1442 = vmatpush2.bf16.msra.mxu0 0
      %1443 = vmatprep.subr.bf16.mxu0 0
      %1444 = vmatpush2.bf16.msra.mxu0 0
      %1445 = vmatprep.subr.bf16.mxu0 0
      %1446 = vmatpush2.bf16.msra.mxu0 0
      %1447 = vmatprep.subr.bf16.mxu0 0
      %1448 = vmatpush2.bf16.msra.mxu0 0
      %1449 = vmatprep.subr.bf16.mxu0 0
      %1450 = vmatpush2.bf16.msra.mxu0 0
      %1451 = vmatprep.subr.bf16.mxu0 0
      %1452 = vmatpush2.bf16.msra.mxu0 0
      %1453 = vmatprep.subr.bf16.mxu0 0
      %1454 = vmatpush2.bf16.msra.mxu0 0
      %1455 = vmatprep.mubr.bf16.mxu0 0
      %1456 = vmatmul.mubr.bf16.gmra.mxu0 %v682
      %v1457 = vpop.f32.mrf.mxu0
      %v1458 = vadd.f32 0.0, %v1457
      %v1459 = vpop.f32.mrf.mxu0
      %v1460 = vadd.f32 0.0, %v1459
      %v1461 = vpop.f32.mrf.mxu0
      %v1462 = vadd.f32 0.0, %v1461
      %v1463 = vpop.f32.mrf.mxu0
      %v1464 = vadd.f32 0.0, %v1463
      %1465 = vmatprep.mubr.bf16.mxu0 0
      %1466 = vmatmul.mubr.bf16.gmra.mxu0 %v685
      %v1467 = vpop.f32.mrf.mxu0
      %v1468 = vadd.f32 0.0, %v1467
      %v1469 = vpop.f32.mrf.mxu0
      %v1470 = vadd.f32 0.0, %v1469
      %v1471 = vpop.f32.mrf.mxu0
      %v1472 = vadd.f32 0.0, %v1471
      %v1473 = vpop.f32.mrf.mxu0
      %v1474 = vadd.f32 0.0, %v1473
      %1475 = vmatprep.mubr.bf16.mxu0 0
      %1476 = vmatmul.mubr.bf16.gmra.mxu0 %v688
      %v1477 = vpop.f32.mrf.mxu0
      %v1478 = vadd.f32 0.0, %v1477
      %v1479 = vpop.f32.mrf.mxu0
      %v1480 = vadd.f32 0.0, %v1479
      %v1481 = vpop.f32.mrf.mxu0
      %v1482 = vadd.f32 0.0, %v1481
      %v1483 = vpop.f32.mrf.mxu0
      %v1484 = vadd.f32 0.0, %v1483
      %1485 = vmatprep.mubr.bf16.mxu0 0
      %1486 = vmatmul.mubr.bf16.gmra.mxu0 %v691
      %v1487 = vpop.f32.mrf.mxu0
      %v1488 = vadd.f32 0.0, %v1487
      %v1489 = vpop.f32.mrf.mxu0
      %v1490 = vadd.f32 0.0, %v1489
      %v1491 = vpop.f32.mrf.mxu0
      %v1492 = vadd.f32 0.0, %v1491
      %v1493 = vpop.f32.mrf.mxu0
      %v1494 = vadd.f32 0.0, %v1493
      %1495 = vdwg.mxu0
      %1496 = vmatprep.subr.bf16.mxu0 0
      %1497 = vmatpush1.bf16.msra.mxu0 0
      %1498 = vmatprep.subr.bf16.mxu0 0
      %1499 = vmatpush1.bf16.msra.mxu0 0
      %1500 = vmatprep.subr.bf16.mxu0 0
      %1501 = vmatpush1.bf16.msra.mxu0 0
      %1502 = vmatprep.subr.bf16.mxu0 0
      %1503 = vmatpush1.bf16.msra.mxu0 0
      %1504 = vmatprep.subr.bf16.mxu0 0
      %1505 = vmatpush1.bf16.msra.mxu0 0
      %1506 = vmatprep.subr.bf16.mxu0 0
      %1507 = vmatpush1.bf16.msra.mxu0 0
      %1508 = vmatprep.subr.bf16.mxu0 0
      %1509 = vmatpush1.bf16.msra.mxu0 0
      %1510 = vmatprep.subr.bf16.mxu0 %v743
      %1511 = vmatpush1.bf16.msra.mxu0 %v740
      %1512 = vmatprep.subr.bf16.mxu0 0
      %1513 = vmatpush2.bf16.msra.mxu0 0
      %1514 = vmatprep.subr.bf16.mxu0 0
      %1515 = vmatpush2.bf16.msra.mxu0 0
      %1516 = vmatprep.subr.bf16.mxu0 0
      %1517 = vmatpush2.bf16.msra.mxu0 0
      %1518 = vmatprep.subr.bf16.mxu0 0
      %1519 = vmatpush2.bf16.msra.mxu0 0
      %1520 = vmatprep.subr.bf16.mxu0 0
      %1521 = vmatpush2.bf16.msra.mxu0 0
      %1522 = vmatprep.subr.bf16.mxu0 0
      %1523 = vmatpush2.bf16.msra.mxu0 0
      %1524 = vmatprep.subr.bf16.mxu0 0
      %1525 = vmatpush2.bf16.msra.mxu0 0
      %1526 = vmatprep.subr.bf16.mxu0 0
      %1527 = vmatpush2.bf16.msra.mxu0 0
      %1528 = vmatprep.mubr.bf16.mxu0 0
      %1529 = vmatmul.mubr.bf16.gmra.mxu0 %v682
      %v1530 = vpop.f32.mrf.mxu0
      %v1531 = vadd.f32 0.0, %v1530
      %v1532 = vpop.f32.mrf.mxu0
      %v1533 = vadd.f32 0.0, %v1532
      %v1534 = vpop.f32.mrf.mxu0
      %v1535 = vadd.f32 0.0, %v1534
      %v1536 = vpop.f32.mrf.mxu0
      %v1537 = vadd.f32 0.0, %v1536
      %1538 = vmatprep.mubr.bf16.mxu0 0
      %1539 = vmatmul.mubr.bf16.gmra.mxu0 %v685
      %v1540 = vpop.f32.mrf.mxu0
      %v1541 = vadd.f32 0.0, %v1540
      %v1542 = vpop.f32.mrf.mxu0
      %v1543 = vadd.f32 0.0, %v1542
      %v1544 = vpop.f32.mrf.mxu0
      %v1545 = vadd.f32 0.0, %v1544
      %v1546 = vpop.f32.mrf.mxu0
      %v1547 = vadd.f32 0.0, %v1546
      %1548 = vmatprep.mubr.bf16.mxu0 0
      %1549 = vmatmul.mubr.bf16.gmra.mxu0 %v688
      %v1550 = vpop.f32.mrf.mxu0
      %v1551 = vadd.f32 0.0, %v1550
      %v1552 = vpop.f32.mrf.mxu0
      %v1553 = vadd.f32 0.0, %v1552
      %v1554 = vpop.f32.mrf.mxu0
      %v1555 = vadd.f32 0.0, %v1554
      %v1556 = vpop.f32.mrf.mxu0
      %v1557 = vadd.f32 0.0, %v1556
      %1558 = vmatprep.mubr.bf16.mxu0 0
      %1559 = vmatmul.mubr.bf16.gmra.mxu0 %v691
      %v1560 = vpop.f32.mrf.mxu0
      %v1561 = vadd.f32 0.0, %v1560
      %v1562 = vpop.f32.mrf.mxu0
      %v1563 = vadd.f32 0.0, %v1562
      %v1564 = vpop.f32.mrf.mxu0
      %v1565 = vadd.f32 0.0, %v1564
      %v1566 = vpop.f32.mrf.mxu0
      %v1567 = vadd.f32 0.0, %v1566
      %1568 = vdwg.mxu0
      %1569 = vmatprep.subr.bf16.mxu0 0
      %1570 = vmatpush1.bf16.msra.mxu0 0
      %1571 = vmatprep.subr.bf16.mxu0 0
      %1572 = vmatpush1.bf16.msra.mxu0 0
      %1573 = vmatprep.subr.bf16.mxu0 0
      %1574 = vmatpush1.bf16.msra.mxu0 0
      %1575 = vmatprep.subr.bf16.mxu0 0
      %1576 = vmatpush1.bf16.msra.mxu0 0
      %1577 = vmatprep.subr.bf16.mxu0 0
      %1578 = vmatpush1.bf16.msra.mxu0 0
      %1579 = vmatprep.subr.bf16.mxu0 0
      %1580 = vmatpush1.bf16.msra.mxu0 0
      %1581 = vmatprep.subr.bf16.mxu0 0
      %1582 = vmatpush1.bf16.msra.mxu0 0
      %1583 = vmatprep.subr.bf16.mxu0 %v749
      %1584 = vmatpush1.bf16.msra.mxu0 %v746
      %1585 = vmatprep.subr.bf16.mxu0 0
      %1586 = vmatpush2.bf16.msra.mxu0 0
      %1587 = vmatprep.subr.bf16.mxu0 0
      %1588 = vmatpush2.bf16.msra.mxu0 0
      %1589 = vmatprep.subr.bf16.mxu0 0
      %1590 = vmatpush2.bf16.msra.mxu0 0
      %1591 = vmatprep.subr.bf16.mxu0 0
      %1592 = vmatpush2.bf16.msra.mxu0 0
      %1593 = vmatprep.subr.bf16.mxu0 0
      %1594 = vmatpush2.bf16.msra.mxu0 0
      %1595 = vmatprep.subr.bf16.mxu0 0
      %1596 = vmatpush2.bf16.msra.mxu0 0
      %1597 = vmatprep.subr.bf16.mxu0 0
      %1598 = vmatpush2.bf16.msra.mxu0 0
      %1599 = vmatprep.subr.bf16.mxu0 0
      %1600 = vmatpush2.bf16.msra.mxu0 0
      %1601 = vmatprep.mubr.bf16.mxu0 0
      %1602 = vmatmul.mubr.bf16.gmra.mxu0 %v682
      %v1603 = vpop.f32.mrf.mxu0
      %v1604 = vadd.f32 0.0, %v1603
      %v1605 = vpop.f32.mrf.mxu0
      %v1606 = vadd.f32 0.0, %v1605
      %v1607 = vpop.f32.mrf.mxu0
      %v1608 = vadd.f32 0.0, %v1607
      %v1609 = vpop.f32.mrf.mxu0
      %v1610 = vadd.f32 0.0, %v1609
      %1611 = vmatprep.mubr.bf16.mxu0 0
      %1612 = vmatmul.mubr.bf16.gmra.mxu0 %v685
      %v1613 = vpop.f32.mrf.mxu0
      %v1614 = vadd.f32 0.0, %v1613
      %v1615 = vpop.f32.mrf.mxu0
      %v1616 = vadd.f32 0.0, %v1615
      %v1617 = vpop.f32.mrf.mxu0
      %v1618 = vadd.f32 0.0, %v1617
      %v1619 = vpop.f32.mrf.mxu0
      %v1620 = vadd.f32 0.0, %v1619
      %1621 = vmatprep.mubr.bf16.mxu0 0
      %1622 = vmatmul.mubr.bf16.gmra.mxu0 %v688
      %v1623 = vpop.f32.mrf.mxu0
      %v1624 = vadd.f32 0.0, %v1623
      %v1625 = vpop.f32.mrf.mxu0
      %v1626 = vadd.f32 0.0, %v1625
      %v1627 = vpop.f32.mrf.mxu0
      %v1628 = vadd.f32 0.0, %v1627
      %v1629 = vpop.f32.mrf.mxu0
      %v1630 = vadd.f32 0.0, %v1629
      %1631 = vmatprep.mubr.bf16.mxu0 0
      %1632 = vmatmul.mubr.bf16.gmra.mxu0 %v691
      %v1633 = vpop.f32.mrf.mxu0
      %v1634 = vadd.f32 0.0, %v1633
      %v1635 = vpop.f32.mrf.mxu0
      %v1636 = vadd.f32 0.0, %v1635
      %v1637 = vpop.f32.mrf.mxu0
      %v1638 = vadd.f32 0.0, %v1637
      %v1639 = vpop.f32.mrf.mxu0
      %v1640 = vadd.f32 0.0, %v1639
      %1641 = vdwg.mxu0
      %1642 = vmatprep.subr.bf16.mxu0 0
      %1643 = vmatpush1.bf16.msra.mxu0 0
      %1644 = vmatprep.subr.bf16.mxu0 0
      %1645 = vmatpush1.bf16.msra.mxu0 0
      %1646 = vmatprep.subr.bf16.mxu0 0
      %1647 = vmatpush1.bf16.msra.mxu0 0
      %1648 = vmatprep.subr.bf16.mxu0 0
      %1649 = vmatpush1.bf16.msra.mxu0 0
      %1650 = vmatprep.subr.bf16.mxu0 0
      %1651 = vmatpush1.bf16.msra.mxu0 0
      %1652 = vmatprep.subr.bf16.mxu0 0
      %1653 = vmatpush1.bf16.msra.mxu0 0
      %1654 = vmatprep.subr.bf16.mxu0 0
      %1655 = vmatpush1.bf16.msra.mxu0 0
      %1656 = vmatprep.subr.bf16.mxu0 %v755
      %1657 = vmatpush1.bf16.msra.mxu0 %v752
      %1658 = vmatprep.subr.bf16.mxu0 0
      %1659 = vmatpush2.bf16.msra.mxu0 0
      %1660 = vmatprep.subr.bf16.mxu0 0
      %1661 = vmatpush2.bf16.msra.mxu0 0
      %1662 = vmatprep.subr.bf16.mxu0 0
      %1663 = vmatpush2.bf16.msra.mxu0 0
      %1664 = vmatprep.subr.bf16.mxu0 0
      %1665 = vmatpush2.bf16.msra.mxu0 0
      %1666 = vmatprep.subr.bf16.mxu0 0
      %1667 = vmatpush2.bf16.msra.mxu0 0
      %1668 = vmatprep.subr.bf16.mxu0 0
      %1669 = vmatpush2.bf16.msra.mxu0 0
      %1670 = vmatprep.subr.bf16.mxu0 0
      %1671 = vmatpush2.bf16.msra.mxu0 0
      %1672 = vmatprep.subr.bf16.mxu0 0
      %1673 = vmatpush2.bf16.msra.mxu0 0
      %1674 = vmatprep.mubr.bf16.mxu0 0
      %1675 = vmatmul.mubr.bf16.gmra.mxu0 %v682
      %v1676 = vpop.f32.mrf.mxu0
      %v1677 = vadd.f32 0.0, %v1676
      %v1678 = vpop.f32.mrf.mxu0
      %v1679 = vadd.f32 0.0, %v1678
      %v1680 = vpop.f32.mrf.mxu0
      %v1681 = vadd.f32 0.0, %v1680
      %v1682 = vpop.f32.mrf.mxu0
      %v1683 = vadd.f32 0.0, %v1682
      %1684 = vmatprep.mubr.bf16.mxu0 0
      %1685 = vmatmul.mubr.bf16.gmra.mxu0 %v685
      %v1686 = vpop.f32.mrf.mxu0
      %v1687 = vadd.f32 0.0, %v1686
      %v1688 = vpop.f32.mrf.mxu0
      %v1689 = vadd.f32 0.0, %v1688
      %v1690 = vpop.f32.mrf.mxu0
      %v1691 = vadd.f32 0.0, %v1690
      %v1692 = vpop.f32.mrf.mxu0
      %v1693 = vadd.f32 0.0, %v1692
      %1694 = vmatprep.mubr.bf16.mxu0 0
      %1695 = vmatmul.mubr.bf16.gmra.mxu0 %v688
      %v1696 = vpop.f32.mrf.mxu0
      %v1697 = vadd.f32 0.0, %v1696
      %v1698 = vpop.f32.mrf.mxu0
      %v1699 = vadd.f32 0.0, %v1698
      %v1700 = vpop.f32.mrf.mxu0
      %v1701 = vadd.f32 0.0, %v1700
      %v1702 = vpop.f32.mrf.mxu0
      %v1703 = vadd.f32 0.0, %v1702
      %1704 = vmatprep.mubr.bf16.mxu0 0
      %1705 = vmatmul.mubr.bf16.gmra.mxu0 %v691
      %v1706 = vpop.f32.mrf.mxu0
      %v1707 = vadd.f32 0.0, %v1706
      %v1708 = vpop.f32.mrf.mxu0
      %v1709 = vadd.f32 0.0, %v1708
      %v1710 = vpop.f32.mrf.mxu0
      %v1711 = vadd.f32 0.0, %v1710
      %v1712 = vpop.f32.mrf.mxu0
      %v1713 = vadd.f32 0.0, %v1712
      %1714 = vdwg.mxu0
      %1715 = vmatprep.subr.bf16.mxu0 0
      %1716 = vmatpush1.bf16.msra.mxu0 0
      %1717 = vmatprep.subr.bf16.mxu0 0
      %1718 = vmatpush1.bf16.msra.mxu0 0
      %1719 = vmatprep.subr.bf16.mxu0 0
      %1720 = vmatpush1.bf16.msra.mxu0 0
      %1721 = vmatprep.subr.bf16.mxu0 0
      %1722 = vmatpush1.bf16.msra.mxu0 0
      %1723 = vmatprep.subr.bf16.mxu0 0
      %1724 = vmatpush1.bf16.msra.mxu0 0
      %1725 = vmatprep.subr.bf16.mxu0 0
      %1726 = vmatpush1.bf16.msra.mxu0 0
      %1727 = vmatprep.subr.bf16.mxu0 0
      %1728 = vmatpush1.bf16.msra.mxu0 0
      %1729 = vmatprep.subr.bf16.mxu0 %v761
      %1730 = vmatpush1.bf16.msra.mxu0 %v758
      %1731 = vmatprep.subr.bf16.mxu0 0
      %1732 = vmatpush2.bf16.msra.mxu0 0
      %1733 = vmatprep.subr.bf16.mxu0 0
      %1734 = vmatpush2.bf16.msra.mxu0 0
      %1735 = vmatprep.subr.bf16.mxu0 0
      %1736 = vmatpush2.bf16.msra.mxu0 0
      %1737 = vmatprep.subr.bf16.mxu0 0
      %1738 = vmatpush2.bf16.msra.mxu0 0
      %1739 = vmatprep.subr.bf16.mxu0 0
      %1740 = vmatpush2.bf16.msra.mxu0 0
      %1741 = vmatprep.subr.bf16.mxu0 0
      %1742 = vmatpush2.bf16.msra.mxu0 0
      %1743 = vmatprep.subr.bf16.mxu0 0
      %1744 = vmatpush2.bf16.msra.mxu0 0
      %1745 = vmatprep.subr.bf16.mxu0 0
      %1746 = vmatpush2.bf16.msra.mxu0 0
      %1747 = vmatprep.mubr.bf16.mxu0 0
      %1748 = vmatmul.mubr.bf16.gmra.mxu0 %v682
      %v1749 = vpop.f32.mrf.mxu0
      %v1750 = vadd.f32 0.0, %v1749
      %v1751 = vpop.f32.mrf.mxu0
      %v1752 = vadd.f32 0.0, %v1751
      %v1753 = vpop.f32.mrf.mxu0
      %v1754 = vadd.f32 0.0, %v1753
      %v1755 = vpop.f32.mrf.mxu0
      %v1756 = vadd.f32 0.0, %v1755
      %1757 = vmatprep.mubr.bf16.mxu0 0
      %1758 = vmatmul.mubr.bf16.gmra.mxu0 %v685
      %v1759 = vpop.f32.mrf.mxu0
      %v1760 = vadd.f32 0.0, %v1759
      %v1761 = vpop.f32.mrf.mxu0
      %v1762 = vadd.f32 0.0, %v1761
      %v1763 = vpop.f32.mrf.mxu0
      %v1764 = vadd.f32 0.0, %v1763
      %v1765 = vpop.f32.mrf.mxu0
      %v1766 = vadd.f32 0.0, %v1765
      %1767 = vmatprep.mubr.bf16.mxu0 0
      %1768 = vmatmul.mubr.bf16.gmra.mxu0 %v688
      %v1769 = vpop.f32.mrf.mxu0
      %v1770 = vadd.f32 0.0, %v1769
      %v1771 = vpop.f32.mrf.mxu0
      %v1772 = vadd.f32 0.0, %v1771
      %v1773 = vpop.f32.mrf.mxu0
      %v1774 = vadd.f32 0.0, %v1773
      %v1775 = vpop.f32.mrf.mxu0
      %v1776 = vadd.f32 0.0, %v1775
      %1777 = vmatprep.mubr.bf16.mxu0 0
      %1778 = vmatmul.mubr.bf16.gmra.mxu0 %v691
      %v1779 = vpop.f32.mrf.mxu0
      %v1780 = vadd.f32 0.0, %v1779
      %v1781 = vpop.f32.mrf.mxu0
      %v1782 = vadd.f32 0.0, %v1781
      %v1783 = vpop.f32.mrf.mxu0
      %v1784 = vadd.f32 0.0, %v1783
      %v1785 = vpop.f32.mrf.mxu0
      %v1786 = vadd.f32 0.0, %v1785
      %1787 = vdwg.mxu0
      %1788 = vmatprep.subr.bf16.mxu0 0
      %1789 = vmatpush1.bf16.msra.mxu0 0
      %1790 = vmatprep.subr.bf16.mxu0 0
      %1791 = vmatpush1.bf16.msra.mxu0 0
      %1792 = vmatprep.subr.bf16.mxu0 0
      %1793 = vmatpush1.bf16.msra.mxu0 0
      %1794 = vmatprep.subr.bf16.mxu0 0
      %1795 = vmatpush1.bf16.msra.mxu0 0
      %1796 = vmatprep.subr.bf16.mxu0 0
      %1797 = vmatpush1.bf16.msra.mxu0 0
      %1798 = vmatprep.subr.bf16.mxu0 0
      %1799 = vmatpush1.bf16.msra.mxu0 0
      %1800 = vmatprep.subr.bf16.mxu0 0
      %1801 = vmatpush1.bf16.msra.mxu0 0
      %1802 = vmatprep.subr.bf16.mxu0 %v767
      %1803 = vmatpush1.bf16.msra.mxu0 %v764
      %1804 = vmatprep.subr.bf16.mxu0 0
      %1805 = vmatpush2.bf16.msra.mxu0 0
      %1806 = vmatprep.subr.bf16.mxu0 0
      %1807 = vmatpush2.bf16.msra.mxu0 0
      %1808 = vmatprep.subr.bf16.mxu0 0
      %1809 = vmatpush2.bf16.msra.mxu0 0
      %1810 = vmatprep.subr.bf16.mxu0 0
      %1811 = vmatpush2.bf16.msra.mxu0 0
      %1812 = vmatprep.subr.bf16.mxu0 0
      %1813 = vmatpush2.bf16.msra.mxu0 0
      %1814 = vmatprep.subr.bf16.mxu0 0
      %1815 = vmatpush2.bf16.msra.mxu0 0
      %1816 = vmatprep.subr.bf16.mxu0 0
      %1817 = vmatpush2.bf16.msra.mxu0 0
      %1818 = vmatprep.subr.bf16.mxu0 0
      %1819 = vmatpush2.bf16.msra.mxu0 0
      %1820 = vmatprep.mubr.bf16.mxu0 0
      %1821 = vmatmul.mubr.bf16.gmra.mxu0 %v682
      %v1822 = vpop.f32.mrf.mxu0
      %v1823 = vadd.f32 0.0, %v1822
      %v1824 = vpop.f32.mrf.mxu0
      %v1825 = vadd.f32 0.0, %v1824
      %v1826 = vpop.f32.mrf.mxu0
      %v1827 = vadd.f32 0.0, %v1826
      %v1828 = vpop.f32.mrf.mxu0
      %v1829 = vadd.f32 0.0, %v1828
      %1830 = vmatprep.mubr.bf16.mxu0 0
      %1831 = vmatmul.mubr.bf16.gmra.mxu0 %v685
      %v1832 = vpop.f32.mrf.mxu0
      %v1833 = vadd.f32 0.0, %v1832
      %v1834 = vpop.f32.mrf.mxu0
      %v1835 = vadd.f32 0.0, %v1834
      %v1836 = vpop.f32.mrf.mxu0
      %v1837 = vadd.f32 0.0, %v1836
      %v1838 = vpop.f32.mrf.mxu0
      %v1839 = vadd.f32 0.0, %v1838
      %1840 = vmatprep.mubr.bf16.mxu0 0
      %1841 = vmatmul.mubr.bf16.gmra.mxu0 %v688
      %v1842 = vpop.f32.mrf.mxu0
      %v1843 = vadd.f32 0.0, %v1842
      %v1844 = vpop.f32.mrf.mxu0
      %v1845 = vadd.f32 0.0, %v1844
      %v1846 = vpop.f32.mrf.mxu0
      %v1847 = vadd.f32 0.0, %v1846
      %v1848 = vpop.f32.mrf.mxu0
      %v1849 = vadd.f32 0.0, %v1848
      %1850 = vmatprep.mubr.bf16.mxu0 0
      %1851 = vmatmul.mubr.bf16.gmra.mxu0 %v691
      %v1852 = vpop.f32.mrf.mxu0
      %v1853 = vadd.f32 0.0, %v1852
      %v1854 = vpop.f32.mrf.mxu0
      %v1855 = vadd.f32 0.0, %v1854
      %v1856 = vpop.f32.mrf.mxu0
      %v1857 = vadd.f32 0.0, %v1856
      %v1858 = vpop.f32.mrf.mxu0
      %v1859 = vadd.f32 0.0, %v1858
      %1860 = vdwg.mxu0
      %1861 = vmatprep.subr.bf16.mxu0 0
      %1862 = vmatpush1.bf16.msra.mxu0 0
      %1863 = vmatprep.subr.bf16.mxu0 0
      %1864 = vmatpush1.bf16.msra.mxu0 0
      %1865 = vmatprep.subr.bf16.mxu0 0
      %1866 = vmatpush1.bf16.msra.mxu0 0
      %1867 = vmatprep.subr.bf16.mxu0 0
      %1868 = vmatpush1.bf16.msra.mxu0 0
      %1869 = vmatprep.subr.bf16.mxu0 0
      %1870 = vmatpush1.bf16.msra.mxu0 0
      %1871 = vmatprep.subr.bf16.mxu0 0
      %1872 = vmatpush1.bf16.msra.mxu0 0
      %1873 = vmatprep.subr.bf16.mxu0 0
      %1874 = vmatpush1.bf16.msra.mxu0 0
      %1875 = vmatprep.subr.bf16.mxu0 %v773
      %1876 = vmatpush1.bf16.msra.mxu0 %v770
      %1877 = vmatprep.subr.bf16.mxu0 0
      %1878 = vmatpush2.bf16.msra.mxu0 0
      %1879 = vmatprep.subr.bf16.mxu0 0
      %1880 = vmatpush2.bf16.msra.mxu0 0
      %1881 = vmatprep.subr.bf16.mxu0 0
      %1882 = vmatpush2.bf16.msra.mxu0 0
      %1883 = vmatprep.subr.bf16.mxu0 0
      %1884 = vmatpush2.bf16.msra.mxu0 0
      %1885 = vmatprep.subr.bf16.mxu0 0
      %1886 = vmatpush2.bf16.msra.mxu0 0
      %1887 = vmatprep.subr.bf16.mxu0 0
      %1888 = vmatpush2.bf16.msra.mxu0 0
      %1889 = vmatprep.subr.bf16.mxu0 0
      %1890 = vmatpush2.bf16.msra.mxu0 0
      %1891 = vmatprep.subr.bf16.mxu0 0
      %1892 = vmatpush2.bf16.msra.mxu0 0
      %1893 = vmatprep.mubr.bf16.mxu0 0
      %1894 = vmatmul.mubr.bf16.gmra.mxu0 %v682
      %v1895 = vpop.f32.mrf.mxu0
      %v1896 = vadd.f32 0.0, %v1895
      %v1897 = vpop.f32.mrf.mxu0
      %v1898 = vadd.f32 0.0, %v1897
      %v1899 = vpop.f32.mrf.mxu0
      %v1900 = vadd.f32 0.0, %v1899
      %v1901 = vpop.f32.mrf.mxu0
      %v1902 = vadd.f32 0.0, %v1901
      %1903 = vmatprep.mubr.bf16.mxu0 0
      %1904 = vmatmul.mubr.bf16.gmra.mxu0 %v685
      %v1905 = vpop.f32.mrf.mxu0
      %v1906 = vadd.f32 0.0, %v1905
      %v1907 = vpop.f32.mrf.mxu0
      %v1908 = vadd.f32 0.0, %v1907
      %v1909 = vpop.f32.mrf.mxu0
      %v1910 = vadd.f32 0.0, %v1909
      %v1911 = vpop.f32.mrf.mxu0
      %v1912 = vadd.f32 0.0, %v1911
      %1913 = vmatprep.mubr.bf16.mxu0 0
      %1914 = vmatmul.mubr.bf16.gmra.mxu0 %v688
      %v1915 = vpop.f32.mrf.mxu0
      %v1916 = vadd.f32 0.0, %v1915
      %v1917 = vpop.f32.mrf.mxu0
      %v1918 = vadd.f32 0.0, %v1917
      %v1919 = vpop.f32.mrf.mxu0
      %v1920 = vadd.f32 0.0, %v1919
      %v1921 = vpop.f32.mrf.mxu0
      %v1922 = vadd.f32 0.0, %v1921
      %1923 = vmatprep.mubr.bf16.mxu0 0
      %1924 = vmatmul.mubr.bf16.gmra.mxu0 %v691
      %v1925 = vpop.f32.mrf.mxu0
      %v1926 = vadd.f32 0.0, %v1925
      %v1927 = vpop.f32.mrf.mxu0
      %v1928 = vadd.f32 0.0, %v1927
      %v1929 = vpop.f32.mrf.mxu0
      %v1930 = vadd.f32 0.0, %v1929
      %v1931 = vpop.f32.mrf.mxu0
      %v1932 = vadd.f32 0.0, %v1931
      %1933 = vdwg.mxu0
      %1934 = vmatprep.subr.bf16.mxu0 0
      %1935 = vmatpush1.bf16.msra.mxu0 0
      %1936 = vmatprep.subr.bf16.mxu0 0
      %1937 = vmatpush1.bf16.msra.mxu0 0
      %1938 = vmatprep.subr.bf16.mxu0 0
      %1939 = vmatpush1.bf16.msra.mxu0 0
      %1940 = vmatprep.subr.bf16.mxu0 0
      %1941 = vmatpush1.bf16.msra.mxu0 0
      %1942 = vmatprep.subr.bf16.mxu0 0
      %1943 = vmatpush1.bf16.msra.mxu0 0
      %1944 = vmatprep.subr.bf16.mxu0 0
      %1945 = vmatpush1.bf16.msra.mxu0 0
      %1946 = vmatprep.subr.bf16.mxu0 0
      %1947 = vmatpush1.bf16.msra.mxu0 0
      %1948 = vmatprep.subr.bf16.mxu0 %v779
      %1949 = vmatpush1.bf16.msra.mxu0 %v776
      %1950 = vmatprep.subr.bf16.mxu0 0
      %1951 = vmatpush2.bf16.msra.mxu0 0
      %1952 = vmatprep.subr.bf16.mxu0 0
      %1953 = vmatpush2.bf16.msra.mxu0 0
      %1954 = vmatprep.subr.bf16.mxu0 0
      %1955 = vmatpush2.bf16.msra.mxu0 0
      %1956 = vmatprep.subr.bf16.mxu0 0
      %1957 = vmatpush2.bf16.msra.mxu0 0
      %1958 = vmatprep.subr.bf16.mxu0 0
      %1959 = vmatpush2.bf16.msra.mxu0 0
      %1960 = vmatprep.subr.bf16.mxu0 0
      %1961 = vmatpush2.bf16.msra.mxu0 0
      %1962 = vmatprep.subr.bf16.mxu0 0
      %1963 = vmatpush2.bf16.msra.mxu0 0
      %1964 = vmatprep.subr.bf16.mxu0 0
      %1965 = vmatpush2.bf16.msra.mxu0 0
      %1966 = vmatprep.mubr.bf16.mxu0 0
      %1967 = vmatmul.mubr.bf16.gmra.mxu0 %v682
      %v1968 = vpop.f32.mrf.mxu0
      %v1969 = vadd.f32 0.0, %v1968
      %v1970 = vpop.f32.mrf.mxu0
      %v1971 = vadd.f32 0.0, %v1970
      %v1972 = vpop.f32.mrf.mxu0
      %v1973 = vadd.f32 0.0, %v1972
      %v1974 = vpop.f32.mrf.mxu0
      %v1975 = vadd.f32 0.0, %v1974
      %1976 = vmatprep.mubr.bf16.mxu0 0
      %1977 = vmatmul.mubr.bf16.gmra.mxu0 %v685
      %v1978 = vpop.f32.mrf.mxu0
      %v1979 = vadd.f32 0.0, %v1978
      %v1980 = vpop.f32.mrf.mxu0
      %v1981 = vadd.f32 0.0, %v1980
      %v1982 = vpop.f32.mrf.mxu0
      %v1983 = vadd.f32 0.0, %v1982
      %v1984 = vpop.f32.mrf.mxu0
      %v1985 = vadd.f32 0.0, %v1984
      %1986 = vmatprep.mubr.bf16.mxu0 0
      %1987 = vmatmul.mubr.bf16.gmra.mxu0 %v688
      %v1988 = vpop.f32.mrf.mxu0
      %v1989 = vadd.f32 0.0, %v1988
      %v1990 = vpop.f32.mrf.mxu0
      %v1991 = vadd.f32 0.0, %v1990
      %v1992 = vpop.f32.mrf.mxu0
      %v1993 = vadd.f32 0.0, %v1992
      %v1994 = vpop.f32.mrf.mxu0
      %v1995 = vadd.f32 0.0, %v1994
      %1996 = vmatprep.mubr.bf16.mxu0 0
      %1997 = vmatmul.mubr.bf16.gmra.mxu0 %v691
      %v1998 = vpop.f32.mrf.mxu0
      %v1999 = vadd.f32 0.0, %v1998
      %v2000 = vpop.f32.mrf.mxu0
      %v2001 = vadd.f32 0.0, %v2000
      %v2002 = vpop.f32.mrf.mxu0
      %v2003 = vadd.f32 0.0, %v2002
      %v2004 = vpop.f32.mrf.mxu0
      %v2005 = vadd.f32 0.0, %v2004
      %2006 = vdwg.mxu0
      %2007 = vmatprep.subr.bf16.mxu0 0
      %2008 = vmatpush1.bf16.msra.mxu0 0
      %2009 = vmatprep.subr.bf16.mxu0 0
      %2010 = vmatpush1.bf16.msra.mxu0 0
      %2011 = vmatprep.subr.bf16.mxu0 0
      %2012 = vmatpush1.bf16.msra.mxu0 0
      %2013 = vmatprep.subr.bf16.mxu0 0
      %2014 = vmatpush1.bf16.msra.mxu0 0
      %2015 = vmatprep.subr.bf16.mxu0 0
      %2016 = vmatpush1.bf16.msra.mxu0 0
      %2017 = vmatprep.subr.bf16.mxu0 0
      %2018 = vmatpush1.bf16.msra.mxu0 0
      %2019 = vmatprep.subr.bf16.mxu0 0
      %2020 = vmatpush1.bf16.msra.mxu0 0
      %2021 = vmatprep.subr.bf16.mxu0 %v785
      %2022 = vmatpush1.bf16.msra.mxu0 %v782
      %2023 = vmatprep.subr.bf16.mxu0 0
      %2024 = vmatpush2.bf16.msra.mxu0 0
      %2025 = vmatprep.subr.bf16.mxu0 0
      %2026 = vmatpush2.bf16.msra.mxu0 0
      %2027 = vmatprep.subr.bf16.mxu0 0
      %2028 = vmatpush2.bf16.msra.mxu0 0
      %2029 = vmatprep.subr.bf16.mxu0 0
      %2030 = vmatpush2.bf16.msra.mxu0 0
      %2031 = vmatprep.subr.bf16.mxu0 0
      %2032 = vmatpush2.bf16.msra.mxu0 0
      %2033 = vmatprep.subr.bf16.mxu0 0
      %2034 = vmatpush2.bf16.msra.mxu0 0
      %2035 = vmatprep.subr.bf16.mxu0 0
      %2036 = vmatpush2.bf16.msra.mxu0 0
      %2037 = vmatprep.subr.bf16.mxu0 0
      %2038 = vmatpush2.bf16.msra.mxu0 0
      %2039 = vmatprep.mubr.bf16.mxu0 0
      %2040 = vmatmul.mubr.bf16.gmra.mxu0 %v682
      %v2041 = vpop.f32.mrf.mxu0
      %v2042 = vadd.f32 0.0, %v2041
      %v2043 = vpop.f32.mrf.mxu0
      %v2044 = vadd.f32 0.0, %v2043
      %v2045 = vpop.f32.mrf.mxu0
      %v2046 = vadd.f32 0.0, %v2045
      %v2047 = vpop.f32.mrf.mxu0
      %v2048 = vadd.f32 0.0, %v2047
      %2049 = vmatprep.mubr.bf16.mxu0 0
      %2050 = vmatmul.mubr.bf16.gmra.mxu0 %v685
      %v2051 = vpop.f32.mrf.mxu0
      %v2052 = vadd.f32 0.0, %v2051
      %v2053 = vpop.f32.mrf.mxu0
      %v2054 = vadd.f32 0.0, %v2053
      %v2055 = vpop.f32.mrf.mxu0
      %v2056 = vadd.f32 0.0, %v2055
      %v2057 = vpop.f32.mrf.mxu0
      %v2058 = vadd.f32 0.0, %v2057
      %2059 = vmatprep.mubr.bf16.mxu0 0
      %2060 = vmatmul.mubr.bf16.gmra.mxu0 %v688
      %v2061 = vpop.f32.mrf.mxu0
      %v2062 = vadd.f32 0.0, %v2061
      %v2063 = vpop.f32.mrf.mxu0
      %v2064 = vadd.f32 0.0, %v2063
      %v2065 = vpop.f32.mrf.mxu0
      %v2066 = vadd.f32 0.0, %v2065
      %v2067 = vpop.f32.mrf.mxu0
      %v2068 = vadd.f32 0.0, %v2067
      %2069 = vmatprep.mubr.bf16.mxu0 0
      %2070 = vmatmul.mubr.bf16.gmra.mxu0 %v691
      %v2071 = vpop.f32.mrf.mxu0
      %v2072 = vadd.f32 0.0, %v2071
      %v2073 = vpop.f32.mrf.mxu0
      %v2074 = vadd.f32 0.0, %v2073
      %v2075 = vpop.f32.mrf.mxu0
      %v2076 = vadd.f32 0.0, %v2075
      %v2077 = vpop.f32.mrf.mxu0
      %v2078 = vadd.f32 0.0, %v2077
      %2079 = vdwg.mxu0
      %2080 = vmatprep.subr.bf16.mxu0 0
      %2081 = vmatpush1.bf16.msra.mxu0 0
      %2082 = vmatprep.subr.bf16.mxu0 0
      %2083 = vmatpush1.bf16.msra.mxu0 0
      %2084 = vmatprep.subr.bf16.mxu0 0
      %2085 = vmatpush1.bf16.msra.mxu0 0
      %2086 = vmatprep.subr.bf16.mxu0 0
      %2087 = vmatpush1.bf16.msra.mxu0 0
      %2088 = vmatprep.subr.bf16.mxu0 0
      %2089 = vmatpush1.bf16.msra.mxu0 0
      %2090 = vmatprep.subr.bf16.mxu0 0
      %2091 = vmatpush1.bf16.msra.mxu0 0
      %2092 = vmatprep.subr.bf16.mxu0 0
      %2093 = vmatpush1.bf16.msra.mxu0 0
      %2094 = vmatprep.subr.bf16.mxu0 %v791
      %2095 = vmatpush1.bf16.msra.mxu0 %v788
      %2096 = vmatprep.subr.bf16.mxu0 0
      %2097 = vmatpush2.bf16.msra.mxu0 0
      %2098 = vmatprep.subr.bf16.mxu0 0
      %2099 = vmatpush2.bf16.msra.mxu0 0
      %2100 = vmatprep.subr.bf16.mxu0 0
      %2101 = vmatpush2.bf16.msra.mxu0 0
      %2102 = vmatprep.subr.bf16.mxu0 0
      %2103 = vmatpush2.bf16.msra.mxu0 0
      %2104 = vmatprep.subr.bf16.mxu0 0
      %2105 = vmatpush2.bf16.msra.mxu0 0
      %2106 = vmatprep.subr.bf16.mxu0 0
      %2107 = vmatpush2.bf16.msra.mxu0 0
      %2108 = vmatprep.subr.bf16.mxu0 0
      %2109 = vmatpush2.bf16.msra.mxu0 0
      %2110 = vmatprep.subr.bf16.mxu0 0
      %2111 = vmatpush2.bf16.msra.mxu0 0
      %2112 = vmatprep.mubr.bf16.mxu0 0
      %2113 = vmatmul.mubr.bf16.gmra.mxu0 %v682
      %v2114 = vpop.f32.mrf.mxu0
      %v2115 = vadd.f32 0.0, %v2114
      %v2116 = vpop.f32.mrf.mxu0
      %v2117 = vadd.f32 0.0, %v2116
      %v2118 = vpop.f32.mrf.mxu0
      %v2119 = vadd.f32 0.0, %v2118
      %v2120 = vpop.f32.mrf.mxu0
      %v2121 = vadd.f32 0.0, %v2120
      %2122 = vmatprep.mubr.bf16.mxu0 0
      %2123 = vmatmul.mubr.bf16.gmra.mxu0 %v685
      %v2124 = vpop.f32.mrf.mxu0
      %v2125 = vadd.f32 0.0, %v2124
      %v2126 = vpop.f32.mrf.mxu0
      %v2127 = vadd.f32 0.0, %v2126
      %v2128 = vpop.f32.mrf.mxu0
      %v2129 = vadd.f32 0.0, %v2128
      %v2130 = vpop.f32.mrf.mxu0
      %v2131 = vadd.f32 0.0, %v2130
      %2132 = vmatprep.mubr.bf16.mxu0 0
      %2133 = vmatmul.mubr.bf16.gmra.mxu0 %v688
      %v2134 = vpop.f32.mrf.mxu0
      %v2135 = vadd.f32 0.0, %v2134
      %v2136 = vpop.f32.mrf.mxu0
      %v2137 = vadd.f32 0.0, %v2136
      %v2138 = vpop.f32.mrf.mxu0
      %v2139 = vadd.f32 0.0, %v2138
      %v2140 = vpop.f32.mrf.mxu0
      %v2141 = vadd.f32 0.0, %v2140
      %2142 = vmatprep.mubr.bf16.mxu0 0
      %2143 = vmatmul.mubr.bf16.gmra.mxu0 %v691
      %v2144 = vpop.f32.mrf.mxu0
      %v2145 = vadd.f32 0.0, %v2144
      %v2146 = vpop.f32.mrf.mxu0
      %v2147 = vadd.f32 0.0, %v2146
      %v2148 = vpop.f32.mrf.mxu0
      %v2149 = vadd.f32 0.0, %v2148
      %v2150 = vpop.f32.mrf.mxu0
      %v2151 = vadd.f32 0.0, %v2150
      %2152 = vdwg.mxu0
      %2153 = vmatprep.subr.bf16.mxu0 0
      %2154 = vmatpush1.bf16.msra.mxu0 0
      %2155 = vmatprep.subr.bf16.mxu0 0
      %2156 = vmatpush1.bf16.msra.mxu0 0
      %2157 = vmatprep.subr.bf16.mxu0 0
      %2158 = vmatpush1.bf16.msra.mxu0 0
      %2159 = vmatprep.subr.bf16.mxu0 0
      %2160 = vmatpush1.bf16.msra.mxu0 0
      %2161 = vmatprep.subr.bf16.mxu0 0
      %2162 = vmatpush1.bf16.msra.mxu0 0
      %2163 = vmatprep.subr.bf16.mxu0 0
      %2164 = vmatpush1.bf16.msra.mxu0 0
      %2165 = vmatprep.subr.bf16.mxu0 0
      %2166 = vmatpush1.bf16.msra.mxu0 0
      %2167 = vmatprep.subr.bf16.mxu0 %v797
      %2168 = vmatpush1.bf16.msra.mxu0 %v794
      %2169 = vmatprep.subr.bf16.mxu0 0
      %2170 = vmatpush2.bf16.msra.mxu0 0
      %2171 = vmatprep.subr.bf16.mxu0 0
      %2172 = vmatpush2.bf16.msra.mxu0 0
      %2173 = vmatprep.subr.bf16.mxu0 0
      %2174 = vmatpush2.bf16.msra.mxu0 0
      %2175 = vmatprep.subr.bf16.mxu0 0
      %2176 = vmatpush2.bf16.msra.mxu0 0
      %2177 = vmatprep.subr.bf16.mxu0 0
      %2178 = vmatpush2.bf16.msra.mxu0 0
      %2179 = vmatprep.subr.bf16.mxu0 0
      %2180 = vmatpush2.bf16.msra.mxu0 0
      %2181 = vmatprep.subr.bf16.mxu0 0
      %2182 = vmatpush2.bf16.msra.mxu0 0
      %2183 = vmatprep.subr.bf16.mxu0 0
      %2184 = vmatpush2.bf16.msra.mxu0 0
      %2185 = vmatprep.mubr.bf16.mxu0 0
      %2186 = vmatmul.mubr.bf16.gmra.mxu0 %v682
      %v2187 = vpop.f32.mrf.mxu0
      %v2188 = vadd.f32 0.0, %v2187
      %v2189 = vpop.f32.mrf.mxu0
      %v2190 = vadd.f32 0.0, %v2189
      %v2191 = vpop.f32.mrf.mxu0
      %v2192 = vadd.f32 0.0, %v2191
      %v2193 = vpop.f32.mrf.mxu0
      %v2194 = vadd.f32 0.0, %v2193
      %2195 = vmatprep.mubr.bf16.mxu0 0
      %2196 = vmatmul.mubr.bf16.gmra.mxu0 %v685
      %v2197 = vpop.f32.mrf.mxu0
      %v2198 = vadd.f32 0.0, %v2197
      %v2199 = vpop.f32.mrf.mxu0
      %v2200 = vadd.f32 0.0, %v2199
      %v2201 = vpop.f32.mrf.mxu0
      %v2202 = vadd.f32 0.0, %v2201
      %v2203 = vpop.f32.mrf.mxu0
      %v2204 = vadd.f32 0.0, %v2203
      %2205 = vmatprep.mubr.bf16.mxu0 0
      %2206 = vmatmul.mubr.bf16.gmra.mxu0 %v688
      %v2207 = vpop.f32.mrf.mxu0
      %v2208 = vadd.f32 0.0, %v2207
      %v2209 = vpop.f32.mrf.mxu0
      %v2210 = vadd.f32 0.0, %v2209
      %v2211 = vpop.f32.mrf.mxu0
      %v2212 = vadd.f32 0.0, %v2211
      %v2213 = vpop.f32.mrf.mxu0
      %v2214 = vadd.f32 0.0, %v2213
      %2215 = vmatprep.mubr.bf16.mxu0 0
      %2216 = vmatmul.mubr.bf16.gmra.mxu0 %v691
      %v2217 = vpop.f32.mrf.mxu0
      %v2218 = vadd.f32 0.0, %v2217
      %v2219 = vpop.f32.mrf.mxu0
      %v2220 = vadd.f32 0.0, %v2219
      %v2221 = vpop.f32.mrf.mxu0
      %v2222 = vadd.f32 0.0, %v2221
      %v2223 = vpop.f32.mrf.mxu0
      %v2224 = vadd.f32 0.0, %v2223
      %2225 = vdwg.mxu0
      %2226 = vmatprep.subr.bf16.mxu0 0
      %2227 = vmatpush1.bf16.msra.mxu0 0
      %2228 = vmatprep.subr.bf16.mxu0 0
      %2229 = vmatpush1.bf16.msra.mxu0 0
      %2230 = vmatprep.subr.bf16.mxu0 0
      %2231 = vmatpush1.bf16.msra.mxu0 0
      %2232 = vmatprep.subr.bf16.mxu0 0
      %2233 = vmatpush1.bf16.msra.mxu0 0
      %2234 = vmatprep.subr.bf16.mxu0 0
      %2235 = vmatpush1.bf16.msra.mxu0 0
      %2236 = vmatprep.subr.bf16.mxu0 0
      %2237 = vmatpush1.bf16.msra.mxu0 0
      %2238 = vmatprep.subr.bf16.mxu0 0
      %2239 = vmatpush1.bf16.msra.mxu0 0
      %2240 = vmatprep.subr.bf16.mxu0 %v803
      %2241 = vmatpush1.bf16.msra.mxu0 %v800
      %2242 = vmatprep.subr.bf16.mxu0 0
      %2243 = vmatpush2.bf16.msra.mxu0 0
      %2244 = vmatprep.subr.bf16.mxu0 0
      %2245 = vmatpush2.bf16.msra.mxu0 0
      %2246 = vmatprep.subr.bf16.mxu0 0
      %2247 = vmatpush2.bf16.msra.mxu0 0
      %2248 = vmatprep.subr.bf16.mxu0 0
      %2249 = vmatpush2.bf16.msra.mxu0 0
      %2250 = vmatprep.subr.bf16.mxu0 0
      %2251 = vmatpush2.bf16.msra.mxu0 0
      %2252 = vmatprep.subr.bf16.mxu0 0
      %2253 = vmatpush2.bf16.msra.mxu0 0
      %2254 = vmatprep.subr.bf16.mxu0 0
      %2255 = vmatpush2.bf16.msra.mxu0 0
      %2256 = vmatprep.subr.bf16.mxu0 0
      %2257 = vmatpush2.bf16.msra.mxu0 0
      %2258 = vmatprep.mubr.bf16.mxu0 0
      %2259 = vmatmul.mubr.bf16.gmra.mxu0 %v682
      %v2260 = vpop.f32.mrf.mxu0
      %v2261 = vadd.f32 0.0, %v2260
      %v2262 = vpop.f32.mrf.mxu0
      %v2263 = vadd.f32 0.0, %v2262
      %v2264 = vpop.f32.mrf.mxu0
      %v2265 = vadd.f32 0.0, %v2264
      %v2266 = vpop.f32.mrf.mxu0
      %v2267 = vadd.f32 0.0, %v2266
      %2268 = vmatprep.mubr.bf16.mxu0 0
      %2269 = vmatmul.mubr.bf16.gmra.mxu0 %v685
      %v2270 = vpop.f32.mrf.mxu0
      %v2271 = vadd.f32 0.0, %v2270
      %v2272 = vpop.f32.mrf.mxu0
      %v2273 = vadd.f32 0.0, %v2272
      %v2274 = vpop.f32.mrf.mxu0
      %v2275 = vadd.f32 0.0, %v2274
      %v2276 = vpop.f32.mrf.mxu0
      %v2277 = vadd.f32 0.0, %v2276
      %2278 = vmatprep.mubr.bf16.mxu0 0
      %2279 = vmatmul.mubr.bf16.gmra.mxu0 %v688
      %v2280 = vpop.f32.mrf.mxu0
      %v2281 = vadd.f32 0.0, %v2280
      %v2282 = vpop.f32.mrf.mxu0
      %v2283 = vadd.f32 0.0, %v2282
      %v2284 = vpop.f32.mrf.mxu0
      %v2285 = vadd.f32 0.0, %v2284
      %v2286 = vpop.f32.mrf.mxu0
      %v2287 = vadd.f32 0.0, %v2286
      %2288 = vmatprep.mubr.bf16.mxu0 0
      %2289 = vmatmul.mubr.bf16.gmra.mxu0 %v691
      %v2290 = vpop.f32.mrf.mxu0
      %v2291 = vadd.f32 0.0, %v2290
      %v2292 = vpop.f32.mrf.mxu0
      %v2293 = vadd.f32 0.0, %v2292
      %v2294 = vpop.f32.mrf.mxu0
      %v2295 = vadd.f32 0.0, %v2294
      %v2296 = vpop.f32.mrf.mxu0
      %v2297 = vadd.f32 0.0, %v2296
      %2298 = vdwg.mxu0
      %2299 = vmatprep.subr.bf16.mxu0 0
      %2300 = vmatpush1.bf16.msra.mxu0 0
      %2301 = vmatprep.subr.bf16.mxu0 0
      %2302 = vmatpush1.bf16.msra.mxu0 0
      %2303 = vmatprep.subr.bf16.mxu0 0
      %2304 = vmatpush1.bf16.msra.mxu0 0
      %2305 = vmatprep.subr.bf16.mxu0 0
      %2306 = vmatpush1.bf16.msra.mxu0 0
      %2307 = vmatprep.subr.bf16.mxu0 0
      %2308 = vmatpush1.bf16.msra.mxu0 0
      %2309 = vmatprep.subr.bf16.mxu0 0
      %2310 = vmatpush1.bf16.msra.mxu0 0
      %2311 = vmatprep.subr.bf16.mxu0 0
      %2312 = vmatpush1.bf16.msra.mxu0 0
      %2313 = vmatprep.subr.bf16.mxu0 %v809
      %2314 = vmatpush1.bf16.msra.mxu0 %v806
      %2315 = vmatprep.subr.bf16.mxu0 0
      %2316 = vmatpush2.bf16.msra.mxu0 0
      %2317 = vmatprep.subr.bf16.mxu0 0
      %2318 = vmatpush2.bf16.msra.mxu0 0
      %2319 = vmatprep.subr.bf16.mxu0 0
      %2320 = vmatpush2.bf16.msra.mxu0 0
      %2321 = vmatprep.subr.bf16.mxu0 0
      %2322 = vmatpush2.bf16.msra.mxu0 0
      %2323 = vmatprep.subr.bf16.mxu0 0
      %2324 = vmatpush2.bf16.msra.mxu0 0
      %2325 = vmatprep.subr.bf16.mxu0 0
      %2326 = vmatpush2.bf16.msra.mxu0 0
      %2327 = vmatprep.subr.bf16.mxu0 0
      %2328 = vmatpush2.bf16.msra.mxu0 0
      %2329 = vmatprep.subr.bf16.mxu0 0
      %2330 = vmatpush2.bf16.msra.mxu0 0
      %2331 = vmatprep.mubr.bf16.mxu0 0
      %2332 = vmatmul.mubr.bf16.gmra.mxu0 %v682
      %v2333 = vpop.f32.mrf.mxu0
      %v2334 = vadd.f32 0.0, %v2333
      %v2335 = vpop.f32.mrf.mxu0
      %v2336 = vadd.f32 0.0, %v2335
      %v2337 = vpop.f32.mrf.mxu0
      %v2338 = vadd.f32 0.0, %v2337
      %v2339 = vpop.f32.mrf.mxu0
      %v2340 = vadd.f32 0.0, %v2339
      %2341 = vmatprep.mubr.bf16.mxu0 0
      %2342 = vmatmul.mubr.bf16.gmra.mxu0 %v685
      %v2343 = vpop.f32.mrf.mxu0
      %v2344 = vadd.f32 0.0, %v2343
      %v2345 = vpop.f32.mrf.mxu0
      %v2346 = vadd.f32 0.0, %v2345
      %v2347 = vpop.f32.mrf.mxu0
      %v2348 = vadd.f32 0.0, %v2347
      %v2349 = vpop.f32.mrf.mxu0
      %v2350 = vadd.f32 0.0, %v2349
      %2351 = vmatprep.mubr.bf16.mxu0 0
      %2352 = vmatmul.mubr.bf16.gmra.mxu0 %v688
      %v2353 = vpop.f32.mrf.mxu0
      %v2354 = vadd.f32 0.0, %v2353
      %v2355 = vpop.f32.mrf.mxu0
      %v2356 = vadd.f32 0.0, %v2355
      %v2357 = vpop.f32.mrf.mxu0
      %v2358 = vadd.f32 0.0, %v2357
      %v2359 = vpop.f32.mrf.mxu0
      %v2360 = vadd.f32 0.0, %v2359
      %2361 = vmatprep.mubr.bf16.mxu0 0
      %2362 = vmatmul.mubr.bf16.gmra.mxu0 %v691
      %v2363 = vpop.f32.mrf.mxu0
      %v2364 = vadd.f32 0.0, %v2363
      %v2365 = vpop.f32.mrf.mxu0
      %v2366 = vadd.f32 0.0, %v2365
      %v2367 = vpop.f32.mrf.mxu0
      %v2368 = vadd.f32 0.0, %v2367
      %v2369 = vpop.f32.mrf.mxu0
      %v2370 = vadd.f32 0.0, %v2369
      %2371 = vdwg.mxu0
      %2372 = vmatprep.subr.bf16.mxu0 0
      %2373 = vmatpush1.bf16.msra.mxu0 0
      %2374 = vmatprep.subr.bf16.mxu0 0
      %2375 = vmatpush1.bf16.msra.mxu0 0
      %2376 = vmatprep.subr.bf16.mxu0 0
      %2377 = vmatpush1.bf16.msra.mxu0 0
      %2378 = vmatprep.subr.bf16.mxu0 0
      %2379 = vmatpush1.bf16.msra.mxu0 0
      %2380 = vmatprep.subr.bf16.mxu0 0
      %2381 = vmatpush1.bf16.msra.mxu0 0
      %2382 = vmatprep.subr.bf16.mxu0 0
      %2383 = vmatpush1.bf16.msra.mxu0 0
      %2384 = vmatprep.subr.bf16.mxu0 0
      %2385 = vmatpush1.bf16.msra.mxu0 0
      %2386 = vmatprep.subr.bf16.mxu0 %v815
      %2387 = vmatpush1.bf16.msra.mxu0 %v812
      %2388 = vmatprep.subr.bf16.mxu0 0
      %2389 = vmatpush2.bf16.msra.mxu0 0
      %2390 = vmatprep.subr.bf16.mxu0 0
      %2391 = vmatpush2.bf16.msra.mxu0 0
      %2392 = vmatprep.subr.bf16.mxu0 0
      %2393 = vmatpush2.bf16.msra.mxu0 0
      %2394 = vmatprep.subr.bf16.mxu0 0
      %2395 = vmatpush2.bf16.msra.mxu0 0
      %2396 = vmatprep.subr.bf16.mxu0 0
      %2397 = vmatpush2.bf16.msra.mxu0 0
      %2398 = vmatprep.subr.bf16.mxu0 0
      %2399 = vmatpush2.bf16.msra.mxu0 0
      %2400 = vmatprep.subr.bf16.mxu0 0
      %2401 = vmatpush2.bf16.msra.mxu0 0
      %2402 = vmatprep.subr.bf16.mxu0 0
      %2403 = vmatpush2.bf16.msra.mxu0 0
      %2404 = vmatprep.mubr.bf16.mxu0 0
      %2405 = vmatmul.mubr.bf16.gmra.mxu0 %v682
      %v2406 = vpop.f32.mrf.mxu0
      %v2407 = vadd.f32 0.0, %v2406
      %v2408 = vpop.f32.mrf.mxu0
      %v2409 = vadd.f32 0.0, %v2408
      %v2410 = vpop.f32.mrf.mxu0
      %v2411 = vadd.f32 0.0, %v2410
      %v2412 = vpop.f32.mrf.mxu0
      %v2413 = vadd.f32 0.0, %v2412
      %2414 = vmatprep.mubr.bf16.mxu0 0
      %2415 = vmatmul.mubr.bf16.gmra.mxu0 %v685
      %v2416 = vpop.f32.mrf.mxu0
      %v2417 = vadd.f32 0.0, %v2416
      %v2418 = vpop.f32.mrf.mxu0
      %v2419 = vadd.f32 0.0, %v2418
      %v2420 = vpop.f32.mrf.mxu0
      %v2421 = vadd.f32 0.0, %v2420
      %v2422 = vpop.f32.mrf.mxu0
      %v2423 = vadd.f32 0.0, %v2422
      %2424 = vmatprep.mubr.bf16.mxu0 0
      %2425 = vmatmul.mubr.bf16.gmra.mxu0 %v688
      %v2426 = vpop.f32.mrf.mxu0
      %v2427 = vadd.f32 0.0, %v2426
      %v2428 = vpop.f32.mrf.mxu0
      %v2429 = vadd.f32 0.0, %v2428
      %v2430 = vpop.f32.mrf.mxu0
      %v2431 = vadd.f32 0.0, %v2430
      %v2432 = vpop.f32.mrf.mxu0
      %v2433 = vadd.f32 0.0, %v2432
      %2434 = vmatprep.mubr.bf16.mxu0 0
      %2435 = vmatmul.mubr.bf16.gmra.mxu0 %v691
      %v2436 = vpop.f32.mrf.mxu0
      %v2437 = vadd.f32 0.0, %v2436
      %v2438 = vpop.f32.mrf.mxu0
      %v2439 = vadd.f32 0.0, %v2438
      %v2440 = vpop.f32.mrf.mxu0
      %v2441 = vadd.f32 0.0, %v2440
      %v2442 = vpop.f32.mrf.mxu0
      %v2443 = vadd.f32 0.0, %v2442
      %2444 = vdwg.mxu0
      %2445 = vmatprep.subr.bf16.mxu0 0
      %2446 = vmatpush1.bf16.msra.mxu0 0
      %2447 = vmatprep.subr.bf16.mxu0 0
      %2448 = vmatpush1.bf16.msra.mxu0 0
      %2449 = vmatprep.subr.bf16.mxu0 0
      %2450 = vmatpush1.bf16.msra.mxu0 0
      %2451 = vmatprep.subr.bf16.mxu0 0
      %2452 = vmatpush1.bf16.msra.mxu0 0
      %2453 = vmatprep.subr.bf16.mxu0 0
      %2454 = vmatpush1.bf16.msra.mxu0 0
      %2455 = vmatprep.subr.bf16.mxu0 0
      %2456 = vmatpush1.bf16.msra.mxu0 0
      %2457 = vmatprep.subr.bf16.mxu0 0
      %2458 = vmatpush1.bf16.msra.mxu0 0
      %2459 = vmatprep.subr.bf16.mxu0 %v821
      %2460 = vmatpush1.bf16.msra.mxu0 %v818
      %2461 = vmatprep.subr.bf16.mxu0 0
      %2462 = vmatpush2.bf16.msra.mxu0 0
      %2463 = vmatprep.subr.bf16.mxu0 0
      %2464 = vmatpush2.bf16.msra.mxu0 0
      %2465 = vmatprep.subr.bf16.mxu0 0
      %2466 = vmatpush2.bf16.msra.mxu0 0
      %2467 = vmatprep.subr.bf16.mxu0 0
      %2468 = vmatpush2.bf16.msra.mxu0 0
      %2469 = vmatprep.subr.bf16.mxu0 0
      %2470 = vmatpush2.bf16.msra.mxu0 0
      %2471 = vmatprep.subr.bf16.mxu0 0
      %2472 = vmatpush2.bf16.msra.mxu0 0
      %2473 = vmatprep.subr.bf16.mxu0 0
      %2474 = vmatpush2.bf16.msra.mxu0 0
      %2475 = vmatprep.subr.bf16.mxu0 0
      %2476 = vmatpush2.bf16.msra.mxu0 0
      %2477 = vmatprep.mubr.bf16.mxu0 0
      %2478 = vmatmul.mubr.bf16.gmra.mxu0 %v682
      %v2479 = vpop.f32.mrf.mxu0
      %v2480 = vadd.f32 0.0, %v2479
      %v2481 = vpop.f32.mrf.mxu0
      %v2482 = vadd.f32 0.0, %v2481
      %v2483 = vpop.f32.mrf.mxu0
      %v2484 = vadd.f32 0.0, %v2483
      %v2485 = vpop.f32.mrf.mxu0
      %v2486 = vadd.f32 0.0, %v2485
      %2487 = vmatprep.mubr.bf16.mxu0 0
      %2488 = vmatmul.mubr.bf16.gmra.mxu0 %v685
      %v2489 = vpop.f32.mrf.mxu0
      %v2490 = vadd.f32 0.0, %v2489
      %v2491 = vpop.f32.mrf.mxu0
      %v2492 = vadd.f32 0.0, %v2491
      %v2493 = vpop.f32.mrf.mxu0
      %v2494 = vadd.f32 0.0, %v2493
      %v2495 = vpop.f32.mrf.mxu0
      %v2496 = vadd.f32 0.0, %v2495
      %2497 = vmatprep.mubr.bf16.mxu0 0
      %2498 = vmatmul.mubr.bf16.gmra.mxu0 %v688
      %v2499 = vpop.f32.mrf.mxu0
      %v2500 = vadd.f32 0.0, %v2499
      %v2501 = vpop.f32.mrf.mxu0
      %v2502 = vadd.f32 0.0, %v2501
      %v2503 = vpop.f32.mrf.mxu0
      %v2504 = vadd.f32 0.0, %v2503
      %v2505 = vpop.f32.mrf.mxu0
      %v2506 = vadd.f32 0.0, %v2505
      %2507 = vmatprep.mubr.bf16.mxu0 0
      %2508 = vmatmul.mubr.bf16.gmra.mxu0 %v691
      %v2509 = vpop.f32.mrf.mxu0
      %v2510 = vadd.f32 0.0, %v2509
      %v2511 = vpop.f32.mrf.mxu0
      %v2512 = vadd.f32 0.0, %v2511
      %v2513 = vpop.f32.mrf.mxu0
      %v2514 = vadd.f32 0.0, %v2513
      %v2515 = vpop.f32.mrf.mxu0
      %v2516 = vadd.f32 0.0, %v2515
      %2517 = vdwg.mxu0
      %2518 = vmatprep.subr.bf16.mxu0 0
      %2519 = vmatpush1.bf16.msra.mxu0 0
      %2520 = vmatprep.subr.bf16.mxu0 0
      %2521 = vmatpush1.bf16.msra.mxu0 0
      %2522 = vmatprep.subr.bf16.mxu0 0
      %2523 = vmatpush1.bf16.msra.mxu0 0
      %2524 = vmatprep.subr.bf16.mxu0 0
      %2525 = vmatpush1.bf16.msra.mxu0 0
      %2526 = vmatprep.subr.bf16.mxu0 0
      %2527 = vmatpush1.bf16.msra.mxu0 0
      %2528 = vmatprep.subr.bf16.mxu0 0
      %2529 = vmatpush1.bf16.msra.mxu0 0
      %2530 = vmatprep.subr.bf16.mxu0 0
      %2531 = vmatpush1.bf16.msra.mxu0 0
      %2532 = vmatprep.subr.bf16.mxu0 %v827
      %2533 = vmatpush1.bf16.msra.mxu0 %v824
      %2534 = vmatprep.subr.bf16.mxu0 0
      %2535 = vmatpush2.bf16.msra.mxu0 0
      %2536 = vmatprep.subr.bf16.mxu0 0
      %2537 = vmatpush2.bf16.msra.mxu0 0
      %2538 = vmatprep.subr.bf16.mxu0 0
      %2539 = vmatpush2.bf16.msra.mxu0 0
      %2540 = vmatprep.subr.bf16.mxu0 0
      %2541 = vmatpush2.bf16.msra.mxu0 0
      %2542 = vmatprep.subr.bf16.mxu0 0
      %2543 = vmatpush2.bf16.msra.mxu0 0
      %2544 = vmatprep.subr.bf16.mxu0 0
      %2545 = vmatpush2.bf16.msra.mxu0 0
      %2546 = vmatprep.subr.bf16.mxu0 0
      %2547 = vmatpush2.bf16.msra.mxu0 0
      %2548 = vmatprep.subr.bf16.mxu0 0
      %2549 = vmatpush2.bf16.msra.mxu0 0
      %2550 = vmatprep.mubr.bf16.mxu0 0
      %2551 = vmatmul.mubr.bf16.gmra.mxu0 %v682
      %v2552 = vpop.f32.mrf.mxu0
      %v2553 = vadd.f32 0.0, %v2552
      %v2554 = vpop.f32.mrf.mxu0
      %v2555 = vadd.f32 0.0, %v2554
      %v2556 = vpop.f32.mrf.mxu0
      %v2557 = vadd.f32 0.0, %v2556
      %v2558 = vpop.f32.mrf.mxu0
      %v2559 = vadd.f32 0.0, %v2558
      %2560 = vmatprep.mubr.bf16.mxu0 0
      %2561 = vmatmul.mubr.bf16.gmra.mxu0 %v685
      %v2562 = vpop.f32.mrf.mxu0
      %v2563 = vadd.f32 0.0, %v2562
      %v2564 = vpop.f32.mrf.mxu0
      %v2565 = vadd.f32 0.0, %v2564
      %v2566 = vpop.f32.mrf.mxu0
      %v2567 = vadd.f32 0.0, %v2566
      %v2568 = vpop.f32.mrf.mxu0
      %v2569 = vadd.f32 0.0, %v2568
      %2570 = vmatprep.mubr.bf16.mxu0 0
      %2571 = vmatmul.mubr.bf16.gmra.mxu0 %v688
      %v2572 = vpop.f32.mrf.mxu0
      %v2573 = vadd.f32 0.0, %v2572
      %v2574 = vpop.f32.mrf.mxu0
      %v2575 = vadd.f32 0.0, %v2574
      %v2576 = vpop.f32.mrf.mxu0
      %v2577 = vadd.f32 0.0, %v2576
      %v2578 = vpop.f32.mrf.mxu0
      %v2579 = vadd.f32 0.0, %v2578
      %2580 = vmatprep.mubr.bf16.mxu0 0
      %2581 = vmatmul.mubr.bf16.gmra.mxu0 %v691
      %v2582 = vpop.f32.mrf.mxu0
      %v2583 = vadd.f32 0.0, %v2582
      %v2584 = vpop.f32.mrf.mxu0
      %v2585 = vadd.f32 0.0, %v2584
      %v2586 = vpop.f32.mrf.mxu0
      %v2587 = vadd.f32 0.0, %v2586
      %v2588 = vpop.f32.mrf.mxu0
      %v2589 = vadd.f32 0.0, %v2588
      %2590 = vdwg.mxu0
      %2591 = vmatprep.subr.bf16.mxu0 0
      %2592 = vmatpush1.bf16.msra.mxu0 0
      %2593 = vmatprep.subr.bf16.mxu0 0
      %2594 = vmatpush1.bf16.msra.mxu0 0
      %2595 = vmatprep.subr.bf16.mxu0 0
      %2596 = vmatpush1.bf16.msra.mxu0 0
      %2597 = vmatprep.subr.bf16.mxu0 0
      %2598 = vmatpush1.bf16.msra.mxu0 0
      %2599 = vmatprep.subr.bf16.mxu0 0
      %2600 = vmatpush1.bf16.msra.mxu0 0
      %2601 = vmatprep.subr.bf16.mxu0 0
      %2602 = vmatpush1.bf16.msra.mxu0 0
      %2603 = vmatprep.subr.bf16.mxu0 0
      %2604 = vmatpush1.bf16.msra.mxu0 0
      %2605 = vmatprep.subr.bf16.mxu0 %v833
      %2606 = vmatpush1.bf16.msra.mxu0 %v830
      %2607 = vmatprep.subr.bf16.mxu0 0
      %2608 = vmatpush2.bf16.msra.mxu0 0
      %2609 = vmatprep.subr.bf16.mxu0 0
      %2610 = vmatpush2.bf16.msra.mxu0 0
      %2611 = vmatprep.subr.bf16.mxu0 0
      %2612 = vmatpush2.bf16.msra.mxu0 0
      %2613 = vmatprep.subr.bf16.mxu0 0
      %2614 = vmatpush2.bf16.msra.mxu0 0
      %2615 = vmatprep.subr.bf16.mxu0 0
      %2616 = vmatpush2.bf16.msra.mxu0 0
      %2617 = vmatprep.subr.bf16.mxu0 0
      %2618 = vmatpush2.bf16.msra.mxu0 0
      %2619 = vmatprep.subr.bf16.mxu0 0
      %2620 = vmatpush2.bf16.msra.mxu0 0
      %2621 = vmatprep.subr.bf16.mxu0 0
      %2622 = vmatpush2.bf16.msra.mxu0 0
      %2623 = vmatprep.mubr.bf16.mxu0 0
      %2624 = vmatmul.mubr.bf16.gmra.mxu0 %v682
      %v2625 = vpop.f32.mrf.mxu0
      %v2626 = vadd.f32 0.0, %v2625
      %v2627 = vpop.f32.mrf.mxu0
      %v2628 = vadd.f32 0.0, %v2627
      %v2629 = vpop.f32.mrf.mxu0
      %v2630 = vadd.f32 0.0, %v2629
      %v2631 = vpop.f32.mrf.mxu0
      %v2632 = vadd.f32 0.0, %v2631
      %2633 = vmatprep.mubr.bf16.mxu0 0
      %2634 = vmatmul.mubr.bf16.gmra.mxu0 %v685
      %v2635 = vpop.f32.mrf.mxu0
      %v2636 = vadd.f32 0.0, %v2635
      %v2637 = vpop.f32.mrf.mxu0
      %v2638 = vadd.f32 0.0, %v2637
      %v2639 = vpop.f32.mrf.mxu0
      %v2640 = vadd.f32 0.0, %v2639
      %v2641 = vpop.f32.mrf.mxu0
      %v2642 = vadd.f32 0.0, %v2641
      %2643 = vmatprep.mubr.bf16.mxu0 0
      %2644 = vmatmul.mubr.bf16.gmra.mxu0 %v688
      %v2645 = vpop.f32.mrf.mxu0
      %v2646 = vadd.f32 0.0, %v2645
      %v2647 = vpop.f32.mrf.mxu0
      %v2648 = vadd.f32 0.0, %v2647
      %v2649 = vpop.f32.mrf.mxu0
      %v2650 = vadd.f32 0.0, %v2649
      %v2651 = vpop.f32.mrf.mxu0
      %v2652 = vadd.f32 0.0, %v2651
      %2653 = vmatprep.mubr.bf16.mxu0 0
      %2654 = vmatmul.mubr.bf16.gmra.mxu0 %v691
      %v2655 = vpop.f32.mrf.mxu0
      %v2656 = vadd.f32 0.0, %v2655
      %v2657 = vpop.f32.mrf.mxu0
      %v2658 = vadd.f32 0.0, %v2657
      %v2659 = vpop.f32.mrf.mxu0
      %v2660 = vadd.f32 0.0, %v2659
      %v2661 = vpop.f32.mrf.mxu0
      %v2662 = vadd.f32 0.0, %v2661
      %2663 = vdwg.mxu0
      %2664 = vmatprep.subr.bf16.mxu0 0
      %2665 = vmatpush1.bf16.msra.mxu0 0
      %2666 = vmatprep.subr.bf16.mxu0 0
      %2667 = vmatpush1.bf16.msra.mxu0 0
      %2668 = vmatprep.subr.bf16.mxu0 0
      %2669 = vmatpush1.bf16.msra.mxu0 0
      %2670 = vmatprep.subr.bf16.mxu0 0
      %2671 = vmatpush1.bf16.msra.mxu0 0
      %2672 = vmatprep.subr.bf16.mxu0 0
      %2673 = vmatpush1.bf16.msra.mxu0 0
      %2674 = vmatprep.subr.bf16.mxu0 0
      %2675 = vmatpush1.bf16.msra.mxu0 0
      %2676 = vmatprep.subr.bf16.mxu0 0
      %2677 = vmatpush1.bf16.msra.mxu0 0
      %2678 = vmatprep.subr.bf16.mxu0 %v839
      %2679 = vmatpush1.bf16.msra.mxu0 %v836
      %2680 = vmatprep.subr.bf16.mxu0 0
      %2681 = vmatpush2.bf16.msra.mxu0 0
      %2682 = vmatprep.subr.bf16.mxu0 0
      %2683 = vmatpush2.bf16.msra.mxu0 0
      %2684 = vmatprep.subr.bf16.mxu0 0
      %2685 = vmatpush2.bf16.msra.mxu0 0
      %2686 = vmatprep.subr.bf16.mxu0 0
      %2687 = vmatpush2.bf16.msra.mxu0 0
      %2688 = vmatprep.subr.bf16.mxu0 0
      %2689 = vmatpush2.bf16.msra.mxu0 0
      %2690 = vmatprep.subr.bf16.mxu0 0
      %2691 = vmatpush2.bf16.msra.mxu0 0
      %2692 = vmatprep.subr.bf16.mxu0 0
      %2693 = vmatpush2.bf16.msra.mxu0 0
      %2694 = vmatprep.subr.bf16.mxu0 0
      %2695 = vmatpush2.bf16.msra.mxu0 0
      %2696 = vmatprep.mubr.bf16.mxu0 0
      %2697 = vmatmul.mubr.bf16.gmra.mxu0 %v682
      %v2698 = vpop.f32.mrf.mxu0
      %v2699 = vadd.f32 0.0, %v2698
      %v2700 = vpop.f32.mrf.mxu0
      %v2701 = vadd.f32 0.0, %v2700
      %v2702 = vpop.f32.mrf.mxu0
      %v2703 = vadd.f32 0.0, %v2702
      %v2704 = vpop.f32.mrf.mxu0
      %v2705 = vadd.f32 0.0, %v2704
      %2706 = vmatprep.mubr.bf16.mxu0 0
      %2707 = vmatmul.mubr.bf16.gmra.mxu0 %v685
      %v2708 = vpop.f32.mrf.mxu0
      %v2709 = vadd.f32 0.0, %v2708
      %v2710 = vpop.f32.mrf.mxu0
      %v2711 = vadd.f32 0.0, %v2710
      %v2712 = vpop.f32.mrf.mxu0
      %v2713 = vadd.f32 0.0, %v2712
      %v2714 = vpop.f32.mrf.mxu0
      %v2715 = vadd.f32 0.0, %v2714
      %2716 = vmatprep.mubr.bf16.mxu0 0
      %2717 = vmatmul.mubr.bf16.gmra.mxu0 %v688
      %v2718 = vpop.f32.mrf.mxu0
      %v2719 = vadd.f32 0.0, %v2718
      %v2720 = vpop.f32.mrf.mxu0
      %v2721 = vadd.f32 0.0, %v2720
      %v2722 = vpop.f32.mrf.mxu0
      %v2723 = vadd.f32 0.0, %v2722
      %v2724 = vpop.f32.mrf.mxu0
      %v2725 = vadd.f32 0.0, %v2724
      %2726 = vmatprep.mubr.bf16.mxu0 0
      %2727 = vmatmul.mubr.bf16.gmra.mxu0 %v691
      %v2728 = vpop.f32.mrf.mxu0
      %v2729 = vadd.f32 0.0, %v2728
      %v2730 = vpop.f32.mrf.mxu0
      %v2731 = vadd.f32 0.0, %v2730
      %v2732 = vpop.f32.mrf.mxu0
      %v2733 = vadd.f32 0.0, %v2732
      %v2734 = vpop.f32.mrf.mxu0
      %v2735 = vadd.f32 0.0, %v2734
      %2736 = vdwg.mxu0
      %2737 = vmatprep.subr.bf16.mxu0 0
      %2738 = vmatpush1.bf16.msra.mxu0 0
      %2739 = vmatprep.subr.bf16.mxu0 0
      %2740 = vmatpush1.bf16.msra.mxu0 0
      %2741 = vmatprep.subr.bf16.mxu0 0
      %2742 = vmatpush1.bf16.msra.mxu0 0
      %2743 = vmatprep.subr.bf16.mxu0 0
      %2744 = vmatpush1.bf16.msra.mxu0 0
      %2745 = vmatprep.subr.bf16.mxu0 0
      %2746 = vmatpush1.bf16.msra.mxu0 0
      %2747 = vmatprep.subr.bf16.mxu0 0
      %2748 = vmatpush1.bf16.msra.mxu0 0
      %2749 = vmatprep.subr.bf16.mxu0 0
      %2750 = vmatpush1.bf16.msra.mxu0 0
      %2751 = vmatprep.subr.bf16.mxu0 %v845
      %2752 = vmatpush1.bf16.msra.mxu0 %v842
      %2753 = vmatprep.subr.bf16.mxu0 0
      %2754 = vmatpush2.bf16.msra.mxu0 0
      %2755 = vmatprep.subr.bf16.mxu0 0
      %2756 = vmatpush2.bf16.msra.mxu0 0
      %2757 = vmatprep.subr.bf16.mxu0 0
      %2758 = vmatpush2.bf16.msra.mxu0 0
      %2759 = vmatprep.subr.bf16.mxu0 0
      %2760 = vmatpush2.bf16.msra.mxu0 0
      %2761 = vmatprep.subr.bf16.mxu0 0
      %2762 = vmatpush2.bf16.msra.mxu0 0
      %2763 = vmatprep.subr.bf16.mxu0 0
      %2764 = vmatpush2.bf16.msra.mxu0 0
      %2765 = vmatprep.subr.bf16.mxu0 0
      %2766 = vmatpush2.bf16.msra.mxu0 0
      %2767 = vmatprep.subr.bf16.mxu0 0
      %2768 = vmatpush2.bf16.msra.mxu0 0
      %2769 = vmatprep.mubr.bf16.mxu0 0
      %2770 = vmatmul.mubr.bf16.gmra.mxu0 %v682
      %v2771 = vpop.f32.mrf.mxu0
      %v2772 = vadd.f32 0.0, %v2771
      %v2773 = vpop.f32.mrf.mxu0
      %v2774 = vadd.f32 0.0, %v2773
      %v2775 = vpop.f32.mrf.mxu0
      %v2776 = vadd.f32 0.0, %v2775
      %v2777 = vpop.f32.mrf.mxu0
      %v2778 = vadd.f32 0.0, %v2777
      %2779 = vmatprep.mubr.bf16.mxu0 0
      %2780 = vmatmul.mubr.bf16.gmra.mxu0 %v685
      %v2781 = vpop.f32.mrf.mxu0
      %v2782 = vadd.f32 0.0, %v2781
      %v2783 = vpop.f32.mrf.mxu0
      %v2784 = vadd.f32 0.0, %v2783
      %v2785 = vpop.f32.mrf.mxu0
      %v2786 = vadd.f32 0.0, %v2785
      %v2787 = vpop.f32.mrf.mxu0
      %v2788 = vadd.f32 0.0, %v2787
      %2789 = vmatprep.mubr.bf16.mxu0 0
      %2790 = vmatmul.mubr.bf16.gmra.mxu0 %v688
      %v2791 = vpop.f32.mrf.mxu0
      %v2792 = vadd.f32 0.0, %v2791
      %v2793 = vpop.f32.mrf.mxu0
      %v2794 = vadd.f32 0.0, %v2793
      %v2795 = vpop.f32.mrf.mxu0
      %v2796 = vadd.f32 0.0, %v2795
      %v2797 = vpop.f32.mrf.mxu0
      %v2798 = vadd.f32 0.0, %v2797
      %2799 = vmatprep.mubr.bf16.mxu0 0
      %2800 = vmatmul.mubr.bf16.gmra.mxu0 %v691
      %v2801 = vpop.f32.mrf.mxu0
      %v2802 = vadd.f32 0.0, %v2801
      %v2803 = vpop.f32.mrf.mxu0
      %v2804 = vadd.f32 0.0, %v2803
      %v2805 = vpop.f32.mrf.mxu0
      %v2806 = vadd.f32 0.0, %v2805
      %v2807 = vpop.f32.mrf.mxu0
      %v2808 = vadd.f32 0.0, %v2807
      %2809 = vdwg.mxu0
      %2810 = vmatprep.subr.bf16.mxu0 0
      %2811 = vmatpush1.bf16.msra.mxu0 0
      %2812 = vmatprep.subr.bf16.mxu0 0
      %2813 = vmatpush1.bf16.msra.mxu0 0
      %2814 = vmatprep.subr.bf16.mxu0 0
      %2815 = vmatpush1.bf16.msra.mxu0 0
      %2816 = vmatprep.subr.bf16.mxu0 0
      %2817 = vmatpush1.bf16.msra.mxu0 0
      %2818 = vmatprep.subr.bf16.mxu0 0
      %2819 = vmatpush1.bf16.msra.mxu0 0
      %2820 = vmatprep.subr.bf16.mxu0 0
      %2821 = vmatpush1.bf16.msra.mxu0 0
      %2822 = vmatprep.subr.bf16.mxu0 0
      %2823 = vmatpush1.bf16.msra.mxu0 0
      %2824 = vmatprep.subr.bf16.mxu0 %v851
      %2825 = vmatpush1.bf16.msra.mxu0 %v848
      %2826 = vmatprep.subr.bf16.mxu0 0
      %2827 = vmatpush2.bf16.msra.mxu0 0
      %2828 = vmatprep.subr.bf16.mxu0 0
      %2829 = vmatpush2.bf16.msra.mxu0 0
      %2830 = vmatprep.subr.bf16.mxu0 0
      %2831 = vmatpush2.bf16.msra.mxu0 0
      %2832 = vmatprep.subr.bf16.mxu0 0
      %2833 = vmatpush2.bf16.msra.mxu0 0
      %2834 = vmatprep.subr.bf16.mxu0 0
      %2835 = vmatpush2.bf16.msra.mxu0 0
      %2836 = vmatprep.subr.bf16.mxu0 0
      %2837 = vmatpush2.bf16.msra.mxu0 0
      %2838 = vmatprep.subr.bf16.mxu0 0
      %2839 = vmatpush2.bf16.msra.mxu0 0
      %2840 = vmatprep.subr.bf16.mxu0 0
      %2841 = vmatpush2.bf16.msra.mxu0 0
      %2842 = vmatprep.mubr.bf16.mxu0 0
      %2843 = vmatmul.mubr.bf16.gmra.mxu0 %v682
      %v2844 = vpop.f32.mrf.mxu0
      %v2845 = vadd.f32 0.0, %v2844
      %v2846 = vpop.f32.mrf.mxu0
      %v2847 = vadd.f32 0.0, %v2846
      %v2848 = vpop.f32.mrf.mxu0
      %v2849 = vadd.f32 0.0, %v2848
      %v2850 = vpop.f32.mrf.mxu0
      %v2851 = vadd.f32 0.0, %v2850
      %2852 = vmatprep.mubr.bf16.mxu0 0
      %2853 = vmatmul.mubr.bf16.gmra.mxu0 %v685
      %v2854 = vpop.f32.mrf.mxu0
      %v2855 = vadd.f32 0.0, %v2854
      %v2856 = vpop.f32.mrf.mxu0
      %v2857 = vadd.f32 0.0, %v2856
      %v2858 = vpop.f32.mrf.mxu0
      %v2859 = vadd.f32 0.0, %v2858
      %v2860 = vpop.f32.mrf.mxu0
      %v2861 = vadd.f32 0.0, %v2860
      %2862 = vmatprep.mubr.bf16.mxu0 0
      %2863 = vmatmul.mubr.bf16.gmra.mxu0 %v688
      %v2864 = vpop.f32.mrf.mxu0
      %v2865 = vadd.f32 0.0, %v2864
      %v2866 = vpop.f32.mrf.mxu0
      %v2867 = vadd.f32 0.0, %v2866
      %v2868 = vpop.f32.mrf.mxu0
      %v2869 = vadd.f32 0.0, %v2868
      %v2870 = vpop.f32.mrf.mxu0
      %v2871 = vadd.f32 0.0, %v2870
      %2872 = vmatprep.mubr.bf16.mxu0 0
      %2873 = vmatmul.mubr.bf16.gmra.mxu0 %v691
      %v2874 = vpop.f32.mrf.mxu0
      %v2875 = vadd.f32 0.0, %v2874
      %v2876 = vpop.f32.mrf.mxu0
      %v2877 = vadd.f32 0.0, %v2876
      %v2878 = vpop.f32.mrf.mxu0
      %v2879 = vadd.f32 0.0, %v2878
      %v2880 = vpop.f32.mrf.mxu0
      %v2881 = vadd.f32 0.0, %v2880
      %2882 = vdwg.mxu0
      %2883 = vmatprep.subr.bf16.mxu0 0
      %2884 = vmatpush1.bf16.msra.mxu0 0
      %2885 = vmatprep.subr.bf16.mxu0 0
      %2886 = vmatpush1.bf16.msra.mxu0 0
      %2887 = vmatprep.subr.bf16.mxu0 0
      %2888 = vmatpush1.bf16.msra.mxu0 0
      %2889 = vmatprep.subr.bf16.mxu0 0
      %2890 = vmatpush1.bf16.msra.mxu0 0
      %2891 = vmatprep.subr.bf16.mxu0 0
      %2892 = vmatpush1.bf16.msra.mxu0 0
      %2893 = vmatprep.subr.bf16.mxu0 0
      %2894 = vmatpush1.bf16.msra.mxu0 0
      %2895 = vmatprep.subr.bf16.mxu0 0
      %2896 = vmatpush1.bf16.msra.mxu0 0
      %2897 = vmatprep.subr.bf16.mxu0 %v857
      %2898 = vmatpush1.bf16.msra.mxu0 %v854
      %2899 = vmatprep.subr.bf16.mxu0 0
      %2900 = vmatpush2.bf16.msra.mxu0 0
      %2901 = vmatprep.subr.bf16.mxu0 0
      %2902 = vmatpush2.bf16.msra.mxu0 0
      %2903 = vmatprep.subr.bf16.mxu0 0
      %2904 = vmatpush2.bf16.msra.mxu0 0
      %2905 = vmatprep.subr.bf16.mxu0 0
      %2906 = vmatpush2.bf16.msra.mxu0 0
      %2907 = vmatprep.subr.bf16.mxu0 0
      %2908 = vmatpush2.bf16.msra.mxu0 0
      %2909 = vmatprep.subr.bf16.mxu0 0
      %2910 = vmatpush2.bf16.msra.mxu0 0
      %2911 = vmatprep.subr.bf16.mxu0 0
      %2912 = vmatpush2.bf16.msra.mxu0 0
      %2913 = vmatprep.subr.bf16.mxu0 0
      %2914 = vmatpush2.bf16.msra.mxu0 0
      %2915 = vmatprep.mubr.bf16.mxu0 0
      %2916 = vmatmul.mubr.bf16.gmra.mxu0 %v682
      %v2917 = vpop.f32.mrf.mxu0
      %v2918 = vadd.f32 0.0, %v2917
      %v2919 = vpop.f32.mrf.mxu0
      %v2920 = vadd.f32 0.0, %v2919
      %v2921 = vpop.f32.mrf.mxu0
      %v2922 = vadd.f32 0.0, %v2921
      %v2923 = vpop.f32.mrf.mxu0
      %v2924 = vadd.f32 0.0, %v2923
      %2925 = vmatprep.mubr.bf16.mxu0 0
      %2926 = vmatmul.mubr.bf16.gmra.mxu0 %v685
      %v2927 = vpop.f32.mrf.mxu0
      %v2928 = vadd.f32 0.0, %v2927
      %v2929 = vpop.f32.mrf.mxu0
      %v2930 = vadd.f32 0.0, %v2929
      %v2931 = vpop.f32.mrf.mxu0
      %v2932 = vadd.f32 0.0, %v2931
      %v2933 = vpop.f32.mrf.mxu0
      %v2934 = vadd.f32 0.0, %v2933
      %2935 = vmatprep.mubr.bf16.mxu0 0
      %2936 = vmatmul.mubr.bf16.gmra.mxu0 %v688
      %v2937 = vpop.f32.mrf.mxu0
      %v2938 = vadd.f32 0.0, %v2937
      %v2939 = vpop.f32.mrf.mxu0
      %v2940 = vadd.f32 0.0, %v2939
      %v2941 = vpop.f32.mrf.mxu0
      %v2942 = vadd.f32 0.0, %v2941
      %v2943 = vpop.f32.mrf.mxu0
      %v2944 = vadd.f32 0.0, %v2943
      %2945 = vmatprep.mubr.bf16.mxu0 0
      %2946 = vmatmul.mubr.bf16.gmra.mxu0 %v691
      %v2947 = vpop.f32.mrf.mxu0
      %v2948 = vadd.f32 0.0, %v2947
      %v2949 = vpop.f32.mrf.mxu0
      %v2950 = vadd.f32 0.0, %v2949
      %v2951 = vpop.f32.mrf.mxu0
      %v2952 = vadd.f32 0.0, %v2951
      %v2953 = vpop.f32.mrf.mxu0
      %v2954 = vadd.f32 0.0, %v2953
      %2955 = vdwg.mxu0
      %2956 = vmatprep.subr.bf16.mxu0 0
      %2957 = vmatpush1.bf16.msra.mxu0 0
      %2958 = vmatprep.subr.bf16.mxu0 0
      %2959 = vmatpush1.bf16.msra.mxu0 0
      %2960 = vmatprep.subr.bf16.mxu0 0
      %2961 = vmatpush1.bf16.msra.mxu0 0
      %2962 = vmatprep.subr.bf16.mxu0 0
      %2963 = vmatpush1.bf16.msra.mxu0 0
      %2964 = vmatprep.subr.bf16.mxu0 0
      %2965 = vmatpush1.bf16.msra.mxu0 0
      %2966 = vmatprep.subr.bf16.mxu0 0
      %2967 = vmatpush1.bf16.msra.mxu0 0
      %2968 = vmatprep.subr.bf16.mxu0 0
      %2969 = vmatpush1.bf16.msra.mxu0 0
      %2970 = vmatprep.subr.bf16.mxu0 %v863
      %2971 = vmatpush1.bf16.msra.mxu0 %v860
      %2972 = vmatprep.subr.bf16.mxu0 0
      %2973 = vmatpush2.bf16.msra.mxu0 0
      %2974 = vmatprep.subr.bf16.mxu0 0
      %2975 = vmatpush2.bf16.msra.mxu0 0
      %2976 = vmatprep.subr.bf16.mxu0 0
      %2977 = vmatpush2.bf16.msra.mxu0 0
      %2978 = vmatprep.subr.bf16.mxu0 0
      %2979 = vmatpush2.bf16.msra.mxu0 0
      %2980 = vmatprep.subr.bf16.mxu0 0
      %2981 = vmatpush2.bf16.msra.mxu0 0
      %2982 = vmatprep.subr.bf16.mxu0 0
      %2983 = vmatpush2.bf16.msra.mxu0 0
      %2984 = vmatprep.subr.bf16.mxu0 0
      %2985 = vmatpush2.bf16.msra.mxu0 0
      %2986 = vmatprep.subr.bf16.mxu0 0
      %2987 = vmatpush2.bf16.msra.mxu0 0
      %2988 = vmatprep.mubr.bf16.mxu0 0
      %2989 = vmatmul.mubr.bf16.gmra.mxu0 %v682
      %v2990 = vpop.f32.mrf.mxu0
      %v2991 = vadd.f32 0.0, %v2990
      %v2992 = vpop.f32.mrf.mxu0
      %v2993 = vadd.f32 0.0, %v2992
      %v2994 = vpop.f32.mrf.mxu0
      %v2995 = vadd.f32 0.0, %v2994
      %v2996 = vpop.f32.mrf.mxu0
      %v2997 = vadd.f32 0.0, %v2996
      %2998 = vmatprep.mubr.bf16.mxu0 0
      %2999 = vmatmul.mubr.bf16.gmra.mxu0 %v685
      %v3000 = vpop.f32.mrf.mxu0
      %v3001 = vadd.f32 0.0, %v3000
      %v3002 = vpop.f32.mrf.mxu0
      %v3003 = vadd.f32 0.0, %v3002
      %v3004 = vpop.f32.mrf.mxu0
      %v3005 = vadd.f32 0.0, %v3004
      %v3006 = vpop.f32.mrf.mxu0
      %v3007 = vadd.f32 0.0, %v3006
      %3008 = vmatprep.mubr.bf16.mxu0 0
      %3009 = vmatmul.mubr.bf16.gmra.mxu0 %v688
      %v3010 = vpop.f32.mrf.mxu0
      %v3011 = vadd.f32 0.0, %v3010
      %v3012 = vpop.f32.mrf.mxu0
      %v3013 = vadd.f32 0.0, %v3012
      %v3014 = vpop.f32.mrf.mxu0
      %v3015 = vadd.f32 0.0, %v3014
      %v3016 = vpop.f32.mrf.mxu0
      %v3017 = vadd.f32 0.0, %v3016
      %3018 = vmatprep.mubr.bf16.mxu0 0
      %3019 = vmatmul.mubr.bf16.gmra.mxu0 %v691
      %v3020 = vpop.f32.mrf.mxu0
      %v3021 = vadd.f32 0.0, %v3020
      %v3022 = vpop.f32.mrf.mxu0
      %v3023 = vadd.f32 0.0, %v3022
      %v3024 = vpop.f32.mrf.mxu0
      %v3025 = vadd.f32 0.0, %v3024
      %v3026 = vpop.f32.mrf.mxu0
      %v3027 = vadd.f32 0.0, %v3026
      %3028 = vdwg.mxu0
      %3029 = vmatprep.subr.bf16.mxu0 0
      %3030 = vmatpush1.bf16.msra.mxu0 0
      %3031 = vmatprep.subr.bf16.mxu0 0
      %3032 = vmatpush1.bf16.msra.mxu0 0
      %3033 = vmatprep.subr.bf16.mxu0 0
      %3034 = vmatpush1.bf16.msra.mxu0 0
      %3035 = vmatprep.subr.bf16.mxu0 0
      %3036 = vmatpush1.bf16.msra.mxu0 0
      %3037 = vmatprep.subr.bf16.mxu0 0
      %3038 = vmatpush1.bf16.msra.mxu0 0
      %3039 = vmatprep.subr.bf16.mxu0 0
      %3040 = vmatpush1.bf16.msra.mxu0 0
      %3041 = vmatprep.subr.bf16.mxu0 0
      %3042 = vmatpush1.bf16.msra.mxu0 0
      %3043 = vmatprep.subr.bf16.mxu0 %v869
      %3044 = vmatpush1.bf16.msra.mxu0 %v866
      %3045 = vmatprep.subr.bf16.mxu0 0
      %3046 = vmatpush2.bf16.msra.mxu0 0
      %3047 = vmatprep.subr.bf16.mxu0 0
      %3048 = vmatpush2.bf16.msra.mxu0 0
      %3049 = vmatprep.subr.bf16.mxu0 0
      %3050 = vmatpush2.bf16.msra.mxu0 0
      %3051 = vmatprep.subr.bf16.mxu0 0
      %3052 = vmatpush2.bf16.msra.mxu0 0
      %3053 = vmatprep.subr.bf16.mxu0 0
      %3054 = vmatpush2.bf16.msra.mxu0 0
      %3055 = vmatprep.subr.bf16.mxu0 0
      %3056 = vmatpush2.bf16.msra.mxu0 0
      %3057 = vmatprep.subr.bf16.mxu0 0
      %3058 = vmatpush2.bf16.msra.mxu0 0
      %3059 = vmatprep.subr.bf16.mxu0 0
      %3060 = vmatpush2.bf16.msra.mxu0 0
      %3061 = vmatprep.mubr.bf16.mxu0 0
      %3062 = vmatmul.mubr.bf16.gmra.mxu0 %v682
      %v3063 = vpop.f32.mrf.mxu0
      %v3064 = vadd.f32 0.0, %v3063
      %v3065 = vpop.f32.mrf.mxu0
      %v3066 = vadd.f32 0.0, %v3065
      %v3067 = vpop.f32.mrf.mxu0
      %v3068 = vadd.f32 0.0, %v3067
      %v3069 = vpop.f32.mrf.mxu0
      %v3070 = vadd.f32 0.0, %v3069
      %3071 = vmatprep.mubr.bf16.mxu0 0
      %3072 = vmatmul.mubr.bf16.gmra.mxu0 %v685
      %v3073 = vpop.f32.mrf.mxu0
      %v3074 = vadd.f32 0.0, %v3073
      %v3075 = vpop.f32.mrf.mxu0
      %v3076 = vadd.f32 0.0, %v3075
      %v3077 = vpop.f32.mrf.mxu0
      %v3078 = vadd.f32 0.0, %v3077
      %v3079 = vpop.f32.mrf.mxu0
      %v3080 = vadd.f32 0.0, %v3079
      %3081 = vmatprep.mubr.bf16.mxu0 0
      %3082 = vmatmul.mubr.bf16.gmra.mxu0 %v688
      %v3083 = vpop.f32.mrf.mxu0
      %v3084 = vadd.f32 0.0, %v3083
      %v3085 = vpop.f32.mrf.mxu0
      %v3086 = vadd.f32 0.0, %v3085
      %v3087 = vpop.f32.mrf.mxu0
      %v3088 = vadd.f32 0.0, %v3087
      %v3089 = vpop.f32.mrf.mxu0
      %v3090 = vadd.f32 0.0, %v3089
      %3091 = vmatprep.mubr.bf16.mxu0 0
      %3092 = vmatmul.mubr.bf16.gmra.mxu0 %v691
      %v3093 = vpop.f32.mrf.mxu0
      %v3094 = vadd.f32 0.0, %v3093
      %v3095 = vpop.f32.mrf.mxu0
      %v3096 = vadd.f32 0.0, %v3095
      %v3097 = vpop.f32.mrf.mxu0
      %v3098 = vadd.f32 0.0, %v3097
      %v3099 = vpop.f32.mrf.mxu0
      %v3100 = vadd.f32 0.0, %v3099
      %3101 = vdwg.mxu0
      %3102 = vmatprep.subr.bf16.mxu0 0
      %3103 = vmatpush1.bf16.msra.mxu0 0
      %3104 = vmatprep.subr.bf16.mxu0 0
      %3105 = vmatpush1.bf16.msra.mxu0 0
      %3106 = vmatprep.subr.bf16.mxu0 0
      %3107 = vmatpush1.bf16.msra.mxu0 0
      %3108 = vmatprep.subr.bf16.mxu0 0
      %3109 = vmatpush1.bf16.msra.mxu0 0
      %3110 = vmatprep.subr.bf16.mxu0 0
      %3111 = vmatpush1.bf16.msra.mxu0 0
      %3112 = vmatprep.subr.bf16.mxu0 0
      %3113 = vmatpush1.bf16.msra.mxu0 0
      %3114 = vmatprep.subr.bf16.mxu0 0
      %3115 = vmatpush1.bf16.msra.mxu0 0
      %3116 = vmatprep.subr.bf16.mxu0 %v875
      %3117 = vmatpush1.bf16.msra.mxu0 %v872
      %3118 = vmatprep.subr.bf16.mxu0 0
      %3119 = vmatpush2.bf16.msra.mxu0 0
      %3120 = vmatprep.subr.bf16.mxu0 0
      %3121 = vmatpush2.bf16.msra.mxu0 0
      %3122 = vmatprep.subr.bf16.mxu0 0
      %3123 = vmatpush2.bf16.msra.mxu0 0
      %3124 = vmatprep.subr.bf16.mxu0 0
      %3125 = vmatpush2.bf16.msra.mxu0 0
      %3126 = vmatprep.subr.bf16.mxu0 0
      %3127 = vmatpush2.bf16.msra.mxu0 0
      %3128 = vmatprep.subr.bf16.mxu0 0
      %3129 = vmatpush2.bf16.msra.mxu0 0
      %3130 = vmatprep.subr.bf16.mxu0 0
      %3131 = vmatpush2.bf16.msra.mxu0 0
      %3132 = vmatprep.subr.bf16.mxu0 0
      %3133 = vmatpush2.bf16.msra.mxu0 0
      %3134 = vmatprep.mubr.bf16.mxu0 0
      %3135 = vmatmul.mubr.bf16.gmra.mxu0 %v682
      %v3136 = vpop.f32.mrf.mxu0
      %v3137 = vadd.f32 0.0, %v3136
      %v3138 = vpop.f32.mrf.mxu0
      %v3139 = vadd.f32 0.0, %v3138
      %v3140 = vpop.f32.mrf.mxu0
      %v3141 = vadd.f32 0.0, %v3140
      %v3142 = vpop.f32.mrf.mxu0
      %v3143 = vadd.f32 0.0, %v3142
      %3144 = vmatprep.mubr.bf16.mxu0 0
      %3145 = vmatmul.mubr.bf16.gmra.mxu0 %v685
      %v3146 = vpop.f32.mrf.mxu0
      %v3147 = vadd.f32 0.0, %v3146
      %v3148 = vpop.f32.mrf.mxu0
      %v3149 = vadd.f32 0.0, %v3148
      %v3150 = vpop.f32.mrf.mxu0
      %v3151 = vadd.f32 0.0, %v3150
      %v3152 = vpop.f32.mrf.mxu0
      %v3153 = vadd.f32 0.0, %v3152
      %3154 = vmatprep.mubr.bf16.mxu0 0
      %3155 = vmatmul.mubr.bf16.gmra.mxu0 %v688
      %v3156 = vpop.f32.mrf.mxu0
      %v3157 = vadd.f32 0.0, %v3156
      %v3158 = vpop.f32.mrf.mxu0
      %v3159 = vadd.f32 0.0, %v3158
      %v3160 = vpop.f32.mrf.mxu0
      %v3161 = vadd.f32 0.0, %v3160
      %v3162 = vpop.f32.mrf.mxu0
      %v3163 = vadd.f32 0.0, %v3162
      %3164 = vmatprep.mubr.bf16.mxu0 0
      %3165 = vmatmul.mubr.bf16.gmra.mxu0 %v691
      %v3166 = vpop.f32.mrf.mxu0
      %v3167 = vadd.f32 0.0, %v3166
      %v3168 = vpop.f32.mrf.mxu0
      %v3169 = vadd.f32 0.0, %v3168
      %v3170 = vpop.f32.mrf.mxu0
      %v3171 = vadd.f32 0.0, %v3170
      %v3172 = vpop.f32.mrf.mxu0
      %v3173 = vadd.f32 0.0, %v3172
      %3174 = vdwg.mxu0
      %3175 = vmatprep.subr.bf16.mxu0 0
      %3176 = vmatpush1.bf16.msra.mxu0 0
      %3177 = vmatprep.subr.bf16.mxu0 0
      %3178 = vmatpush1.bf16.msra.mxu0 0
      %3179 = vmatprep.subr.bf16.mxu0 0
      %3180 = vmatpush1.bf16.msra.mxu0 0
      %3181 = vmatprep.subr.bf16.mxu0 0
      %3182 = vmatpush1.bf16.msra.mxu0 0
      %3183 = vmatprep.subr.bf16.mxu0 0
      %3184 = vmatpush1.bf16.msra.mxu0 0
      %3185 = vmatprep.subr.bf16.mxu0 0
      %3186 = vmatpush1.bf16.msra.mxu0 0
      %3187 = vmatprep.subr.bf16.mxu0 0
      %3188 = vmatpush1.bf16.msra.mxu0 0
      %3189 = vmatprep.subr.bf16.mxu0 %v881
      %3190 = vmatpush1.bf16.msra.mxu0 %v878
      %3191 = vmatprep.subr.bf16.mxu0 0
      %3192 = vmatpush2.bf16.msra.mxu0 0
      %3193 = vmatprep.subr.bf16.mxu0 0
      %3194 = vmatpush2.bf16.msra.mxu0 0
      %3195 = vmatprep.subr.bf16.mxu0 0
      %3196 = vmatpush2.bf16.msra.mxu0 0
      %3197 = vmatprep.subr.bf16.mxu0 0
      %3198 = vmatpush2.bf16.msra.mxu0 0
      %3199 = vmatprep.subr.bf16.mxu0 0
      %3200 = vmatpush2.bf16.msra.mxu0 0
      %3201 = vmatprep.subr.bf16.mxu0 0
      %3202 = vmatpush2.bf16.msra.mxu0 0
      %3203 = vmatprep.subr.bf16.mxu0 0
      %3204 = vmatpush2.bf16.msra.mxu0 0
      %3205 = vmatprep.subr.bf16.mxu0 0
      %3206 = vmatpush2.bf16.msra.mxu0 0
      %3207 = vmatprep.mubr.bf16.mxu0 0
      %3208 = vmatmul.mubr.bf16.gmra.mxu0 %v682
      %v3209 = vpop.f32.mrf.mxu0
      %v3210 = vadd.f32 0.0, %v3209
      %v3211 = vpop.f32.mrf.mxu0
      %v3212 = vadd.f32 0.0, %v3211
      %v3213 = vpop.f32.mrf.mxu0
      %v3214 = vadd.f32 0.0, %v3213
      %v3215 = vpop.f32.mrf.mxu0
      %v3216 = vadd.f32 0.0, %v3215
      %3217 = vmatprep.mubr.bf16.mxu0 0
      %3218 = vmatmul.mubr.bf16.gmra.mxu0 %v685
      %v3219 = vpop.f32.mrf.mxu0
      %v3220 = vadd.f32 0.0, %v3219
      %v3221 = vpop.f32.mrf.mxu0
      %v3222 = vadd.f32 0.0, %v3221
      %v3223 = vpop.f32.mrf.mxu0
      %v3224 = vadd.f32 0.0, %v3223
      %v3225 = vpop.f32.mrf.mxu0
      %v3226 = vadd.f32 0.0, %v3225
      %3227 = vmatprep.mubr.bf16.mxu0 0
      %3228 = vmatmul.mubr.bf16.gmra.mxu0 %v688
      %v3229 = vpop.f32.mrf.mxu0
      %v3230 = vadd.f32 0.0, %v3229
      %v3231 = vpop.f32.mrf.mxu0
      %v3232 = vadd.f32 0.0, %v3231
      %v3233 = vpop.f32.mrf.mxu0
      %v3234 = vadd.f32 0.0, %v3233
      %v3235 = vpop.f32.mrf.mxu0
      %v3236 = vadd.f32 0.0, %v3235
      %3237 = vmatprep.mubr.bf16.mxu0 0
      %3238 = vmatmul.mubr.bf16.gmra.mxu0 %v691
      %v3239 = vpop.f32.mrf.mxu0
      %v3240 = vadd.f32 0.0, %v3239
      %v3241 = vpop.f32.mrf.mxu0
      %v3242 = vadd.f32 0.0, %v3241
      %v3243 = vpop.f32.mrf.mxu0
      %v3244 = vadd.f32 0.0, %v3243
      %v3245 = vpop.f32.mrf.mxu0
      %v3246 = vadd.f32 0.0, %v3245
      %3247 = vdwg.mxu0
      %3248 = vmatprep.subr.bf16.mxu0 0
      %3249 = vmatpush1.bf16.msra.mxu0 0
      %3250 = vmatprep.subr.bf16.mxu0 0
      %3251 = vmatpush1.bf16.msra.mxu0 0
      %3252 = vmatprep.subr.bf16.mxu0 0
      %3253 = vmatpush1.bf16.msra.mxu0 0
      %3254 = vmatprep.subr.bf16.mxu0 0
      %3255 = vmatpush1.bf16.msra.mxu0 0
      %3256 = vmatprep.subr.bf16.mxu0 0
      %3257 = vmatpush1.bf16.msra.mxu0 0
      %3258 = vmatprep.subr.bf16.mxu0 0
      %3259 = vmatpush1.bf16.msra.mxu0 0
      %3260 = vmatprep.subr.bf16.mxu0 0
      %3261 = vmatpush1.bf16.msra.mxu0 0
      %3262 = vmatprep.subr.bf16.mxu0 %v887
      %3263 = vmatpush1.bf16.msra.mxu0 %v884
      %3264 = vmatprep.subr.bf16.mxu0 0
      %3265 = vmatpush2.bf16.msra.mxu0 0
      %3266 = vmatprep.subr.bf16.mxu0 0
      %3267 = vmatpush2.bf16.msra.mxu0 0
      %3268 = vmatprep.subr.bf16.mxu0 0
      %3269 = vmatpush2.bf16.msra.mxu0 0
      %3270 = vmatprep.subr.bf16.mxu0 0
      %3271 = vmatpush2.bf16.msra.mxu0 0
      %3272 = vmatprep.subr.bf16.mxu0 0
      %3273 = vmatpush2.bf16.msra.mxu0 0
      %3274 = vmatprep.subr.bf16.mxu0 0
      %3275 = vmatpush2.bf16.msra.mxu0 0
      %3276 = vmatprep.subr.bf16.mxu0 0
      %3277 = vmatpush2.bf16.msra.mxu0 0
      %3278 = vmatprep.subr.bf16.mxu0 0
      %3279 = vmatpush2.bf16.msra.mxu0 0
      %3280 = vmatprep.mubr.bf16.mxu0 0
      %3281 = vmatmul.mubr.bf16.gmra.mxu0 %v682
      %v3282 = vpop.f32.mrf.mxu0
      %v3283 = vadd.f32 0.0, %v3282
      %v3284 = vpop.f32.mrf.mxu0
      %v3285 = vadd.f32 0.0, %v3284
      %v3286 = vpop.f32.mrf.mxu0
      %v3287 = vadd.f32 0.0, %v3286
      %v3288 = vpop.f32.mrf.mxu0
      %v3289 = vadd.f32 0.0, %v3288
      %3290 = vmatprep.mubr.bf16.mxu0 0
      %3291 = vmatmul.mubr.bf16.gmra.mxu0 %v685
      %v3292 = vpop.f32.mrf.mxu0
      %v3293 = vadd.f32 0.0, %v3292
      %v3294 = vpop.f32.mrf.mxu0
      %v3295 = vadd.f32 0.0, %v3294
      %v3296 = vpop.f32.mrf.mxu0
      %v3297 = vadd.f32 0.0, %v3296
      %v3298 = vpop.f32.mrf.mxu0
      %v3299 = vadd.f32 0.0, %v3298
      %3300 = vmatprep.mubr.bf16.mxu0 0
      %3301 = vmatmul.mubr.bf16.gmra.mxu0 %v688
      %v3302 = vpop.f32.mrf.mxu0
      %v3303 = vadd.f32 0.0, %v3302
      %v3304 = vpop.f32.mrf.mxu0
      %v3305 = vadd.f32 0.0, %v3304
      %v3306 = vpop.f32.mrf.mxu0
      %v3307 = vadd.f32 0.0, %v3306
      %v3308 = vpop.f32.mrf.mxu0
      %v3309 = vadd.f32 0.0, %v3308
      %3310 = vmatprep.mubr.bf16.mxu0 0
      %3311 = vmatmul.mubr.bf16.gmra.mxu0 %v691
      %v3312 = vpop.f32.mrf.mxu0
      %v3313 = vadd.f32 0.0, %v3312
      %v3314 = vpop.f32.mrf.mxu0
      %v3315 = vadd.f32 0.0, %v3314
      %v3316 = vpop.f32.mrf.mxu0
      %v3317 = vadd.f32 0.0, %v3316
      %v3318 = vpop.f32.mrf.mxu0
      %v3319 = vadd.f32 0.0, %v3318
      %3320 = vdwg.mxu0
      %3321 = vmatprep.subr.bf16.mxu0 0
      %3322 = vmatpush1.bf16.msra.mxu0 0
      %3323 = vmatprep.subr.bf16.mxu0 0
      %3324 = vmatpush1.bf16.msra.mxu0 0
      %3325 = vmatprep.subr.bf16.mxu0 0
      %3326 = vmatpush1.bf16.msra.mxu0 0
      %3327 = vmatprep.subr.bf16.mxu0 0
      %3328 = vmatpush1.bf16.msra.mxu0 0
      %3329 = vmatprep.subr.bf16.mxu0 0
      %3330 = vmatpush1.bf16.msra.mxu0 0
      %3331 = vmatprep.subr.bf16.mxu0 0
      %3332 = vmatpush1.bf16.msra.mxu0 0
      %3333 = vmatprep.subr.bf16.mxu0 0
      %3334 = vmatpush1.bf16.msra.mxu0 0
      %3335 = vmatprep.subr.bf16.mxu0 %v893
      %3336 = vmatpush1.bf16.msra.mxu0 %v890
      %3337 = vmatprep.subr.bf16.mxu0 0
      %3338 = vmatpush2.bf16.msra.mxu0 0
      %3339 = vmatprep.subr.bf16.mxu0 0
      %3340 = vmatpush2.bf16.msra.mxu0 0
      %3341 = vmatprep.subr.bf16.mxu0 0
      %3342 = vmatpush2.bf16.msra.mxu0 0
      %3343 = vmatprep.subr.bf16.mxu0 0
      %3344 = vmatpush2.bf16.msra.mxu0 0
      %3345 = vmatprep.subr.bf16.mxu0 0
      %3346 = vmatpush2.bf16.msra.mxu0 0
      %3347 = vmatprep.subr.bf16.mxu0 0
      %3348 = vmatpush2.bf16.msra.mxu0 0
      %3349 = vmatprep.subr.bf16.mxu0 0
      %3350 = vmatpush2.bf16.msra.mxu0 0
      %3351 = vmatprep.subr.bf16.mxu0 0
      %3352 = vmatpush2.bf16.msra.mxu0 0
      %3353 = vmatprep.mubr.bf16.mxu0 0
      %3354 = vmatmul.mubr.bf16.gmra.mxu0 %v682
      %v3355 = vpop.f32.mrf.mxu0
      %v3356 = vadd.f32 0.0, %v3355
      %v3357 = vpop.f32.mrf.mxu0
      %v3358 = vadd.f32 0.0, %v3357
      %v3359 = vpop.f32.mrf.mxu0
      %v3360 = vadd.f32 0.0, %v3359
      %v3361 = vpop.f32.mrf.mxu0
      %v3362 = vadd.f32 0.0, %v3361
      %3363 = vmatprep.mubr.bf16.mxu0 0
      %3364 = vmatmul.mubr.bf16.gmra.mxu0 %v685
      %v3365 = vpop.f32.mrf.mxu0
      %v3366 = vadd.f32 0.0, %v3365
      %v3367 = vpop.f32.mrf.mxu0
      %v3368 = vadd.f32 0.0, %v3367
      %v3369 = vpop.f32.mrf.mxu0
      %v3370 = vadd.f32 0.0, %v3369
      %v3371 = vpop.f32.mrf.mxu0
      %v3372 = vadd.f32 0.0, %v3371
      %3373 = vmatprep.mubr.bf16.mxu0 0
      %3374 = vmatmul.mubr.bf16.gmra.mxu0 %v688
      %v3375 = vpop.f32.mrf.mxu0
      %v3376 = vadd.f32 0.0, %v3375
      %v3377 = vpop.f32.mrf.mxu0
      %v3378 = vadd.f32 0.0, %v3377
      %v3379 = vpop.f32.mrf.mxu0
      %v3380 = vadd.f32 0.0, %v3379
      %v3381 = vpop.f32.mrf.mxu0
      %v3382 = vadd.f32 0.0, %v3381
      %3383 = vmatprep.mubr.bf16.mxu0 0
      %3384 = vmatmul.mubr.bf16.gmra.mxu0 %v691
      %v3385 = vpop.f32.mrf.mxu0
      %v3386 = vadd.f32 0.0, %v3385
      %v3387 = vpop.f32.mrf.mxu0
      %v3388 = vadd.f32 0.0, %v3387
      %v3389 = vpop.f32.mrf.mxu0
      %v3390 = vadd.f32 0.0, %v3389
      %v3391 = vpop.f32.mrf.mxu0
      %v3392 = vadd.f32 0.0, %v3391
      %3393 = vdwg.mxu0
      %3394 = vmatprep.subr.bf16.mxu0 0
      %3395 = vmatpush1.bf16.msra.mxu0 0
      %3396 = vmatprep.subr.bf16.mxu0 0
      %3397 = vmatpush1.bf16.msra.mxu0 0
      %3398 = vmatprep.subr.bf16.mxu0 0
      %3399 = vmatpush1.bf16.msra.mxu0 0
      %3400 = vmatprep.subr.bf16.mxu0 0
      %3401 = vmatpush1.bf16.msra.mxu0 0
      %3402 = vmatprep.subr.bf16.mxu0 0
      %3403 = vmatpush1.bf16.msra.mxu0 0
      %3404 = vmatprep.subr.bf16.mxu0 0
      %3405 = vmatpush1.bf16.msra.mxu0 0
      %3406 = vmatprep.subr.bf16.mxu0 0
      %3407 = vmatpush1.bf16.msra.mxu0 0
      %3408 = vmatprep.subr.bf16.mxu0 %v899
      %3409 = vmatpush1.bf16.msra.mxu0 %v896
      %3410 = vmatprep.subr.bf16.mxu0 0
      %3411 = vmatpush2.bf16.msra.mxu0 0
      %3412 = vmatprep.subr.bf16.mxu0 0
      %3413 = vmatpush2.bf16.msra.mxu0 0
      %3414 = vmatprep.subr.bf16.mxu0 0
      %3415 = vmatpush2.bf16.msra.mxu0 0
      %3416 = vmatprep.subr.bf16.mxu0 0
      %3417 = vmatpush2.bf16.msra.mxu0 0
      %3418 = vmatprep.subr.bf16.mxu0 0
      %3419 = vmatpush2.bf16.msra.mxu0 0
      %3420 = vmatprep.subr.bf16.mxu0 0
      %3421 = vmatpush2.bf16.msra.mxu0 0
      %3422 = vmatprep.subr.bf16.mxu0 0
      %3423 = vmatpush2.bf16.msra.mxu0 0
      %3424 = vmatprep.subr.bf16.mxu0 0
      %3425 = vmatpush2.bf16.msra.mxu0 0
      %3426 = vmatprep.mubr.bf16.mxu0 0
      %3427 = vmatmul.mubr.bf16.gmra.mxu0 %v682
      %v3428 = vpop.f32.mrf.mxu0
      %v3429 = vadd.f32 0.0, %v3428
      %v3430 = vpop.f32.mrf.mxu0
      %v3431 = vadd.f32 0.0, %v3430
      %v3432 = vpop.f32.mrf.mxu0
      %v3433 = vadd.f32 0.0, %v3432
      %v3434 = vpop.f32.mrf.mxu0
      %v3435 = vadd.f32 0.0, %v3434
      %3436 = vmatprep.mubr.bf16.mxu0 0
      %3437 = vmatmul.mubr.bf16.gmra.mxu0 %v685
      %v3438 = vpop.f32.mrf.mxu0
      %v3439 = vadd.f32 0.0, %v3438
      %v3440 = vpop.f32.mrf.mxu0
      %v3441 = vadd.f32 0.0, %v3440
      %v3442 = vpop.f32.mrf.mxu0
      %v3443 = vadd.f32 0.0, %v3442
      %v3444 = vpop.f32.mrf.mxu0
      %v3445 = vadd.f32 0.0, %v3444
      %3446 = vmatprep.mubr.bf16.mxu0 0
      %3447 = vmatmul.mubr.bf16.gmra.mxu0 %v688
      %v3448 = vpop.f32.mrf.mxu0
      %v3449 = vadd.f32 0.0, %v3448
      %v3450 = vpop.f32.mrf.mxu0
      %v3451 = vadd.f32 0.0, %v3450
      %v3452 = vpop.f32.mrf.mxu0
      %v3453 = vadd.f32 0.0, %v3452
      %v3454 = vpop.f32.mrf.mxu0
      %v3455 = vadd.f32 0.0, %v3454
      %3456 = vmatprep.mubr.bf16.mxu0 0
      %3457 = vmatmul.mubr.bf16.gmra.mxu0 %v691
      %v3458 = vpop.f32.mrf.mxu0
      %v3459 = vadd.f32 0.0, %v3458
      %v3460 = vpop.f32.mrf.mxu0
      %v3461 = vadd.f32 0.0, %v3460
      %v3462 = vpop.f32.mrf.mxu0
      %v3463 = vadd.f32 0.0, %v3462
      %v3464 = vpop.f32.mrf.mxu0
      %v3465 = vadd.f32 0.0, %v3464
      %3466 = vdwg.mxu0
      %3467 = vmatprep.subr.bf16.mxu0 0
      %3468 = vmatpush1.bf16.msra.mxu0 0
      %3469 = vmatprep.subr.bf16.mxu0 0
      %3470 = vmatpush1.bf16.msra.mxu0 0
      %3471 = vmatprep.subr.bf16.mxu0 0
      %3472 = vmatpush1.bf16.msra.mxu0 0
      %3473 = vmatprep.subr.bf16.mxu0 0
      %3474 = vmatpush1.bf16.msra.mxu0 0
      %3475 = vmatprep.subr.bf16.mxu0 0
      %3476 = vmatpush1.bf16.msra.mxu0 0
      %3477 = vmatprep.subr.bf16.mxu0 0
      %3478 = vmatpush1.bf16.msra.mxu0 0
      %3479 = vmatprep.subr.bf16.mxu0 0
      %3480 = vmatpush1.bf16.msra.mxu0 0
      %3481 = vmatprep.subr.bf16.mxu0 %v905
      %3482 = vmatpush1.bf16.msra.mxu0 %v902
      %3483 = vmatprep.subr.bf16.mxu0 0
      %3484 = vmatpush2.bf16.msra.mxu0 0
      %3485 = vmatprep.subr.bf16.mxu0 0
      %3486 = vmatpush2.bf16.msra.mxu0 0
      %3487 = vmatprep.subr.bf16.mxu0 0
      %3488 = vmatpush2.bf16.msra.mxu0 0
      %3489 = vmatprep.subr.bf16.mxu0 0
      %3490 = vmatpush2.bf16.msra.mxu0 0
      %3491 = vmatprep.subr.bf16.mxu0 0
      %3492 = vmatpush2.bf16.msra.mxu0 0
      %3493 = vmatprep.subr.bf16.mxu0 0
      %3494 = vmatpush2.bf16.msra.mxu0 0
      %3495 = vmatprep.subr.bf16.mxu0 0
      %3496 = vmatpush2.bf16.msra.mxu0 0
      %3497 = vmatprep.subr.bf16.mxu0 0
      %3498 = vmatpush2.bf16.msra.mxu0 0
      %3499 = vmatprep.mubr.bf16.mxu0 0
      %3500 = vmatmul.mubr.bf16.gmra.mxu0 %v682
      %v3501 = vpop.f32.mrf.mxu0
      %v3502 = vadd.f32 0.0, %v3501
      %v3503 = vpop.f32.mrf.mxu0
      %v3504 = vadd.f32 0.0, %v3503
      %v3505 = vpop.f32.mrf.mxu0
      %v3506 = vadd.f32 0.0, %v3505
      %v3507 = vpop.f32.mrf.mxu0
      %v3508 = vadd.f32 0.0, %v3507
      %3509 = vmatprep.mubr.bf16.mxu0 0
      %3510 = vmatmul.mubr.bf16.gmra.mxu0 %v685
      %v3511 = vpop.f32.mrf.mxu0
      %v3512 = vadd.f32 0.0, %v3511
      %v3513 = vpop.f32.mrf.mxu0
      %v3514 = vadd.f32 0.0, %v3513
      %v3515 = vpop.f32.mrf.mxu0
      %v3516 = vadd.f32 0.0, %v3515
      %v3517 = vpop.f32.mrf.mxu0
      %v3518 = vadd.f32 0.0, %v3517
      %3519 = vmatprep.mubr.bf16.mxu0 0
      %3520 = vmatmul.mubr.bf16.gmra.mxu0 %v688
      %v3521 = vpop.f32.mrf.mxu0
      %v3522 = vadd.f32 0.0, %v3521
      %v3523 = vpop.f32.mrf.mxu0
      %v3524 = vadd.f32 0.0, %v3523
      %v3525 = vpop.f32.mrf.mxu0
      %v3526 = vadd.f32 0.0, %v3525
      %v3527 = vpop.f32.mrf.mxu0
      %v3528 = vadd.f32 0.0, %v3527
      %3529 = vmatprep.mubr.bf16.mxu0 0
      %3530 = vmatmul.mubr.bf16.gmra.mxu0 %v691
      %v3531 = vpop.f32.mrf.mxu0
      %v3532 = vadd.f32 0.0, %v3531
      %v3533 = vpop.f32.mrf.mxu0
      %v3534 = vadd.f32 0.0, %v3533
      %v3535 = vpop.f32.mrf.mxu0
      %v3536 = vadd.f32 0.0, %v3535
      %v3537 = vpop.f32.mrf.mxu0
      %v3538 = vadd.f32 0.0, %v3537
      %3539 = vdwg.mxu0
      %3540 = vmatprep.subr.bf16.mxu0 0
      %3541 = vmatpush1.bf16.msra.mxu0 0
      %3542 = vmatprep.subr.bf16.mxu0 0
      %3543 = vmatpush1.bf16.msra.mxu0 0
      %3544 = vmatprep.subr.bf16.mxu0 0
      %3545 = vmatpush1.bf16.msra.mxu0 0
      %3546 = vmatprep.subr.bf16.mxu0 0
      %3547 = vmatpush1.bf16.msra.mxu0 0
      %3548 = vmatprep.subr.bf16.mxu0 0
      %3549 = vmatpush1.bf16.msra.mxu0 0
      %3550 = vmatprep.subr.bf16.mxu0 0
      %3551 = vmatpush1.bf16.msra.mxu0 0
      %3552 = vmatprep.subr.bf16.mxu0 0
      %3553 = vmatpush1.bf16.msra.mxu0 0
      %3554 = vmatprep.subr.bf16.mxu0 %v911
      %3555 = vmatpush1.bf16.msra.mxu0 %v908
      %3556 = vmatprep.subr.bf16.mxu0 0
      %3557 = vmatpush2.bf16.msra.mxu0 0
      %3558 = vmatprep.subr.bf16.mxu0 0
      %3559 = vmatpush2.bf16.msra.mxu0 0
      %3560 = vmatprep.subr.bf16.mxu0 0
      %3561 = vmatpush2.bf16.msra.mxu0 0
      %3562 = vmatprep.subr.bf16.mxu0 0
      %3563 = vmatpush2.bf16.msra.mxu0 0
      %3564 = vmatprep.subr.bf16.mxu0 0
      %3565 = vmatpush2.bf16.msra.mxu0 0
      %3566 = vmatprep.subr.bf16.mxu0 0
      %3567 = vmatpush2.bf16.msra.mxu0 0
      %3568 = vmatprep.subr.bf16.mxu0 0
      %3569 = vmatpush2.bf16.msra.mxu0 0
      %3570 = vmatprep.subr.bf16.mxu0 0
      %3571 = vmatpush2.bf16.msra.mxu0 0
      %3572 = vmatprep.mubr.bf16.mxu0 0
      %3573 = vmatmul.mubr.bf16.gmra.mxu0 %v682
      %v3574 = vpop.f32.mrf.mxu0
      %v3575 = vadd.f32 0.0, %v3574
      %v3576 = vpop.f32.mrf.mxu0
      %v3577 = vadd.f32 0.0, %v3576
      %v3578 = vpop.f32.mrf.mxu0
      %v3579 = vadd.f32 0.0, %v3578
      %v3580 = vpop.f32.mrf.mxu0
      %v3581 = vadd.f32 0.0, %v3580
      %3582 = vmatprep.mubr.bf16.mxu0 0
      %3583 = vmatmul.mubr.bf16.gmra.mxu0 %v685
      %v3584 = vpop.f32.mrf.mxu0
      %v3585 = vadd.f32 0.0, %v3584
      %v3586 = vpop.f32.mrf.mxu0
      %v3587 = vadd.f32 0.0, %v3586
      %v3588 = vpop.f32.mrf.mxu0
      %v3589 = vadd.f32 0.0, %v3588
      %v3590 = vpop.f32.mrf.mxu0
      %v3591 = vadd.f32 0.0, %v3590
      %3592 = vmatprep.mubr.bf16.mxu0 0
      %3593 = vmatmul.mubr.bf16.gmra.mxu0 %v688
      %v3594 = vpop.f32.mrf.mxu0
      %v3595 = vadd.f32 0.0, %v3594
      %v3596 = vpop.f32.mrf.mxu0
      %v3597 = vadd.f32 0.0, %v3596
      %v3598 = vpop.f32.mrf.mxu0
      %v3599 = vadd.f32 0.0, %v3598
      %v3600 = vpop.f32.mrf.mxu0
      %v3601 = vadd.f32 0.0, %v3600
      %3602 = vmatprep.mubr.bf16.mxu0 0
      %3603 = vmatmul.mubr.bf16.gmra.mxu0 %v691
      %v3604 = vpop.f32.mrf.mxu0
      %v3605 = vadd.f32 0.0, %v3604
      %v3606 = vpop.f32.mrf.mxu0
      %v3607 = vadd.f32 0.0, %v3606
      %v3608 = vpop.f32.mrf.mxu0
      %v3609 = vadd.f32 0.0, %v3608
      %v3610 = vpop.f32.mrf.mxu0
      %v3611 = vadd.f32 0.0, %v3610
      %3612 = vdwg.mxu0
      %3613 = vmatprep.subr.bf16.mxu0 0
      %3614 = vmatpush1.bf16.msra.mxu0 0
      %3615 = vmatprep.subr.bf16.mxu0 0
      %3616 = vmatpush1.bf16.msra.mxu0 0
      %3617 = vmatprep.subr.bf16.mxu0 0
      %3618 = vmatpush1.bf16.msra.mxu0 0
      %3619 = vmatprep.subr.bf16.mxu0 0
      %3620 = vmatpush1.bf16.msra.mxu0 0
      %3621 = vmatprep.subr.bf16.mxu0 0
      %3622 = vmatpush1.bf16.msra.mxu0 0
      %3623 = vmatprep.subr.bf16.mxu0 0
      %3624 = vmatpush1.bf16.msra.mxu0 0
      %3625 = vmatprep.subr.bf16.mxu0 0
      %3626 = vmatpush1.bf16.msra.mxu0 0
      %3627 = vmatprep.subr.bf16.mxu0 %v917
      %3628 = vmatpush1.bf16.msra.mxu0 %v914
      %3629 = vmatprep.subr.bf16.mxu0 0
      %3630 = vmatpush2.bf16.msra.mxu0 0
      %3631 = vmatprep.subr.bf16.mxu0 0
      %3632 = vmatpush2.bf16.msra.mxu0 0
      %3633 = vmatprep.subr.bf16.mxu0 0
      %3634 = vmatpush2.bf16.msra.mxu0 0
      %3635 = vmatprep.subr.bf16.mxu0 0
      %3636 = vmatpush2.bf16.msra.mxu0 0
      %3637 = vmatprep.subr.bf16.mxu0 0
      %3638 = vmatpush2.bf16.msra.mxu0 0
      %3639 = vmatprep.subr.bf16.mxu0 0
      %3640 = vmatpush2.bf16.msra.mxu0 0
      %3641 = vmatprep.subr.bf16.mxu0 0
      %3642 = vmatpush2.bf16.msra.mxu0 0
      %3643 = vmatprep.subr.bf16.mxu0 0
      %3644 = vmatpush2.bf16.msra.mxu0 0
      %3645 = vmatprep.mubr.bf16.mxu0 0
      %3646 = vmatmul.mubr.bf16.gmra.mxu0 %v682
      %v3647 = vpop.f32.mrf.mxu0
      %v3648 = vadd.f32 0.0, %v3647
      %v3649 = vpop.f32.mrf.mxu0
      %v3650 = vadd.f32 0.0, %v3649
      %v3651 = vpop.f32.mrf.mxu0
      %v3652 = vadd.f32 0.0, %v3651
      %v3653 = vpop.f32.mrf.mxu0
      %v3654 = vadd.f32 0.0, %v3653
      %3655 = vmatprep.mubr.bf16.mxu0 0
      %3656 = vmatmul.mubr.bf16.gmra.mxu0 %v685
      %v3657 = vpop.f32.mrf.mxu0
      %v3658 = vadd.f32 0.0, %v3657
      %v3659 = vpop.f32.mrf.mxu0
      %v3660 = vadd.f32 0.0, %v3659
      %v3661 = vpop.f32.mrf.mxu0
      %v3662 = vadd.f32 0.0, %v3661
      %v3663 = vpop.f32.mrf.mxu0
      %v3664 = vadd.f32 0.0, %v3663
      %3665 = vmatprep.mubr.bf16.mxu0 0
      %3666 = vmatmul.mubr.bf16.gmra.mxu0 %v688
      %v3667 = vpop.f32.mrf.mxu0
      %v3668 = vadd.f32 0.0, %v3667
      %v3669 = vpop.f32.mrf.mxu0
      %v3670 = vadd.f32 0.0, %v3669
      %v3671 = vpop.f32.mrf.mxu0
      %v3672 = vadd.f32 0.0, %v3671
      %v3673 = vpop.f32.mrf.mxu0
      %v3674 = vadd.f32 0.0, %v3673
      %3675 = vmatprep.mubr.bf16.mxu0 0
      %3676 = vmatmul.mubr.bf16.gmra.mxu0 %v691
      %v3677 = vpop.f32.mrf.mxu0
      %v3678 = vadd.f32 0.0, %v3677
      %v3679 = vpop.f32.mrf.mxu0
      %v3680 = vadd.f32 0.0, %v3679
      %v3681 = vpop.f32.mrf.mxu0
      %v3682 = vadd.f32 0.0, %v3681
      %v3683 = vpop.f32.mrf.mxu0
      %v3684 = vadd.f32 0.0, %v3683
      %3685 = vdwg.mxu0
      %3686 = vmatprep.subr.bf16.mxu0 0
      %3687 = vmatpush1.bf16.msra.mxu0 0
      %3688 = vmatprep.subr.bf16.mxu0 0
      %3689 = vmatpush1.bf16.msra.mxu0 0
      %3690 = vmatprep.subr.bf16.mxu0 0
      %3691 = vmatpush1.bf16.msra.mxu0 0
      %3692 = vmatprep.subr.bf16.mxu0 0
      %3693 = vmatpush1.bf16.msra.mxu0 0
      %3694 = vmatprep.subr.bf16.mxu0 0
      %3695 = vmatpush1.bf16.msra.mxu0 0
      %3696 = vmatprep.subr.bf16.mxu0 0
      %3697 = vmatpush1.bf16.msra.mxu0 0
      %3698 = vmatprep.subr.bf16.mxu0 0
      %3699 = vmatpush1.bf16.msra.mxu0 0
      %3700 = vmatprep.subr.bf16.mxu0 %v923
      %3701 = vmatpush1.bf16.msra.mxu0 %v920
      %3702 = vmatprep.subr.bf16.mxu0 0
      %3703 = vmatpush2.bf16.msra.mxu0 0
      %3704 = vmatprep.subr.bf16.mxu0 0
      %3705 = vmatpush2.bf16.msra.mxu0 0
      %3706 = vmatprep.subr.bf16.mxu0 0
      %3707 = vmatpush2.bf16.msra.mxu0 0
      %3708 = vmatprep.subr.bf16.mxu0 0
      %3709 = vmatpush2.bf16.msra.mxu0 0
      %3710 = vmatprep.subr.bf16.mxu0 0
      %3711 = vmatpush2.bf16.msra.mxu0 0
      %3712 = vmatprep.subr.bf16.mxu0 0
      %3713 = vmatpush2.bf16.msra.mxu0 0
      %3714 = vmatprep.subr.bf16.mxu0 0
      %3715 = vmatpush2.bf16.msra.mxu0 0
      %3716 = vmatprep.subr.bf16.mxu0 0
      %3717 = vmatpush2.bf16.msra.mxu0 0
      %3718 = vmatprep.mubr.bf16.mxu0 0
      %3719 = vmatmul.mubr.bf16.gmra.mxu0 %v682
      %v3720 = vpop.f32.mrf.mxu0
      %v3721 = vadd.f32 0.0, %v3720
      %v3722 = vpop.f32.mrf.mxu0
      %v3723 = vadd.f32 0.0, %v3722
      %v3724 = vpop.f32.mrf.mxu0
      %v3725 = vadd.f32 0.0, %v3724
      %v3726 = vpop.f32.mrf.mxu0
      %v3727 = vadd.f32 0.0, %v3726
      %3728 = vmatprep.mubr.bf16.mxu0 0
      %3729 = vmatmul.mubr.bf16.gmra.mxu0 %v685
      %v3730 = vpop.f32.mrf.mxu0
      %v3731 = vadd.f32 0.0, %v3730
      %v3732 = vpop.f32.mrf.mxu0
      %v3733 = vadd.f32 0.0, %v3732
      %v3734 = vpop.f32.mrf.mxu0
      %v3735 = vadd.f32 0.0, %v3734
      %v3736 = vpop.f32.mrf.mxu0
      %v3737 = vadd.f32 0.0, %v3736
      %3738 = vmatprep.mubr.bf16.mxu0 0
      %3739 = vmatmul.mubr.bf16.gmra.mxu0 %v688
      %v3740 = vpop.f32.mrf.mxu0
      %v3741 = vadd.f32 0.0, %v3740
      %v3742 = vpop.f32.mrf.mxu0
      %v3743 = vadd.f32 0.0, %v3742
      %v3744 = vpop.f32.mrf.mxu0
      %v3745 = vadd.f32 0.0, %v3744
      %v3746 = vpop.f32.mrf.mxu0
      %v3747 = vadd.f32 0.0, %v3746
      %3748 = vmatprep.mubr.bf16.mxu0 0
      %3749 = vmatmul.mubr.bf16.gmra.mxu0 %v691
      %v3750 = vpop.f32.mrf.mxu0
      %v3751 = vadd.f32 0.0, %v3750
      %v3752 = vpop.f32.mrf.mxu0
      %v3753 = vadd.f32 0.0, %v3752
      %v3754 = vpop.f32.mrf.mxu0
      %v3755 = vadd.f32 0.0, %v3754
      %v3756 = vpop.f32.mrf.mxu0
      %v3757 = vadd.f32 0.0, %v3756
      %3758 = vdwg.mxu0
      %3759 = vmatprep.subr.bf16.mxu0 0
      %3760 = vmatpush1.bf16.msra.mxu0 0
      %3761 = vmatprep.subr.bf16.mxu0 0
      %3762 = vmatpush1.bf16.msra.mxu0 0
      %3763 = vmatprep.subr.bf16.mxu0 0
      %3764 = vmatpush1.bf16.msra.mxu0 0
      %3765 = vmatprep.subr.bf16.mxu0 0
      %3766 = vmatpush1.bf16.msra.mxu0 0
      %3767 = vmatprep.subr.bf16.mxu0 0
      %3768 = vmatpush1.bf16.msra.mxu0 0
      %3769 = vmatprep.subr.bf16.mxu0 0
      %3770 = vmatpush1.bf16.msra.mxu0 0
      %3771 = vmatprep.subr.bf16.mxu0 0
      %3772 = vmatpush1.bf16.msra.mxu0 0
      %3773 = vmatprep.subr.bf16.mxu0 %v929
      %3774 = vmatpush1.bf16.msra.mxu0 %v926
      %3775 = vmatprep.subr.bf16.mxu0 0
      %3776 = vmatpush2.bf16.msra.mxu0 0
      %3777 = vmatprep.subr.bf16.mxu0 0
      %3778 = vmatpush2.bf16.msra.mxu0 0
      %3779 = vmatprep.subr.bf16.mxu0 0
      %3780 = vmatpush2.bf16.msra.mxu0 0
      %3781 = vmatprep.subr.bf16.mxu0 0
      %3782 = vmatpush2.bf16.msra.mxu0 0
      %3783 = vmatprep.subr.bf16.mxu0 0
      %3784 = vmatpush2.bf16.msra.mxu0 0
      %3785 = vmatprep.subr.bf16.mxu0 0
      %3786 = vmatpush2.bf16.msra.mxu0 0
      %3787 = vmatprep.subr.bf16.mxu0 0
      %3788 = vmatpush2.bf16.msra.mxu0 0
      %3789 = vmatprep.subr.bf16.mxu0 0
      %3790 = vmatpush2.bf16.msra.mxu0 0
      %3791 = vmatprep.mubr.bf16.mxu0 0
      %3792 = vmatmul.mubr.bf16.gmra.mxu0 %v682
      %v3793 = vpop.f32.mrf.mxu0
      %v3794 = vadd.f32 0.0, %v3793
      %v3795 = vpop.f32.mrf.mxu0
      %v3796 = vadd.f32 0.0, %v3795
      %v3797 = vpop.f32.mrf.mxu0
      %v3798 = vadd.f32 0.0, %v3797
      %v3799 = vpop.f32.mrf.mxu0
      %v3800 = vadd.f32 0.0, %v3799
      %3801 = vmatprep.mubr.bf16.mxu0 0
      %3802 = vmatmul.mubr.bf16.gmra.mxu0 %v685
      %v3803 = vpop.f32.mrf.mxu0
      %v3804 = vadd.f32 0.0, %v3803
      %v3805 = vpop.f32.mrf.mxu0
      %v3806 = vadd.f32 0.0, %v3805
      %v3807 = vpop.f32.mrf.mxu0
      %v3808 = vadd.f32 0.0, %v3807
      %v3809 = vpop.f32.mrf.mxu0
      %v3810 = vadd.f32 0.0, %v3809
      %3811 = vmatprep.mubr.bf16.mxu0 0
      %3812 = vmatmul.mubr.bf16.gmra.mxu0 %v688
      %v3813 = vpop.f32.mrf.mxu0
      %v3814 = vadd.f32 0.0, %v3813
      %v3815 = vpop.f32.mrf.mxu0
      %v3816 = vadd.f32 0.0, %v3815
      %v3817 = vpop.f32.mrf.mxu0
      %v3818 = vadd.f32 0.0, %v3817
      %v3819 = vpop.f32.mrf.mxu0
      %v3820 = vadd.f32 0.0, %v3819
      %3821 = vmatprep.mubr.bf16.mxu0 0
      %3822 = vmatmul.mubr.bf16.gmra.mxu0 %v691
      %v3823 = vpop.f32.mrf.mxu0
      %v3824 = vadd.f32 0.0, %v3823
      %v3825 = vpop.f32.mrf.mxu0
      %v3826 = vadd.f32 0.0, %v3825
      %v3827 = vpop.f32.mrf.mxu0
      %v3828 = vadd.f32 0.0, %v3827
      %v3829 = vpop.f32.mrf.mxu0
      %v3830 = vadd.f32 0.0, %v3829
      %3831 = vdwg.mxu0
      %3832 = vmatprep.subr.bf16.mxu0 0
      %3833 = vmatpush1.bf16.msra.mxu0 0
      %3834 = vmatprep.subr.bf16.mxu0 0
      %3835 = vmatpush1.bf16.msra.mxu0 0
      %3836 = vmatprep.subr.bf16.mxu0 0
      %3837 = vmatpush1.bf16.msra.mxu0 0
      %3838 = vmatprep.subr.bf16.mxu0 0
      %3839 = vmatpush1.bf16.msra.mxu0 0
      %3840 = vmatprep.subr.bf16.mxu0 0
      %3841 = vmatpush1.bf16.msra.mxu0 0
      %3842 = vmatprep.subr.bf16.mxu0 0
      %3843 = vmatpush1.bf16.msra.mxu0 0
      %3844 = vmatprep.subr.bf16.mxu0 0
      %3845 = vmatpush1.bf16.msra.mxu0 0
      %3846 = vmatprep.subr.bf16.mxu0 %v935
      %3847 = vmatpush1.bf16.msra.mxu0 %v932
      %3848 = vmatprep.subr.bf16.mxu0 0
      %3849 = vmatpush2.bf16.msra.mxu0 0
      %3850 = vmatprep.subr.bf16.mxu0 0
      %3851 = vmatpush2.bf16.msra.mxu0 0
      %3852 = vmatprep.subr.bf16.mxu0 0
      %3853 = vmatpush2.bf16.msra.mxu0 0
      %3854 = vmatprep.subr.bf16.mxu0 0
      %3855 = vmatpush2.bf16.msra.mxu0 0
      %3856 = vmatprep.subr.bf16.mxu0 0
      %3857 = vmatpush2.bf16.msra.mxu0 0
      %3858 = vmatprep.subr.bf16.mxu0 0
      %3859 = vmatpush2.bf16.msra.mxu0 0
      %3860 = vmatprep.subr.bf16.mxu0 0
      %3861 = vmatpush2.bf16.msra.mxu0 0
      %3862 = vmatprep.subr.bf16.mxu0 0
      %3863 = vmatpush2.bf16.msra.mxu0 0
      %3864 = vmatprep.mubr.bf16.mxu0 0
      %3865 = vmatmul.mubr.bf16.gmra.mxu0 %v682
      %v3866 = vpop.f32.mrf.mxu0
      %v3867 = vadd.f32 0.0, %v3866
      %v3868 = vpop.f32.mrf.mxu0
      %v3869 = vadd.f32 0.0, %v3868
      %v3870 = vpop.f32.mrf.mxu0
      %v3871 = vadd.f32 0.0, %v3870
      %v3872 = vpop.f32.mrf.mxu0
      %v3873 = vadd.f32 0.0, %v3872
      %3874 = vmatprep.mubr.bf16.mxu0 0
      %3875 = vmatmul.mubr.bf16.gmra.mxu0 %v685
      %v3876 = vpop.f32.mrf.mxu0
      %v3877 = vadd.f32 0.0, %v3876
      %v3878 = vpop.f32.mrf.mxu0
      %v3879 = vadd.f32 0.0, %v3878
      %v3880 = vpop.f32.mrf.mxu0
      %v3881 = vadd.f32 0.0, %v3880
      %v3882 = vpop.f32.mrf.mxu0
      %v3883 = vadd.f32 0.0, %v3882
      %3884 = vmatprep.mubr.bf16.mxu0 0
      %3885 = vmatmul.mubr.bf16.gmra.mxu0 %v688
      %v3886 = vpop.f32.mrf.mxu0
      %v3887 = vadd.f32 0.0, %v3886
      %v3888 = vpop.f32.mrf.mxu0
      %v3889 = vadd.f32 0.0, %v3888
      %v3890 = vpop.f32.mrf.mxu0
      %v3891 = vadd.f32 0.0, %v3890
      %v3892 = vpop.f32.mrf.mxu0
      %v3893 = vadd.f32 0.0, %v3892
      %3894 = vmatprep.mubr.bf16.mxu0 0
      %3895 = vmatmul.mubr.bf16.gmra.mxu0 %v691
      %v3896 = vpop.f32.mrf.mxu0
      %v3897 = vadd.f32 0.0, %v3896
      %v3898 = vpop.f32.mrf.mxu0
      %v3899 = vadd.f32 0.0, %v3898
      %v3900 = vpop.f32.mrf.mxu0
      %v3901 = vadd.f32 0.0, %v3900
      %v3902 = vpop.f32.mrf.mxu0
      %v3903 = vadd.f32 0.0, %v3902
      %3904 = vdwg.mxu0
      %3905 = vmatprep.subr.bf16.mxu0 0
      %3906 = vmatpush1.bf16.msra.mxu0 0
      %3907 = vmatprep.subr.bf16.mxu0 0
      %3908 = vmatpush1.bf16.msra.mxu0 0
      %3909 = vmatprep.subr.bf16.mxu0 0
      %3910 = vmatpush1.bf16.msra.mxu0 0
      %3911 = vmatprep.subr.bf16.mxu0 0
      %3912 = vmatpush1.bf16.msra.mxu0 0
      %3913 = vmatprep.subr.bf16.mxu0 0
      %3914 = vmatpush1.bf16.msra.mxu0 0
      %3915 = vmatprep.subr.bf16.mxu0 0
      %3916 = vmatpush1.bf16.msra.mxu0 0
      %3917 = vmatprep.subr.bf16.mxu0 0
      %3918 = vmatpush1.bf16.msra.mxu0 0
      %3919 = vmatprep.subr.bf16.mxu0 %v941
      %3920 = vmatpush1.bf16.msra.mxu0 %v938
      %3921 = vmatprep.subr.bf16.mxu0 0
      %3922 = vmatpush2.bf16.msra.mxu0 0
      %3923 = vmatprep.subr.bf16.mxu0 0
      %3924 = vmatpush2.bf16.msra.mxu0 0
      %3925 = vmatprep.subr.bf16.mxu0 0
      %3926 = vmatpush2.bf16.msra.mxu0 0
      %3927 = vmatprep.subr.bf16.mxu0 0
      %3928 = vmatpush2.bf16.msra.mxu0 0
      %3929 = vmatprep.subr.bf16.mxu0 0
      %3930 = vmatpush2.bf16.msra.mxu0 0
      %3931 = vmatprep.subr.bf16.mxu0 0
      %3932 = vmatpush2.bf16.msra.mxu0 0
      %3933 = vmatprep.subr.bf16.mxu0 0
      %3934 = vmatpush2.bf16.msra.mxu0 0
      %3935 = vmatprep.subr.bf16.mxu0 0
      %3936 = vmatpush2.bf16.msra.mxu0 0
      %3937 = vmatprep.mubr.bf16.mxu0 0
      %3938 = vmatmul.mubr.bf16.gmra.mxu0 %v682
      %v3939 = vpop.f32.mrf.mxu0
      %v3940 = vadd.f32 0.0, %v3939
      %v3941 = vpop.f32.mrf.mxu0
      %v3942 = vadd.f32 0.0, %v3941
      %v3943 = vpop.f32.mrf.mxu0
      %v3944 = vadd.f32 0.0, %v3943
      %v3945 = vpop.f32.mrf.mxu0
      %v3946 = vadd.f32 0.0, %v3945
      %3947 = vmatprep.mubr.bf16.mxu0 0
      %3948 = vmatmul.mubr.bf16.gmra.mxu0 %v685
      %v3949 = vpop.f32.mrf.mxu0
      %v3950 = vadd.f32 0.0, %v3949
      %v3951 = vpop.f32.mrf.mxu0
      %v3952 = vadd.f32 0.0, %v3951
      %v3953 = vpop.f32.mrf.mxu0
      %v3954 = vadd.f32 0.0, %v3953
      %v3955 = vpop.f32.mrf.mxu0
      %v3956 = vadd.f32 0.0, %v3955
      %3957 = vmatprep.mubr.bf16.mxu0 0
      %3958 = vmatmul.mubr.bf16.gmra.mxu0 %v688
      %v3959 = vpop.f32.mrf.mxu0
      %v3960 = vadd.f32 0.0, %v3959
      %v3961 = vpop.f32.mrf.mxu0
      %v3962 = vadd.f32 0.0, %v3961
      %v3963 = vpop.f32.mrf.mxu0
      %v3964 = vadd.f32 0.0, %v3963
      %v3965 = vpop.f32.mrf.mxu0
      %v3966 = vadd.f32 0.0, %v3965
      %3967 = vmatprep.mubr.bf16.mxu0 0
      %3968 = vmatmul.mubr.bf16.gmra.mxu0 %v691
      %v3969 = vpop.f32.mrf.mxu0
      %v3970 = vadd.f32 0.0, %v3969
      %v3971 = vpop.f32.mrf.mxu0
      %v3972 = vadd.f32 0.0, %v3971
      %v3973 = vpop.f32.mrf.mxu0
      %v3974 = vadd.f32 0.0, %v3973
      %v3975 = vpop.f32.mrf.mxu0
      %v3976 = vadd.f32 0.0, %v3975
      %3977 = vdwg.mxu0
      %3978 = vmatprep.subr.bf16.mxu0 0
      %3979 = vmatpush1.bf16.msra.mxu0 0
      %3980 = vmatprep.subr.bf16.mxu0 0
      %3981 = vmatpush1.bf16.msra.mxu0 0
      %3982 = vmatprep.subr.bf16.mxu0 0
      %3983 = vmatpush1.bf16.msra.mxu0 0
      %3984 = vmatprep.subr.bf16.mxu0 0
      %3985 = vmatpush1.bf16.msra.mxu0 0
      %3986 = vmatprep.subr.bf16.mxu0 0
      %3987 = vmatpush1.bf16.msra.mxu0 0
      %3988 = vmatprep.subr.bf16.mxu0 0
      %3989 = vmatpush1.bf16.msra.mxu0 0
      %3990 = vmatprep.subr.bf16.mxu0 0
      %3991 = vmatpush1.bf16.msra.mxu0 0
      %3992 = vmatprep.subr.bf16.mxu0 %v947
      %3993 = vmatpush1.bf16.msra.mxu0 %v944
      %3994 = vmatprep.subr.bf16.mxu0 0
      %3995 = vmatpush2.bf16.msra.mxu0 0
      %3996 = vmatprep.subr.bf16.mxu0 0
      %3997 = vmatpush2.bf16.msra.mxu0 0
      %3998 = vmatprep.subr.bf16.mxu0 0
      %3999 = vmatpush2.bf16.msra.mxu0 0
      %4000 = vmatprep.subr.bf16.mxu0 0
      %4001 = vmatpush2.bf16.msra.mxu0 0
      %4002 = vmatprep.subr.bf16.mxu0 0
      %4003 = vmatpush2.bf16.msra.mxu0 0
      %4004 = vmatprep.subr.bf16.mxu0 0
      %4005 = vmatpush2.bf16.msra.mxu0 0
      %4006 = vmatprep.subr.bf16.mxu0 0
      %4007 = vmatpush2.bf16.msra.mxu0 0
      %4008 = vmatprep.subr.bf16.mxu0 0
      %4009 = vmatpush2.bf16.msra.mxu0 0
      %4010 = vmatprep.mubr.bf16.mxu0 0
      %4011 = vmatmul.mubr.bf16.gmra.mxu0 %v682
      %v4012 = vpop.f32.mrf.mxu0
      %v4013 = vadd.f32 0.0, %v4012
      %v4014 = vpop.f32.mrf.mxu0
      %v4015 = vadd.f32 0.0, %v4014
      %v4016 = vpop.f32.mrf.mxu0
      %v4017 = vadd.f32 0.0, %v4016
      %v4018 = vpop.f32.mrf.mxu0
      %v4019 = vadd.f32 0.0, %v4018
      %4020 = vmatprep.mubr.bf16.mxu0 0
      %4021 = vmatmul.mubr.bf16.gmra.mxu0 %v685
      %v4022 = vpop.f32.mrf.mxu0
      %v4023 = vadd.f32 0.0, %v4022
      %v4024 = vpop.f32.mrf.mxu0
      %v4025 = vadd.f32 0.0, %v4024
      %v4026 = vpop.f32.mrf.mxu0
      %v4027 = vadd.f32 0.0, %v4026
      %v4028 = vpop.f32.mrf.mxu0
      %v4029 = vadd.f32 0.0, %v4028
      %4030 = vmatprep.mubr.bf16.mxu0 0
      %4031 = vmatmul.mubr.bf16.gmra.mxu0 %v688
      %v4032 = vpop.f32.mrf.mxu0
      %v4033 = vadd.f32 0.0, %v4032
      %v4034 = vpop.f32.mrf.mxu0
      %v4035 = vadd.f32 0.0, %v4034
      %v4036 = vpop.f32.mrf.mxu0
      %v4037 = vadd.f32 0.0, %v4036
      %v4038 = vpop.f32.mrf.mxu0
      %v4039 = vadd.f32 0.0, %v4038
      %4040 = vmatprep.mubr.bf16.mxu0 0
      %4041 = vmatmul.mubr.bf16.gmra.mxu0 %v691
      %v4042 = vpop.f32.mrf.mxu0
      %v4043 = vadd.f32 0.0, %v4042
      %v4044 = vpop.f32.mrf.mxu0
      %v4045 = vadd.f32 0.0, %v4044
      %v4046 = vpop.f32.mrf.mxu0
      %v4047 = vadd.f32 0.0, %v4046
      %v4048 = vpop.f32.mrf.mxu0
      %v4049 = vadd.f32 0.0, %v4048
      %4050 = vdwg.mxu0
      %4051 = vmatprep.subr.bf16.mxu0 0
      %4052 = vmatpush1.bf16.msra.mxu0 0
      %4053 = vmatprep.subr.bf16.mxu0 0
      %4054 = vmatpush1.bf16.msra.mxu0 0
      %4055 = vmatprep.subr.bf16.mxu0 0
      %4056 = vmatpush1.bf16.msra.mxu0 0
      %4057 = vmatprep.subr.bf16.mxu0 0
      %4058 = vmatpush1.bf16.msra.mxu0 0
      %4059 = vmatprep.subr.bf16.mxu0 0
      %4060 = vmatpush1.bf16.msra.mxu0 0
      %4061 = vmatprep.subr.bf16.mxu0 0
      %4062 = vmatpush1.bf16.msra.mxu0 0
      %4063 = vmatprep.subr.bf16.mxu0 0
      %4064 = vmatpush1.bf16.msra.mxu0 0
      %4065 = vmatprep.subr.bf16.mxu0 %v953
      %4066 = vmatpush1.bf16.msra.mxu0 %v950
      %4067 = vmatprep.subr.bf16.mxu0 0
      %4068 = vmatpush2.bf16.msra.mxu0 0
      %4069 = vmatprep.subr.bf16.mxu0 0
      %4070 = vmatpush2.bf16.msra.mxu0 0
      %4071 = vmatprep.subr.bf16.mxu0 0
      %4072 = vmatpush2.bf16.msra.mxu0 0
      %4073 = vmatprep.subr.bf16.mxu0 0
      %4074 = vmatpush2.bf16.msra.mxu0 0
      %4075 = vmatprep.subr.bf16.mxu0 0
      %4076 = vmatpush2.bf16.msra.mxu0 0
      %4077 = vmatprep.subr.bf16.mxu0 0
      %4078 = vmatpush2.bf16.msra.mxu0 0
      %4079 = vmatprep.subr.bf16.mxu0 0
      %4080 = vmatpush2.bf16.msra.mxu0 0
      %4081 = vmatprep.subr.bf16.mxu0 0
      %4082 = vmatpush2.bf16.msra.mxu0 0
      %4083 = vmatprep.mubr.bf16.mxu0 0
      %4084 = vmatmul.mubr.bf16.gmra.mxu0 %v682
      %v4085 = vpop.f32.mrf.mxu0
      %v4086 = vadd.f32 0.0, %v4085
      %v4087 = vpop.f32.mrf.mxu0
      %v4088 = vadd.f32 0.0, %v4087
      %v4089 = vpop.f32.mrf.mxu0
      %v4090 = vadd.f32 0.0, %v4089
      %v4091 = vpop.f32.mrf.mxu0
      %v4092 = vadd.f32 0.0, %v4091
      %4093 = vmatprep.mubr.bf16.mxu0 0
      %4094 = vmatmul.mubr.bf16.gmra.mxu0 %v685
      %v4095 = vpop.f32.mrf.mxu0
      %v4096 = vadd.f32 0.0, %v4095
      %v4097 = vpop.f32.mrf.mxu0
      %v4098 = vadd.f32 0.0, %v4097
      %v4099 = vpop.f32.mrf.mxu0
      %v4100 = vadd.f32 0.0, %v4099
      %v4101 = vpop.f32.mrf.mxu0
      %v4102 = vadd.f32 0.0, %v4101
      %4103 = vmatprep.mubr.bf16.mxu0 0
      %4104 = vmatmul.mubr.bf16.gmra.mxu0 %v688
      %v4105 = vpop.f32.mrf.mxu0
      %v4106 = vadd.f32 0.0, %v4105
      %v4107 = vpop.f32.mrf.mxu0
      %v4108 = vadd.f32 0.0, %v4107
      %v4109 = vpop.f32.mrf.mxu0
      %v4110 = vadd.f32 0.0, %v4109
      %v4111 = vpop.f32.mrf.mxu0
      %v4112 = vadd.f32 0.0, %v4111
      %4113 = vmatprep.mubr.bf16.mxu0 0
      %4114 = vmatmul.mubr.bf16.gmra.mxu0 %v691
      %v4115 = vpop.f32.mrf.mxu0
      %v4116 = vadd.f32 0.0, %v4115
      %v4117 = vpop.f32.mrf.mxu0
      %v4118 = vadd.f32 0.0, %v4117
      %v4119 = vpop.f32.mrf.mxu0
      %v4120 = vadd.f32 0.0, %v4119
      %v4121 = vpop.f32.mrf.mxu0
      %v4122 = vadd.f32 0.0, %v4121
      %4123 = vdwg.mxu0
      %4124 = vmatprep.subr.bf16.mxu0 0
      %4125 = vmatpush1.bf16.msra.mxu0 0
      %4126 = vmatprep.subr.bf16.mxu0 0
      %4127 = vmatpush1.bf16.msra.mxu0 0
      %4128 = vmatprep.subr.bf16.mxu0 0
      %4129 = vmatpush1.bf16.msra.mxu0 0
      %4130 = vmatprep.subr.bf16.mxu0 0
      %4131 = vmatpush1.bf16.msra.mxu0 0
      %4132 = vmatprep.subr.bf16.mxu0 0
      %4133 = vmatpush1.bf16.msra.mxu0 0
      %4134 = vmatprep.subr.bf16.mxu0 0
      %4135 = vmatpush1.bf16.msra.mxu0 0
      %4136 = vmatprep.subr.bf16.mxu0 0
      %4137 = vmatpush1.bf16.msra.mxu0 0
      %4138 = vmatprep.subr.bf16.mxu0 %v959
      %4139 = vmatpush1.bf16.msra.mxu0 %v956
      %4140 = vmatprep.subr.bf16.mxu0 0
      %4141 = vmatpush2.bf16.msra.mxu0 0
      %4142 = vmatprep.subr.bf16.mxu0 0
      %4143 = vmatpush2.bf16.msra.mxu0 0
      %4144 = vmatprep.subr.bf16.mxu0 0
      %4145 = vmatpush2.bf16.msra.mxu0 0
      %4146 = vmatprep.subr.bf16.mxu0 0
      %4147 = vmatpush2.bf16.msra.mxu0 0
      %4148 = vmatprep.subr.bf16.mxu0 0
      %4149 = vmatpush2.bf16.msra.mxu0 0
      %4150 = vmatprep.subr.bf16.mxu0 0
      %4151 = vmatpush2.bf16.msra.mxu0 0
      %4152 = vmatprep.subr.bf16.mxu0 0
      %4153 = vmatpush2.bf16.msra.mxu0 0
      %4154 = vmatprep.subr.bf16.mxu0 0
      %4155 = vmatpush2.bf16.msra.mxu0 0
      %4156 = vmatprep.mubr.bf16.mxu0 0
      %4157 = vmatmul.mubr.bf16.gmra.mxu0 %v682
      %v4158 = vpop.f32.mrf.mxu0
      %v4159 = vadd.f32 0.0, %v4158
      %v4160 = vpop.f32.mrf.mxu0
      %v4161 = vadd.f32 0.0, %v4160
      %v4162 = vpop.f32.mrf.mxu0
      %v4163 = vadd.f32 0.0, %v4162
      %v4164 = vpop.f32.mrf.mxu0
      %v4165 = vadd.f32 0.0, %v4164
      %4166 = vmatprep.mubr.bf16.mxu0 0
      %4167 = vmatmul.mubr.bf16.gmra.mxu0 %v685
      %v4168 = vpop.f32.mrf.mxu0
      %v4169 = vadd.f32 0.0, %v4168
      %v4170 = vpop.f32.mrf.mxu0
      %v4171 = vadd.f32 0.0, %v4170
      %v4172 = vpop.f32.mrf.mxu0
      %v4173 = vadd.f32 0.0, %v4172
      %v4174 = vpop.f32.mrf.mxu0
      %v4175 = vadd.f32 0.0, %v4174
      %4176 = vmatprep.mubr.bf16.mxu0 0
      %4177 = vmatmul.mubr.bf16.gmra.mxu0 %v688
      %v4178 = vpop.f32.mrf.mxu0
      %v4179 = vadd.f32 0.0, %v4178
      %v4180 = vpop.f32.mrf.mxu0
      %v4181 = vadd.f32 0.0, %v4180
      %v4182 = vpop.f32.mrf.mxu0
      %v4183 = vadd.f32 0.0, %v4182
      %v4184 = vpop.f32.mrf.mxu0
      %v4185 = vadd.f32 0.0, %v4184
      %4186 = vmatprep.mubr.bf16.mxu0 0
      %4187 = vmatmul.mubr.bf16.gmra.mxu0 %v691
      %v4188 = vpop.f32.mrf.mxu0
      %v4189 = vadd.f32 0.0, %v4188
      %v4190 = vpop.f32.mrf.mxu0
      %v4191 = vadd.f32 0.0, %v4190
      %v4192 = vpop.f32.mrf.mxu0
      %v4193 = vadd.f32 0.0, %v4192
      %v4194 = vpop.f32.mrf.mxu0
      %v4195 = vadd.f32 0.0, %v4194
      %4196 = vdwg.mxu0
      %4197 = vmatprep.subr.bf16.mxu0 0
      %4198 = vmatpush1.bf16.msra.mxu0 0
      %4199 = vmatprep.subr.bf16.mxu0 0
      %4200 = vmatpush1.bf16.msra.mxu0 0
      %4201 = vmatprep.subr.bf16.mxu0 0
      %4202 = vmatpush1.bf16.msra.mxu0 0
      %4203 = vmatprep.subr.bf16.mxu0 0
      %4204 = vmatpush1.bf16.msra.mxu0 0
      %4205 = vmatprep.subr.bf16.mxu0 0
      %4206 = vmatpush1.bf16.msra.mxu0 0
      %4207 = vmatprep.subr.bf16.mxu0 0
      %4208 = vmatpush1.bf16.msra.mxu0 0
      %4209 = vmatprep.subr.bf16.mxu0 0
      %4210 = vmatpush1.bf16.msra.mxu0 0
      %4211 = vmatprep.subr.bf16.mxu0 %v965
      %4212 = vmatpush1.bf16.msra.mxu0 %v962
      %4213 = vmatprep.subr.bf16.mxu0 0
      %4214 = vmatpush2.bf16.msra.mxu0 0
      %4215 = vmatprep.subr.bf16.mxu0 0
      %4216 = vmatpush2.bf16.msra.mxu0 0
      %4217 = vmatprep.subr.bf16.mxu0 0
      %4218 = vmatpush2.bf16.msra.mxu0 0
      %4219 = vmatprep.subr.bf16.mxu0 0
      %4220 = vmatpush2.bf16.msra.mxu0 0
      %4221 = vmatprep.subr.bf16.mxu0 0
      %4222 = vmatpush2.bf16.msra.mxu0 0
      %4223 = vmatprep.subr.bf16.mxu0 0
      %4224 = vmatpush2.bf16.msra.mxu0 0
      %4225 = vmatprep.subr.bf16.mxu0 0
      %4226 = vmatpush2.bf16.msra.mxu0 0
      %4227 = vmatprep.subr.bf16.mxu0 0
      %4228 = vmatpush2.bf16.msra.mxu0 0
      %4229 = vmatprep.mubr.bf16.mxu0 0
      %4230 = vmatmul.mubr.bf16.gmra.mxu0 %v682
      %v4231 = vpop.f32.mrf.mxu0
      %v4232 = vadd.f32 0.0, %v4231
      %v4233 = vpop.f32.mrf.mxu0
      %v4234 = vadd.f32 0.0, %v4233
      %v4235 = vpop.f32.mrf.mxu0
      %v4236 = vadd.f32 0.0, %v4235
      %v4237 = vpop.f32.mrf.mxu0
      %v4238 = vadd.f32 0.0, %v4237
      %4239 = vmatprep.mubr.bf16.mxu0 0
      %4240 = vmatmul.mubr.bf16.gmra.mxu0 %v685
      %v4241 = vpop.f32.mrf.mxu0
      %v4242 = vadd.f32 0.0, %v4241
      %v4243 = vpop.f32.mrf.mxu0
      %v4244 = vadd.f32 0.0, %v4243
      %v4245 = vpop.f32.mrf.mxu0
      %v4246 = vadd.f32 0.0, %v4245
      %v4247 = vpop.f32.mrf.mxu0
      %v4248 = vadd.f32 0.0, %v4247
      %4249 = vmatprep.mubr.bf16.mxu0 0
      %4250 = vmatmul.mubr.bf16.gmra.mxu0 %v688
      %v4251 = vpop.f32.mrf.mxu0
      %v4252 = vadd.f32 0.0, %v4251
      %v4253 = vpop.f32.mrf.mxu0
      %v4254 = vadd.f32 0.0, %v4253
      %v4255 = vpop.f32.mrf.mxu0
      %v4256 = vadd.f32 0.0, %v4255
      %v4257 = vpop.f32.mrf.mxu0
      %v4258 = vadd.f32 0.0, %v4257
      %4259 = vmatprep.mubr.bf16.mxu0 0
      %4260 = vmatmul.mubr.bf16.gmra.mxu0 %v691
      %v4261 = vpop.f32.mrf.mxu0
      %v4262 = vadd.f32 0.0, %v4261
      %v4263 = vpop.f32.mrf.mxu0
      %v4264 = vadd.f32 0.0, %v4263
      %v4265 = vpop.f32.mrf.mxu0
      %v4266 = vadd.f32 0.0, %v4265
      %v4267 = vpop.f32.mrf.mxu0
      %v4268 = vadd.f32 0.0, %v4267
      %4269 = vdwg.mxu0
      %4270 = vmatprep.subr.bf16.mxu0 0
      %4271 = vmatpush1.bf16.msra.mxu0 0
      %4272 = vmatprep.subr.bf16.mxu0 0
      %4273 = vmatpush1.bf16.msra.mxu0 0
      %4274 = vmatprep.subr.bf16.mxu0 0
      %4275 = vmatpush1.bf16.msra.mxu0 0
      %4276 = vmatprep.subr.bf16.mxu0 0
      %4277 = vmatpush1.bf16.msra.mxu0 0
      %4278 = vmatprep.subr.bf16.mxu0 0
      %4279 = vmatpush1.bf16.msra.mxu0 0
      %4280 = vmatprep.subr.bf16.mxu0 0
      %4281 = vmatpush1.bf16.msra.mxu0 0
      %4282 = vmatprep.subr.bf16.mxu0 0
      %4283 = vmatpush1.bf16.msra.mxu0 0
      %4284 = vmatprep.subr.bf16.mxu0 %v971
      %4285 = vmatpush1.bf16.msra.mxu0 %v968
      %4286 = vmatprep.subr.bf16.mxu0 0
      %4287 = vmatpush2.bf16.msra.mxu0 0
      %4288 = vmatprep.subr.bf16.mxu0 0
      %4289 = vmatpush2.bf16.msra.mxu0 0
      %4290 = vmatprep.subr.bf16.mxu0 0
      %4291 = vmatpush2.bf16.msra.mxu0 0
      %4292 = vmatprep.subr.bf16.mxu0 0
      %4293 = vmatpush2.bf16.msra.mxu0 0
      %4294 = vmatprep.subr.bf16.mxu0 0
      %4295 = vmatpush2.bf16.msra.mxu0 0
      %4296 = vmatprep.subr.bf16.mxu0 0
      %4297 = vmatpush2.bf16.msra.mxu0 0
      %4298 = vmatprep.subr.bf16.mxu0 0
      %4299 = vmatpush2.bf16.msra.mxu0 0
      %4300 = vmatprep.subr.bf16.mxu0 0
      %4301 = vmatpush2.bf16.msra.mxu0 0
      %4302 = vmatprep.mubr.bf16.mxu0 0
      %4303 = vmatmul.mubr.bf16.gmra.mxu0 %v682
      %v4304 = vpop.f32.mrf.mxu0
      %v4305 = vadd.f32 0.0, %v4304
      %v4306 = vpop.f32.mrf.mxu0
      %v4307 = vadd.f32 0.0, %v4306
      %v4308 = vpop.f32.mrf.mxu0
      %v4309 = vadd.f32 0.0, %v4308
      %v4310 = vpop.f32.mrf.mxu0
      %v4311 = vadd.f32 0.0, %v4310
      %4312 = vmatprep.mubr.bf16.mxu0 0
      %4313 = vmatmul.mubr.bf16.gmra.mxu0 %v685
      %v4314 = vpop.f32.mrf.mxu0
      %v4315 = vadd.f32 0.0, %v4314
      %v4316 = vpop.f32.mrf.mxu0
      %v4317 = vadd.f32 0.0, %v4316
      %v4318 = vpop.f32.mrf.mxu0
      %v4319 = vadd.f32 0.0, %v4318
      %v4320 = vpop.f32.mrf.mxu0
      %v4321 = vadd.f32 0.0, %v4320
      %4322 = vmatprep.mubr.bf16.mxu0 0
      %4323 = vmatmul.mubr.bf16.gmra.mxu0 %v688
      %v4324 = vpop.f32.mrf.mxu0
      %v4325 = vadd.f32 0.0, %v4324
      %v4326 = vpop.f32.mrf.mxu0
      %v4327 = vadd.f32 0.0, %v4326
      %v4328 = vpop.f32.mrf.mxu0
      %v4329 = vadd.f32 0.0, %v4328
      %v4330 = vpop.f32.mrf.mxu0
      %v4331 = vadd.f32 0.0, %v4330
      %4332 = vmatprep.mubr.bf16.mxu0 0
      %4333 = vmatmul.mubr.bf16.gmra.mxu0 %v691
      %v4334 = vpop.f32.mrf.mxu0
      %v4335 = vadd.f32 0.0, %v4334
      %v4336 = vpop.f32.mrf.mxu0
      %v4337 = vadd.f32 0.0, %v4336
      %v4338 = vpop.f32.mrf.mxu0
      %v4339 = vadd.f32 0.0, %v4338
      %v4340 = vpop.f32.mrf.mxu0
      %v4341 = vadd.f32 0.0, %v4340
      %4342 = vdwg.mxu0
      %4343 = vmatprep.subr.bf16.mxu0 0
      %4344 = vmatpush1.bf16.msra.mxu0 0
      %4345 = vmatprep.subr.bf16.mxu0 0
      %4346 = vmatpush1.bf16.msra.mxu0 0
      %4347 = vmatprep.subr.bf16.mxu0 0
      %4348 = vmatpush1.bf16.msra.mxu0 0
      %4349 = vmatprep.subr.bf16.mxu0 0
      %4350 = vmatpush1.bf16.msra.mxu0 0
      %4351 = vmatprep.subr.bf16.mxu0 0
      %4352 = vmatpush1.bf16.msra.mxu0 0
      %4353 = vmatprep.subr.bf16.mxu0 0
      %4354 = vmatpush1.bf16.msra.mxu0 0
      %4355 = vmatprep.subr.bf16.mxu0 0
      %4356 = vmatpush1.bf16.msra.mxu0 0
      %4357 = vmatprep.subr.bf16.mxu0 %v977
      %4358 = vmatpush1.bf16.msra.mxu0 %v974
      %4359 = vmatprep.subr.bf16.mxu0 0
      %4360 = vmatpush2.bf16.msra.mxu0 0
      %4361 = vmatprep.subr.bf16.mxu0 0
      %4362 = vmatpush2.bf16.msra.mxu0 0
      %4363 = vmatprep.subr.bf16.mxu0 0
      %4364 = vmatpush2.bf16.msra.mxu0 0
      %4365 = vmatprep.subr.bf16.mxu0 0
      %4366 = vmatpush2.bf16.msra.mxu0 0
      %4367 = vmatprep.subr.bf16.mxu0 0
      %4368 = vmatpush2.bf16.msra.mxu0 0
      %4369 = vmatprep.subr.bf16.mxu0 0
      %4370 = vmatpush2.bf16.msra.mxu0 0
      %4371 = vmatprep.subr.bf16.mxu0 0
      %4372 = vmatpush2.bf16.msra.mxu0 0
      %4373 = vmatprep.subr.bf16.mxu0 0
      %4374 = vmatpush2.bf16.msra.mxu0 0
      %4375 = vmatprep.mubr.bf16.mxu0 0
      %4376 = vmatmul.mubr.bf16.gmra.mxu0 %v682
      %v4377 = vpop.f32.mrf.mxu0
      %v4378 = vadd.f32 0.0, %v4377
      %v4379 = vpop.f32.mrf.mxu0
      %v4380 = vadd.f32 0.0, %v4379
      %v4381 = vpop.f32.mrf.mxu0
      %v4382 = vadd.f32 0.0, %v4381
      %v4383 = vpop.f32.mrf.mxu0
      %v4384 = vadd.f32 0.0, %v4383
      %4385 = vmatprep.mubr.bf16.mxu0 0
      %4386 = vmatmul.mubr.bf16.gmra.mxu0 %v685
      %v4387 = vpop.f32.mrf.mxu0
      %v4388 = vadd.f32 0.0, %v4387
      %v4389 = vpop.f32.mrf.mxu0
      %v4390 = vadd.f32 0.0, %v4389
      %v4391 = vpop.f32.mrf.mxu0
      %v4392 = vadd.f32 0.0, %v4391
      %v4393 = vpop.f32.mrf.mxu0
      %v4394 = vadd.f32 0.0, %v4393
      %4395 = vmatprep.mubr.bf16.mxu0 0
      %4396 = vmatmul.mubr.bf16.gmra.mxu0 %v688
      %v4397 = vpop.f32.mrf.mxu0
      %v4398 = vadd.f32 0.0, %v4397
      %v4399 = vpop.f32.mrf.mxu0
      %v4400 = vadd.f32 0.0, %v4399
      %v4401 = vpop.f32.mrf.mxu0
      %v4402 = vadd.f32 0.0, %v4401
      %v4403 = vpop.f32.mrf.mxu0
      %v4404 = vadd.f32 0.0, %v4403
      %4405 = vmatprep.mubr.bf16.mxu0 0
      %4406 = vmatmul.mubr.bf16.gmra.mxu0 %v691
      %v4407 = vpop.f32.mrf.mxu0
      %v4408 = vadd.f32 0.0, %v4407
      %v4409 = vpop.f32.mrf.mxu0
      %v4410 = vadd.f32 0.0, %v4409
      %v4411 = vpop.f32.mrf.mxu0
      %v4412 = vadd.f32 0.0, %v4411
      %v4413 = vpop.f32.mrf.mxu0
      %v4414 = vadd.f32 0.0, %v4413
      %4415 = vdwg.mxu0
      %4416 = vmatprep.subr.bf16.mxu0 0
      %4417 = vmatpush1.bf16.msra.mxu0 0
      %4418 = vmatprep.subr.bf16.mxu0 0
      %4419 = vmatpush1.bf16.msra.mxu0 0
      %4420 = vmatprep.subr.bf16.mxu0 0
      %4421 = vmatpush1.bf16.msra.mxu0 0
      %4422 = vmatprep.subr.bf16.mxu0 0
      %4423 = vmatpush1.bf16.msra.mxu0 0
      %4424 = vmatprep.subr.bf16.mxu0 0
      %4425 = vmatpush1.bf16.msra.mxu0 0
      %4426 = vmatprep.subr.bf16.mxu0 0
      %4427 = vmatpush1.bf16.msra.mxu0 0
      %4428 = vmatprep.subr.bf16.mxu0 0
      %4429 = vmatpush1.bf16.msra.mxu0 0
      %4430 = vmatprep.subr.bf16.mxu0 %v983
      %4431 = vmatpush1.bf16.msra.mxu0 %v980
      %4432 = vmatprep.subr.bf16.mxu0 0
      %4433 = vmatpush2.bf16.msra.mxu0 0
      %4434 = vmatprep.subr.bf16.mxu0 0
      %4435 = vmatpush2.bf16.msra.mxu0 0
      %4436 = vmatprep.subr.bf16.mxu0 0
      %4437 = vmatpush2.bf16.msra.mxu0 0
      %4438 = vmatprep.subr.bf16.mxu0 0
      %4439 = vmatpush2.bf16.msra.mxu0 0
      %4440 = vmatprep.subr.bf16.mxu0 0
      %4441 = vmatpush2.bf16.msra.mxu0 0
      %4442 = vmatprep.subr.bf16.mxu0 0
      %4443 = vmatpush2.bf16.msra.mxu0 0
      %4444 = vmatprep.subr.bf16.mxu0 0
      %4445 = vmatpush2.bf16.msra.mxu0 0
      %4446 = vmatprep.subr.bf16.mxu0 0
      %4447 = vmatpush2.bf16.msra.mxu0 0
      %4448 = vmatprep.mubr.bf16.mxu0 0
      %4449 = vmatmul.mubr.bf16.gmra.mxu0 %v682
      %v4450 = vpop.f32.mrf.mxu0
      %v4451 = vadd.f32 0.0, %v4450
      %v4452 = vpop.f32.mrf.mxu0
      %v4453 = vadd.f32 0.0, %v4452
      %v4454 = vpop.f32.mrf.mxu0
      %v4455 = vadd.f32 0.0, %v4454
      %v4456 = vpop.f32.mrf.mxu0
      %v4457 = vadd.f32 0.0, %v4456
      %4458 = vmatprep.mubr.bf16.mxu0 0
      %4459 = vmatmul.mubr.bf16.gmra.mxu0 %v685
      %v4460 = vpop.f32.mrf.mxu0
      %v4461 = vadd.f32 0.0, %v4460
      %v4462 = vpop.f32.mrf.mxu0
      %v4463 = vadd.f32 0.0, %v4462
      %v4464 = vpop.f32.mrf.mxu0
      %v4465 = vadd.f32 0.0, %v4464
      %v4466 = vpop.f32.mrf.mxu0
      %v4467 = vadd.f32 0.0, %v4466
      %4468 = vmatprep.mubr.bf16.mxu0 0
      %4469 = vmatmul.mubr.bf16.gmra.mxu0 %v688
      %v4470 = vpop.f32.mrf.mxu0
      %v4471 = vadd.f32 0.0, %v4470
      %v4472 = vpop.f32.mrf.mxu0
      %v4473 = vadd.f32 0.0, %v4472
      %v4474 = vpop.f32.mrf.mxu0
      %v4475 = vadd.f32 0.0, %v4474
      %v4476 = vpop.f32.mrf.mxu0
      %v4477 = vadd.f32 0.0, %v4476
      %4478 = vmatprep.mubr.bf16.mxu0 0
      %4479 = vmatmul.mubr.bf16.gmra.mxu0 %v691
      %v4480 = vpop.f32.mrf.mxu0
      %v4481 = vadd.f32 0.0, %v4480
      %v4482 = vpop.f32.mrf.mxu0
      %v4483 = vadd.f32 0.0, %v4482
      %v4484 = vpop.f32.mrf.mxu0
      %v4485 = vadd.f32 0.0, %v4484
      %v4486 = vpop.f32.mrf.mxu0
      %v4487 = vadd.f32 0.0, %v4486
      %4488 = vdwg.mxu0
      %v4489 = vmax.f32 %v1020, %v1896
      %v4490 = vmax.f32 %v1022, %v1898
      %v4491 = vmax.f32 %v1093, %v1969
      %v4492 = vmax.f32 %v1095, %v1971
      %v4493 = vmax.f32 %v1166, %v2042
      %v4494 = vmax.f32 %v1168, %v2044
      %v4495 = vmax.f32 %v1239, %v2115
      %v4496 = vmax.f32 %v1241, %v2117
      %v4497 = vmax.f32 %v1312, %v2188
      %v4498 = vmax.f32 %v1314, %v2190
      %v4499 = vmax.f32 %v1385, %v2261
      %v4500 = vmax.f32 %v1387, %v2263
      %v4501 = vmax.f32 %v1458, %v2334
      %v4502 = vmax.f32 %v1460, %v2336
      %v4503 = vmax.f32 %v1531, %v2407
      %v4504 = vmax.f32 %v1533, %v2409
      %v4505 = vmax.f32 %v1604, %v2480
      %v4506 = vmax.f32 %v1606, %v2482
      %v4507 = vmax.f32 %v1677, %v2553
      %v4508 = vmax.f32 %v1679, %v2555
      %v4509 = vmax.f32 %v1750, %v2626
      %v4510 = vmax.f32 %v1752, %v2628
      %v4511 = vmax.f32 %v1823, %v2699
      %v4512 = vmax.f32 %v1825, %v2701
      %v4513 = vmax.f32 %v1024, %v1900
      %v4514 = vmax.f32 %v1026, %v1902
      %v4515 = vmax.f32 %v1097, %v1973
      %v4516 = vmax.f32 %v1099, %v1975
      %v4517 = vmax.f32 %v1170, %v2046
      %v4518 = vmax.f32 %v1172, %v2048
      %v4519 = vmax.f32 %v1243, %v2119
      %v4520 = vmax.f32 %v1245, %v2121
      %v4521 = vmax.f32 %v1316, %v2192
      %v4522 = vmax.f32 %v1318, %v2194
      %v4523 = vmax.f32 %v1389, %v2265
      %v4524 = vmax.f32 %v1391, %v2267
      %v4525 = vmax.f32 %v1462, %v2338
      %v4526 = vmax.f32 %v1464, %v2340
      %v4527 = vmax.f32 %v1535, %v2411
      %v4528 = vmax.f32 %v1537, %v2413
      %v4529 = vmax.f32 %v1608, %v2484
      %v4530 = vmax.f32 %v1610, %v2486
      %v4531 = vmax.f32 %v1681, %v2557
      %v4532 = vmax.f32 %v1683, %v2559
      %v4533 = vmax.f32 %v1754, %v2630
      %v4534 = vmax.f32 %v1756, %v2632
      %v4535 = vmax.f32 %v1827, %v2703
      %v4536 = vmax.f32 %v1829, %v2705
      %v4537 = vmax.f32 %v1030, %v1906
      %v4538 = vmax.f32 %v1032, %v1908
      %v4539 = vmax.f32 %v1103, %v1979
      %v4540 = vmax.f32 %v1105, %v1981
      %v4541 = vmax.f32 %v1176, %v2052
      %v4542 = vmax.f32 %v1178, %v2054
      %v4543 = vmax.f32 %v1249, %v2125
      %v4544 = vmax.f32 %v1251, %v2127
      %v4545 = vmax.f32 %v1322, %v2198
      %v4546 = vmax.f32 %v1324, %v2200
      %v4547 = vmax.f32 %v1395, %v2271
      %v4548 = vmax.f32 %v1397, %v2273
      %v4549 = vmax.f32 %v1468, %v2344
      %v4550 = vmax.f32 %v1470, %v2346
      %v4551 = vmax.f32 %v1541, %v2417
      %v4552 = vmax.f32 %v1543, %v2419
      %v4553 = vmax.f32 %v1614, %v2490
      %v4554 = vmax.f32 %v1616, %v2492
      %v4555 = vmax.f32 %v1687, %v2563
      %v4556 = vmax.f32 %v1689, %v2565
      %v4557 = vmax.f32 %v1760, %v2636
      %v4558 = vmax.f32 %v1762, %v2638
      %v4559 = vmax.f32 %v1833, %v2709
      %v4560 = vmax.f32 %v1835, %v2711
      %v4561 = vmax.f32 %v1034, %v1910
      %v4562 = vmax.f32 %v1036, %v1912
      %v4563 = vmax.f32 %v1107, %v1983
      %v4564 = vmax.f32 %v1109, %v1985
      %v4565 = vmax.f32 %v1180, %v2056
      %v4566 = vmax.f32 %v1182, %v2058
      %v4567 = vmax.f32 %v1253, %v2129
      %v4568 = vmax.f32 %v1255, %v2131
      %v4569 = vmax.f32 %v1326, %v2202
      %v4570 = vmax.f32 %v1328, %v2204
      %v4571 = vmax.f32 %v1399, %v2275
      %v4572 = vmax.f32 %v1401, %v2277
      %v4573 = vmax.f32 %v1472, %v2348
      %v4574 = vmax.f32 %v1474, %v2350
      %v4575 = vmax.f32 %v1545, %v2421
      %v4576 = vmax.f32 %v1547, %v2423
      %v4577 = vmax.f32 %v1618, %v2494
      %v4578 = vmax.f32 %v1620, %v2496
      %v4579 = vmax.f32 %v1691, %v2567
      %v4580 = vmax.f32 %v1693, %v2569
      %v4581 = vmax.f32 %v1764, %v2640
      %v4582 = vmax.f32 %v1766, %v2642
      %v4583 = vmax.f32 %v1837, %v2713
      %v4584 = vmax.f32 %v1839, %v2715
      %v4585 = vmax.f32 %v1040, %v1916
      %v4586 = vmax.f32 %v1042, %v1918
      %v4587 = vmax.f32 %v1113, %v1989
      %v4588 = vmax.f32 %v1115, %v1991
      %v4589 = vmax.f32 %v1186, %v2062
      %v4590 = vmax.f32 %v1188, %v2064
      %v4591 = vmax.f32 %v1259, %v2135
      %v4592 = vmax.f32 %v1261, %v2137
      %v4593 = vmax.f32 %v1332, %v2208
      %v4594 = vmax.f32 %v1334, %v2210
      %v4595 = vmax.f32 %v1405, %v2281
      %v4596 = vmax.f32 %v1407, %v2283
      %v4597 = vmax.f32 %v1478, %v2354
      %v4598 = vmax.f32 %v1480, %v2356
      %v4599 = vmax.f32 %v1551, %v2427
      %v4600 = vmax.f32 %v1553, %v2429
      %v4601 = vmax.f32 %v1624, %v2500
      %v4602 = vmax.f32 %v1626, %v2502
      %v4603 = vmax.f32 %v1697, %v2573
      %v4604 = vmax.f32 %v1699, %v2575
      %v4605 = vmax.f32 %v1770, %v2646
      %v4606 = vmax.f32 %v1772, %v2648
      %v4607 = vmax.f32 %v1843, %v2719
      %v4608 = vmax.f32 %v1845, %v2721
      %v4609 = vmax.f32 %v1044, %v1920
      %v4610 = vmax.f32 %v1046, %v1922
      %v4611 = vmax.f32 %v1117, %v1993
      %v4612 = vmax.f32 %v1119, %v1995
      %v4613 = vmax.f32 %v1190, %v2066
      %v4614 = vmax.f32 %v1192, %v2068
      %v4615 = vmax.f32 %v1263, %v2139
      %v4616 = vmax.f32 %v1265, %v2141
      %v4617 = vmax.f32 %v1336, %v2212
      %v4618 = vmax.f32 %v1338, %v2214
      %v4619 = vmax.f32 %v1409, %v2285
      %v4620 = vmax.f32 %v1411, %v2287
      %v4621 = vmax.f32 %v1482, %v2358
      %v4622 = vmax.f32 %v1484, %v2360
      %v4623 = vmax.f32 %v1555, %v2431
      %v4624 = vmax.f32 %v1557, %v2433
      %v4625 = vmax.f32 %v1628, %v2504
      %v4626 = vmax.f32 %v1630, %v2506
      %v4627 = vmax.f32 %v1701, %v2577
      %v4628 = vmax.f32 %v1703, %v2579
      %v4629 = vmax.f32 %v1774, %v2650
      %v4630 = vmax.f32 %v1776, %v2652
      %v4631 = vmax.f32 %v1847, %v2723
      %v4632 = vmax.f32 %v1849, %v2725
      %v4633 = vmax.f32 %v1050, %v1926
      %v4634 = vmax.f32 %v1052, %v1928
      %v4635 = vmax.f32 %v1123, %v1999
      %v4636 = vmax.f32 %v1125, %v2001
      %v4637 = vmax.f32 %v1196, %v2072
      %v4638 = vmax.f32 %v1198, %v2074
      %v4639 = vmax.f32 %v1269, %v2145
      %v4640 = vmax.f32 %v1271, %v2147
      %v4641 = vmax.f32 %v1342, %v2218
      %v4642 = vmax.f32 %v1344, %v2220
      %v4643 = vmax.f32 %v1415, %v2291
      %v4644 = vmax.f32 %v1417, %v2293
      %v4645 = vmax.f32 %v1488, %v2364
      %v4646 = vmax.f32 %v1490, %v2366
      %v4647 = vmax.f32 %v1561, %v2437
      %v4648 = vmax.f32 %v1563, %v2439
      %v4649 = vmax.f32 %v1634, %v2510
      %v4650 = vmax.f32 %v1636, %v2512
      %v4651 = vmax.f32 %v1707, %v2583
      %v4652 = vmax.f32 %v1709, %v2585
      %v4653 = vmax.f32 %v1780, %v2656
      %v4654 = vmax.f32 %v1782, %v2658
      %v4655 = vmax.f32 %v1853, %v2729
      %v4656 = vmax.f32 %v1855, %v2731
      %v4657 = vmax.f32 %v1054, %v1930
      %v4658 = vmax.f32 %v1056, %v1932
      %v4659 = vmax.f32 %v1127, %v2003
      %v4660 = vmax.f32 %v1129, %v2005
      %v4661 = vmax.f32 %v1200, %v2076
      %v4662 = vmax.f32 %v1202, %v2078
      %v4663 = vmax.f32 %v1273, %v2149
      %v4664 = vmax.f32 %v1275, %v2151
      %v4665 = vmax.f32 %v1346, %v2222
      %v4666 = vmax.f32 %v1348, %v2224
      %v4667 = vmax.f32 %v1419, %v2295
      %v4668 = vmax.f32 %v1421, %v2297
      %v4669 = vmax.f32 %v1492, %v2368
      %v4670 = vmax.f32 %v1494, %v2370
      %v4671 = vmax.f32 %v1565, %v2441
      %v4672 = vmax.f32 %v1567, %v2443
      %v4673 = vmax.f32 %v1638, %v2514
      %v4674 = vmax.f32 %v1640, %v2516
      %v4675 = vmax.f32 %v1711, %v2587
      %v4676 = vmax.f32 %v1713, %v2589
      %v4677 = vmax.f32 %v1784, %v2660
      %v4678 = vmax.f32 %v1786, %v2662
      %v4679 = vmax.f32 %v1857, %v2733
      %v4680 = vmax.f32 %v1859, %v2735
      %v4681 = vmax.f32 %v2772, %v3648
      %v4682 = vmax.f32 %v2774, %v3650
      %v4683 = vmax.f32 %v2845, %v3721
      %v4684 = vmax.f32 %v2847, %v3723
      %v4685 = vmax.f32 %v2918, %v3794
      %v4686 = vmax.f32 %v2920, %v3796
      %v4687 = vmax.f32 %v2991, %v3867
      %v4688 = vmax.f32 %v2993, %v3869
      %v4689 = vmax.f32 %v3064, %v3940
      %v4690 = vmax.f32 %v3066, %v3942
      %v4691 = vmax.f32 %v3137, %v4013
      %v4692 = vmax.f32 %v3139, %v4015
      %v4693 = vmax.f32 %v3210, %v4086
      %v4694 = vmax.f32 %v3212, %v4088
      %v4695 = vmax.f32 %v3283, %v4159
      %v4696 = vmax.f32 %v3285, %v4161
      %v4697 = vmax.f32 %v3356, %v4232
      %v4698 = vmax.f32 %v3358, %v4234
      %v4699 = vmax.f32 %v3429, %v4305
      %v4700 = vmax.f32 %v3431, %v4307
      %v4701 = vmax.f32 %v3502, %v4378
      %v4702 = vmax.f32 %v3504, %v4380
      %v4703 = vmax.f32 %v3575, %v4451
      %v4704 = vmax.f32 %v3577, %v4453
      %v4705 = vmax.f32 %v2776, %v3652
      %v4706 = vmax.f32 %v2778, %v3654
      %v4707 = vmax.f32 %v2849, %v3725
      %v4708 = vmax.f32 %v2851, %v3727
      %v4709 = vmax.f32 %v2922, %v3798
      %v4710 = vmax.f32 %v2924, %v3800
      %v4711 = vmax.f32 %v2995, %v3871
      %v4712 = vmax.f32 %v2997, %v3873
      %v4713 = vmax.f32 %v3068, %v3944
      %v4714 = vmax.f32 %v3070, %v3946
      %v4715 = vmax.f32 %v3141, %v4017
      %v4716 = vmax.f32 %v3143, %v4019
      %v4717 = vmax.f32 %v3214, %v4090
      %v4718 = vmax.f32 %v3216, %v4092
      %v4719 = vmax.f32 %v3287, %v4163
      %v4720 = vmax.f32 %v3289, %v4165
      %v4721 = vmax.f32 %v3360, %v4236
      %v4722 = vmax.f32 %v3362, %v4238
      %v4723 = vmax.f32 %v3433, %v4309
      %v4724 = vmax.f32 %v3435, %v4311
      %v4725 = vmax.f32 %v3506, %v4382
      %v4726 = vmax.f32 %v3508, %v4384
      %v4727 = vmax.f32 %v3579, %v4455
      %v4728 = vmax.f32 %v3581, %v4457
      %v4729 = vmax.f32 %v2782, %v3658
      %v4730 = vmax.f32 %v2784, %v3660
      %v4731 = vmax.f32 %v2855, %v3731
      %v4732 = vmax.f32 %v2857, %v3733
      %v4733 = vmax.f32 %v2928, %v3804
      %v4734 = vmax.f32 %v2930, %v3806
      %v4735 = vmax.f32 %v3001, %v3877
      %v4736 = vmax.f32 %v3003, %v3879
      %v4737 = vmax.f32 %v3074, %v3950
      %v4738 = vmax.f32 %v3076, %v3952
      %v4739 = vmax.f32 %v3147, %v4023
      %v4740 = vmax.f32 %v3149, %v4025
      %v4741 = vmax.f32 %v3220, %v4096
      %v4742 = vmax.f32 %v3222, %v4098
      %v4743 = vmax.f32 %v3293, %v4169
      %v4744 = vmax.f32 %v3295, %v4171
      %v4745 = vmax.f32 %v3366, %v4242
      %v4746 = vmax.f32 %v3368, %v4244
      %v4747 = vmax.f32 %v3439, %v4315
      %v4748 = vmax.f32 %v3441, %v4317
      %v4749 = vmax.f32 %v3512, %v4388
      %v4750 = vmax.f32 %v3514, %v4390
      %v4751 = vmax.f32 %v3585, %v4461
      %v4752 = vmax.f32 %v3587, %v4463
      %v4753 = vmax.f32 %v2786, %v3662
      %v4754 = vmax.f32 %v2788, %v3664
      %v4755 = vmax.f32 %v2859, %v3735
      %v4756 = vmax.f32 %v2861, %v3737
      %v4757 = vmax.f32 %v2932, %v3808
      %v4758 = vmax.f32 %v2934, %v3810
      %v4759 = vmax.f32 %v3005, %v3881
      %v4760 = vmax.f32 %v3007, %v3883
      %v4761 = vmax.f32 %v3078, %v3954
      %v4762 = vmax.f32 %v3080, %v3956
      %v4763 = vmax.f32 %v3151, %v4027
      %v4764 = vmax.f32 %v3153, %v4029
      %v4765 = vmax.f32 %v3224, %v4100
      %v4766 = vmax.f32 %v3226, %v4102
      %v4767 = vmax.f32 %v3297, %v4173
      %v4768 = vmax.f32 %v3299, %v4175
      %v4769 = vmax.f32 %v3370, %v4246
      %v4770 = vmax.f32 %v3372, %v4248
      %v4771 = vmax.f32 %v3443, %v4319
      %v4772 = vmax.f32 %v3445, %v4321
      %v4773 = vmax.f32 %v3516, %v4392
      %v4774 = vmax.f32 %v3518, %v4394
      %v4775 = vmax.f32 %v3589, %v4465
      %v4776 = vmax.f32 %v3591, %v4467
      %v4777 = vmax.f32 %v2792, %v3668
      %v4778 = vmax.f32 %v2794, %v3670
      %v4779 = vmax.f32 %v2865, %v3741
      %v4780 = vmax.f32 %v2867, %v3743
      %v4781 = vmax.f32 %v2938, %v3814
      %v4782 = vmax.f32 %v2940, %v3816
      %v4783 = vmax.f32 %v3011, %v3887
      %v4784 = vmax.f32 %v3013, %v3889
      %v4785 = vmax.f32 %v3084, %v3960
      %v4786 = vmax.f32 %v3086, %v3962
      %v4787 = vmax.f32 %v3157, %v4033
      %v4788 = vmax.f32 %v3159, %v4035
      %v4789 = vmax.f32 %v3230, %v4106
      %v4790 = vmax.f32 %v3232, %v4108
      %v4791 = vmax.f32 %v3303, %v4179
      %v4792 = vmax.f32 %v3305, %v4181
      %v4793 = vmax.f32 %v3376, %v4252
      %v4794 = vmax.f32 %v3378, %v4254
      %v4795 = vmax.f32 %v3449, %v4325
      %v4796 = vmax.f32 %v3451, %v4327
      %v4797 = vmax.f32 %v3522, %v4398
      %v4798 = vmax.f32 %v3524, %v4400
      %v4799 = vmax.f32 %v3595, %v4471
      %v4800 = vmax.f32 %v3597, %v4473
      %v4801 = vmax.f32 %v2796, %v3672
      %v4802 = vmax.f32 %v2798, %v3674
      %v4803 = vmax.f32 %v2869, %v3745
      %v4804 = vmax.f32 %v2871, %v3747
      %v4805 = vmax.f32 %v2942, %v3818
      %v4806 = vmax.f32 %v2944, %v3820
      %v4807 = vmax.f32 %v3015, %v3891
      %v4808 = vmax.f32 %v3017, %v3893
      %v4809 = vmax.f32 %v3088, %v3964
      %v4810 = vmax.f32 %v3090, %v3966
      %v4811 = vmax.f32 %v3161, %v4037
      %v4812 = vmax.f32 %v3163, %v4039
      %v4813 = vmax.f32 %v3234, %v4110
      %v4814 = vmax.f32 %v3236, %v4112
      %v4815 = vmax.f32 %v3307, %v4183
      %v4816 = vmax.f32 %v3309, %v4185
      %v4817 = vmax.f32 %v3380, %v4256
      %v4818 = vmax.f32 %v3382, %v4258
      %v4819 = vmax.f32 %v3453, %v4329
      %v4820 = vmax.f32 %v3455, %v4331
      %v4821 = vmax.f32 %v3526, %v4402
      %v4822 = vmax.f32 %v3528, %v4404
      %v4823 = vmax.f32 %v3599, %v4475
      %v4824 = vmax.f32 %v3601, %v4477
      %v4825 = vmax.f32 %v2802, %v3678
      %v4826 = vmax.f32 %v2804, %v3680
      %v4827 = vmax.f32 %v2875, %v3751
      %v4828 = vmax.f32 %v2877, %v3753
      %v4829 = vmax.f32 %v2948, %v3824
      %v4830 = vmax.f32 %v2950, %v3826
      %v4831 = vmax.f32 %v3021, %v3897
      %v4832 = vmax.f32 %v3023, %v3899
      %v4833 = vmax.f32 %v3094, %v3970
      %v4834 = vmax.f32 %v3096, %v3972
      %v4835 = vmax.f32 %v3167, %v4043
      %v4836 = vmax.f32 %v3169, %v4045
      %v4837 = vmax.f32 %v3240, %v4116
      %v4838 = vmax.f32 %v3242, %v4118
      %v4839 = vmax.f32 %v3313, %v4189
      %v4840 = vmax.f32 %v3315, %v4191
      %v4841 = vmax.f32 %v3386, %v4262
      %v4842 = vmax.f32 %v3388, %v4264
      %v4843 = vmax.f32 %v3459, %v4335
      %v4844 = vmax.f32 %v3461, %v4337
      %v4845 = vmax.f32 %v3532, %v4408
      %v4846 = vmax.f32 %v3534, %v4410
      %v4847 = vmax.f32 %v3605, %v4481
      %v4848 = vmax.f32 %v3607, %v4483
      %v4849 = vmax.f32 %v2806, %v3682
      %v4850 = vmax.f32 %v2808, %v3684
      %v4851 = vmax.f32 %v2879, %v3755
      %v4852 = vmax.f32 %v2881, %v3757
      %v4853 = vmax.f32 %v2952, %v3828
      %v4854 = vmax.f32 %v2954, %v3830
      %v4855 = vmax.f32 %v3025, %v3901
      %v4856 = vmax.f32 %v3027, %v3903
      %v4857 = vmax.f32 %v3098, %v3974
      %v4858 = vmax.f32 %v3100, %v3976
      %v4859 = vmax.f32 %v3171, %v4047
      %v4860 = vmax.f32 %v3173, %v4049
      %v4861 = vmax.f32 %v3244, %v4120
      %v4862 = vmax.f32 %v3246, %v4122
      %v4863 = vmax.f32 %v3317, %v4193
      %v4864 = vmax.f32 %v3319, %v4195
      %v4865 = vmax.f32 %v3390, %v4266
      %v4866 = vmax.f32 %v3392, %v4268
      %v4867 = vmax.f32 %v3463, %v4339
      %v4868 = vmax.f32 %v3465, %v4341
      %v4869 = vmax.f32 %v3536, %v4412
      %v4870 = vmax.f32 %v3538, %v4414
      %v4871 = vmax.f32 %v3609, %v4485
      %v4872 = vmax.f32 %v3611, %v4487
      %v4873 = vmax.f32 %v4489, %v4681
      %v4874 = vmax.f32 %v4490, %v4682
      %v4875 = vmax.f32 %v4491, %v4683
      %v4876 = vmax.f32 %v4492, %v4684
      %v4877 = vmax.f32 %v4493, %v4685
      %v4878 = vmax.f32 %v4494, %v4686
      %v4879 = vmax.f32 %v4495, %v4687
      %v4880 = vmax.f32 %v4496, %v4688
      %v4881 = vmax.f32 %v4497, %v4689
      %v4882 = vmax.f32 %v4498, %v4690
      %v4883 = vmax.f32 %v4499, %v4691
      %v4884 = vmax.f32 %v4500, %v4692
      %v4885 = vmax.f32 %v4501, %v4693
      %v4886 = vmax.f32 %v4502, %v4694
      %v4887 = vmax.f32 %v4503, %v4695
      %v4888 = vmax.f32 %v4504, %v4696
      %v4889 = vmax.f32 %v4505, %v4697
      %v4890 = vmax.f32 %v4506, %v4698
      %v4891 = vmax.f32 %v4507, %v4699
      %v4892 = vmax.f32 %v4508, %v4700
      %v4893 = vmax.f32 %v4509, %v4701
      %v4894 = vmax.f32 %v4510, %v4702
      %v4895 = vmax.f32 %v4511, %v4703
      %v4896 = vmax.f32 %v4512, %v4704
      %v4897 = vmax.f32 %v4513, %v4705
      %v4898 = vmax.f32 %v4514, %v4706
      %v4899 = vmax.f32 %v4515, %v4707
      %v4900 = vmax.f32 %v4516, %v4708
      %v4901 = vmax.f32 %v4517, %v4709
      %v4902 = vmax.f32 %v4518, %v4710
      %v4903 = vmax.f32 %v4519, %v4711
      %v4904 = vmax.f32 %v4520, %v4712
      %v4905 = vmax.f32 %v4521, %v4713
      %v4906 = vmax.f32 %v4522, %v4714
      %v4907 = vmax.f32 %v4523, %v4715
      %v4908 = vmax.f32 %v4524, %v4716
      %v4909 = vmax.f32 %v4525, %v4717
      %v4910 = vmax.f32 %v4526, %v4718
      %v4911 = vmax.f32 %v4527, %v4719
      %v4912 = vmax.f32 %v4528, %v4720
      %v4913 = vmax.f32 %v4529, %v4721
      %v4914 = vmax.f32 %v4530, %v4722
      %v4915 = vmax.f32 %v4531, %v4723
      %v4916 = vmax.f32 %v4532, %v4724
      %v4917 = vmax.f32 %v4533, %v4725
      %v4918 = vmax.f32 %v4534, %v4726
      %v4919 = vmax.f32 %v4535, %v4727
      %v4920 = vmax.f32 %v4536, %v4728
      %v4921 = vmax.f32 %v4537, %v4729
      %v4922 = vmax.f32 %v4538, %v4730
      %v4923 = vmax.f32 %v4539, %v4731
      %v4924 = vmax.f32 %v4540, %v4732
      %v4925 = vmax.f32 %v4541, %v4733
      %v4926 = vmax.f32 %v4542, %v4734
      %v4927 = vmax.f32 %v4543, %v4735
      %v4928 = vmax.f32 %v4544, %v4736
      %v4929 = vmax.f32 %v4545, %v4737
      %v4930 = vmax.f32 %v4546, %v4738
      %v4931 = vmax.f32 %v4547, %v4739
      %v4932 = vmax.f32 %v4548, %v4740
      %v4933 = vmax.f32 %v4549, %v4741
      %v4934 = vmax.f32 %v4550, %v4742
      %v4935 = vmax.f32 %v4551, %v4743
      %v4936 = vmax.f32 %v4552, %v4744
      %v4937 = vmax.f32 %v4553, %v4745
      %v4938 = vmax.f32 %v4554, %v4746
      %v4939 = vmax.f32 %v4555, %v4747
      %v4940 = vmax.f32 %v4556, %v4748
      %v4941 = vmax.f32 %v4557, %v4749
      %v4942 = vmax.f32 %v4558, %v4750
      %v4943 = vmax.f32 %v4559, %v4751
      %v4944 = vmax.f32 %v4560, %v4752
      %v4945 = vmax.f32 %v4561, %v4753
      %v4946 = vmax.f32 %v4562, %v4754
      %v4947 = vmax.f32 %v4563, %v4755
      %v4948 = vmax.f32 %v4564, %v4756
      %v4949 = vmax.f32 %v4565, %v4757
      %v4950 = vmax.f32 %v4566, %v4758
      %v4951 = vmax.f32 %v4567, %v4759
      %v4952 = vmax.f32 %v4568, %v4760
      %v4953 = vmax.f32 %v4569, %v4761
      %v4954 = vmax.f32 %v4570, %v4762
      %v4955 = vmax.f32 %v4571, %v4763
      %v4956 = vmax.f32 %v4572, %v4764
      %v4957 = vmax.f32 %v4573, %v4765
      %v4958 = vmax.f32 %v4574, %v4766
      %v4959 = vmax.f32 %v4575, %v4767
      %v4960 = vmax.f32 %v4576, %v4768
      %v4961 = vmax.f32 %v4577, %v4769
      %v4962 = vmax.f32 %v4578, %v4770
      %v4963 = vmax.f32 %v4579, %v4771
      %v4964 = vmax.f32 %v4580, %v4772
      %v4965 = vmax.f32 %v4581, %v4773
      %v4966 = vmax.f32 %v4582, %v4774
      %v4967 = vmax.f32 %v4583, %v4775
      %v4968 = vmax.f32 %v4584, %v4776
      %v4969 = vmax.f32 %v4585, %v4777
      %v4970 = vmax.f32 %v4586, %v4778
      %v4971 = vmax.f32 %v4587, %v4779
      %v4972 = vmax.f32 %v4588, %v4780
      %v4973 = vmax.f32 %v4589, %v4781
      %v4974 = vmax.f32 %v4590, %v4782
      %v4975 = vmax.f32 %v4591, %v4783
      %v4976 = vmax.f32 %v4592, %v4784
      %v4977 = vmax.f32 %v4593, %v4785
      %v4978 = vmax.f32 %v4594, %v4786
      %v4979 = vmax.f32 %v4595, %v4787
      %v4980 = vmax.f32 %v4596, %v4788
      %v4981 = vmax.f32 %v4597, %v4789
      %v4982 = vmax.f32 %v4598, %v4790
      %v4983 = vmax.f32 %v4599, %v4791
      %v4984 = vmax.f32 %v4600, %v4792
      %v4985 = vmax.f32 %v4601, %v4793
      %v4986 = vmax.f32 %v4602, %v4794
      %v4987 = vmax.f32 %v4603, %v4795
      %v4988 = vmax.f32 %v4604, %v4796
      %v4989 = vmax.f32 %v4605, %v4797
      %v4990 = vmax.f32 %v4606, %v4798
      %v4991 = vmax.f32 %v4607, %v4799
      %v4992 = vmax.f32 %v4608, %v4800
      %v4993 = vmax.f32 %v4609, %v4801
      %v4994 = vmax.f32 %v4610, %v4802
      %v4995 = vmax.f32 %v4611, %v4803
      %v4996 = vmax.f32 %v4612, %v4804
      %v4997 = vmax.f32 %v4613, %v4805
      %v4998 = vmax.f32 %v4614, %v4806
      %v4999 = vmax.f32 %v4615, %v4807
      %v5000 = vmax.f32 %v4616, %v4808
      %v5001 = vmax.f32 %v4617, %v4809
      %v5002 = vmax.f32 %v4618, %v4810
      %v5003 = vmax.f32 %v4619, %v4811
      %v5004 = vmax.f32 %v4620, %v4812
      %v5005 = vmax.f32 %v4621, %v4813
      %v5006 = vmax.f32 %v4622, %v4814
      %v5007 = vmax.f32 %v4623, %v4815
      %v5008 = vmax.f32 %v4624, %v4816
      %v5009 = vmax.f32 %v4625, %v4817
      %v5010 = vmax.f32 %v4626, %v4818
      %v5011 = vmax.f32 %v4627, %v4819
      %v5012 = vmax.f32 %v4628, %v4820
      %v5013 = vmax.f32 %v4629, %v4821
      %v5014 = vmax.f32 %v4630, %v4822
      %v5015 = vmax.f32 %v4631, %v4823
      %v5016 = vmax.f32 %v4632, %v4824
      %v5017 = vmax.f32 %v4633, %v4825
      %v5018 = vmax.f32 %v4634, %v4826
      %v5019 = vmax.f32 %v4635, %v4827
      %v5020 = vmax.f32 %v4636, %v4828
      %v5021 = vmax.f32 %v4637, %v4829
      %v5022 = vmax.f32 %v4638, %v4830
      %v5023 = vmax.f32 %v4639, %v4831
      %v5024 = vmax.f32 %v4640, %v4832
      %v5025 = vmax.f32 %v4641, %v4833
      %v5026 = vmax.f32 %v4642, %v4834
      %v5027 = vmax.f32 %v4643, %v4835
      %v5028 = vmax.f32 %v4644, %v4836
      %v5029 = vmax.f32 %v4645, %v4837
      %v5030 = vmax.f32 %v4646, %v4838
      %v5031 = vmax.f32 %v4647, %v4839
      %v5032 = vmax.f32 %v4648, %v4840
      %v5033 = vmax.f32 %v4649, %v4841
      %v5034 = vmax.f32 %v4650, %v4842
      %v5035 = vmax.f32 %v4651, %v4843
      %v5036 = vmax.f32 %v4652, %v4844
      %v5037 = vmax.f32 %v4653, %v4845
      %v5038 = vmax.f32 %v4654, %v4846
      %v5039 = vmax.f32 %v4655, %v4847
      %v5040 = vmax.f32 %v4656, %v4848
      %v5041 = vmax.f32 %v4657, %v4849
      %v5042 = vmax.f32 %v4658, %v4850
      %v5043 = vmax.f32 %v4659, %v4851
      %v5044 = vmax.f32 %v4660, %v4852
      %v5045 = vmax.f32 %v4661, %v4853
      %v5046 = vmax.f32 %v4662, %v4854
      %v5047 = vmax.f32 %v4663, %v4855
      %v5048 = vmax.f32 %v4664, %v4856
      %v5049 = vmax.f32 %v4665, %v4857
      %v5050 = vmax.f32 %v4666, %v4858
      %v5051 = vmax.f32 %v4667, %v4859
      %v5052 = vmax.f32 %v4668, %v4860
      %v5053 = vmax.f32 %v4669, %v4861
      %v5054 = vmax.f32 %v4670, %v4862
      %v5055 = vmax.f32 %v4671, %v4863
      %v5056 = vmax.f32 %v4672, %v4864
      %v5057 = vmax.f32 %v4673, %v4865
      %v5058 = vmax.f32 %v4674, %v4866
      %v5059 = vmax.f32 %v4675, %v4867
      %v5060 = vmax.f32 %v4676, %v4868
      %v5061 = vmax.f32 %v4677, %v4869
      %v5062 = vmax.f32 %v4678, %v4870
      %v5063 = vmax.f32 %v4679, %v4871
      %v5064 = vmax.f32 %v4680, %v4872
      %v5065 = vld [vmem:[%s2] sm:$0xff]
      %v5066 = vld [vmem:[%s2 + $0x8] sm:$0xff]
      %v5067 = vld [vmem:[%s2 + $0x10] sm:$0xff]
      %v5068 = vld [vmem:[%s2 + $0x18] sm:$0xff]
      %v5069 = vld [vmem:[%s2 + $0x20] sm:$0xff]
      %v5070 = vld [vmem:[%s2 + $0x28] sm:$0xff]
      %v5071 = vld [vmem:[%s2 + $0x30] sm:$0xff]
      %v5072 = vld [vmem:[%s2 + $0x38] sm:$0xff]
      %5074 = vset.pattern.permute.xlu0 0
      %5075 = vperm.xlu0 %5074, %v5065
      %v5076 = vpop.permute.xlu0 %5075
      %5079 = vset.pattern.permute.xlu0 0
      %5080 = vperm.xlu0 %5079, %v5066
      %v5081 = vpop.permute.xlu0 %5080
      %5084 = vset.pattern.permute.xlu0 0
      %5085 = vperm.xlu0 %5084, %v5067
      %v5086 = vpop.permute.xlu0 %5085
      %5089 = vset.pattern.permute.xlu0 0
      %5090 = vperm.xlu0 %5089, %v5068
      %v5091 = vpop.permute.xlu0 %5090
      %5094 = vset.pattern.permute.xlu0 0
      %5095 = vperm.xlu0 %5094, %v5069
      %v5096 = vpop.permute.xlu0 %5095
      %5099 = vset.pattern.permute.xlu0 0
      %5100 = vperm.xlu0 %5099, %v5070
      %v5101 = vpop.permute.xlu0 %5100
      %5104 = vset.pattern.permute.xlu0 0
      %5105 = vperm.xlu0 %5104, %v5071
      %v5106 = vpop.permute.xlu0 %5105
      %5109 = vset.pattern.permute.xlu0 0
      %5110 = vperm.xlu0 %5109, %v5072
      %v5111 = vpop.permute.xlu0 %5110
      %v5113 = vadd.f32 %v4873, %v5076
      %v5114 = vadd.f32 %v4874, %v5076
      %v5115 = vadd.f32 %v4875, %v5076
      %v5116 = vadd.f32 %v4876, %v5076
      %v5117 = vadd.f32 %v4877, %v5076
      %v5118 = vadd.f32 %v4878, %v5076
      %v5119 = vadd.f32 %v4879, %v5076
      %v5120 = vadd.f32 %v4880, %v5076
      %v5121 = vadd.f32 %v4881, %v5076
      %v5122 = vadd.f32 %v4882, %v5076
      %v5123 = vadd.f32 %v4883, %v5076
      %v5124 = vadd.f32 %v4884, %v5076
      %v5125 = vadd.f32 %v4885, %v5076
      %v5126 = vadd.f32 %v4886, %v5076
      %v5127 = vadd.f32 %v4887, %v5076
      %v5128 = vadd.f32 %v4888, %v5076
      %v5129 = vadd.f32 %v4889, %v5076
      %v5130 = vadd.f32 %v4890, %v5076
      %v5131 = vadd.f32 %v4891, %v5076
      %v5132 = vadd.f32 %v4892, %v5076
      %v5133 = vadd.f32 %v4893, %v5076
      %v5134 = vadd.f32 %v4894, %v5076
      %v5135 = vadd.f32 %v4895, %v5076
      %v5136 = vadd.f32 %v4896, %v5076
      %v5137 = vadd.f32 %v4897, %v5081
      %v5138 = vadd.f32 %v4898, %v5081
      %v5139 = vadd.f32 %v4899, %v5081
      %v5140 = vadd.f32 %v4900, %v5081
      %v5141 = vadd.f32 %v4901, %v5081
      %v5142 = vadd.f32 %v4902, %v5081
      %v5143 = vadd.f32 %v4903, %v5081
      %v5144 = vadd.f32 %v4904, %v5081
      %v5145 = vadd.f32 %v4905, %v5081
      %v5146 = vadd.f32 %v4906, %v5081
      %v5147 = vadd.f32 %v4907, %v5081
      %v5148 = vadd.f32 %v4908, %v5081
      %v5149 = vadd.f32 %v4909, %v5081
      %v5150 = vadd.f32 %v4910, %v5081
      %v5151 = vadd.f32 %v4911, %v5081
      %v5152 = vadd.f32 %v4912, %v5081
      %v5153 = vadd.f32 %v4913, %v5081
      %v5154 = vadd.f32 %v4914, %v5081
      %v5155 = vadd.f32 %v4915, %v5081
      %v5156 = vadd.f32 %v4916, %v5081
      %v5157 = vadd.f32 %v4917, %v5081
      %v5158 = vadd.f32 %v4918, %v5081
      %v5159 = vadd.f32 %v4919, %v5081
      %v5160 = vadd.f32 %v4920, %v5081
      %v5161 = vadd.f32 %v4921, %v5086
      %v5162 = vadd.f32 %v4922, %v5086
      %v5163 = vadd.f32 %v4923, %v5086
      %v5164 = vadd.f32 %v4924, %v5086
      %v5165 = vadd.f32 %v4925, %v5086
      %v5166 = vadd.f32 %v4926, %v5086
      %v5167 = vadd.f32 %v4927, %v5086
      %v5168 = vadd.f32 %v4928, %v5086
      %v5169 = vadd.f32 %v4929, %v5086
      %v5170 = vadd.f32 %v4930, %v5086
      %v5171 = vadd.f32 %v4931, %v5086
      %v5172 = vadd.f32 %v4932, %v5086
      %v5173 = vadd.f32 %v4933, %v5086
      %v5174 = vadd.f32 %v4934, %v5086
      %v5175 = vadd.f32 %v4935, %v5086
      %v5176 = vadd.f32 %v4936, %v5086
      %v5177 = vadd.f32 %v4937, %v5086
      %v5178 = vadd.f32 %v4938, %v5086
      %v5179 = vadd.f32 %v4939, %v5086
      %v5180 = vadd.f32 %v4940, %v5086
      %v5181 = vadd.f32 %v4941, %v5086
      %v5182 = vadd.f32 %v4942, %v5086
      %v5183 = vadd.f32 %v4943, %v5086
      %v5184 = vadd.f32 %v4944, %v5086
      %v5185 = vadd.f32 %v4945, %v5091
      %v5186 = vadd.f32 %v4946, %v5091
      %v5187 = vadd.f32 %v4947, %v5091
      %v5188 = vadd.f32 %v4948, %v5091
      %v5189 = vadd.f32 %v4949, %v5091
      %v5190 = vadd.f32 %v4950, %v5091
      %v5191 = vadd.f32 %v4951, %v5091
      %v5192 = vadd.f32 %v4952, %v5091
      %v5193 = vadd.f32 %v4953, %v5091
      %v5194 = vadd.f32 %v4954, %v5091
      %v5195 = vadd.f32 %v4955, %v5091
      %v5196 = vadd.f32 %v4956, %v5091
      %v5197 = vadd.f32 %v4957, %v5091
      %v5198 = vadd.f32 %v4958, %v5091
      %v5199 = vadd.f32 %v4959, %v5091
      %v5200 = vadd.f32 %v4960, %v5091
      %v5201 = vadd.f32 %v4961, %v5091
      %v5202 = vadd.f32 %v4962, %v5091
      %v5203 = vadd.f32 %v4963, %v5091
      %v5204 = vadd.f32 %v4964, %v5091
      %v5205 = vadd.f32 %v4965, %v5091
      %v5206 = vadd.f32 %v4966, %v5091
      %v5207 = vadd.f32 %v4967, %v5091
      %v5208 = vadd.f32 %v4968, %v5091
      %v5209 = vadd.f32 %v4969, %v5096
      %v5210 = vadd.f32 %v4970, %v5096
      %v5211 = vadd.f32 %v4971, %v5096
      %v5212 = vadd.f32 %v4972, %v5096
      %v5213 = vadd.f32 %v4973, %v5096
      %v5214 = vadd.f32 %v4974, %v5096
      %v5215 = vadd.f32 %v4975, %v5096
      %v5216 = vadd.f32 %v4976, %v5096
      %v5217 = vadd.f32 %v4977, %v5096
      %v5218 = vadd.f32 %v4978, %v5096
      %v5219 = vadd.f32 %v4979, %v5096
      %v5220 = vadd.f32 %v4980, %v5096
      %v5221 = vadd.f32 %v4981, %v5096
      %v5222 = vadd.f32 %v4982, %v5096
      %v5223 = vadd.f32 %v4983, %v5096
      %v5224 = vadd.f32 %v4984, %v5096
      %v5225 = vadd.f32 %v4985, %v5096
      %v5226 = vadd.f32 %v4986, %v5096
      %v5227 = vadd.f32 %v4987, %v5096
      %v5228 = vadd.f32 %v4988, %v5096
      %v5229 = vadd.f32 %v4989, %v5096
      %v5230 = vadd.f32 %v4990, %v5096
      %v5231 = vadd.f32 %v4991, %v5096
      %v5232 = vadd.f32 %v4992, %v5096
      %v5233 = vadd.f32 %v4993, %v5101
      %v5234 = vadd.f32 %v4994, %v5101
      %v5235 = vadd.f32 %v4995, %v5101
      %v5236 = vadd.f32 %v4996, %v5101
      %v5237 = vadd.f32 %v4997, %v5101
      %v5238 = vadd.f32 %v4998, %v5101
      %v5239 = vadd.f32 %v4999, %v5101
      %v5240 = vadd.f32 %v5000, %v5101
      %v5241 = vadd.f32 %v5001, %v5101
      %v5242 = vadd.f32 %v5002, %v5101
      %v5243 = vadd.f32 %v5003, %v5101
      %v5244 = vadd.f32 %v5004, %v5101
      %v5245 = vadd.f32 %v5005, %v5101
      %v5246 = vadd.f32 %v5006, %v5101
      %v5247 = vadd.f32 %v5007, %v5101
      %v5248 = vadd.f32 %v5008, %v5101
      %v5249 = vadd.f32 %v5009, %v5101
      %v5250 = vadd.f32 %v5010, %v5101
      %v5251 = vadd.f32 %v5011, %v5101
      %v5252 = vadd.f32 %v5012, %v5101
      %v5253 = vadd.f32 %v5013, %v5101
      %v5254 = vadd.f32 %v5014, %v5101
      %v5255 = vadd.f32 %v5015, %v5101
      %v5256 = vadd.f32 %v5016, %v5101
      %v5257 = vadd.f32 %v5017, %v5106
      %v5258 = vadd.f32 %v5018, %v5106
      %v5259 = vadd.f32 %v5019, %v5106
      %v5260 = vadd.f32 %v5020, %v5106
      %v5261 = vadd.f32 %v5021, %v5106
      %v5262 = vadd.f32 %v5022, %v5106
      %v5263 = vadd.f32 %v5023, %v5106
      %v5264 = vadd.f32 %v5024, %v5106
      %v5265 = vadd.f32 %v5025, %v5106
      %v5266 = vadd.f32 %v5026, %v5106
      %v5267 = vadd.f32 %v5027, %v5106
      %v5268 = vadd.f32 %v5028, %v5106
      %v5269 = vadd.f32 %v5029, %v5106
      %v5270 = vadd.f32 %v5030, %v5106
      %v5271 = vadd.f32 %v5031, %v5106
      %v5272 = vadd.f32 %v5032, %v5106
      %v5273 = vadd.f32 %v5033, %v5106
      %v5274 = vadd.f32 %v5034, %v5106
      %v5275 = vadd.f32 %v5035, %v5106
      %v5276 = vadd.f32 %v5036, %v5106
      %v5277 = vadd.f32 %v5037, %v5106
      %v5278 = vadd.f32 %v5038, %v5106
      %v5279 = vadd.f32 %v5039, %v5106
      %v5280 = vadd.f32 %v5040, %v5106
      %v5281 = vadd.f32 %v5041, %v5111
      %v5282 = vadd.f32 %v5042, %v5111
      %v5283 = vadd.f32 %v5043, %v5111
      %v5284 = vadd.f32 %v5044, %v5111
      %v5285 = vadd.f32 %v5045, %v5111
      %v5286 = vadd.f32 %v5046, %v5111
      %v5287 = vadd.f32 %v5047, %v5111
      %v5288 = vadd.f32 %v5048, %v5111
      %v5289 = vadd.f32 %v5049, %v5111
      %v5290 = vadd.f32 %v5050, %v5111
      %v5291 = vadd.f32 %v5051, %v5111
      %v5292 = vadd.f32 %v5052, %v5111
      %v5293 = vadd.f32 %v5053, %v5111
      %v5294 = vadd.f32 %v5054, %v5111
      %v5295 = vadd.f32 %v5055, %v5111
      %v5296 = vadd.f32 %v5056, %v5111
      %v5297 = vadd.f32 %v5057, %v5111
      %v5298 = vadd.f32 %v5058, %v5111
      %v5299 = vadd.f32 %v5059, %v5111
      %v5300 = vadd.f32 %v5060, %v5111
      %v5301 = vadd.f32 %v5061, %v5111
      %v5302 = vadd.f32 %v5062, %v5111
      %v5303 = vadd.f32 %v5063, %v5111
      %v5304 = vadd.f32 %v5064, %v5111
      %v5305 = vmax.f32 %v5113, 0.0
      %v5306 = vmax.f32 %v5114, 0.0
      %v5307 = vmax.f32 %v5115, 0.0
      %v5308 = vmax.f32 %v5116, 0.0
      %v5309 = vmax.f32 %v5117, 0.0
      %v5310 = vmax.f32 %v5118, 0.0
      %v5311 = vmax.f32 %v5119, 0.0
      %v5312 = vmax.f32 %v5120, 0.0
      %v5313 = vmax.f32 %v5121, 0.0
      %v5314 = vmax.f32 %v5122, 0.0
      %v5315 = vmax.f32 %v5123, 0.0
      %v5316 = vmax.f32 %v5124, 0.0
      %v5317 = vmax.f32 %v5125, 0.0
      %v5318 = vmax.f32 %v5126, 0.0
      %v5319 = vmax.f32 %v5127, 0.0
      %v5320 = vmax.f32 %v5128, 0.0
      %v5321 = vmax.f32 %v5129, 0.0
      %v5322 = vmax.f32 %v5130, 0.0
      %v5323 = vmax.f32 %v5131, 0.0
      %v5324 = vmax.f32 %v5132, 0.0
      %v5325 = vmax.f32 %v5133, 0.0
      %v5326 = vmax.f32 %v5134, 0.0
      %v5327 = vmax.f32 %v5135, 0.0
      %v5328 = vmax.f32 %v5136, 0.0
      %v5329 = vmax.f32 %v5137, 0.0
      %v5330 = vmax.f32 %v5138, 0.0
      %v5331 = vmax.f32 %v5139, 0.0
      %v5332 = vmax.f32 %v5140, 0.0
      %v5333 = vmax.f32 %v5141, 0.0
      %v5334 = vmax.f32 %v5142, 0.0
      %v5335 = vmax.f32 %v5143, 0.0
      %v5336 = vmax.f32 %v5144, 0.0
      %v5337 = vmax.f32 %v5145, 0.0
      %v5338 = vmax.f32 %v5146, 0.0
      %v5339 = vmax.f32 %v5147, 0.0
      %v5340 = vmax.f32 %v5148, 0.0
      %v5341 = vmax.f32 %v5149, 0.0
      %v5342 = vmax.f32 %v5150, 0.0
      %v5343 = vmax.f32 %v5151, 0.0
      %v5344 = vmax.f32 %v5152, 0.0
      %v5345 = vmax.f32 %v5153, 0.0
      %v5346 = vmax.f32 %v5154, 0.0
      %v5347 = vmax.f32 %v5155, 0.0
      %v5348 = vmax.f32 %v5156, 0.0
      %v5349 = vmax.f32 %v5157, 0.0
      %v5350 = vmax.f32 %v5158, 0.0
      %v5351 = vmax.f32 %v5159, 0.0
      %v5352 = vmax.f32 %v5160, 0.0
      %v5353 = vmax.f32 %v5161, 0.0
      %v5354 = vmax.f32 %v5162, 0.0
      %v5355 = vmax.f32 %v5163, 0.0
      %v5356 = vmax.f32 %v5164, 0.0
      %v5357 = vmax.f32 %v5165, 0.0
      %v5358 = vmax.f32 %v5166, 0.0
      %v5359 = vmax.f32 %v5167, 0.0
      %v5360 = vmax.f32 %v5168, 0.0
      %v5361 = vmax.f32 %v5169, 0.0
      %v5362 = vmax.f32 %v5170, 0.0
      %v5363 = vmax.f32 %v5171, 0.0
      %v5364 = vmax.f32 %v5172, 0.0
      %v5365 = vmax.f32 %v5173, 0.0
      %v5366 = vmax.f32 %v5174, 0.0
      %v5367 = vmax.f32 %v5175, 0.0
      %v5368 = vmax.f32 %v5176, 0.0
      %v5369 = vmax.f32 %v5177, 0.0
      %v5370 = vmax.f32 %v5178, 0.0
      %v5371 = vmax.f32 %v5179, 0.0
      %v5372 = vmax.f32 %v5180, 0.0
      %v5373 = vmax.f32 %v5181, 0.0
      %v5374 = vmax.f32 %v5182, 0.0
      %v5375 = vmax.f32 %v5183, 0.0
      %v5376 = vmax.f32 %v5184, 0.0
      %v5377 = vmax.f32 %v5185, 0.0
      %v5378 = vmax.f32 %v5186, 0.0
      %v5379 = vmax.f32 %v5187, 0.0
      %v5380 = vmax.f32 %v5188, 0.0
      %v5381 = vmax.f32 %v5189, 0.0
      %v5382 = vmax.f32 %v5190, 0.0
      %v5383 = vmax.f32 %v5191, 0.0
      %v5384 = vmax.f32 %v5192, 0.0
      %v5385 = vmax.f32 %v5193, 0.0
      %v5386 = vmax.f32 %v5194, 0.0
      %v5387 = vmax.f32 %v5195, 0.0
      %v5388 = vmax.f32 %v5196, 0.0
      %v5389 = vmax.f32 %v5197, 0.0
      %v5390 = vmax.f32 %v5198, 0.0
      %v5391 = vmax.f32 %v5199, 0.0
      %v5392 = vmax.f32 %v5200, 0.0
      %v5393 = vmax.f32 %v5201, 0.0
      %v5394 = vmax.f32 %v5202, 0.0
      %v5395 = vmax.f32 %v5203, 0.0
      %v5396 = vmax.f32 %v5204, 0.0
      %v5397 = vmax.f32 %v5205, 0.0
      %v5398 = vmax.f32 %v5206, 0.0
      %v5399 = vmax.f32 %v5207, 0.0
      %v5400 = vmax.f32 %v5208, 0.0
      %v5401 = vmax.f32 %v5209, 0.0
      %v5402 = vmax.f32 %v5210, 0.0
      %v5403 = vmax.f32 %v5211, 0.0
      %v5404 = vmax.f32 %v5212, 0.0
      %v5405 = vmax.f32 %v5213, 0.0
      %v5406 = vmax.f32 %v5214, 0.0
      %v5407 = vmax.f32 %v5215, 0.0
      %v5408 = vmax.f32 %v5216, 0.0
      %v5409 = vmax.f32 %v5217, 0.0
      %v5410 = vmax.f32 %v5218, 0.0
      %v5411 = vmax.f32 %v5219, 0.0
      %v5412 = vmax.f32 %v5220, 0.0
      %v5413 = vmax.f32 %v5221, 0.0
      %v5414 = vmax.f32 %v5222, 0.0
      %v5415 = vmax.f32 %v5223, 0.0
      %v5416 = vmax.f32 %v5224, 0.0
      %v5417 = vmax.f32 %v5225, 0.0
      %v5418 = vmax.f32 %v5226, 0.0
      %v5419 = vmax.f32 %v5227, 0.0
      %v5420 = vmax.f32 %v5228, 0.0
      %v5421 = vmax.f32 %v5229, 0.0
      %v5422 = vmax.f32 %v5230, 0.0
      %v5423 = vmax.f32 %v5231, 0.0
      %v5424 = vmax.f32 %v5232, 0.0
      %v5425 = vmax.f32 %v5233, 0.0
      %v5426 = vmax.f32 %v5234, 0.0
      %v5427 = vmax.f32 %v5235, 0.0
      %v5428 = vmax.f32 %v5236, 0.0
      %v5429 = vmax.f32 %v5237, 0.0
      %v5430 = vmax.f32 %v5238, 0.0
      %v5431 = vmax.f32 %v5239, 0.0
      %v5432 = vmax.f32 %v5240, 0.0
      %v5433 = vmax.f32 %v5241, 0.0
      %v5434 = vmax.f32 %v5242, 0.0
      %v5435 = vmax.f32 %v5243, 0.0
      %v5436 = vmax.f32 %v5244, 0.0
      %v5437 = vmax.f32 %v5245, 0.0
      %v5438 = vmax.f32 %v5246, 0.0
      %v5439 = vmax.f32 %v5247, 0.0
      %v5440 = vmax.f32 %v5248, 0.0
      %v5441 = vmax.f32 %v5249, 0.0
      %v5442 = vmax.f32 %v5250, 0.0
      %v5443 = vmax.f32 %v5251, 0.0
      %v5444 = vmax.f32 %v5252, 0.0
      %v5445 = vmax.f32 %v5253, 0.0
      %v5446 = vmax.f32 %v5254, 0.0
      %v5447 = vmax.f32 %v5255, 0.0
      %v5448 = vmax.f32 %v5256, 0.0
      %v5449 = vmax.f32 %v5257, 0.0
      %v5450 = vmax.f32 %v5258, 0.0
      %v5451 = vmax.f32 %v5259, 0.0
      %v5452 = vmax.f32 %v5260, 0.0
      %v5453 = vmax.f32 %v5261, 0.0
      %v5454 = vmax.f32 %v5262, 0.0
      %v5455 = vmax.f32 %v5263, 0.0
      %v5456 = vmax.f32 %v5264, 0.0
      %v5457 = vmax.f32 %v5265, 0.0
      %v5458 = vmax.f32 %v5266, 0.0
      %v5459 = vmax.f32 %v5267, 0.0
      %v5460 = vmax.f32 %v5268, 0.0
      %v5461 = vmax.f32 %v5269, 0.0
      %v5462 = vmax.f32 %v5270, 0.0
      %v5463 = vmax.f32 %v5271, 0.0
      %v5464 = vmax.f32 %v5272, 0.0
      %v5465 = vmax.f32 %v5273, 0.0
      %v5466 = vmax.f32 %v5274, 0.0
      %v5467 = vmax.f32 %v5275, 0.0
      %v5468 = vmax.f32 %v5276, 0.0
      %v5469 = vmax.f32 %v5277, 0.0
      %v5470 = vmax.f32 %v5278, 0.0
      %v5471 = vmax.f32 %v5279, 0.0
      %v5472 = vmax.f32 %v5280, 0.0
      %v5473 = vmax.f32 %v5281, 0.0
      %v5474 = vmax.f32 %v5282, 0.0
      %v5475 = vmax.f32 %v5283, 0.0
      %v5476 = vmax.f32 %v5284, 0.0
      %v5477 = vmax.f32 %v5285, 0.0
      %v5478 = vmax.f32 %v5286, 0.0
      %v5479 = vmax.f32 %v5287, 0.0
      %v5480 = vmax.f32 %v5288, 0.0
      %v5481 = vmax.f32 %v5289, 0.0
      %v5482 = vmax.f32 %v5290, 0.0
      %v5483 = vmax.f32 %v5291, 0.0
      %v5484 = vmax.f32 %v5292, 0.0
      %v5485 = vmax.f32 %v5293, 0.0
      %v5486 = vmax.f32 %v5294, 0.0
      %v5487 = vmax.f32 %v5295, 0.0
      %v5488 = vmax.f32 %v5296, 0.0
      %v5489 = vmax.f32 %v5297, 0.0
      %v5490 = vmax.f32 %v5298, 0.0
      %v5491 = vmax.f32 %v5299, 0.0
      %v5492 = vmax.f32 %v5300, 0.0
      %v5493 = vmax.f32 %v5301, 0.0
      %v5494 = vmax.f32 %v5302, 0.0
      %v5495 = vmax.f32 %v5303, 0.0
      %v5496 = vmax.f32 %v5304, 0.0
      %v5497 = vpack.c.bf16 %v5329, %v5305
      %v5498 = vpack.c.bf16 %v5330, %v5306
      %v5499 = vpack.c.bf16 %v5331, %v5307
      %v5500 = vpack.c.bf16 %v5332, %v5308
      %v5501 = vpack.c.bf16 %v5333, %v5309
      %v5502 = vpack.c.bf16 %v5334, %v5310
      %v5503 = vpack.c.bf16 %v5335, %v5311
      %v5504 = vpack.c.bf16 %v5336, %v5312
      %v5505 = vpack.c.bf16 %v5337, %v5313
      %v5506 = vpack.c.bf16 %v5338, %v5314
      %v5507 = vpack.c.bf16 %v5339, %v5315
      %v5508 = vpack.c.bf16 %v5340, %v5316
      %v5509 = vpack.c.bf16 %v5341, %v5317
      %v5510 = vpack.c.bf16 %v5342, %v5318
      %v5511 = vpack.c.bf16 %v5343, %v5319
      %v5512 = vpack.c.bf16 %v5344, %v5320
      %v5513 = vpack.c.bf16 %v5345, %v5321
      %v5514 = vpack.c.bf16 %v5346, %v5322
      %v5515 = vpack.c.bf16 %v5347, %v5323
      %v5516 = vpack.c.bf16 %v5348, %v5324
      %v5517 = vpack.c.bf16 %v5349, %v5325
      %v5518 = vpack.c.bf16 %v5350, %v5326
      %v5519 = vpack.c.bf16 %v5351, %v5327
      %v5520 = vpack.c.bf16 %v5352, %v5328
      %v5521 = vpack.c.bf16 %v5377, %v5353
      %v5522 = vpack.c.bf16 %v5378, %v5354
      %v5523 = vpack.c.bf16 %v5379, %v5355
      %v5524 = vpack.c.bf16 %v5380, %v5356
      %v5525 = vpack.c.bf16 %v5381, %v5357
      %v5526 = vpack.c.bf16 %v5382, %v5358
      %v5527 = vpack.c.bf16 %v5383, %v5359
      %v5528 = vpack.c.bf16 %v5384, %v5360
      %v5529 = vpack.c.bf16 %v5385, %v5361
      %v5530 = vpack.c.bf16 %v5386, %v5362
      %v5531 = vpack.c.bf16 %v5387, %v5363
      %v5532 = vpack.c.bf16 %v5388, %v5364
      %v5533 = vpack.c.bf16 %v5389, %v5365
      %v5534 = vpack.c.bf16 %v5390, %v5366
      %v5535 = vpack.c.bf16 %v5391, %v5367
      %v5536 = vpack.c.bf16 %v5392, %v5368
      %v5537 = vpack.c.bf16 %v5393, %v5369
      %v5538 = vpack.c.bf16 %v5394, %v5370
      %v5539 = vpack.c.bf16 %v5395, %v5371
      %v5540 = vpack.c.bf16 %v5396, %v5372
      %v5541 = vpack.c.bf16 %v5397, %v5373
      %v5542 = vpack.c.bf16 %v5398, %v5374
      %v5543 = vpack.c.bf16 %v5399, %v5375
      %v5544 = vpack.c.bf16 %v5400, %v5376
      %v5545 = vpack.c.bf16 %v5425, %v5401
      %v5546 = vpack.c.bf16 %v5426, %v5402
      %v5547 = vpack.c.bf16 %v5427, %v5403
      %v5548 = vpack.c.bf16 %v5428, %v5404
      %v5549 = vpack.c.bf16 %v5429, %v5405
      %v5550 = vpack.c.bf16 %v5430, %v5406
      %v5551 = vpack.c.bf16 %v5431, %v5407
      %v5552 = vpack.c.bf16 %v5432, %v5408
      %v5553 = vpack.c.bf16 %v5433, %v5409
      %v5554 = vpack.c.bf16 %v5434, %v5410
      %v5555 = vpack.c.bf16 %v5435, %v5411
      %v5556 = vpack.c.bf16 %v5436, %v5412
      %v5557 = vpack.c.bf16 %v5437, %v5413
      %v5558 = vpack.c.bf16 %v5438, %v5414
      %v5559 = vpack.c.bf16 %v5439, %v5415
      %v5560 = vpack.c.bf16 %v5440, %v5416
      %v5561 = vpack.c.bf16 %v5441, %v5417
      %v5562 = vpack.c.bf16 %v5442, %v5418
      %v5563 = vpack.c.bf16 %v5443, %v5419
      %v5564 = vpack.c.bf16 %v5444, %v5420
      %v5565 = vpack.c.bf16 %v5445, %v5421
      %v5566 = vpack.c.bf16 %v5446, %v5422
      %v5567 = vpack.c.bf16 %v5447, %v5423
      %v5568 = vpack.c.bf16 %v5448, %v5424
      %v5569 = vpack.c.bf16 %v5473, %v5449
      %v5570 = vpack.c.bf16 %v5474, %v5450
      %v5571 = vpack.c.bf16 %v5475, %v5451
      %v5572 = vpack.c.bf16 %v5476, %v5452
      %v5573 = vpack.c.bf16 %v5477, %v5453
      %v5574 = vpack.c.bf16 %v5478, %v5454
      %v5575 = vpack.c.bf16 %v5479, %v5455
      %v5576 = vpack.c.bf16 %v5480, %v5456
      %v5577 = vpack.c.bf16 %v5481, %v5457
      %v5578 = vpack.c.bf16 %v5482, %v5458
      %v5579 = vpack.c.bf16 %v5483, %v5459
      %v5580 = vpack.c.bf16 %v5484, %v5460
      %v5581 = vpack.c.bf16 %v5485, %v5461
      %v5582 = vpack.c.bf16 %v5486, %v5462
      %v5583 = vpack.c.bf16 %v5487, %v5463
      %v5584 = vpack.c.bf16 %v5488, %v5464
      %v5585 = vpack.c.bf16 %v5489, %v5465
      %v5586 = vpack.c.bf16 %v5490, %v5466
      %v5587 = vpack.c.bf16 %v5491, %v5467
      %v5588 = vpack.c.bf16 %v5492, %v5468
      %v5589 = vpack.c.bf16 %v5493, %v5469
      %v5590 = vpack.c.bf16 %v5494, %v5470
      %v5591 = vpack.c.bf16 %v5495, %v5471
      %v5592 = vpack.c.bf16 %v5496, %v5472
      %v5689 = vunpack.c.l.b16 %v5497
      %v5690 = vunpack.c.l.b16 %v5498
      %v5691 = vunpack.c.l.b16 %v5499
      %v5692 = vunpack.c.l.b16 %v5500
      %v5693 = vunpack.c.l.b16 %v5501
      %v5694 = vunpack.c.l.b16 %v5502
      %v5695 = vunpack.c.l.b16 %v5503
      %v5696 = vunpack.c.l.b16 %v5504
      %v5697 = vunpack.c.l.b16 %v5505
      %v5698 = vunpack.c.l.b16 %v5506
      %v5699 = vunpack.c.l.b16 %v5507
      %v5700 = vunpack.c.l.b16 %v5508
      %v5701 = vunpack.c.l.b16 %v5509
      %v5702 = vunpack.c.l.b16 %v5510
      %v5703 = vunpack.c.l.b16 %v5511
      %v5704 = vunpack.c.l.b16 %v5512
      %v5705 = vunpack.c.l.b16 %v5513
      %v5706 = vunpack.c.l.b16 %v5514
      %v5707 = vunpack.c.l.b16 %v5515
      %v5708 = vunpack.c.l.b16 %v5516
      %v5709 = vunpack.c.l.b16 %v5517
      %v5710 = vunpack.c.l.b16 %v5518
      %v5711 = vunpack.c.l.b16 %v5519
      %v5712 = vunpack.c.l.b16 %v5520
      %v5713 = vunpack.c.h.b16 %v5497
      %v5714 = vunpack.c.h.b16 %v5498
      %v5715 = vunpack.c.h.b16 %v5499
      %v5716 = vunpack.c.h.b16 %v5500
      %v5717 = vunpack.c.h.b16 %v5501
      %v5718 = vunpack.c.h.b16 %v5502
      %v5719 = vunpack.c.h.b16 %v5503
      %v5720 = vunpack.c.h.b16 %v5504
      %v5721 = vunpack.c.h.b16 %v5505
      %v5722 = vunpack.c.h.b16 %v5506
      %v5723 = vunpack.c.h.b16 %v5507
      %v5724 = vunpack.c.h.b16 %v5508
      %v5725 = vunpack.c.h.b16 %v5509
      %v5726 = vunpack.c.h.b16 %v5510
      %v5727 = vunpack.c.h.b16 %v5511
      %v5728 = vunpack.c.h.b16 %v5512
      %v5729 = vunpack.c.h.b16 %v5513
      %v5730 = vunpack.c.h.b16 %v5514
      %v5731 = vunpack.c.h.b16 %v5515
      %v5732 = vunpack.c.h.b16 %v5516
      %v5733 = vunpack.c.h.b16 %v5517
      %v5734 = vunpack.c.h.b16 %v5518
      %v5735 = vunpack.c.h.b16 %v5519
      %v5736 = vunpack.c.h.b16 %v5520
      %v5737 = vunpack.c.l.b16 %v5521
      %v5738 = vunpack.c.l.b16 %v5522
      %v5739 = vunpack.c.l.b16 %v5523
      %v5740 = vunpack.c.l.b16 %v5524
      %v5741 = vunpack.c.l.b16 %v5525
      %v5742 = vunpack.c.l.b16 %v5526
      %v5743 = vunpack.c.l.b16 %v5527
      %v5744 = vunpack.c.l.b16 %v5528
      %v5745 = vunpack.c.l.b16 %v5529
      %v5746 = vunpack.c.l.b16 %v5530
      %v5747 = vunpack.c.l.b16 %v5531
      %v5748 = vunpack.c.l.b16 %v5532
      %v5749 = vunpack.c.l.b16 %v5533
      %v5750 = vunpack.c.l.b16 %v5534
      %v5751 = vunpack.c.l.b16 %v5535
      %v5752 = vunpack.c.l.b16 %v5536
      %v5753 = vunpack.c.l.b16 %v5537
      %v5754 = vunpack.c.l.b16 %v5538
      %v5755 = vunpack.c.l.b16 %v5539
      %v5756 = vunpack.c.l.b16 %v5540
      %v5757 = vunpack.c.l.b16 %v5541
      %v5758 = vunpack.c.l.b16 %v5542
      %v5759 = vunpack.c.l.b16 %v5543
      %v5760 = vunpack.c.l.b16 %v5544
      %v5761 = vunpack.c.h.b16 %v5521
      %v5762 = vunpack.c.h.b16 %v5522
      %v5763 = vunpack.c.h.b16 %v5523
      %v5764 = vunpack.c.h.b16 %v5524
      %v5765 = vunpack.c.h.b16 %v5525
      %v5766 = vunpack.c.h.b16 %v5526
      %v5767 = vunpack.c.h.b16 %v5527
      %v5768 = vunpack.c.h.b16 %v5528
      %v5769 = vunpack.c.h.b16 %v5529
      %v5770 = vunpack.c.h.b16 %v5530
      %v5771 = vunpack.c.h.b16 %v5531
      %v5772 = vunpack.c.h.b16 %v5532
      %v5773 = vunpack.c.h.b16 %v5533
      %v5774 = vunpack.c.h.b16 %v5534
      %v5775 = vunpack.c.h.b16 %v5535
      %v5776 = vunpack.c.h.b16 %v5536
      %v5777 = vunpack.c.h.b16 %v5537
      %v5778 = vunpack.c.h.b16 %v5538
      %v5779 = vunpack.c.h.b16 %v5539
      %v5780 = vunpack.c.h.b16 %v5540
      %v5781 = vunpack.c.h.b16 %v5541
      %v5782 = vunpack.c.h.b16 %v5542
      %v5783 = vunpack.c.h.b16 %v5543
      %v5784 = vunpack.c.h.b16 %v5544
      %v5785 = vunpack.c.l.b16 %v5545
      %v5786 = vunpack.c.l.b16 %v5546
      %v5787 = vunpack.c.l.b16 %v5547
      %v5788 = vunpack.c.l.b16 %v5548
      %v5789 = vunpack.c.l.b16 %v5549
      %v5790 = vunpack.c.l.b16 %v5550
      %v5791 = vunpack.c.l.b16 %v5551
      %v5792 = vunpack.c.l.b16 %v5552
      %v5793 = vunpack.c.l.b16 %v5553
      %v5794 = vunpack.c.l.b16 %v5554
      %v5795 = vunpack.c.l.b16 %v5555
      %v5796 = vunpack.c.l.b16 %v5556
      %v5797 = vunpack.c.l.b16 %v5557
      %v5798 = vunpack.c.l.b16 %v5558
      %v5799 = vunpack.c.l.b16 %v5559
      %v5800 = vunpack.c.l.b16 %v5560
      %v5801 = vunpack.c.l.b16 %v5561
      %v5802 = vunpack.c.l.b16 %v5562
      %v5803 = vunpack.c.l.b16 %v5563
      %v5804 = vunpack.c.l.b16 %v5564
      %v5805 = vunpack.c.l.b16 %v5565
      %v5806 = vunpack.c.l.b16 %v5566
      %v5807 = vunpack.c.l.b16 %v5567
      %v5808 = vunpack.c.l.b16 %v5568
      %v5809 = vunpack.c.h.b16 %v5545
      %v5810 = vunpack.c.h.b16 %v5546
      %v5811 = vunpack.c.h.b16 %v5547
      %v5812 = vunpack.c.h.b16 %v5548
      %v5813 = vunpack.c.h.b16 %v5549
      %v5814 = vunpack.c.h.b16 %v5550
      %v5815 = vunpack.c.h.b16 %v5551
      %v5816 = vunpack.c.h.b16 %v5552
      %v5817 = vunpack.c.h.b16 %v5553
      %v5818 = vunpack.c.h.b16 %v5554
      %v5819 = vunpack.c.h.b16 %v5555
      %v5820 = vunpack.c.h.b16 %v5556
      %v5821 = vunpack.c.h.b16 %v5557
      %v5822 = vunpack.c.h.b16 %v5558
      %v5823 = vunpack.c.h.b16 %v5559
      %v5824 = vunpack.c.h.b16 %v5560
      %v5825 = vunpack.c.h.b16 %v5561
      %v5826 = vunpack.c.h.b16 %v5562
      %v5827 = vunpack.c.h.b16 %v5563
      %v5828 = vunpack.c.h.b16 %v5564
      %v5829 = vunpack.c.h.b16 %v5565
      %v5830 = vunpack.c.h.b16 %v5566
      %v5831 = vunpack.c.h.b16 %v5567
      %v5832 = vunpack.c.h.b16 %v5568
      %v5833 = vunpack.c.l.b16 %v5569
      %v5834 = vunpack.c.l.b16 %v5570
      %v5835 = vunpack.c.l.b16 %v5571
      %v5836 = vunpack.c.l.b16 %v5572
      %v5837 = vunpack.c.l.b16 %v5573
      %v5838 = vunpack.c.l.b16 %v5574
      %v5839 = vunpack.c.l.b16 %v5575
      %v5840 = vunpack.c.l.b16 %v5576
      %v5841 = vunpack.c.l.b16 %v5577
      %v5842 = vunpack.c.l.b16 %v5578
      %v5843 = vunpack.c.l.b16 %v5579
      %v5844 = vunpack.c.l.b16 %v5580
      %v5845 = vunpack.c.l.b16 %v5581
      %v5846 = vunpack.c.l.b16 %v5582
      %v5847 = vunpack.c.l.b16 %v5583
      %v5848 = vunpack.c.l.b16 %v5584
      %v5849 = vunpack.c.l.b16 %v5585
      %v5850 = vunpack.c.l.b16 %v5586
      %v5851 = vunpack.c.l.b16 %v5587
      %v5852 = vunpack.c.l.b16 %v5588
      %v5853 = vunpack.c.l.b16 %v5589
      %v5854 = vunpack.c.l.b16 %v5590
      %v5855 = vunpack.c.l.b16 %v5591
      %v5856 = vunpack.c.l.b16 %v5592
      %v5857 = vunpack.c.h.b16 %v5569
      %v5858 = vunpack.c.h.b16 %v5570
      %v5859 = vunpack.c.h.b16 %v5571
      %v5860 = vunpack.c.h.b16 %v5572
      %v5861 = vunpack.c.h.b16 %v5573
      %v5862 = vunpack.c.h.b16 %v5574
      %v5863 = vunpack.c.h.b16 %v5575
      %v5864 = vunpack.c.h.b16 %v5576
      %v5865 = vunpack.c.h.b16 %v5577
      %v5866 = vunpack.c.h.b16 %v5578
      %v5867 = vunpack.c.h.b16 %v5579
      %v5868 = vunpack.c.h.b16 %v5580
      %v5869 = vunpack.c.h.b16 %v5581
      %v5870 = vunpack.c.h.b16 %v5582
      %v5871 = vunpack.c.h.b16 %v5583
      %v5872 = vunpack.c.h.b16 %v5584
      %v5873 = vunpack.c.h.b16 %v5585
      %v5874 = vunpack.c.h.b16 %v5586
      %v5875 = vunpack.c.h.b16 %v5587
      %v5876 = vunpack.c.h.b16 %v5588
      %v5877 = vunpack.c.h.b16 %v5589
      %v5878 = vunpack.c.h.b16 %v5590
      %v5879 = vunpack.c.h.b16 %v5591
      %v5880 = vunpack.c.h.b16 %v5592
      %v5881 = vpack.c.b16 %v5690, %v5689
      %v5882 = vpack.c.b16 %v5692, %v5691
      %v5883 = vpack.c.b16 %v5694, %v5693
      %v5884 = vpack.c.b16 %v5696, %v5695
      %v5885 = vpack.c.b16 %v5698, %v5697
      %v5886 = vpack.c.b16 %v5700, %v5699
      %v5887 = vpack.c.b16 %v5702, %v5701
      %v5888 = vpack.c.b16 %v5704, %v5703
      %v5889 = vpack.c.b16 %v5706, %v5705
      %v5890 = vpack.c.b16 %v5708, %v5707
      %v5891 = vpack.c.b16 %v5710, %v5709
      %v5892 = vpack.c.b16 %v5712, %v5711
      %v5893 = vpack.c.b16 %v5714, %v5713
      %v5894 = vpack.c.b16 %v5716, %v5715
      %v5895 = vpack.c.b16 %v5718, %v5717
      %v5896 = vpack.c.b16 %v5720, %v5719
      %v5897 = vpack.c.b16 %v5722, %v5721
      %v5898 = vpack.c.b16 %v5724, %v5723
      %v5899 = vpack.c.b16 %v5726, %v5725
      %v5900 = vpack.c.b16 %v5728, %v5727
      %v5901 = vpack.c.b16 %v5730, %v5729
      %v5902 = vpack.c.b16 %v5732, %v5731
      %v5903 = vpack.c.b16 %v5734, %v5733
      %v5904 = vpack.c.b16 %v5736, %v5735
      %v5905 = vpack.c.b16 %v5738, %v5737
      %v5906 = vpack.c.b16 %v5740, %v5739
      %v5907 = vpack.c.b16 %v5742, %v5741
      %v5908 = vpack.c.b16 %v5744, %v5743
      %v5909 = vpack.c.b16 %v5746, %v5745
      %v5910 = vpack.c.b16 %v5748, %v5747
      %v5911 = vpack.c.b16 %v5750, %v5749
      %v5912 = vpack.c.b16 %v5752, %v5751
      %v5913 = vpack.c.b16 %v5754, %v5753
      %v5914 = vpack.c.b16 %v5756, %v5755
      %v5915 = vpack.c.b16 %v5758, %v5757
      %v5916 = vpack.c.b16 %v5760, %v5759
      %v5917 = vpack.c.b16 %v5762, %v5761
      %v5918 = vpack.c.b16 %v5764, %v5763
      %v5919 = vpack.c.b16 %v5766, %v5765
      %v5920 = vpack.c.b16 %v5768, %v5767
      %v5921 = vpack.c.b16 %v5770, %v5769
      %v5922 = vpack.c.b16 %v5772, %v5771
      %v5923 = vpack.c.b16 %v5774, %v5773
      %v5924 = vpack.c.b16 %v5776, %v5775
      %v5925 = vpack.c.b16 %v5778, %v5777
      %v5926 = vpack.c.b16 %v5780, %v5779
      %v5927 = vpack.c.b16 %v5782, %v5781
      %v5928 = vpack.c.b16 %v5784, %v5783
      %v5929 = vpack.c.b16 %v5786, %v5785
      %v5930 = vpack.c.b16 %v5788, %v5787
      %v5931 = vpack.c.b16 %v5790, %v5789
      %v5932 = vpack.c.b16 %v5792, %v5791
      %v5933 = vpack.c.b16 %v5794, %v5793
      %v5934 = vpack.c.b16 %v5796, %v5795
      %v5935 = vpack.c.b16 %v5798, %v5797
      %v5936 = vpack.c.b16 %v5800, %v5799
      %v5937 = vpack.c.b16 %v5802, %v5801
      %v5938 = vpack.c.b16 %v5804, %v5803
      %v5939 = vpack.c.b16 %v5806, %v5805
      %v5940 = vpack.c.b16 %v5808, %v5807
      %v5941 = vpack.c.b16 %v5810, %v5809
      %v5942 = vpack.c.b16 %v5812, %v5811
      %v5943 = vpack.c.b16 %v5814, %v5813
      %v5944 = vpack.c.b16 %v5816, %v5815
      %v5945 = vpack.c.b16 %v5818, %v5817
      %v5946 = vpack.c.b16 %v5820, %v5819
      %v5947 = vpack.c.b16 %v5822, %v5821
      %v5948 = vpack.c.b16 %v5824, %v5823
      %v5949 = vpack.c.b16 %v5826, %v5825
      %v5950 = vpack.c.b16 %v5828, %v5827
      %v5951 = vpack.c.b16 %v5830, %v5829
      %v5952 = vpack.c.b16 %v5832, %v5831
      %v5953 = vpack.c.b16 %v5834, %v5833
      %v5954 = vpack.c.b16 %v5836, %v5835
      %v5955 = vpack.c.b16 %v5838, %v5837
      %v5956 = vpack.c.b16 %v5840, %v5839
      %v5957 = vpack.c.b16 %v5842, %v5841
      %v5958 = vpack.c.b16 %v5844, %v5843
      %v5959 = vpack.c.b16 %v5846, %v5845
      %v5960 = vpack.c.b16 %v5848, %v5847
      %v5961 = vpack.c.b16 %v5850, %v5849
      %v5962 = vpack.c.b16 %v5852, %v5851
      %v5963 = vpack.c.b16 %v5854, %v5853
      %v5964 = vpack.c.b16 %v5856, %v5855
      %v5965 = vpack.c.b16 %v5858, %v5857
      %v5966 = vpack.c.b16 %v5860, %v5859
      %v5967 = vpack.c.b16 %v5862, %v5861
      %v5968 = vpack.c.b16 %v5864, %v5863
      %v5969 = vpack.c.b16 %v5866, %v5865
      %v5970 = vpack.c.b16 %v5868, %v5867
      %v5971 = vpack.c.b16 %v5870, %v5869
      %v5972 = vpack.c.b16 %v5872, %v5871
      %v5973 = vpack.c.b16 %v5874, %v5873
      %v5974 = vpack.c.b16 %v5876, %v5875
      %v5975 = vpack.c.b16 %v5878, %v5877
      %v5976 = vpack.c.b16 %v5880, %v5879
      %6073 = vst [vmem:[%s170] sm:$0xff] %v5881
      %6074 = vst [vmem:[%s170 + $0x8] sm:$0xff] %v5882
      %6075 = vst [vmem:[%s170 + $0x10] sm:$0xff] %v5883
      %6076 = vst [vmem:[%s170 + $0x18] sm:$0xff] %v5884
      %6077 = vst [vmem:[%s170 + $0x20] sm:$0xff] %v5885
      %6078 = vst [vmem:[%s170 + $0x28] sm:$0xff] %v5886
      %6079 = vst [vmem:[%s170 + $0x30] sm:$0xff] %v5887
      %6080 = vst [vmem:[%s170 + $0x38] sm:$0xff] %v5888
      %6081 = vst [vmem:[%s170 + $0x40] sm:$0xff] %v5889
      %6082 = vst [vmem:[%s170 + $0x48] sm:$0xff] %v5890
      %6083 = vst [vmem:[%s170 + $0x50] sm:$0xff] %v5891
      %vm6084 = vcmask 662532
      %vm6085 = vmor %vm6084, %vm693
      %6086 = vst.msk [vmem:[%s170 + $0x58] sm:$0xff] %vm6085, %v5892
      %6087 = vst [vmem:[%s170 + $0x60] sm:$0xff] %v5893
      %6088 = vst [vmem:[%s170 + $0x68] sm:$0xff] %v5894
      %6089 = vst [vmem:[%s170 + $0x70] sm:$0xff] %v5895
      %6090 = vst [vmem:[%s170 + $0x78] sm:$0xff] %v5896
      %6091 = vst [vmem:[%s170 + $0x80] sm:$0xff] %v5897
      %6092 = vst [vmem:[%s170 + $0x88] sm:$0xff] %v5898
      %6093 = vst [vmem:[%s170 + $0x90] sm:$0xff] %v5899
      %6094 = vst [vmem:[%s170 + $0x98] sm:$0xff] %v5900
      %6095 = vst [vmem:[%s170 + $0xa0] sm:$0xff] %v5901
      %6096 = vst [vmem:[%s170 + $0xa8] sm:$0xff] %v5902
      %6097 = vst [vmem:[%s170 + $0xb0] sm:$0xff] %v5903
      %6098 = vst.msk [vmem:[%s170 + $0xb8] sm:$0xff] %vm6085, %v5904
      %6099 = vst [vmem:[%s170 + $0xc0] sm:$0xff] %v5905
      %6100 = vst [vmem:[%s170 + $0xc8] sm:$0xff] %v5906
      %6101 = vst [vmem:[%s170 + $0xd0] sm:$0xff] %v5907
      %6102 = vst [vmem:[%s170 + $0xd8] sm:$0xff] %v5908
      %6103 = vst [vmem:[%s170 + $0xe0] sm:$0xff] %v5909
      %6104 = vst [vmem:[%s170 + $0xe8] sm:$0xff] %v5910
      %6105 = vst [vmem:[%s170 + $0xf0] sm:$0xff] %v5911
      %6106 = vst [vmem:[%s170 + $0xf8] sm:$0xff] %v5912
      %6107 = vst [vmem:[%s170 + $0x100] sm:$0xff] %v5913
      %6108 = vst [vmem:[%s170 + $0x108] sm:$0xff] %v5914
      %6109 = vst [vmem:[%s170 + $0x110] sm:$0xff] %v5915
      %6110 = vst.msk [vmem:[%s170 + $0x118] sm:$0xff] %vm6085, %v5916
      %6111 = vst [vmem:[%s170 + $0x120] sm:$0xff] %v5917
      %6112 = vst [vmem:[%s170 + $0x128] sm:$0xff] %v5918
      %6113 = vst [vmem:[%s170 + $0x130] sm:$0xff] %v5919
      %6114 = vst [vmem:[%s170 + $0x138] sm:$0xff] %v5920
      %6115 = vst [vmem:[%s170 + $0x140] sm:$0xff] %v5921
      %6116 = vst [vmem:[%s170 + $0x148] sm:$0xff] %v5922
      %6117 = vst [vmem:[%s170 + $0x150] sm:$0xff] %v5923
      %6118 = vst [vmem:[%s170 + $0x158] sm:$0xff] %v5924
      %6119 = vst [vmem:[%s170 + $0x160] sm:$0xff] %v5925
      %6120 = vst [vmem:[%s170 + $0x168] sm:$0xff] %v5926
      %6121 = vst [vmem:[%s170 + $0x170] sm:$0xff] %v5927
      %6122 = vst.msk [vmem:[%s170 + $0x178] sm:$0xff] %vm6085, %v5928
      %6123 = vst [vmem:[%s170 + $0x180] sm:$0xff] %v5929
      %6124 = vst [vmem:[%s170 + $0x188] sm:$0xff] %v5930
      %6125 = vst [vmem:[%s170 + $0x190] sm:$0xff] %v5931
      %6126 = vst [vmem:[%s170 + $0x198] sm:$0xff] %v5932
      %6127 = vst [vmem:[%s170 + $0x1a0] sm:$0xff] %v5933
      %6128 = vst [vmem:[%s170 + $0x1a8] sm:$0xff] %v5934
      %6129 = vst [vmem:[%s170 + $0x1b0] sm:$0xff] %v5935
      %6130 = vst [vmem:[%s170 + $0x1b8] sm:$0xff] %v5936
      %6131 = vst [vmem:[%s170 + $0x1c0] sm:$0xff] %v5937
      %6132 = vst [vmem:[%s170 + $0x1c8] sm:$0xff] %v5938
      %6133 = vst [vmem:[%s170 + $0x1d0] sm:$0xff] %v5939
      %6134 = vst.msk [vmem:[%s170 + $0x1d8] sm:$0xff] %vm6085, %v5940
      %6135 = vst [vmem:[%s170 + $0x1e0] sm:$0xff] %v5941
      %6136 = vst [vmem:[%s170 + $0x1e8] sm:$0xff] %v5942
      %6137 = vst [vmem:[%s170 + $0x1f0] sm:$0xff] %v5943
      %6138 = vst [vmem:[%s170 + $0x1f8] sm:$0xff] %v5944
      %6139 = vst [vmem:[%s170 + $0x200] sm:$0xff] %v5945
      %6140 = vst [vmem:[%s170 + $0x208] sm:$0xff] %v5946
      %6141 = vst [vmem:[%s170 + $0x210] sm:$0xff] %v5947
      %6142 = vst [vmem:[%s170 + $0x218] sm:$0xff] %v5948
      %6143 = vst [vmem:[%s170 + $0x220] sm:$0xff] %v5949
      %6144 = vst [vmem:[%s170 + $0x228] sm:$0xff] %v5950
      %6145 = vst [vmem:[%s170 + $0x230] sm:$0xff] %v5951
      %6146 = vst.msk [vmem:[%s170 + $0x238] sm:$0xff] %vm6085, %v5952
      %6147 = vst [vmem:[%s170 + $0x240] sm:$0xff] %v5953
      %6148 = vst [vmem:[%s170 + $0x248] sm:$0xff] %v5954
      %6149 = vst [vmem:[%s170 + $0x250] sm:$0xff] %v5955
      %6150 = vst [vmem:[%s170 + $0x258] sm:$0xff] %v5956
      %6151 = vst [vmem:[%s170 + $0x260] sm:$0xff] %v5957
      %6152 = vst [vmem:[%s170 + $0x268] sm:$0xff] %v5958
      %6153 = vst [vmem:[%s170 + $0x270] sm:$0xff] %v5959
      %6154 = vst [vmem:[%s170 + $0x278] sm:$0xff] %v5960
      %6155 = vst [vmem:[%s170 + $0x280] sm:$0xff] %v5961
      %6156 = vst [vmem:[%s170 + $0x288] sm:$0xff] %v5962
      %6157 = vst [vmem:[%s170 + $0x290] sm:$0xff] %v5963
      %6158 = vst.msk [vmem:[%s170 + $0x298] sm:$0xff] %vm6085, %v5964
      %6159 = vst [vmem:[%s170 + $0x2a0] sm:$0xff] %v5965
      %6160 = vst [vmem:[%s170 + $0x2a8] sm:$0xff] %v5966
      %6161 = vst [vmem:[%s170 + $0x2b0] sm:$0xff] %v5967
      %6162 = vst [vmem:[%s170 + $0x2b8] sm:$0xff] %v5968
      %6163 = vst [vmem:[%s170 + $0x2c0] sm:$0xff] %v5969
      %6164 = vst [vmem:[%s170 + $0x2c8] sm:$0xff] %v5970
      %6165 = vst [vmem:[%s170 + $0x2d0] sm:$0xff] %v5971
      %6166 = vst [vmem:[%s170 + $0x2d8] sm:$0xff] %v5972
      %6167 = vst [vmem:[%s170 + $0x2e0] sm:$0xff] %v5973
      %6168 = vst [vmem:[%s170 + $0x2e8] sm:$0xff] %v5974
      %6169 = vst [vmem:[%s170 + $0x2f0] sm:$0xff] %v5975
      %6170 = vst.msk [vmem:[%s170 + $0x2f8] sm:$0xff] %vm6085, %v5976
      %p6171 = scmp.lt.s32.totalorder %s14, 1
      %s6172 = scalar_select %p6171, %s14, 1
      %s6173 = smul.addr %s6172, 192
      %s6174 = smul.addr %s6173, 4
      %s6175 = scalar_lea.vmem %s3, %s6174
      // Predicated region
      $region33: #{mlp_classic_forward.2} parent=31 // pred_check
        %p6176 = pneg %p100
      $region34: #{mlp_classic_forward.2} parent=31 // pred_check_branch
        %6178 = sbr.rel (%p6176) target = $region36
      $region35: #{mlp_classic_forward.2} parent=31 // pred_region
        _
      $region36: #{mlp_classic_forward.2} parent=31 // pred_fallthru
        _
    $region32: #{mlp_classic_forward.2} parent=5 // pred_fallthru
      _
    %p6179 = scmp.le.s32.totalorder 2, %s9
    // Predicated region
    $region37: #{mlp_classic_forward.2} parent=5 // pred_check
      %p6180 = pneg %p6179
    $region38: #{mlp_classic_forward.2} parent=5 // pred_check_branch
      %6182 = sbr.rel (%p6180) target = $region40
    $region39: #{mlp_classic_forward.2} parent=5 // pred_region
      %s6183 = ssub.s32 %s9, 2
      // Predicated region
      $region41: #{mlp_classic_forward.2} parent=39 // pred_check
        %p6184 = pneg %p106
      $region42: #{mlp_classic_forward.2} parent=39 // pred_check_branch
        %6186 = sbr.rel (%p6184) target = $region44
      $region43: #{mlp_classic_forward.2} parent=39 // pred_region
        %p6187 = scmp.lt.s32.totalorder %s15, 1
        %s6188 = scalar_select %p6187, %s15, 1
        %s6189 = smul.addr %s6188, 192
        %s6190 = smul.addr %s6189, 4
        %s6191 = scalar_lea.vmem %s3, %s6190
      $region44: #{mlp_classic_forward.2} parent=39 // pred_fallthru
        _
    $region40: #{mlp_classic_forward.2} parent=5 // pred_fallthru
      _
  $region6: #{mlp_classic_forward.2} parent=0 // loop_footer
    %s13 = sadd.s32 1, %s9
  $region7: #{mlp_classic_forward.2} parent=0 // loop_footer_branch
    %8 = sbr.rel target = $region3
  $region8: #{mlp_classic_forward.2} parent=0 // loop_exit
    _

// kernel: mlp_classic_forward.3
$region0: #{mlp_classic_forward.3}
  #allocation0 [shape = 'u32[]', space=smem, size = 0x4, offset = 0x4, fixed_abs, tag = 'smem constant byte address 0x4 - core index']
  #allocation1 [shape = 'u32[144,128]{1,0:T(1,128)}', space=vmem, size = 0x12000, scoped, tag = 'internal scratch']
  %s0 = inlined_call_operand.vmem [shape: bf16[2,576,676], index: 0, kind: input, shape index: {}]
  %s1 = inlined_call_operand.vmem [shape: bf16[32,576], index: 1, kind: input, shape index: {}]
  %s2 = inlined_call_operand.vmem [shape: f32[32,1], index: 2, kind: input, shape index: {}]
  %s3 = inlined_call_operand.vmem [shape: bf16[2,32,169], index: 3, kind: output, shape index: {}]
  %s4 = sld [smem:[#allocation0]]
  $region45: #{mlp_classic_forward.3} parent=0
    _
  %s6 = ssub.s32 1, %s4
  %s7 = scalar_select 0, %s6, %s4
  loop: start=0, step=1, limit=4
  $region2: #{mlp_classic_forward.3} parent=0 // loop_pre_header
    _
  $region3: #{mlp_classic_forward.3} parent=0 // loop_header
    %s9 = sphi 0, %s13
    %p10 = scmp.ge.s32.totalorder %s9, 4
    %s19 = sphi 0, %s21
    %s22 = sphi 0, %s19
    %s23 = sphi 0, %s22
    %s39 = sphi 0, %s23
    %s43 = sphi 0, %s43
    %s45 = sphi 0, %s43
    %s46 = sphi 0, %s45
    %s60 = sphi 0, %s46
    %s64 = sphi 0, %s64
    %s66 = sphi 0, %s64
    %s67 = sphi 0, %s66
    %s81 = sphi 0, %s67
    %s87 = sphi 0, %s89
    %s90 = sphi 0, %s87
    %s91 = sphi 0, %s90
    %s107 = sphi 0, %s91
  $region4: #{mlp_classic_forward.3} parent=0 // loop_header_branch
    %12 = sbr.rel (%p10) target = $region8
  $region5: #{mlp_classic_forward.3} parent=0 // loop_body
    %s14 = ssub.s32 %s9, 1
    %s15 = ssub.s32 %s9, 2
    %s16 = sadd.s32 %s9, 1
    %s17 = ssub.s32 %s9, %s16
    %p18 = scmp.eq.s32.totalorder %s17, 0
    %s20 = sadd.s32 %s19, 1
    %s21 = scalar_select %p18, %s19, %s20
    %p24 = pneg %p18
    %p25 = scmp.eq.s32.totalorder %s9, 1
    %p26 = por %p24, %p25
    %p27 = scmp.ne.s32.totalorder %s19, %s22
    %p28 = scmp.eq.s32.totalorder %s9, 0
    %p29 = por %p27, %p28
    %p30 = scmp.ne.s32.totalorder %s19, %s22
    %p31 = scmp.eq.s32.totalorder %s14, 1
    %p32 = por %p30, %p31
    %p33 = scmp.ne.s32.totalorder %s22, %s23
    %p34 = scmp.eq.s32.totalorder %s14, 0
    %p35 = por %p33, %p34
    %p36 = scmp.ne.s32.totalorder %s22, %s23
    %p37 = scmp.eq.s32.totalorder %s15, 1
    %p38 = por %p36, %p37
    %p40 = scmp.ne.s32.totalorder %s23, %s39
    %p41 = scmp.eq.s32.totalorder %s15, 0
    %p42 = por %p40, %p41
    %s44 = sadd.s32 %s43, 1
    %p47 = scmp.eq.s32.totalorder %s9, 1
    %p48 = scmp.ne.s32.totalorder %s43, %s45
    %p49 = scmp.eq.s32.totalorder %s9, 0
    %p50 = por %p48, %p49
    %p51 = scmp.ne.s32.totalorder %s43, %s45
    %p52 = scmp.eq.s32.totalorder %s14, 1
    %p53 = por %p51, %p52
    %p54 = scmp.ne.s32.totalorder %s45, %s46
    %p55 = scmp.eq.s32.totalorder %s14, 0
    %p56 = por %p54, %p55
    %p57 = scmp.ne.s32.totalorder %s45, %s46
    %p58 = scmp.eq.s32.totalorder %s15, 1
    %p59 = por %p57, %p58
    %p61 = scmp.ne.s32.totalorder %s46, %s60
    %p62 = scmp.eq.s32.totalorder %s15, 0
    %p63 = por %p61, %p62
    %s65 = sadd.s32 %s64, 1
    %p68 = scmp.eq.s32.totalorder %s9, 1
    %p69 = scmp.ne.s32.totalorder %s64, %s66
    %p70 = scmp.eq.s32.totalorder %s9, 0
    %p71 = por %p69, %p70
    %p72 = scmp.ne.s32.totalorder %s64, %s66
    %p73 = scmp.eq.s32.totalorder %s14, 1
    %p74 = por %p72, %p73
    %p75 = scmp.ne.s32.totalorder %s66, %s67
    %p76 = scmp.eq.s32.totalorder %s14, 0
    %p77 = por %p75, %p76
    %p78 = scmp.ne.s32.totalorder %s66, %s67
    %p79 = scmp.eq.s32.totalorder %s15, 1
    %p80 = por %p78, %p79
    %p82 = scmp.ne.s32.totalorder %s67, %s81
    %p83 = scmp.eq.s32.totalorder %s15, 0
    %p84 = por %p82, %p83
    %s85 = ssub.s32 %s9, %s16
    %p86 = scmp.eq.s32.totalorder %s85, 0
    %s88 = sadd.s32 %s87, 1
    %s89 = scalar_select %p86, %s87, %s88
    %p92 = pneg %p86
    %p93 = scmp.eq.s32.totalorder %s9, 1
    %p94 = por %p92, %p93
    %p95 = scmp.ne.s32.totalorder %s87, %s90
    %p96 = scmp.eq.s32.totalorder %s9, 0
    %p97 = por %p95, %p96
    %p98 = scmp.ne.s32.totalorder %s87, %s90
    %p99 = scmp.eq.s32.totalorder %s14, 1
    %p100 = por %p98, %p99
    %p101 = scmp.ne.s32.totalorder %s90, %s91
    %p102 = scmp.eq.s32.totalorder %s14, 0
    %p103 = por %p101, %p102
    %p104 = scmp.ne.s32.totalorder %s90, %s91
    %p105 = scmp.eq.s32.totalorder %s15, 1
    %p106 = por %p104, %p105
    %p108 = scmp.ne.s32.totalorder %s91, %s107
    %p109 = scmp.eq.s32.totalorder %s15, 0
    %p110 = por %p108, %p109
    %p111 = scmp.le.s32.totalorder 1, %s9
    %p112 = scmp.lt.s32.totalorder %s9, 3
    %p113 = pnand %p111, %p112
    %p114 = pneg %p113
    // Predicated region
    $region9: #{mlp_classic_forward.3} parent=5 // pred_check
      _
    $region10: #{mlp_classic_forward.3} parent=5 // pred_check_branch
      %116 = sbr.rel (%p113) target = $region12
    $region11: #{mlp_classic_forward.3} parent=5 // pred_region
      %s117 = ssub.s32 %s9, 1
      // Predicated region
      $region13: #{mlp_classic_forward.3} parent=11 // pred_check
        %p118 = pneg %p56
      $region14: #{mlp_classic_forward.3} parent=11 // pred_check_branch
        %120 = sbr.rel (%p118) target = $region16
      $region15: #{mlp_classic_forward.3} parent=11 // pred_region
        _
      $region16: #{mlp_classic_forward.3} parent=11 // pred_fallthru
        _
      // Predicated region
      $region17: #{mlp_classic_forward.3} parent=11 // pred_check
        %p121 = pneg %p77
      $region18: #{mlp_classic_forward.3} parent=11 // pred_check_branch
        %123 = sbr.rel (%p121) target = $region20
      $region19: #{mlp_classic_forward.3} parent=11 // pred_region
        _
      $region20: #{mlp_classic_forward.3} parent=11 // pred_fallthru
        _
    $region12: #{mlp_classic_forward.3} parent=5 // pred_fallthru
      _
    %p124 = scmp.lt.s32.totalorder %s9, 2
    // Predicated region
    $region21: #{mlp_classic_forward.3} parent=5 // pred_check
      %p125 = pneg %p124
    $region22: #{mlp_classic_forward.3} parent=5 // pred_check_branch
      %127 = sbr.rel (%p125) target = $region24
    $region23: #{mlp_classic_forward.3} parent=5 // pred_region
      // Predicated region
      $region25: #{mlp_classic_forward.3} parent=23 // pred_check
        %p128 = pneg %p29
      $region26: #{mlp_classic_forward.3} parent=23 // pred_check_branch
        %130 = sbr.rel (%p128) target = $region28
      $region27: #{mlp_classic_forward.3} parent=23 // pred_region
        %p131 = scmp.lt.s32.totalorder %s9, 1
        %s132 = scalar_select %p131, %s9, 1
        %s133 = smul.addr %s132, 432
        %s134 = smul.addr %s133, 4
        %s135 = scalar_lea.vmem %s0, %s134
      $region28: #{mlp_classic_forward.3} parent=23 // pred_fallthru
        _
    $region24: #{mlp_classic_forward.3} parent=5 // pred_fallthru
      _
    %p136 = scmp.le.s32.totalorder 1, %s9
    %p137 = scmp.lt.s32.totalorder %s9, 3
    %p138 = pnand %p136, %p137
    %p139 = pneg %p138
    // Predicated region
    $region29: #{mlp_classic_forward.3} parent=5 // pred_check
      _
    $region30: #{mlp_classic_forward.3} parent=5 // pred_check_branch
      %141 = sbr.rel (%p138) target = $region32
    $region31: #{mlp_classic_forward.3} parent=5 // pred_region
      %s142 = ssub.s32 %s9, 1
      %p143 = scmp.lt.s32.totalorder %s14, 1
      %s144 = scalar_select %p143, %s14, 1
      %s145 = smul.addr %s144, 432
      %s146 = smul.addr %s145, 4
      %s147 = scalar_lea.vmem %s0, %s146
      %p148 = pneg %p35
      %p149 = pneg %p32
      %p150 = pneg %p56
      %p151 = pneg %p53
      %p152 = pneg %p77
      %p153 = pneg %p74
      %p154 = pneg %p103
      %p155 = pneg %p100
      %p156 = scmp.lt.s32.totalorder %s14, 1
      %s157 = scalar_select %p156, %s14, 1
      %s158 = smul.addr %s157, 8
      %s159 = smul.addr %s158, 4
      %s160 = scalar_lea.vmem %s3, %s159
      %p161 = scmp.lt.s32.totalorder %s14, 1
      %s162 = scalar_select %p161, %s14, 1
      %s163 = smul.addr %s162, 432
      %s164 = smul.addr %s163, 4
      %s165 = scalar_lea.vmem %s0, %s164
      %p166 = scmp.lt.s32.totalorder %s14, 1
      %s167 = scalar_select %p166, %s14, 1
      %s168 = smul.addr %s167, 8
      %s169 = smul.addr %s168, 4
      %s170 = scalar_lea.vmem %s3, %s169
      %v172 = vld [vmem:[%s1] sm:$0xff]
      %v173 = vld [vmem:[%s1 + $0x8] sm:$0xff]
      %v174 = vld [vmem:[%s1 + $0x10] sm:$0xf]
      %v175 = vld [vmem:[%s1 + $0x14] sm:$0xff]
      %v176 = vld [vmem:[%s1 + $0x1c] sm:$0xff]
      %v177 = vld [vmem:[%s1 + $0x24] sm:$0xf]
      %v178 = vld [vmem:[%s1 + $0x28] sm:$0xff]
      %v179 = vld [vmem:[%s1 + $0x30] sm:$0xff]
      %v180 = vld [vmem:[%s1 + $0x38] sm:$0xf]
      %v181 = vld [vmem:[%s1 + $0x3c] sm:$0xff]
      %v182 = vld [vmem:[%s1 + $0x44] sm:$0xff]
      %v183 = vld [vmem:[%s1 + $0x4c] sm:$0xf]
      %v184 = vld [vmem:[%s165] sm:$0xff]
      %v185 = vld [vmem:[%s165 + $0x8] sm:$0xff]
      %v186 = vld [vmem:[%s165 + $0x10] sm:$0xff]
      %v187 = vld [vmem:[%s165 + $0x18] sm:$0xff]
      %v188 = vld [vmem:[%s165 + $0x20] sm:$0xff]
      %v189 = vld [vmem:[%s165 + $0x28] sm:$0xff]
      %v190 = vld [vmem:[%s165 + $0x30] sm:$0xff]
      %v191 = vld [vmem:[%s165 + $0x38] sm:$0xff]
      %v192 = vld [vmem:[%s165 + $0x40] sm:$0xff]
      %v193 = vld [vmem:[%s165 + $0x48] sm:$0xff]
      %v194 = vld [vmem:[%s165 + $0x50] sm:$0xff]
      %v195 = vld [vmem:[%s165 + $0x58] sm:$0xff]
      %v196 = vld [vmem:[%s165 + $0x60] sm:$0xff]
      %v197 = vld [vmem:[%s165 + $0x68] sm:$0xff]
      %v198 = vld [vmem:[%s165 + $0x70] sm:$0xff]
      %v199 = vld [vmem:[%s165 + $0x78] sm:$0xff]
      %v200 = vld [vmem:[%s165 + $0x80] sm:$0xff]
      %v201 = vld [vmem:[%s165 + $0x88] sm:$0xff]
      %v202 = vld [vmem:[%s165 + $0x90] sm:$0xff]
      %v203 = vld [vmem:[%s165 + $0x98] sm:$0xff]
      %v204 = vld [vmem:[%s165 + $0xa0] sm:$0xff]
      %v205 = vld [vmem:[%s165 + $0xa8] sm:$0xff]
      %v206 = vld [vmem:[%s165 + $0xb0] sm:$0xff]
      %v207 = vld [vmem:[%s165 + $0xb8] sm:$0xff]
      %v208 = vld [vmem:[%s165 + $0xc0] sm:$0xff]
      %v209 = vld [vmem:[%s165 + $0xc8] sm:$0xff]
      %v210 = vld [vmem:[%s165 + $0xd0] sm:$0xff]
      %v211 = vld [vmem:[%s165 + $0xd8] sm:$0xff]
      %v212 = vld [vmem:[%s165 + $0xe0] sm:$0xff]
      %v213 = vld [vmem:[%s165 + $0xe8] sm:$0xff]
      %v214 = vld [vmem:[%s165 + $0xf0] sm:$0xff]
      %v215 = vld [vmem:[%s165 + $0xf8] sm:$0xff]
      %v216 = vld [vmem:[%s165 + $0x100] sm:$0xff]
      %v217 = vld [vmem:[%s165 + $0x108] sm:$0xff]
      %v218 = vld [vmem:[%s165 + $0x110] sm:$0xff]
      %v219 = vld [vmem:[%s165 + $0x118] sm:$0xff]
      %v220 = vld [vmem:[%s165 + $0x120] sm:$0xff]
      %v221 = vld [vmem:[%s165 + $0x128] sm:$0xff]
      %v222 = vld [vmem:[%s165 + $0x130] sm:$0xff]
      %v223 = vld [vmem:[%s165 + $0x138] sm:$0xff]
      %v224 = vld [vmem:[%s165 + $0x140] sm:$0xff]
      %v225 = vld [vmem:[%s165 + $0x148] sm:$0xff]
      %v226 = vld [vmem:[%s165 + $0x150] sm:$0xff]
      %v227 = vld [vmem:[%s165 + $0x158] sm:$0xff]
      %v228 = vld [vmem:[%s165 + $0x160] sm:$0xff]
      %v229 = vld [vmem:[%s165 + $0x168] sm:$0xff]
      %v230 = vld [vmem:[%s165 + $0x170] sm:$0xff]
      %v231 = vld [vmem:[%s165 + $0x178] sm:$0xff]
      %v232 = vld [vmem:[%s165 + $0x180] sm:$0xff]
      %v233 = vld [vmem:[%s165 + $0x188] sm:$0xff]
      %v234 = vld [vmem:[%s165 + $0x190] sm:$0xff]
      %v235 = vld [vmem:[%s165 + $0x198] sm:$0xff]
      %v236 = vld [vmem:[%s165 + $0x1a0] sm:$0xff]
      %v237 = vld [vmem:[%s165 + $0x1a8] sm:$0xff]
      %v238 = vld [vmem:[%s165 + $0x1b0] sm:$0xff]
      %v239 = vld [vmem:[%s165 + $0x1b8] sm:$0xff]
      %v240 = vld [vmem:[%s165 + $0x1c0] sm:$0xff]
      %v241 = vld [vmem:[%s165 + $0x1c8] sm:$0xff]
      %v242 = vld [vmem:[%s165 + $0x1d0] sm:$0xff]
      %v243 = vld [vmem:[%s165 + $0x1d8] sm:$0xff]
      %v244 = vld [vmem:[%s165 + $0x1e0] sm:$0xff]
      %v245 = vld [vmem:[%s165 + $0x1e8] sm:$0xff]
      %v246 = vld [vmem:[%s165 + $0x1f0] sm:$0xff]
      %v247 = vld [vmem:[%s165 + $0x1f8] sm:$0xff]
      %v248 = vld [vmem:[%s165 + $0x200] sm:$0xff]
      %v249 = vld [vmem:[%s165 + $0x208] sm:$0xff]
      %v250 = vld [vmem:[%s165 + $0x210] sm:$0xff]
      %v251 = vld [vmem:[%s165 + $0x218] sm:$0xff]
      %v252 = vld [vmem:[%s165 + $0x220] sm:$0xff]
      %v253 = vld [vmem:[%s165 + $0x228] sm:$0xff]
      %v254 = vld [vmem:[%s165 + $0x230] sm:$0xff]
      %v255 = vld [vmem:[%s165 + $0x238] sm:$0xff]
      %v256 = vld [vmem:[%s165 + $0x240] sm:$0xff]
      %v257 = vld [vmem:[%s165 + $0x248] sm:$0xff]
      %v258 = vld [vmem:[%s165 + $0x250] sm:$0xff]
      %v259 = vld [vmem:[%s165 + $0x258] sm:$0xff]
      %v260 = vld [vmem:[%s165 + $0x260] sm:$0xff]
      %v261 = vld [vmem:[%s165 + $0x268] sm:$0xff]
      %v262 = vld [vmem:[%s165 + $0x270] sm:$0xff]
      %v263 = vld [vmem:[%s165 + $0x278] sm:$0xff]
      %v264 = vld [vmem:[%s165 + $0x280] sm:$0xff]
      %v265 = vld [vmem:[%s165 + $0x288] sm:$0xff]
      %v266 = vld [vmem:[%s165 + $0x290] sm:$0xff]
      %v267 = vld [vmem:[%s165 + $0x298] sm:$0xff]
      %v268 = vld [vmem:[%s165 + $0x2a0] sm:$0xff]
      %v269 = vld [vmem:[%s165 + $0x2a8] sm:$0xff]
      %v270 = vld [vmem:[%s165 + $0x2b0] sm:$0xff]
      %v271 = vld [vmem:[%s165 + $0x2b8] sm:$0xff]
      %v272 = vld [vmem:[%s165 + $0x2c0] sm:$0xff]
      %v273 = vld [vmem:[%s165 + $0x2c8] sm:$0xff]
      %v274 = vld [vmem:[%s165 + $0x2d0] sm:$0xff]
      %v275 = vld [vmem:[%s165 + $0x2d8] sm:$0xff]
      %v276 = vld [vmem:[%s165 + $0x2e0] sm:$0xff]
      %v277 = vld [vmem:[%s165 + $0x2e8] sm:$0xff]
      %v278 = vld [vmem:[%s165 + $0x2f0] sm:$0xff]
      %v279 = vld [vmem:[%s165 + $0x2f8] sm:$0xff]
      %v280 = vld [vmem:[%s165 + $0x300] sm:$0xff]
      %v281 = vld [vmem:[%s165 + $0x308] sm:$0xff]
      %v282 = vld [vmem:[%s165 + $0x310] sm:$0xff]
      %v283 = vld [vmem:[%s165 + $0x318] sm:$0xff]
      %v284 = vld [vmem:[%s165 + $0x320] sm:$0xff]
      %v285 = vld [vmem:[%s165 + $0x328] sm:$0xff]
      %v286 = vld [vmem:[%s165 + $0x330] sm:$0xff]
      %v287 = vld [vmem:[%s165 + $0x338] sm:$0xff]
      %v288 = vld [vmem:[%s165 + $0x340] sm:$0xff]
      %v289 = vld [vmem:[%s165 + $0x348] sm:$0xff]
      %v290 = vld [vmem:[%s165 + $0x350] sm:$0xff]
      %v291 = vld [vmem:[%s165 + $0x358] sm:$0xff]
      %v292 = vld [vmem:[%s165 + $0x360] sm:$0xff]
      %v293 = vld [vmem:[%s165 + $0x368] sm:$0xff]
      %v294 = vld [vmem:[%s165 + $0x370] sm:$0xff]
      %v295 = vld [vmem:[%s165 + $0x378] sm:$0xff]
      %v296 = vld [vmem:[%s165 + $0x380] sm:$0xff]
      %v297 = vld [vmem:[%s165 + $0x388] sm:$0xff]
      %v298 = vld [vmem:[%s165 + $0x390] sm:$0xff]
      %v299 = vld [vmem:[%s165 + $0x398] sm:$0xff]
      %v300 = vld [vmem:[%s165 + $0x3a0] sm:$0xff]
      %v301 = vld [vmem:[%s165 + $0x3a8] sm:$0xff]
      %v302 = vld [vmem:[%s165 + $0x3b0] sm:$0xff]
      %v303 = vld [vmem:[%s165 + $0x3b8] sm:$0xff]
      %v304 = vld [vmem:[%s165 + $0x3c0] sm:$0xff]
      %v305 = vld [vmem:[%s165 + $0x3c8] sm:$0xff]
      %v306 = vld [vmem:[%s165 + $0x3d0] sm:$0xff]
      %v307 = vld [vmem:[%s165 + $0x3d8] sm:$0xff]
      %v308 = vld [vmem:[%s165 + $0x3e0] sm:$0xff]
      %v309 = vld [vmem:[%s165 + $0x3e8] sm:$0xff]
      %v310 = vld [vmem:[%s165 + $0x3f0] sm:$0xff]
      %v311 = vld [vmem:[%s165 + $0x3f8] sm:$0xff]
      %v312 = vld [vmem:[%s165 + $0x400] sm:$0xff]
      %v313 = vld [vmem:[%s165 + $0x408] sm:$0xff]
      %v314 = vld [vmem:[%s165 + $0x410] sm:$0xff]
      %v315 = vld [vmem:[%s165 + $0x418] sm:$0xff]
      %v316 = vld [vmem:[%s165 + $0x420] sm:$0xff]
      %v317 = vld [vmem:[%s165 + $0x428] sm:$0xff]
      %v318 = vld [vmem:[%s165 + $0x430] sm:$0xff]
      %v319 = vld [vmem:[%s165 + $0x438] sm:$0xff]
      %v320 = vld [vmem:[%s165 + $0x440] sm:$0xff]
      %v321 = vld [vmem:[%s165 + $0x448] sm:$0xff]
      %v322 = vld [vmem:[%s165 + $0x450] sm:$0xff]
      %v323 = vld [vmem:[%s165 + $0x458] sm:$0xff]
      %v324 = vld [vmem:[%s165 + $0x460] sm:$0xff]
      %v325 = vld [vmem:[%s165 + $0x468] sm:$0xff]
      %v326 = vld [vmem:[%s165 + $0x470] sm:$0xff]
      %v327 = vld [vmem:[%s165 + $0x478] sm:$0xff]
      %v328 = vld [vmem:[%s165 + $0x480] sm:$0xff]
      %v329 = vld [vmem:[%s165 + $0x488] sm:$0xff]
      %v330 = vld [vmem:[%s165 + $0x490] sm:$0xff]
      %v331 = vld [vmem:[%s165 + $0x498] sm:$0xff]
      %v332 = vld [vmem:[%s165 + $0x4a0] sm:$0xff]
      %v333 = vld [vmem:[%s165 + $0x4a8] sm:$0xff]
      %v334 = vld [vmem:[%s165 + $0x4b0] sm:$0xff]
      %v335 = vld [vmem:[%s165 + $0x4b8] sm:$0xff]
      %v336 = vld [vmem:[%s165 + $0x4c0] sm:$0xff]
      %v337 = vld [vmem:[%s165 + $0x4c8] sm:$0xff]
      %v338 = vld [vmem:[%s165 + $0x4d0] sm:$0xff]
      %v339 = vld [vmem:[%s165 + $0x4d8] sm:$0xff]
      %v340 = vld [vmem:[%s165 + $0x4e0] sm:$0xff]
      %v341 = vld [vmem:[%s165 + $0x4e8] sm:$0xff]
      %v342 = vld [vmem:[%s165 + $0x4f0] sm:$0xff]
      %v343 = vld [vmem:[%s165 + $0x4f8] sm:$0xff]
      %v344 = vld [vmem:[%s165 + $0x500] sm:$0xff]
      %v345 = vld [vmem:[%s165 + $0x508] sm:$0xff]
      %v346 = vld [vmem:[%s165 + $0x510] sm:$0xff]
      %v347 = vld [vmem:[%s165 + $0x518] sm:$0xff]
      %v348 = vld [vmem:[%s165 + $0x520] sm:$0xff]
      %v349 = vld [vmem:[%s165 + $0x528] sm:$0xff]
      %v350 = vld [vmem:[%s165 + $0x530] sm:$0xff]
      %v351 = vld [vmem:[%s165 + $0x538] sm:$0xff]
      %v352 = vld [vmem:[%s165 + $0x540] sm:$0xff]
      %v353 = vld [vmem:[%s165 + $0x548] sm:$0xff]
      %v354 = vld [vmem:[%s165 + $0x550] sm:$0xff]
      %v355 = vld [vmem:[%s165 + $0x558] sm:$0xff]
      %v356 = vld [vmem:[%s165 + $0x560] sm:$0xff]
      %v357 = vld [vmem:[%s165 + $0x568] sm:$0xff]
      %v358 = vld [vmem:[%s165 + $0x570] sm:$0xff]
      %v359 = vld [vmem:[%s165 + $0x578] sm:$0xff]
      %v360 = vld [vmem:[%s165 + $0x580] sm:$0xff]
      %v361 = vld [vmem:[%s165 + $0x588] sm:$0xff]
      %v362 = vld [vmem:[%s165 + $0x590] sm:$0xff]
      %v363 = vld [vmem:[%s165 + $0x598] sm:$0xff]
      %v364 = vld [vmem:[%s165 + $0x5a0] sm:$0xff]
      %v365 = vld [vmem:[%s165 + $0x5a8] sm:$0xff]
      %v366 = vld [vmem:[%s165 + $0x5b0] sm:$0xff]
      %v367 = vld [vmem:[%s165 + $0x5b8] sm:$0xff]
      %v368 = vld [vmem:[%s165 + $0x5c0] sm:$0xff]
      %v369 = vld [vmem:[%s165 + $0x5c8] sm:$0xff]
      %v370 = vld [vmem:[%s165 + $0x5d0] sm:$0xff]
      %v371 = vld [vmem:[%s165 + $0x5d8] sm:$0xff]
      %v372 = vld [vmem:[%s165 + $0x5e0] sm:$0xff]
      %v373 = vld [vmem:[%s165 + $0x5e8] sm:$0xff]
      %v374 = vld [vmem:[%s165 + $0x5f0] sm:$0xff]
      %v375 = vld [vmem:[%s165 + $0x5f8] sm:$0xff]
      %v376 = vld [vmem:[%s165 + $0x600] sm:$0xff]
      %v377 = vld [vmem:[%s165 + $0x608] sm:$0xff]
      %v378 = vld [vmem:[%s165 + $0x610] sm:$0xff]
      %v379 = vld [vmem:[%s165 + $0x618] sm:$0xff]
      %v380 = vld [vmem:[%s165 + $0x620] sm:$0xff]
      %v381 = vld [vmem:[%s165 + $0x628] sm:$0xff]
      %v382 = vld [vmem:[%s165 + $0x630] sm:$0xff]
      %v383 = vld [vmem:[%s165 + $0x638] sm:$0xff]
      %v384 = vld [vmem:[%s165 + $0x640] sm:$0xff]
      %v385 = vld [vmem:[%s165 + $0x648] sm:$0xff]
      %v386 = vld [vmem:[%s165 + $0x650] sm:$0xff]
      %v387 = vld [vmem:[%s165 + $0x658] sm:$0xff]
      %v388 = vld [vmem:[%s165 + $0x660] sm:$0xff]
      %v389 = vld [vmem:[%s165 + $0x668] sm:$0xff]
      %v390 = vld [vmem:[%s165 + $0x670] sm:$0xff]
      %v391 = vld [vmem:[%s165 + $0x678] sm:$0xff]
      %v392 = vld [vmem:[%s165 + $0x680] sm:$0xff]
      %v393 = vld [vmem:[%s165 + $0x688] sm:$0xff]
      %v394 = vld [vmem:[%s165 + $0x690] sm:$0xff]
      %v395 = vld [vmem:[%s165 + $0x698] sm:$0xff]
      %v396 = vld [vmem:[%s165 + $0x6a0] sm:$0xff]
      %v397 = vld [vmem:[%s165 + $0x6a8] sm:$0xff]
      %v398 = vld [vmem:[%s165 + $0x6b0] sm:$0xff]
      %v399 = vld [vmem:[%s165 + $0x6b8] sm:$0xff]
      %v412 = vunpack.c.l.b16 %v172
      %v413 = vunpack.c.h.b16 %v172
      %v414 = vunpack.c.l.b16 %v173
      %v415 = vunpack.c.h.b16 %v173
      %v416 = vunpack.c.l.b16 %v174
      %v417 = vunpack.c.l.b16 %v175
      %v418 = vunpack.c.h.b16 %v175
      %v419 = vunpack.c.l.b16 %v176
      %v420 = vunpack.c.h.b16 %v176
      %v421 = vunpack.c.l.b16 %v177
      %v422 = vunpack.c.l.b16 %v178
      %v423 = vunpack.c.h.b16 %v178
      %v424 = vunpack.c.l.b16 %v179
      %v425 = vunpack.c.h.b16 %v179
      %v426 = vunpack.c.l.b16 %v180
      %v427 = vunpack.c.l.b16 %v181
      %v428 = vunpack.c.h.b16 %v181
      %v429 = vunpack.c.l.b16 %v182
      %v430 = vunpack.c.h.b16 %v182
      %v431 = vunpack.c.l.b16 %v183
      %v432 = vpack.c.b16 %v417, %v412
      %v433 = vpack.c.b16 %v418, %v413
      %v434 = vpack.c.b16 %v419, %v414
      %v435 = vpack.c.b16 %v420, %v415
      %v436 = vpack.c.b16 %v421, %v416
      %v437 = vpack.c.b16 %v427, %v422
      %v438 = vpack.c.b16 %v428, %v423
      %v439 = vpack.c.b16 %v429, %v424
      %v440 = vpack.c.b16 %v430, %v425
      %v441 = vpack.c.b16 %v431, %v426
      %v666 = vunpack.c.l.b16 %v184
      %v667 = vunpack.c.h.b16 %v184
      %v668 = vunpack.c.l.b16 %v185
      %v669 = vunpack.c.h.b16 %v185
      %v670 = vunpack.c.l.b16 %v186
      %v671 = vunpack.c.h.b16 %v186
      %v672 = vunpack.c.l.b16 %v187
      %v673 = vunpack.c.h.b16 %v187
      %v674 = vunpack.c.l.b16 %v188
      %v675 = vunpack.c.h.b16 %v188
      %v676 = vunpack.c.l.b16 %v189
      %v677 = vunpack.c.h.b16 %v189
      %v678 = vunpack.c.l.b16 %v190
      %v679 = vunpack.c.h.b16 %v190
      %v680 = vunpack.c.l.b16 %v191
      %v681 = vunpack.c.h.b16 %v191
      %v682 = vunpack.c.l.b16 %v192
      %v683 = vunpack.c.h.b16 %v192
      %v684 = vunpack.c.l.b16 %v193
      %v685 = vunpack.c.h.b16 %v193
      %v686 = vunpack.c.l.b16 %v194
      %v687 = vunpack.c.h.b16 %v194
      %v688 = vunpack.c.l.b16 %v195
      %v689 = vunpack.c.h.b16 %v195
      %v690 = vunpack.c.l.b16 %v196
      %v691 = vunpack.c.h.b16 %v196
      %v692 = vunpack.c.l.b16 %v197
      %v693 = vunpack.c.h.b16 %v197
      %v694 = vunpack.c.l.b16 %v198
      %v695 = vunpack.c.h.b16 %v198
      %v696 = vunpack.c.l.b16 %v199
      %v697 = vunpack.c.h.b16 %v199
      %v698 = vunpack.c.l.b16 %v200
      %v699 = vunpack.c.h.b16 %v200
      %v700 = vunpack.c.l.b16 %v201
      %v701 = vunpack.c.h.b16 %v201
      %v702 = vunpack.c.l.b16 %v202
      %v703 = vunpack.c.h.b16 %v202
      %v704 = vunpack.c.l.b16 %v203
      %v705 = vunpack.c.h.b16 %v203
      %v706 = vunpack.c.l.b16 %v204
      %v707 = vunpack.c.h.b16 %v204
      %v708 = vunpack.c.l.b16 %v205
      %v709 = vunpack.c.h.b16 %v205
      %v710 = vunpack.c.l.b16 %v206
      %v711 = vunpack.c.h.b16 %v206
      %v712 = vunpack.c.l.b16 %v207
      %v713 = vunpack.c.h.b16 %v207
      %v714 = vunpack.c.l.b16 %v208
      %v715 = vunpack.c.h.b16 %v208
      %v716 = vunpack.c.l.b16 %v209
      %v717 = vunpack.c.h.b16 %v209
      %v718 = vunpack.c.l.b16 %v210
      %v719 = vunpack.c.h.b16 %v210
      %v720 = vunpack.c.l.b16 %v211
      %v721 = vunpack.c.h.b16 %v211
      %v722 = vunpack.c.l.b16 %v212
      %v723 = vunpack.c.h.b16 %v212
      %v724 = vunpack.c.l.b16 %v213
      %v725 = vunpack.c.h.b16 %v213
      %v726 = vunpack.c.l.b16 %v214
      %v727 = vunpack.c.h.b16 %v214
      %v728 = vunpack.c.l.b16 %v215
      %v729 = vunpack.c.h.b16 %v215
      %v730 = vunpack.c.l.b16 %v216
      %v731 = vunpack.c.h.b16 %v216
      %v732 = vunpack.c.l.b16 %v217
      %v733 = vunpack.c.h.b16 %v217
      %v734 = vunpack.c.l.b16 %v218
      %v735 = vunpack.c.h.b16 %v218
      %v736 = vunpack.c.l.b16 %v219
      %v737 = vunpack.c.h.b16 %v219
      %v738 = vunpack.c.l.b16 %v220
      %v739 = vunpack.c.h.b16 %v220
      %v740 = vunpack.c.l.b16 %v221
      %v741 = vunpack.c.h.b16 %v221
      %v742 = vunpack.c.l.b16 %v222
      %v743 = vunpack.c.h.b16 %v222
      %v744 = vunpack.c.l.b16 %v223
      %v745 = vunpack.c.h.b16 %v223
      %v746 = vunpack.c.l.b16 %v224
      %v747 = vunpack.c.h.b16 %v224
      %v748 = vunpack.c.l.b16 %v225
      %v749 = vunpack.c.h.b16 %v225
      %v750 = vunpack.c.l.b16 %v226
      %v751 = vunpack.c.h.b16 %v226
      %v752 = vunpack.c.l.b16 %v227
      %v753 = vunpack.c.h.b16 %v227
      %v754 = vunpack.c.l.b16 %v228
      %v755 = vunpack.c.h.b16 %v228
      %v756 = vunpack.c.l.b16 %v229
      %v757 = vunpack.c.h.b16 %v229
      %v758 = vunpack.c.l.b16 %v230
      %v759 = vunpack.c.h.b16 %v230
      %v760 = vunpack.c.l.b16 %v231
      %v761 = vunpack.c.h.b16 %v231
      %v762 = vunpack.c.l.b16 %v232
      %v763 = vunpack.c.h.b16 %v232
      %v764 = vunpack.c.l.b16 %v233
      %v765 = vunpack.c.h.b16 %v233
      %v766 = vunpack.c.l.b16 %v234
      %v767 = vunpack.c.h.b16 %v234
      %v768 = vunpack.c.l.b16 %v235
      %v769 = vunpack.c.h.b16 %v235
      %v770 = vunpack.c.l.b16 %v236
      %v771 = vunpack.c.h.b16 %v236
      %v772 = vunpack.c.l.b16 %v237
      %v773 = vunpack.c.h.b16 %v237
      %v774 = vunpack.c.l.b16 %v238
      %v775 = vunpack.c.h.b16 %v238
      %v776 = vunpack.c.l.b16 %v239
      %v777 = vunpack.c.h.b16 %v239
      %v778 = vunpack.c.l.b16 %v240
      %v779 = vunpack.c.h.b16 %v240
      %v780 = vunpack.c.l.b16 %v241
      %v781 = vunpack.c.h.b16 %v241
      %v782 = vunpack.c.l.b16 %v242
      %v783 = vunpack.c.h.b16 %v242
      %v784 = vunpack.c.l.b16 %v243
      %v785 = vunpack.c.h.b16 %v243
      %v786 = vunpack.c.l.b16 %v244
      %v787 = vunpack.c.h.b16 %v244
      %v788 = vunpack.c.l.b16 %v245
      %v789 = vunpack.c.h.b16 %v245
      %v790 = vunpack.c.l.b16 %v246
      %v791 = vunpack.c.h.b16 %v246
      %v792 = vunpack.c.l.b16 %v247
      %v793 = vunpack.c.h.b16 %v247
      %v794 = vunpack.c.l.b16 %v248
      %v795 = vunpack.c.h.b16 %v248
      %v796 = vunpack.c.l.b16 %v249
      %v797 = vunpack.c.h.b16 %v249
      %v798 = vunpack.c.l.b16 %v250
      %v799 = vunpack.c.h.b16 %v250
      %v800 = vunpack.c.l.b16 %v251
      %v801 = vunpack.c.h.b16 %v251
      %v802 = vunpack.c.l.b16 %v252
      %v803 = vunpack.c.h.b16 %v252
      %v804 = vunpack.c.l.b16 %v253
      %v805 = vunpack.c.h.b16 %v253
      %v806 = vunpack.c.l.b16 %v254
      %v807 = vunpack.c.h.b16 %v254
      %v808 = vunpack.c.l.b16 %v255
      %v809 = vunpack.c.h.b16 %v255
      %v810 = vunpack.c.l.b16 %v256
      %v811 = vunpack.c.h.b16 %v256
      %v812 = vunpack.c.l.b16 %v257
      %v813 = vunpack.c.h.b16 %v257
      %v814 = vunpack.c.l.b16 %v258
      %v815 = vunpack.c.h.b16 %v258
      %v816 = vunpack.c.l.b16 %v259
      %v817 = vunpack.c.h.b16 %v259
      %v818 = vunpack.c.l.b16 %v260
      %v819 = vunpack.c.h.b16 %v260
      %v820 = vunpack.c.l.b16 %v261
      %v821 = vunpack.c.h.b16 %v261
      %v822 = vunpack.c.l.b16 %v262
      %v823 = vunpack.c.h.b16 %v262
      %v824 = vunpack.c.l.b16 %v263
      %v825 = vunpack.c.h.b16 %v263
      %v826 = vunpack.c.l.b16 %v264
      %v827 = vunpack.c.h.b16 %v264
      %v828 = vunpack.c.l.b16 %v265
      %v829 = vunpack.c.h.b16 %v265
      %v830 = vunpack.c.l.b16 %v266
      %v831 = vunpack.c.h.b16 %v266
      %v832 = vunpack.c.l.b16 %v267
      %v833 = vunpack.c.h.b16 %v267
      %v834 = vunpack.c.l.b16 %v268
      %v835 = vunpack.c.h.b16 %v268
      %v836 = vunpack.c.l.b16 %v269
      %v837 = vunpack.c.h.b16 %v269
      %v838 = vunpack.c.l.b16 %v270
      %v839 = vunpack.c.h.b16 %v270
      %v840 = vunpack.c.l.b16 %v271
      %v841 = vunpack.c.h.b16 %v271
      %v842 = vunpack.c.l.b16 %v272
      %v843 = vunpack.c.h.b16 %v272
      %v844 = vunpack.c.l.b16 %v273
      %v845 = vunpack.c.h.b16 %v273
      %v846 = vunpack.c.l.b16 %v274
      %v847 = vunpack.c.h.b16 %v274
      %v848 = vunpack.c.l.b16 %v275
      %v849 = vunpack.c.h.b16 %v275
      %v850 = vunpack.c.l.b16 %v276
      %v851 = vunpack.c.h.b16 %v276
      %v852 = vunpack.c.l.b16 %v277
      %v853 = vunpack.c.h.b16 %v277
      %v854 = vunpack.c.l.b16 %v278
      %v855 = vunpack.c.h.b16 %v278
      %v856 = vunpack.c.l.b16 %v279
      %v857 = vunpack.c.h.b16 %v279
      %v858 = vunpack.c.l.b16 %v280
      %v859 = vunpack.c.h.b16 %v280
      %v860 = vunpack.c.l.b16 %v281
      %v861 = vunpack.c.h.b16 %v281
      %v862 = vunpack.c.l.b16 %v282
      %v863 = vunpack.c.h.b16 %v282
      %v864 = vunpack.c.l.b16 %v283
      %v865 = vunpack.c.h.b16 %v283
      %v866 = vunpack.c.l.b16 %v284
      %v867 = vunpack.c.h.b16 %v284
      %v868 = vunpack.c.l.b16 %v285
      %v869 = vunpack.c.h.b16 %v285
      %v870 = vunpack.c.l.b16 %v286
      %v871 = vunpack.c.h.b16 %v286
      %v872 = vunpack.c.l.b16 %v287
      %v873 = vunpack.c.h.b16 %v287
      %v874 = vunpack.c.l.b16 %v288
      %v875 = vunpack.c.h.b16 %v288
      %v876 = vunpack.c.l.b16 %v289
      %v877 = vunpack.c.h.b16 %v289
      %v878 = vunpack.c.l.b16 %v290
      %v879 = vunpack.c.h.b16 %v290
      %v880 = vunpack.c.l.b16 %v291
      %v881 = vunpack.c.h.b16 %v291
      %v882 = vunpack.c.l.b16 %v292
      %v883 = vunpack.c.h.b16 %v292
      %v884 = vunpack.c.l.b16 %v293
      %v885 = vunpack.c.h.b16 %v293
      %v886 = vunpack.c.l.b16 %v294
      %v887 = vunpack.c.h.b16 %v294
      %v888 = vunpack.c.l.b16 %v295
      %v889 = vunpack.c.h.b16 %v295
      %v890 = vunpack.c.l.b16 %v296
      %v891 = vunpack.c.h.b16 %v296
      %v892 = vunpack.c.l.b16 %v297
      %v893 = vunpack.c.h.b16 %v297
      %v894 = vunpack.c.l.b16 %v298
      %v895 = vunpack.c.h.b16 %v298
      %v896 = vunpack.c.l.b16 %v299
      %v897 = vunpack.c.h.b16 %v299
      %v898 = vunpack.c.l.b16 %v300
      %v899 = vunpack.c.h.b16 %v300
      %v900 = vunpack.c.l.b16 %v301
      %v901 = vunpack.c.h.b16 %v301
      %v902 = vunpack.c.l.b16 %v302
      %v903 = vunpack.c.h.b16 %v302
      %v904 = vunpack.c.l.b16 %v303
      %v905 = vunpack.c.h.b16 %v303
      %v906 = vunpack.c.l.b16 %v304
      %v907 = vunpack.c.h.b16 %v304
      %v908 = vunpack.c.l.b16 %v305
      %v909 = vunpack.c.h.b16 %v305
      %v910 = vunpack.c.l.b16 %v306
      %v911 = vunpack.c.h.b16 %v306
      %v912 = vunpack.c.l.b16 %v307
      %v913 = vunpack.c.h.b16 %v307
      %v914 = vunpack.c.l.b16 %v308
      %v915 = vunpack.c.h.b16 %v308
      %v916 = vunpack.c.l.b16 %v309
      %v917 = vunpack.c.h.b16 %v309
      %v918 = vunpack.c.l.b16 %v310
      %v919 = vunpack.c.h.b16 %v310
      %v920 = vunpack.c.l.b16 %v311
      %v921 = vunpack.c.h.b16 %v311
      %v922 = vunpack.c.l.b16 %v312
      %v923 = vunpack.c.h.b16 %v312
      %v924 = vunpack.c.l.b16 %v313
      %v925 = vunpack.c.h.b16 %v313
      %v926 = vunpack.c.l.b16 %v314
      %v927 = vunpack.c.h.b16 %v314
      %v928 = vunpack.c.l.b16 %v315
      %v929 = vunpack.c.h.b16 %v315
      %v930 = vunpack.c.l.b16 %v316
      %v931 = vunpack.c.h.b16 %v316
      %v932 = vunpack.c.l.b16 %v317
      %v933 = vunpack.c.h.b16 %v317
      %v934 = vunpack.c.l.b16 %v318
      %v935 = vunpack.c.h.b16 %v318
      %v936 = vunpack.c.l.b16 %v319
      %v937 = vunpack.c.h.b16 %v319
      %v938 = vunpack.c.l.b16 %v320
      %v939 = vunpack.c.h.b16 %v320
      %v940 = vunpack.c.l.b16 %v321
      %v941 = vunpack.c.h.b16 %v321
      %v942 = vunpack.c.l.b16 %v322
      %v943 = vunpack.c.h.b16 %v322
      %v944 = vunpack.c.l.b16 %v323
      %v945 = vunpack.c.h.b16 %v323
      %v946 = vunpack.c.l.b16 %v324
      %v947 = vunpack.c.h.b16 %v324
      %v948 = vunpack.c.l.b16 %v325
      %v949 = vunpack.c.h.b16 %v325
      %v950 = vunpack.c.l.b16 %v326
      %v951 = vunpack.c.h.b16 %v326
      %v952 = vunpack.c.l.b16 %v327
      %v953 = vunpack.c.h.b16 %v327
      %v954 = vunpack.c.l.b16 %v328
      %v955 = vunpack.c.h.b16 %v328
      %v956 = vunpack.c.l.b16 %v329
      %v957 = vunpack.c.h.b16 %v329
      %v958 = vunpack.c.l.b16 %v330
      %v959 = vunpack.c.h.b16 %v330
      %v960 = vunpack.c.l.b16 %v331
      %v961 = vunpack.c.h.b16 %v331
      %v962 = vunpack.c.l.b16 %v332
      %v963 = vunpack.c.h.b16 %v332
      %v964 = vunpack.c.l.b16 %v333
      %v965 = vunpack.c.h.b16 %v333
      %v966 = vunpack.c.l.b16 %v334
      %v967 = vunpack.c.h.b16 %v334
      %v968 = vunpack.c.l.b16 %v335
      %v969 = vunpack.c.h.b16 %v335
      %v970 = vunpack.c.l.b16 %v336
      %v971 = vunpack.c.h.b16 %v336
      %v972 = vunpack.c.l.b16 %v337
      %v973 = vunpack.c.h.b16 %v337
      %v974 = vunpack.c.l.b16 %v338
      %v975 = vunpack.c.h.b16 %v338
      %v976 = vunpack.c.l.b16 %v339
      %v977 = vunpack.c.h.b16 %v339
      %v978 = vunpack.c.l.b16 %v340
      %v979 = vunpack.c.h.b16 %v340
      %v980 = vunpack.c.l.b16 %v341
      %v981 = vunpack.c.h.b16 %v341
      %v982 = vunpack.c.l.b16 %v342
      %v983 = vunpack.c.h.b16 %v342
      %v984 = vunpack.c.l.b16 %v343
      %v985 = vunpack.c.h.b16 %v343
      %v986 = vunpack.c.l.b16 %v344
      %v987 = vunpack.c.h.b16 %v344
      %v988 = vunpack.c.l.b16 %v345
      %v989 = vunpack.c.h.b16 %v345
      %v990 = vunpack.c.l.b16 %v346
      %v991 = vunpack.c.h.b16 %v346
      %v992 = vunpack.c.l.b16 %v347
      %v993 = vunpack.c.h.b16 %v347
      %v994 = vunpack.c.l.b16 %v348
      %v995 = vunpack.c.h.b16 %v348
      %v996 = vunpack.c.l.b16 %v349
      %v997 = vunpack.c.h.b16 %v349
      %v998 = vunpack.c.l.b16 %v350
      %v999 = vunpack.c.h.b16 %v350
      %v1000 = vunpack.c.l.b16 %v351
      %v1001 = vunpack.c.h.b16 %v351
      %v1002 = vunpack.c.l.b16 %v352
      %v1003 = vunpack.c.h.b16 %v352
      %v1004 = vunpack.c.l.b16 %v353
      %v1005 = vunpack.c.h.b16 %v353
      %v1006 = vunpack.c.l.b16 %v354
      %v1007 = vunpack.c.h.b16 %v354
      %v1008 = vunpack.c.l.b16 %v355
      %v1009 = vunpack.c.h.b16 %v355
      %v1010 = vunpack.c.l.b16 %v356
      %v1011 = vunpack.c.h.b16 %v356
      %v1012 = vunpack.c.l.b16 %v357
      %v1013 = vunpack.c.h.b16 %v357
      %v1014 = vunpack.c.l.b16 %v358
      %v1015 = vunpack.c.h.b16 %v358
      %v1016 = vunpack.c.l.b16 %v359
      %v1017 = vunpack.c.h.b16 %v359
      %v1018 = vunpack.c.l.b16 %v360
      %v1019 = vunpack.c.h.b16 %v360
      %v1020 = vunpack.c.l.b16 %v361
      %v1021 = vunpack.c.h.b16 %v361
      %v1022 = vunpack.c.l.b16 %v362
      %v1023 = vunpack.c.h.b16 %v362
      %v1024 = vunpack.c.l.b16 %v363
      %v1025 = vunpack.c.h.b16 %v363
      %v1026 = vunpack.c.l.b16 %v364
      %v1027 = vunpack.c.h.b16 %v364
      %v1028 = vunpack.c.l.b16 %v365
      %v1029 = vunpack.c.h.b16 %v365
      %v1030 = vunpack.c.l.b16 %v366
      %v1031 = vunpack.c.h.b16 %v366
      %v1032 = vunpack.c.l.b16 %v367
      %v1033 = vunpack.c.h.b16 %v367
      %v1034 = vunpack.c.l.b16 %v368
      %v1035 = vunpack.c.h.b16 %v368
      %v1036 = vunpack.c.l.b16 %v369
      %v1037 = vunpack.c.h.b16 %v369
      %v1038 = vunpack.c.l.b16 %v370
      %v1039 = vunpack.c.h.b16 %v370
      %v1040 = vunpack.c.l.b16 %v371
      %v1041 = vunpack.c.h.b16 %v371
      %v1042 = vunpack.c.l.b16 %v372
      %v1043 = vunpack.c.h.b16 %v372
      %v1044 = vunpack.c.l.b16 %v373
      %v1045 = vunpack.c.h.b16 %v373
      %v1046 = vunpack.c.l.b16 %v374
      %v1047 = vunpack.c.h.b16 %v374
      %v1048 = vunpack.c.l.b16 %v375
      %v1049 = vunpack.c.h.b16 %v375
      %v1050 = vunpack.c.l.b16 %v376
      %v1051 = vunpack.c.h.b16 %v376
      %v1052 = vunpack.c.l.b16 %v377
      %v1053 = vunpack.c.h.b16 %v377
      %v1054 = vunpack.c.l.b16 %v378
      %v1055 = vunpack.c.h.b16 %v378
      %v1056 = vunpack.c.l.b16 %v379
      %v1057 = vunpack.c.h.b16 %v379
      %v1058 = vunpack.c.l.b16 %v380
      %v1059 = vunpack.c.h.b16 %v380
      %v1060 = vunpack.c.l.b16 %v381
      %v1061 = vunpack.c.h.b16 %v381
      %v1062 = vunpack.c.l.b16 %v382
      %v1063 = vunpack.c.h.b16 %v382
      %v1064 = vunpack.c.l.b16 %v383
      %v1065 = vunpack.c.h.b16 %v383
      %v1066 = vunpack.c.l.b16 %v384
      %v1067 = vunpack.c.h.b16 %v384
      %v1068 = vunpack.c.l.b16 %v385
      %v1069 = vunpack.c.h.b16 %v385
      %v1070 = vunpack.c.l.b16 %v386
      %v1071 = vunpack.c.h.b16 %v386
      %v1072 = vunpack.c.l.b16 %v387
      %v1073 = vunpack.c.h.b16 %v387
      %v1074 = vunpack.c.l.b16 %v388
      %v1075 = vunpack.c.h.b16 %v388
      %v1076 = vunpack.c.l.b16 %v389
      %v1077 = vunpack.c.h.b16 %v389
      %v1078 = vunpack.c.l.b16 %v390
      %v1079 = vunpack.c.h.b16 %v390
      %v1080 = vunpack.c.l.b16 %v391
      %v1081 = vunpack.c.h.b16 %v391
      %v1082 = vunpack.c.l.b16 %v392
      %v1083 = vunpack.c.h.b16 %v392
      %v1084 = vunpack.c.l.b16 %v393
      %v1085 = vunpack.c.h.b16 %v393
      %v1086 = vunpack.c.l.b16 %v394
      %v1087 = vunpack.c.h.b16 %v394
      %v1088 = vunpack.c.l.b16 %v395
      %v1089 = vunpack.c.h.b16 %v395
      %v1090 = vunpack.c.l.b16 %v396
      %v1091 = vunpack.c.h.b16 %v396
      %v1092 = vunpack.c.l.b16 %v397
      %v1093 = vunpack.c.h.b16 %v397
      %v1094 = vunpack.c.l.b16 %v398
      %v1095 = vunpack.c.h.b16 %v398
      %v1096 = vunpack.c.l.b16 %v399
      %v1097 = vunpack.c.h.b16 %v399
      %v1098 = vpack.c.b16 %v672, %v666
      %v1099 = vpack.c.b16 %v673, %v667
      %v1100 = vpack.c.b16 %v674, %v668
      %v1101 = vpack.c.b16 %v675, %v669
      %v1102 = vpack.c.b16 %v676, %v670
      %v1103 = vpack.c.b16 %v677, %v671
      %v1104 = vpack.c.b16 %v684, %v678
      %v1105 = vpack.c.b16 %v685, %v679
      %v1106 = vpack.c.b16 %v686, %v680
      %v1107 = vpack.c.b16 %v687, %v681
      %v1108 = vpack.c.b16 %v688, %v682
      %v1109 = vpack.c.b16 %v689, %v683
      %v1110 = vpack.c.b16 %v696, %v690
      %v1111 = vpack.c.b16 %v697, %v691
      %v1112 = vpack.c.b16 %v698, %v692
      %v1113 = vpack.c.b16 %v699, %v693
      %v1114 = vpack.c.b16 %v700, %v694
      %v1115 = vpack.c.b16 %v701, %v695
      %v1116 = vpack.c.b16 %v708, %v702
      %v1117 = vpack.c.b16 %v709, %v703
      %v1118 = vpack.c.b16 %v710, %v704
      %v1119 = vpack.c.b16 %v711, %v705
      %v1120 = vpack.c.b16 %v712, %v706
      %v1121 = vpack.c.b16 %v713, %v707
      %v1122 = vpack.c.b16 %v720, %v714
      %v1123 = vpack.c.b16 %v721, %v715
      %v1124 = vpack.c.b16 %v722, %v716
      %v1125 = vpack.c.b16 %v723, %v717
      %v1126 = vpack.c.b16 %v724, %v718
      %v1127 = vpack.c.b16 %v725, %v719
      %v1128 = vpack.c.b16 %v732, %v726
      %v1129 = vpack.c.b16 %v733, %v727
      %v1130 = vpack.c.b16 %v734, %v728
      %v1131 = vpack.c.b16 %v735, %v729
      %v1132 = vpack.c.b16 %v736, %v730
      %v1133 = vpack.c.b16 %v737, %v731
      %v1134 = vpack.c.b16 %v744, %v738
      %v1135 = vpack.c.b16 %v745, %v739
      %v1136 = vpack.c.b16 %v746, %v740
      %v1137 = vpack.c.b16 %v747, %v741
      %v1138 = vpack.c.b16 %v748, %v742
      %v1139 = vpack.c.b16 %v749, %v743
      %v1140 = vpack.c.b16 %v756, %v750
      %v1141 = vpack.c.b16 %v757, %v751
      %v1142 = vpack.c.b16 %v758, %v752
      %v1143 = vpack.c.b16 %v759, %v753
      %v1144 = vpack.c.b16 %v760, %v754
      %v1145 = vpack.c.b16 %v761, %v755
      %v1146 = vpack.c.b16 %v768, %v762
      %v1147 = vpack.c.b16 %v769, %v763
      %v1148 = vpack.c.b16 %v770, %v764
      %v1149 = vpack.c.b16 %v771, %v765
      %v1150 = vpack.c.b16 %v772, %v766
      %v1151 = vpack.c.b16 %v773, %v767
      %v1152 = vpack.c.b16 %v780, %v774
      %v1153 = vpack.c.b16 %v781, %v775
      %v1154 = vpack.c.b16 %v782, %v776
      %v1155 = vpack.c.b16 %v783, %v777
      %v1156 = vpack.c.b16 %v784, %v778
      %v1157 = vpack.c.b16 %v785, %v779
      %v1158 = vpack.c.b16 %v792, %v786
      %v1159 = vpack.c.b16 %v793, %v787
      %v1160 = vpack.c.b16 %v794, %v788
      %v1161 = vpack.c.b16 %v795, %v789
      %v1162 = vpack.c.b16 %v796, %v790
      %v1163 = vpack.c.b16 %v797, %v791
      %v1164 = vpack.c.b16 %v804, %v798
      %v1165 = vpack.c.b16 %v805, %v799
      %v1166 = vpack.c.b16 %v806, %v800
      %v1167 = vpack.c.b16 %v807, %v801
      %v1168 = vpack.c.b16 %v808, %v802
      %v1169 = vpack.c.b16 %v809, %v803
      %v1170 = vpack.c.b16 %v816, %v810
      %v1171 = vpack.c.b16 %v817, %v811
      %v1172 = vpack.c.b16 %v818, %v812
      %v1173 = vpack.c.b16 %v819, %v813
      %v1174 = vpack.c.b16 %v820, %v814
      %v1175 = vpack.c.b16 %v821, %v815
      %v1176 = vpack.c.b16 %v828, %v822
      %v1177 = vpack.c.b16 %v829, %v823
      %v1178 = vpack.c.b16 %v830, %v824
      %v1179 = vpack.c.b16 %v831, %v825
      %v1180 = vpack.c.b16 %v832, %v826
      %v1181 = vpack.c.b16 %v833, %v827
      %v1182 = vpack.c.b16 %v840, %v834
      %v1183 = vpack.c.b16 %v841, %v835
      %v1184 = vpack.c.b16 %v842, %v836
      %v1185 = vpack.c.b16 %v843, %v837
      %v1186 = vpack.c.b16 %v844, %v838
      %v1187 = vpack.c.b16 %v845, %v839
      %v1188 = vpack.c.b16 %v852, %v846
      %v1189 = vpack.c.b16 %v853, %v847
      %v1190 = vpack.c.b16 %v854, %v848
      %v1191 = vpack.c.b16 %v855, %v849
      %v1192 = vpack.c.b16 %v856, %v850
      %v1193 = vpack.c.b16 %v857, %v851
      %v1194 = vpack.c.b16 %v864, %v858
      %v1195 = vpack.c.b16 %v865, %v859
      %v1196 = vpack.c.b16 %v866, %v860
      %v1197 = vpack.c.b16 %v867, %v861
      %v1198 = vpack.c.b16 %v868, %v862
      %v1199 = vpack.c.b16 %v869, %v863
      %v1200 = vpack.c.b16 %v876, %v870
      %v1201 = vpack.c.b16 %v877, %v871
      %v1202 = vpack.c.b16 %v878, %v872
      %v1203 = vpack.c.b16 %v879, %v873
      %v1204 = vpack.c.b16 %v880, %v874
      %v1205 = vpack.c.b16 %v881, %v875
      %v1206 = vpack.c.b16 %v888, %v882
      %v1207 = vpack.c.b16 %v889, %v883
      %v1208 = vpack.c.b16 %v890, %v884
      %v1209 = vpack.c.b16 %v891, %v885
      %v1210 = vpack.c.b16 %v892, %v886
      %v1211 = vpack.c.b16 %v893, %v887
      %v1212 = vpack.c.b16 %v900, %v894
      %v1213 = vpack.c.b16 %v901, %v895
      %v1214 = vpack.c.b16 %v902, %v896
      %v1215 = vpack.c.b16 %v903, %v897
      %v1216 = vpack.c.b16 %v904, %v898
      %v1217 = vpack.c.b16 %v905, %v899
      %v1218 = vpack.c.b16 %v912, %v906
      %v1219 = vpack.c.b16 %v913, %v907
      %v1220 = vpack.c.b16 %v914, %v908
      %v1221 = vpack.c.b16 %v915, %v909
      %v1222 = vpack.c.b16 %v916, %v910
      %v1223 = vpack.c.b16 %v917, %v911
      %v1224 = vpack.c.b16 %v924, %v918
      %v1225 = vpack.c.b16 %v925, %v919
      %v1226 = vpack.c.b16 %v926, %v920
      %v1227 = vpack.c.b16 %v927, %v921
      %v1228 = vpack.c.b16 %v928, %v922
      %v1229 = vpack.c.b16 %v929, %v923
      %v1230 = vpack.c.b16 %v936, %v930
      %v1231 = vpack.c.b16 %v937, %v931
      %v1232 = vpack.c.b16 %v938, %v932
      %v1233 = vpack.c.b16 %v939, %v933
      %v1234 = vpack.c.b16 %v940, %v934
      %v1235 = vpack.c.b16 %v941, %v935
      %v1236 = vpack.c.b16 %v948, %v942
      %v1237 = vpack.c.b16 %v949, %v943
      %v1238 = vpack.c.b16 %v950, %v944
      %v1239 = vpack.c.b16 %v951, %v945
      %v1240 = vpack.c.b16 %v952, %v946
      %v1241 = vpack.c.b16 %v953, %v947
      %v1242 = vpack.c.b16 %v960, %v954
      %v1243 = vpack.c.b16 %v961, %v955
      %v1244 = vpack.c.b16 %v962, %v956
      %v1245 = vpack.c.b16 %v963, %v957
      %v1246 = vpack.c.b16 %v964, %v958
      %v1247 = vpack.c.b16 %v965, %v959
      %v1248 = vpack.c.b16 %v972, %v966
      %v1249 = vpack.c.b16 %v973, %v967
      %v1250 = vpack.c.b16 %v974, %v968
      %v1251 = vpack.c.b16 %v975, %v969
      %v1252 = vpack.c.b16 %v976, %v970
      %v1253 = vpack.c.b16 %v977, %v971
      %v1254 = vpack.c.b16 %v984, %v978
      %v1255 = vpack.c.b16 %v985, %v979
      %v1256 = vpack.c.b16 %v986, %v980
      %v1257 = vpack.c.b16 %v987, %v981
      %v1258 = vpack.c.b16 %v988, %v982
      %v1259 = vpack.c.b16 %v989, %v983
      %v1260 = vpack.c.b16 %v996, %v990
      %v1261 = vpack.c.b16 %v997, %v991
      %v1262 = vpack.c.b16 %v998, %v992
      %v1263 = vpack.c.b16 %v999, %v993
      %v1264 = vpack.c.b16 %v1000, %v994
      %v1265 = vpack.c.b16 %v1001, %v995
      %v1266 = vpack.c.b16 %v1008, %v1002
      %v1267 = vpack.c.b16 %v1009, %v1003
      %v1268 = vpack.c.b16 %v1010, %v1004
      %v1269 = vpack.c.b16 %v1011, %v1005
      %v1270 = vpack.c.b16 %v1012, %v1006
      %v1271 = vpack.c.b16 %v1013, %v1007
      %v1272 = vpack.c.b16 %v1020, %v1014
      %v1273 = vpack.c.b16 %v1021, %v1015
      %v1274 = vpack.c.b16 %v1022, %v1016
      %v1275 = vpack.c.b16 %v1023, %v1017
      %v1276 = vpack.c.b16 %v1024, %v1018
      %v1277 = vpack.c.b16 %v1025, %v1019
      %v1278 = vpack.c.b16 %v1032, %v1026
      %v1279 = vpack.c.b16 %v1033, %v1027
      %v1280 = vpack.c.b16 %v1034, %v1028
      %v1281 = vpack.c.b16 %v1035, %v1029
      %v1282 = vpack.c.b16 %v1036, %v1030
      %v1283 = vpack.c.b16 %v1037, %v1031
      %v1284 = vpack.c.b16 %v1044, %v1038
      %v1285 = vpack.c.b16 %v1045, %v1039
      %v1286 = vpack.c.b16 %v1046, %v1040
      %v1287 = vpack.c.b16 %v1047, %v1041
      %v1288 = vpack.c.b16 %v1048, %v1042
      %v1289 = vpack.c.b16 %v1049, %v1043
      %v1290 = vpack.c.b16 %v1056, %v1050
      %v1291 = vpack.c.b16 %v1057, %v1051
      %v1292 = vpack.c.b16 %v1058, %v1052
      %v1293 = vpack.c.b16 %v1059, %v1053
      %v1294 = vpack.c.b16 %v1060, %v1054
      %v1295 = vpack.c.b16 %v1061, %v1055
      %v1296 = vpack.c.b16 %v1068, %v1062
      %v1297 = vpack.c.b16 %v1069, %v1063
      %v1298 = vpack.c.b16 %v1070, %v1064
      %v1299 = vpack.c.b16 %v1071, %v1065
      %v1300 = vpack.c.b16 %v1072, %v1066
      %v1301 = vpack.c.b16 %v1073, %v1067
      %v1302 = vpack.c.b16 %v1080, %v1074
      %v1303 = vpack.c.b16 %v1081, %v1075
      %v1304 = vpack.c.b16 %v1082, %v1076
      %v1305 = vpack.c.b16 %v1083, %v1077
      %v1306 = vpack.c.b16 %v1084, %v1078
      %v1307 = vpack.c.b16 %v1085, %v1079
      %v1308 = vpack.c.b16 %v1092, %v1086
      %v1309 = vpack.c.b16 %v1093, %v1087
      %v1310 = vpack.c.b16 %v1094, %v1088
      %v1311 = vpack.c.b16 %v1095, %v1089
      %v1312 = vpack.c.b16 %v1096, %v1090
      %v1313 = vpack.c.b16 %v1097, %v1091
      %vm1530 = vcmask 523264
      %v1532 = vsel %vm1530, %v436, 0
      %v1535 = vsel %vm1530, %v441, 0
      %1537 = vmatprep.subr.bf16.mxu0 %v1141
      %1538 = vmatpush1.bf16.msra.mxu0 %v1140
      %1539 = vmatprep.subr.bf16.mxu0 %v1135
      %1540 = vmatpush1.bf16.msra.mxu0 %v1134
      %1541 = vmatprep.subr.bf16.mxu0 %v1129
      %1542 = vmatpush1.bf16.msra.mxu0 %v1128
      %1543 = vmatprep.subr.bf16.mxu0 %v1123
      %1544 = vmatpush1.bf16.msra.mxu0 %v1122
      %1545 = vmatprep.subr.bf16.mxu0 %v1117
      %1546 = vmatpush1.bf16.msra.mxu0 %v1116
      %1547 = vmatprep.subr.bf16.mxu0 %v1111
      %1548 = vmatpush1.bf16.msra.mxu0 %v1110
      %1549 = vmatprep.subr.bf16.mxu0 %v1105
      %1550 = vmatpush1.bf16.msra.mxu0 %v1104
      %1551 = vmatprep.subr.bf16.mxu0 %v1099
      %1552 = vmatpush1.bf16.msra.mxu0 %v1098
      %1553 = vmatprep.subr.bf16.mxu0 %v1189
      %1554 = vmatpush2.bf16.msra.mxu0 %v1188
      %1555 = vmatprep.subr.bf16.mxu0 %v1183
      %1556 = vmatpush2.bf16.msra.mxu0 %v1182
      %1557 = vmatprep.subr.bf16.mxu0 %v1177
      %1558 = vmatpush2.bf16.msra.mxu0 %v1176
      %1559 = vmatprep.subr.bf16.mxu0 %v1171
      %1560 = vmatpush2.bf16.msra.mxu0 %v1170
      %1561 = vmatprep.subr.bf16.mxu0 %v1165
      %1562 = vmatpush2.bf16.msra.mxu0 %v1164
      %1563 = vmatprep.subr.bf16.mxu0 %v1159
      %1564 = vmatpush2.bf16.msra.mxu0 %v1158
      %1565 = vmatprep.subr.bf16.mxu0 %v1153
      %1566 = vmatpush2.bf16.msra.mxu0 %v1152
      %1567 = vmatprep.subr.bf16.mxu0 %v1147
      %1568 = vmatpush2.bf16.msra.mxu0 %v1146
      %1569 = vmatprep.mubr.bf16.mxu0 %v433
      %1570 = vmatmul.mubr.bf16.gmra.mxu0 %v432
      %v1571 = vpop.f32.mrf.mxu0
      %v1572 = vadd.f32 0.0, %v1571
      %v1573 = vpop.f32.mrf.mxu0
      %v1574 = vadd.f32 0.0, %v1573
      %v1575 = vpop.f32.mrf.mxu0
      %v1576 = vadd.f32 0.0, %v1575
      %v1577 = vpop.f32.mrf.mxu0
      %v1578 = vadd.f32 0.0, %v1577
      %1579 = vmatprep.mubr.bf16.mxu0 %v438
      %1580 = vmatmul.mubr.bf16.gmra.mxu0 %v437
      %v1581 = vpop.f32.mrf.mxu0
      %v1582 = vadd.f32 0.0, %v1581
      %v1583 = vpop.f32.mrf.mxu0
      %v1584 = vadd.f32 0.0, %v1583
      %v1585 = vpop.f32.mrf.mxu0
      %v1586 = vadd.f32 0.0, %v1585
      %v1587 = vpop.f32.mrf.mxu0
      %v1588 = vadd.f32 0.0, %v1587
      %1589 = vdwg.mxu0
      %1590 = vmatprep.subr.bf16.mxu0 %v1237
      %1591 = vmatpush1.bf16.msra.mxu0 %v1236
      %1592 = vmatprep.subr.bf16.mxu0 %v1231
      %1593 = vmatpush1.bf16.msra.mxu0 %v1230
      %1594 = vmatprep.subr.bf16.mxu0 %v1225
      %1595 = vmatpush1.bf16.msra.mxu0 %v1224
      %1596 = vmatprep.subr.bf16.mxu0 %v1219
      %1597 = vmatpush1.bf16.msra.mxu0 %v1218
      %1598 = vmatprep.subr.bf16.mxu0 %v1213
      %1599 = vmatpush1.bf16.msra.mxu0 %v1212
      %1600 = vmatprep.subr.bf16.mxu0 %v1207
      %1601 = vmatpush1.bf16.msra.mxu0 %v1206
      %1602 = vmatprep.subr.bf16.mxu0 %v1201
      %1603 = vmatpush1.bf16.msra.mxu0 %v1200
      %1604 = vmatprep.subr.bf16.mxu0 %v1195
      %1605 = vmatpush1.bf16.msra.mxu0 %v1194
      %1606 = vmatprep.subr.bf16.mxu0 %v1285
      %1607 = vmatpush2.bf16.msra.mxu0 %v1284
      %1608 = vmatprep.subr.bf16.mxu0 %v1279
      %1609 = vmatpush2.bf16.msra.mxu0 %v1278
      %1610 = vmatprep.subr.bf16.mxu0 %v1273
      %1611 = vmatpush2.bf16.msra.mxu0 %v1272
      %1612 = vmatprep.subr.bf16.mxu0 %v1267
      %1613 = vmatpush2.bf16.msra.mxu0 %v1266
      %1614 = vmatprep.subr.bf16.mxu0 %v1261
      %1615 = vmatpush2.bf16.msra.mxu0 %v1260
      %1616 = vmatprep.subr.bf16.mxu0 %v1255
      %1617 = vmatpush2.bf16.msra.mxu0 %v1254
      %1618 = vmatprep.subr.bf16.mxu0 %v1249
      %1619 = vmatpush2.bf16.msra.mxu0 %v1248
      %1620 = vmatprep.subr.bf16.mxu0 %v1243
      %1621 = vmatpush2.bf16.msra.mxu0 %v1242
      %1622 = vmatprep.mubr.bf16.mxu0 %v435
      %1623 = vmatmul.mubr.bf16.gmra.mxu0 %v434
      %v1624 = vpop.f32.mrf.mxu0
      %v1625 = vadd.f32 %v1572, %v1624
      %v1626 = vpop.f32.mrf.mxu0
      %v1627 = vadd.f32 %v1574, %v1626
      %v1628 = vpop.f32.mrf.mxu0
      %v1629 = vadd.f32 %v1576, %v1628
      %v1630 = vpop.f32.mrf.mxu0
      %v1631 = vadd.f32 %v1578, %v1630
      %1632 = vmatprep.mubr.bf16.mxu0 %v440
      %1633 = vmatmul.mubr.bf16.gmra.mxu0 %v439
      %v1634 = vpop.f32.mrf.mxu0
      %v1635 = vadd.f32 %v1582, %v1634
      %v1636 = vpop.f32.mrf.mxu0
      %v1637 = vadd.f32 %v1584, %v1636
      %v1638 = vpop.f32.mrf.mxu0
      %v1639 = vadd.f32 %v1586, %v1638
      %v1640 = vpop.f32.mrf.mxu0
      %v1641 = vadd.f32 %v1588, %v1640
      %1642 = vdwg.mxu0
      %1643 = vmatprep.subr.bf16.mxu0 0
      %1644 = vmatpush1.bf16.msra.mxu0 0
      %1645 = vmatprep.subr.bf16.mxu0 0
      %1646 = vmatpush1.bf16.msra.mxu0 0
      %1647 = vmatprep.subr.bf16.mxu0 0
      %1648 = vmatpush1.bf16.msra.mxu0 0
      %1649 = vmatprep.subr.bf16.mxu0 0
      %1650 = vmatpush1.bf16.msra.mxu0 0
      %1651 = vmatprep.subr.bf16.mxu0 %v1309
      %1652 = vmatpush1.bf16.msra.mxu0 %v1308
      %1653 = vmatprep.subr.bf16.mxu0 %v1303
      %1654 = vmatpush1.bf16.msra.mxu0 %v1302
      %1655 = vmatprep.subr.bf16.mxu0 %v1297
      %1656 = vmatpush1.bf16.msra.mxu0 %v1296
      %1657 = vmatprep.subr.bf16.mxu0 %v1291
      %1658 = vmatpush1.bf16.msra.mxu0 %v1290
      %1659 = vmatprep.subr.bf16.mxu0 0
      %1660 = vmatpush2.bf16.msra.mxu0 0
      %1661 = vmatprep.subr.bf16.mxu0 0
      %1662 = vmatpush2.bf16.msra.mxu0 0
      %1663 = vmatprep.subr.bf16.mxu0 0
      %1664 = vmatpush2.bf16.msra.mxu0 0
      %1665 = vmatprep.subr.bf16.mxu0 0
      %1666 = vmatpush2.bf16.msra.mxu0 0
      %1667 = vmatprep.subr.bf16.mxu0 0
      %1668 = vmatpush2.bf16.msra.mxu0 0
      %1669 = vmatprep.subr.bf16.mxu0 0
      %1670 = vmatpush2.bf16.msra.mxu0 0
      %1671 = vmatprep.subr.bf16.mxu0 0
      %1672 = vmatpush2.bf16.msra.mxu0 0
      %1673 = vmatprep.subr.bf16.mxu0 0
      %1674 = vmatpush2.bf16.msra.mxu0 0
      %1675 = vmatprep.mubr.bf16.mxu0 0
      %1676 = vmatmul.mubr.bf16.gmra.mxu0 %v1532
      %v1677 = vpop.f32.mrf.mxu0
      %v1678 = vadd.f32 %v1625, %v1677
      %v1679 = vpop.f32.mrf.mxu0
      %v1680 = vadd.f32 %v1627, %v1679
      %v1681 = vpop.f32.mrf.mxu0
      %v1682 = vadd.f32 %v1629, %v1681
      %v1683 = vpop.f32.mrf.mxu0
      %v1684 = vadd.f32 %v1631, %v1683
      %1685 = vmatprep.mubr.bf16.mxu0 0
      %1686 = vmatmul.mubr.bf16.gmra.mxu0 %v1535
      %v1687 = vpop.f32.mrf.mxu0
      %v1688 = vadd.f32 %v1635, %v1687
      %v1689 = vpop.f32.mrf.mxu0
      %v1690 = vadd.f32 %v1637, %v1689
      %v1691 = vpop.f32.mrf.mxu0
      %v1692 = vadd.f32 %v1639, %v1691
      %v1693 = vpop.f32.mrf.mxu0
      %v1694 = vadd.f32 %v1641, %v1693
      %1695 = vdwg.mxu0
      %1696 = vmatprep.subr.bf16.mxu0 %v1143
      %1697 = vmatpush1.bf16.msra.mxu0 %v1142
      %1698 = vmatprep.subr.bf16.mxu0 %v1137
      %1699 = vmatpush1.bf16.msra.mxu0 %v1136
      %1700 = vmatprep.subr.bf16.mxu0 %v1131
      %1701 = vmatpush1.bf16.msra.mxu0 %v1130
      %1702 = vmatprep.subr.bf16.mxu0 %v1125
      %1703 = vmatpush1.bf16.msra.mxu0 %v1124
      %1704 = vmatprep.subr.bf16.mxu0 %v1119
      %1705 = vmatpush1.bf16.msra.mxu0 %v1118
      %1706 = vmatprep.subr.bf16.mxu0 %v1113
      %1707 = vmatpush1.bf16.msra.mxu0 %v1112
      %1708 = vmatprep.subr.bf16.mxu0 %v1107
      %1709 = vmatpush1.bf16.msra.mxu0 %v1106
      %1710 = vmatprep.subr.bf16.mxu0 %v1101
      %1711 = vmatpush1.bf16.msra.mxu0 %v1100
      %1712 = vmatprep.subr.bf16.mxu0 %v1191
      %1713 = vmatpush2.bf16.msra.mxu0 %v1190
      %1714 = vmatprep.subr.bf16.mxu0 %v1185
      %1715 = vmatpush2.bf16.msra.mxu0 %v1184
      %1716 = vmatprep.subr.bf16.mxu0 %v1179
      %1717 = vmatpush2.bf16.msra.mxu0 %v1178
      %1718 = vmatprep.subr.bf16.mxu0 %v1173
      %1719 = vmatpush2.bf16.msra.mxu0 %v1172
      %1720 = vmatprep.subr.bf16.mxu0 %v1167
      %1721 = vmatpush2.bf16.msra.mxu0 %v1166
      %1722 = vmatprep.subr.bf16.mxu0 %v1161
      %1723 = vmatpush2.bf16.msra.mxu0 %v1160
      %1724 = vmatprep.subr.bf16.mxu0 %v1155
      %1725 = vmatpush2.bf16.msra.mxu0 %v1154
      %1726 = vmatprep.subr.bf16.mxu0 %v1149
      %1727 = vmatpush2.bf16.msra.mxu0 %v1148
      %1728 = vmatprep.mubr.bf16.mxu0 %v433
      %1729 = vmatmul.mubr.bf16.gmra.mxu0 %v432
      %v1730 = vpop.f32.mrf.mxu0
      %v1731 = vadd.f32 0.0, %v1730
      %v1732 = vpop.f32.mrf.mxu0
      %v1733 = vadd.f32 0.0, %v1732
      %v1734 = vpop.f32.mrf.mxu0
      %v1735 = vadd.f32 0.0, %v1734
      %v1736 = vpop.f32.mrf.mxu0
      %v1737 = vadd.f32 0.0, %v1736
      %1738 = vmatprep.mubr.bf16.mxu0 %v438
      %1739 = vmatmul.mubr.bf16.gmra.mxu0 %v437
      %v1740 = vpop.f32.mrf.mxu0
      %v1741 = vadd.f32 0.0, %v1740
      %v1742 = vpop.f32.mrf.mxu0
      %v1743 = vadd.f32 0.0, %v1742
      %v1744 = vpop.f32.mrf.mxu0
      %v1745 = vadd.f32 0.0, %v1744
      %v1746 = vpop.f32.mrf.mxu0
      %v1747 = vadd.f32 0.0, %v1746
      %1748 = vdwg.mxu0
      %1749 = vmatprep.subr.bf16.mxu0 %v1239
      %1750 = vmatpush1.bf16.msra.mxu0 %v1238
      %1751 = vmatprep.subr.bf16.mxu0 %v1233
      %1752 = vmatpush1.bf16.msra.mxu0 %v1232
      %1753 = vmatprep.subr.bf16.mxu0 %v1227
      %1754 = vmatpush1.bf16.msra.mxu0 %v1226
      %1755 = vmatprep.subr.bf16.mxu0 %v1221
      %1756 = vmatpush1.bf16.msra.mxu0 %v1220
      %1757 = vmatprep.subr.bf16.mxu0 %v1215
      %1758 = vmatpush1.bf16.msra.mxu0 %v1214
      %1759 = vmatprep.subr.bf16.mxu0 %v1209
      %1760 = vmatpush1.bf16.msra.mxu0 %v1208
      %1761 = vmatprep.subr.bf16.mxu0 %v1203
      %1762 = vmatpush1.bf16.msra.mxu0 %v1202
      %1763 = vmatprep.subr.bf16.mxu0 %v1197
      %1764 = vmatpush1.bf16.msra.mxu0 %v1196
      %1765 = vmatprep.subr.bf16.mxu0 %v1287
      %1766 = vmatpush2.bf16.msra.mxu0 %v1286
      %1767 = vmatprep.subr.bf16.mxu0 %v1281
      %1768 = vmatpush2.bf16.msra.mxu0 %v1280
      %1769 = vmatprep.subr.bf16.mxu0 %v1275
      %1770 = vmatpush2.bf16.msra.mxu0 %v1274
      %1771 = vmatprep.subr.bf16.mxu0 %v1269
      %1772 = vmatpush2.bf16.msra.mxu0 %v1268
      %1773 = vmatprep.subr.bf16.mxu0 %v1263
      %1774 = vmatpush2.bf16.msra.mxu0 %v1262
      %1775 = vmatprep.subr.bf16.mxu0 %v1257
      %1776 = vmatpush2.bf16.msra.mxu0 %v1256
      %1777 = vmatprep.subr.bf16.mxu0 %v1251
      %1778 = vmatpush2.bf16.msra.mxu0 %v1250
      %1779 = vmatprep.subr.bf16.mxu0 %v1245
      %1780 = vmatpush2.bf16.msra.mxu0 %v1244
      %1781 = vmatprep.mubr.bf16.mxu0 %v435
      %1782 = vmatmul.mubr.bf16.gmra.mxu0 %v434
      %v1783 = vpop.f32.mrf.mxu0
      %v1784 = vadd.f32 %v1731, %v1783
      %v1785 = vpop.f32.mrf.mxu0
      %v1786 = vadd.f32 %v1733, %v1785
      %v1787 = vpop.f32.mrf.mxu0
      %v1788 = vadd.f32 %v1735, %v1787
      %v1789 = vpop.f32.mrf.mxu0
      %v1790 = vadd.f32 %v1737, %v1789
      %1791 = vmatprep.mubr.bf16.mxu0 %v440
      %1792 = vmatmul.mubr.bf16.gmra.mxu0 %v439
      %v1793 = vpop.f32.mrf.mxu0
      %v1794 = vadd.f32 %v1741, %v1793
      %v1795 = vpop.f32.mrf.mxu0
      %v1796 = vadd.f32 %v1743, %v1795
      %v1797 = vpop.f32.mrf.mxu0
      %v1798 = vadd.f32 %v1745, %v1797
      %v1799 = vpop.f32.mrf.mxu0
      %v1800 = vadd.f32 %v1747, %v1799
      %1801 = vdwg.mxu0
      %1802 = vmatprep.subr.bf16.mxu0 0
      %1803 = vmatpush1.bf16.msra.mxu0 0
      %1804 = vmatprep.subr.bf16.mxu0 0
      %1805 = vmatpush1.bf16.msra.mxu0 0
      %1806 = vmatprep.subr.bf16.mxu0 0
      %1807 = vmatpush1.bf16.msra.mxu0 0
      %1808 = vmatprep.subr.bf16.mxu0 0
      %1809 = vmatpush1.bf16.msra.mxu0 0
      %1810 = vmatprep.subr.bf16.mxu0 %v1311
      %1811 = vmatpush1.bf16.msra.mxu0 %v1310
      %1812 = vmatprep.subr.bf16.mxu0 %v1305
      %1813 = vmatpush1.bf16.msra.mxu0 %v1304
      %1814 = vmatprep.subr.bf16.mxu0 %v1299
      %1815 = vmatpush1.bf16.msra.mxu0 %v1298
      %1816 = vmatprep.subr.bf16.mxu0 %v1293
      %1817 = vmatpush1.bf16.msra.mxu0 %v1292
      %1818 = vmatprep.subr.bf16.mxu0 0
      %1819 = vmatpush2.bf16.msra.mxu0 0
      %1820 = vmatprep.subr.bf16.mxu0 0
      %1821 = vmatpush2.bf16.msra.mxu0 0
      %1822 = vmatprep.subr.bf16.mxu0 0
      %1823 = vmatpush2.bf16.msra.mxu0 0
      %1824 = vmatprep.subr.bf16.mxu0 0
      %1825 = vmatpush2.bf16.msra.mxu0 0
      %1826 = vmatprep.subr.bf16.mxu0 0
      %1827 = vmatpush2.bf16.msra.mxu0 0
      %1828 = vmatprep.subr.bf16.mxu0 0
      %1829 = vmatpush2.bf16.msra.mxu0 0
      %1830 = vmatprep.subr.bf16.mxu0 0
      %1831 = vmatpush2.bf16.msra.mxu0 0
      %1832 = vmatprep.subr.bf16.mxu0 0
      %1833 = vmatpush2.bf16.msra.mxu0 0
      %1834 = vmatprep.mubr.bf16.mxu0 0
      %1835 = vmatmul.mubr.bf16.gmra.mxu0 %v1532
      %v1836 = vpop.f32.mrf.mxu0
      %v1837 = vadd.f32 %v1784, %v1836
      %v1838 = vpop.f32.mrf.mxu0
      %v1839 = vadd.f32 %v1786, %v1838
      %v1840 = vpop.f32.mrf.mxu0
      %v1841 = vadd.f32 %v1788, %v1840
      %v1842 = vpop.f32.mrf.mxu0
      %v1843 = vadd.f32 %v1790, %v1842
      %1844 = vmatprep.mubr.bf16.mxu0 0
      %1845 = vmatmul.mubr.bf16.gmra.mxu0 %v1535
      %v1846 = vpop.f32.mrf.mxu0
      %v1847 = vadd.f32 %v1794, %v1846
      %v1848 = vpop.f32.mrf.mxu0
      %v1849 = vadd.f32 %v1796, %v1848
      %v1850 = vpop.f32.mrf.mxu0
      %v1851 = vadd.f32 %v1798, %v1850
      %v1852 = vpop.f32.mrf.mxu0
      %v1853 = vadd.f32 %v1800, %v1852
      %1854 = vdwg.mxu0
      %1855 = vmatprep.subr.bf16.mxu0 %v1145
      %1856 = vmatpush1.bf16.msra.mxu0 %v1144
      %1857 = vmatprep.subr.bf16.mxu0 %v1139
      %1858 = vmatpush1.bf16.msra.mxu0 %v1138
      %1859 = vmatprep.subr.bf16.mxu0 %v1133
      %1860 = vmatpush1.bf16.msra.mxu0 %v1132
      %1861 = vmatprep.subr.bf16.mxu0 %v1127
      %1862 = vmatpush1.bf16.msra.mxu0 %v1126
      %1863 = vmatprep.subr.bf16.mxu0 %v1121
      %1864 = vmatpush1.bf16.msra.mxu0 %v1120
      %1865 = vmatprep.subr.bf16.mxu0 %v1115
      %1866 = vmatpush1.bf16.msra.mxu0 %v1114
      %1867 = vmatprep.subr.bf16.mxu0 %v1109
      %1868 = vmatpush1.bf16.msra.mxu0 %v1108
      %1869 = vmatprep.subr.bf16.mxu0 %v1103
      %1870 = vmatpush1.bf16.msra.mxu0 %v1102
      %1871 = vmatprep.subr.bf16.mxu0 %v1193
      %1872 = vmatpush2.bf16.msra.mxu0 %v1192
      %1873 = vmatprep.subr.bf16.mxu0 %v1187
      %1874 = vmatpush2.bf16.msra.mxu0 %v1186
      %1875 = vmatprep.subr.bf16.mxu0 %v1181
      %1876 = vmatpush2.bf16.msra.mxu0 %v1180
      %1877 = vmatprep.subr.bf16.mxu0 %v1175
      %1878 = vmatpush2.bf16.msra.mxu0 %v1174
      %1879 = vmatprep.subr.bf16.mxu0 %v1169
      %1880 = vmatpush2.bf16.msra.mxu0 %v1168
      %1881 = vmatprep.subr.bf16.mxu0 %v1163
      %1882 = vmatpush2.bf16.msra.mxu0 %v1162
      %1883 = vmatprep.subr.bf16.mxu0 %v1157
      %1884 = vmatpush2.bf16.msra.mxu0 %v1156
      %1885 = vmatprep.subr.bf16.mxu0 %v1151
      %1886 = vmatpush2.bf16.msra.mxu0 %v1150
      %1887 = vmatprep.mubr.bf16.mxu0 %v433
      %1888 = vmatmul.mubr.bf16.gmra.mxu0 %v432
      %v1889 = vpop.f32.mrf.mxu0
      %v1890 = vadd.f32 0.0, %v1889
      %v1891 = vpop.f32.mrf.mxu0
      %v1892 = vadd.f32 0.0, %v1891
      %v1893 = vpop.f32.mrf.mxu0
      %v1894 = vadd.f32 0.0, %v1893
      %v1895 = vpop.f32.mrf.mxu0
      %v1896 = vadd.f32 0.0, %v1895
      %1897 = vmatprep.mubr.bf16.mxu0 %v438
      %1898 = vmatmul.mubr.bf16.gmra.mxu0 %v437
      %v1899 = vpop.f32.mrf.mxu0
      %v1900 = vadd.f32 0.0, %v1899
      %v1901 = vpop.f32.mrf.mxu0
      %v1902 = vadd.f32 0.0, %v1901
      %v1903 = vpop.f32.mrf.mxu0
      %v1904 = vadd.f32 0.0, %v1903
      %v1905 = vpop.f32.mrf.mxu0
      %v1906 = vadd.f32 0.0, %v1905
      %1907 = vdwg.mxu0
      %1908 = vmatprep.subr.bf16.mxu0 %v1241
      %1909 = vmatpush1.bf16.msra.mxu0 %v1240
      %1910 = vmatprep.subr.bf16.mxu0 %v1235
      %1911 = vmatpush1.bf16.msra.mxu0 %v1234
      %1912 = vmatprep.subr.bf16.mxu0 %v1229
      %1913 = vmatpush1.bf16.msra.mxu0 %v1228
      %1914 = vmatprep.subr.bf16.mxu0 %v1223
      %1915 = vmatpush1.bf16.msra.mxu0 %v1222
      %1916 = vmatprep.subr.bf16.mxu0 %v1217
      %1917 = vmatpush1.bf16.msra.mxu0 %v1216
      %1918 = vmatprep.subr.bf16.mxu0 %v1211
      %1919 = vmatpush1.bf16.msra.mxu0 %v1210
      %1920 = vmatprep.subr.bf16.mxu0 %v1205
      %1921 = vmatpush1.bf16.msra.mxu0 %v1204
      %1922 = vmatprep.subr.bf16.mxu0 %v1199
      %1923 = vmatpush1.bf16.msra.mxu0 %v1198
      %1924 = vmatprep.subr.bf16.mxu0 %v1289
      %1925 = vmatpush2.bf16.msra.mxu0 %v1288
      %1926 = vmatprep.subr.bf16.mxu0 %v1283
      %1927 = vmatpush2.bf16.msra.mxu0 %v1282
      %1928 = vmatprep.subr.bf16.mxu0 %v1277
      %1929 = vmatpush2.bf16.msra.mxu0 %v1276
      %1930 = vmatprep.subr.bf16.mxu0 %v1271
      %1931 = vmatpush2.bf16.msra.mxu0 %v1270
      %1932 = vmatprep.subr.bf16.mxu0 %v1265
      %1933 = vmatpush2.bf16.msra.mxu0 %v1264
      %1934 = vmatprep.subr.bf16.mxu0 %v1259
      %1935 = vmatpush2.bf16.msra.mxu0 %v1258
      %1936 = vmatprep.subr.bf16.mxu0 %v1253
      %1937 = vmatpush2.bf16.msra.mxu0 %v1252
      %1938 = vmatprep.subr.bf16.mxu0 %v1247
      %1939 = vmatpush2.bf16.msra.mxu0 %v1246
      %1940 = vmatprep.mubr.bf16.mxu0 %v435
      %1941 = vmatmul.mubr.bf16.gmra.mxu0 %v434
      %v1942 = vpop.f32.mrf.mxu0
      %v1943 = vadd.f32 %v1890, %v1942
      %v1944 = vpop.f32.mrf.mxu0
      %v1945 = vadd.f32 %v1892, %v1944
      %v1946 = vpop.f32.mrf.mxu0
      %v1947 = vadd.f32 %v1894, %v1946
      %v1948 = vpop.f32.mrf.mxu0
      %v1949 = vadd.f32 %v1896, %v1948
      %1950 = vmatprep.mubr.bf16.mxu0 %v440
      %1951 = vmatmul.mubr.bf16.gmra.mxu0 %v439
      %v1952 = vpop.f32.mrf.mxu0
      %v1953 = vadd.f32 %v1900, %v1952
      %v1954 = vpop.f32.mrf.mxu0
      %v1955 = vadd.f32 %v1902, %v1954
      %v1956 = vpop.f32.mrf.mxu0
      %v1957 = vadd.f32 %v1904, %v1956
      %v1958 = vpop.f32.mrf.mxu0
      %v1959 = vadd.f32 %v1906, %v1958
      %1960 = vdwg.mxu0
      %1961 = vmatprep.subr.bf16.mxu0 0
      %1962 = vmatpush1.bf16.msra.mxu0 0
      %1963 = vmatprep.subr.bf16.mxu0 0
      %1964 = vmatpush1.bf16.msra.mxu0 0
      %1965 = vmatprep.subr.bf16.mxu0 0
      %1966 = vmatpush1.bf16.msra.mxu0 0
      %1967 = vmatprep.subr.bf16.mxu0 0
      %1968 = vmatpush1.bf16.msra.mxu0 0
      %1969 = vmatprep.subr.bf16.mxu0 %v1313
      %1970 = vmatpush1.bf16.msra.mxu0 %v1312
      %1971 = vmatprep.subr.bf16.mxu0 %v1307
      %1972 = vmatpush1.bf16.msra.mxu0 %v1306
      %1973 = vmatprep.subr.bf16.mxu0 %v1301
      %1974 = vmatpush1.bf16.msra.mxu0 %v1300
      %1975 = vmatprep.subr.bf16.mxu0 %v1295
      %1976 = vmatpush1.bf16.msra.mxu0 %v1294
      %1977 = vmatprep.subr.bf16.mxu0 0
      %1978 = vmatpush2.bf16.msra.mxu0 0
      %1979 = vmatprep.subr.bf16.mxu0 0
      %1980 = vmatpush2.bf16.msra.mxu0 0
      %1981 = vmatprep.subr.bf16.mxu0 0
      %1982 = vmatpush2.bf16.msra.mxu0 0
      %1983 = vmatprep.subr.bf16.mxu0 0
      %1984 = vmatpush2.bf16.msra.mxu0 0
      %1985 = vmatprep.subr.bf16.mxu0 0
      %1986 = vmatpush2.bf16.msra.mxu0 0
      %1987 = vmatprep.subr.bf16.mxu0 0
      %1988 = vmatpush2.bf16.msra.mxu0 0
      %1989 = vmatprep.subr.bf16.mxu0 0
      %1990 = vmatpush2.bf16.msra.mxu0 0
      %1991 = vmatprep.subr.bf16.mxu0 0
      %1992 = vmatpush2.bf16.msra.mxu0 0
      %1993 = vmatprep.mubr.bf16.mxu0 0
      %1994 = vmatmul.mubr.bf16.gmra.mxu0 %v1532
      %v1995 = vpop.f32.mrf.mxu0
      %v1996 = vadd.f32 %v1943, %v1995
      %v1997 = vpop.f32.mrf.mxu0
      %v1998 = vadd.f32 %v1945, %v1997
      %v1999 = vpop.f32.mrf.mxu0
      %v2000 = vadd.f32 %v1947, %v1999
      %v2001 = vpop.f32.mrf.mxu0
      %v2002 = vadd.f32 %v1949, %v2001
      %2003 = vmatprep.mubr.bf16.mxu0 0
      %2004 = vmatmul.mubr.bf16.gmra.mxu0 %v1535
      %v2005 = vpop.f32.mrf.mxu0
      %v2006 = vadd.f32 %v1953, %v2005
      %v2007 = vpop.f32.mrf.mxu0
      %v2008 = vadd.f32 %v1955, %v2007
      %v2009 = vpop.f32.mrf.mxu0
      %v2010 = vadd.f32 %v1957, %v2009
      %v2011 = vpop.f32.mrf.mxu0
      %v2012 = vadd.f32 %v1959, %v2011
      %2013 = vdwg.mxu0
      %2022 = vrot.lane.b32.xlu0 %v1680, 87
      %v2023 = vpop.permute.xlu0 %2022
      %2024 = vrot.lane.b32.xlu0 %v1837, 87
      %v2025 = vpop.permute.xlu0 %2024
      %2026 = vrot.lane.b32.xlu0 %v1684, 87
      %v2027 = vpop.permute.xlu0 %2026
      %2028 = vrot.lane.b32.xlu0 %v1841, 87
      %v2029 = vpop.permute.xlu0 %2028
      %2030 = vrot.lane.b32.xlu0 %v1690, 87
      %v2031 = vpop.permute.xlu0 %2030
      %2032 = vrot.lane.b32.xlu0 %v1847, 87
      %v2033 = vpop.permute.xlu0 %2032
      %2034 = vrot.lane.b32.xlu0 %v1694, 87
      %v2035 = vpop.permute.xlu0 %2034
      %2036 = vrot.lane.b32.xlu0 %v1851, 87
      %v2037 = vpop.permute.xlu0 %2036
      %vm2038 = vcmask 711680
      %v2039 = vsel %vm2038, %v2023, %v2025
      %v2040 = vsel %vm2038, %v2027, %v2029
      %v2041 = vsel %vm2038, %v2031, %v2033
      %v2042 = vsel %vm2038, %v2035, %v2037
      %v2051 = vmax.f32 %v1678, %v2039
      %v2052 = vmax.f32 %v1680, %v2025
      %v2053 = vmax.f32 %v1682, %v2040
      %v2054 = vmax.f32 %v1684, %v2029
      %v2055 = vmax.f32 %v1688, %v2041
      %v2056 = vmax.f32 %v1690, %v2033
      %v2057 = vmax.f32 %v1692, %v2042
      %v2058 = vmax.f32 %v1694, %v2037
      %2071 = vrot.lane.b32.xlu0 %v1839, 87
      %v2072 = vpop.permute.xlu0 %2071
      %2073 = vrot.lane.b32.xlu0 %v1996, 87
      %v2074 = vpop.permute.xlu0 %2073
      %2075 = vrot.lane.b32.xlu0 %v1998, 87
      %v2076 = vpop.permute.xlu0 %2075
      %2077 = vrot.lane.b32.xlu0 %v1843, 87
      %v2078 = vpop.permute.xlu0 %2077
      %2079 = vrot.lane.b32.xlu0 %v2000, 87
      %v2080 = vpop.permute.xlu0 %2079
      %2081 = vrot.lane.b32.xlu0 %v2002, 87
      %v2082 = vpop.permute.xlu0 %2081
      %2083 = vrot.lane.b32.xlu0 %v1849, 87
      %v2084 = vpop.permute.xlu0 %2083
      %2085 = vrot.lane.b32.xlu0 %v2006, 87
      %v2086 = vpop.permute.xlu0 %2085
      %2087 = vrot.lane.b32.xlu0 %v2008, 87
      %v2088 = vpop.permute.xlu0 %2087
      %2089 = vrot.lane.b32.xlu0 %v1853, 87
      %v2090 = vpop.permute.xlu0 %2089
      %2091 = vrot.lane.b32.xlu0 %v2010, 87
      %v2092 = vpop.permute.xlu0 %2091
      %2093 = vrot.lane.b32.xlu0 %v2012, 87
      %v2094 = vpop.permute.xlu0 %2093
      %v2095 = vsel %vm2038, %v2072, %v2074
      %v2096 = vsel %vm2038, %v2074, %v2076
      %v2097 = vsel %vm2038, %v2078, %v2080
      %v2098 = vsel %vm2038, %v2080, %v2082
      %v2099 = vsel %vm2038, %v2084, %v2086
      %v2100 = vsel %vm2038, %v2086, %v2088
      %v2101 = vsel %vm2038, %v2090, %v2092
      %v2102 = vsel %vm2038, %v2092, %v2094
      %v2111 = vmax.f32 %v1837, %v2095
      %v2112 = vmax.f32 %v1839, %v2096
      %v2113 = vmax.f32 %v1841, %v2097
      %v2114 = vmax.f32 %v1843, %v2098
      %v2115 = vmax.f32 %v1847, %v2099
      %v2116 = vmax.f32 %v1849, %v2100
      %v2117 = vmax.f32 %v1851, %v2101
      %v2118 = vmax.f32 %v1853, %v2102
      %2127 = vrot.lane.b32.xlu0 %v2111, 46
      %v2128 = vpop.permute.xlu0 %2127
      %2129 = vrot.lane.b32.xlu0 %v2112, 46
      %v2130 = vpop.permute.xlu0 %2129
      %2131 = vrot.lane.b32.xlu0 %v2113, 46
      %v2132 = vpop.permute.xlu0 %2131
      %2133 = vrot.lane.b32.xlu0 %v2114, 46
      %v2134 = vpop.permute.xlu0 %2133
      %2135 = vrot.lane.b32.xlu0 %v2115, 46
      %v2136 = vpop.permute.xlu0 %2135
      %2137 = vrot.lane.b32.xlu0 %v2116, 46
      %v2138 = vpop.permute.xlu0 %2137
      %2139 = vrot.lane.b32.xlu0 %v2117, 46
      %v2140 = vpop.permute.xlu0 %2139
      %2141 = vrot.lane.b32.xlu0 %v2118, 46
      %v2142 = vpop.permute.xlu0 %2141
      %vm2143 = vcmask 375808
      %v2144 = vsel %vm2143, %v2128, %v2130
      %v2145 = vsel %vm2143, %v2132, %v2134
      %v2146 = vsel %vm2143, %v2136, %v2138
      %v2147 = vsel %vm2143, %v2140, %v2142
      %v2156 = vmax.f32 %v2051, %v2144
      %v2157 = vmax.f32 %v2052, %v2130
      %v2158 = vmax.f32 %v2053, %v2145
      %v2159 = vmax.f32 %v2054, %v2134
      %v2160 = vmax.f32 %v2055, %v2146
      %v2161 = vmax.f32 %v2056, %v2138
      %v2162 = vmax.f32 %v2057, %v2147
      %v2163 = vmax.f32 %v2058, %v2142
      %v2164 = vld [vmem:[%s2] sm:$0xff]
      %v2165 = vld [vmem:[%s2 + $0x8] sm:$0xff]
      %v2166 = vld [vmem:[%s2 + $0x10] sm:$0xff]
      %v2167 = vld [vmem:[%s2 + $0x18] sm:$0xff]
      %2169 = vset.pattern.permute.xlu0 0
      %2170 = vperm.xlu0 %2169, %v2164
      %v2171 = vpop.permute.xlu0 %2170
      %2174 = vset.pattern.permute.xlu0 0
      %2175 = vperm.xlu0 %2174, %v2165
      %v2176 = vpop.permute.xlu0 %2175
      %2179 = vset.pattern.permute.xlu0 0
      %2180 = vperm.xlu0 %2179, %v2166
      %v2181 = vpop.permute.xlu0 %2180
      %2184 = vset.pattern.permute.xlu0 0
      %2185 = vperm.xlu0 %2184, %v2167
      %v2186 = vpop.permute.xlu0 %2185
      %v2188 = vadd.f32 %v2156, %v2171
      %v2189 = vadd.f32 %v2157, %v2171
      %v2190 = vadd.f32 %v2158, %v2176
      %v2191 = vadd.f32 %v2159, %v2176
      %v2192 = vadd.f32 %v2160, %v2181
      %v2193 = vadd.f32 %v2161, %v2181
      %v2194 = vadd.f32 %v2162, %v2186
      %v2195 = vadd.f32 %v2163, %v2186
      %v2196 = vmax.f32 %v2188, 0.0
      %v2197 = vmax.f32 %v2189, 0.0
      %v2198 = vmax.f32 %v2190, 0.0
      %v2199 = vmax.f32 %v2191, 0.0
      %v2200 = vmax.f32 %v2192, 0.0
      %v2201 = vmax.f32 %v2193, 0.0
      %v2202 = vmax.f32 %v2194, 0.0
      %v2203 = vmax.f32 %v2195, 0.0
      %v2204 = vpack.c.bf16 %v2198, %v2196
      %v2205 = vpack.c.bf16 %v2199, %v2197
      %v2206 = vpack.c.bf16 %v2202, %v2200
      %v2207 = vpack.c.bf16 %v2203, %v2201
      %v2212 = vunpack.c.l.b16 %v2204
      %v2213 = vunpack.c.l.b16 %v2205
      %v2214 = vunpack.c.h.b16 %v2204
      %v2215 = vunpack.c.h.b16 %v2205
      %v2216 = vunpack.c.l.b16 %v2206
      %v2217 = vunpack.c.l.b16 %v2207
      %v2218 = vunpack.c.h.b16 %v2206
      %v2219 = vunpack.c.h.b16 %v2207
      %v2220 = vpack.c.b16 %v2213, %v2212
      %v2221 = vpack.c.b16 %v2215, %v2214
      %v2222 = vpack.c.b16 %v2217, %v2216
      %v2223 = vpack.c.b16 %v2219, %v2218
      %vm2228 = vcmask 1043456
      %vm2229 = vcmask 334852
      %vm2230 = vmor %vm2229, %vm2228
      %2231 = vst.msk [vmem:[%s170] sm:$0xff] %vm2230, %v2220
      %2232 = vst.msk [vmem:[%s170 + $0x8] sm:$0xff] %vm2230, %v2221
      %2233 = vst.msk [vmem:[%s170 + $0x10] sm:$0xff] %vm2230, %v2222
      %2234 = vst.msk [vmem:[%s170 + $0x18] sm:$0xff] %vm2230, %v2223
      %p2235 = scmp.lt.s32.totalorder %s14, 1
      %s2236 = scalar_select %p2235, %s14, 1
      %s2237 = smul.addr %s2236, 8
      %s2238 = smul.addr %s2237, 4
      %s2239 = scalar_lea.vmem %s3, %s2238
      // Predicated region
      $region33: #{mlp_classic_forward.3} parent=31 // pred_check
        %p2240 = pneg %p100
      $region34: #{mlp_classic_forward.3} parent=31 // pred_check_branch
        %2242 = sbr.rel (%p2240) target = $region36
      $region35: #{mlp_classic_forward.3} parent=31 // pred_region
        _
      $region36: #{mlp_classic_forward.3} parent=31 // pred_fallthru
        _
    $region32: #{mlp_classic_forward.3} parent=5 // pred_fallthru
      _
    %p2243 = scmp.le.s32.totalorder 2, %s9
    // Predicated region
    $region37: #{mlp_classic_forward.3} parent=5 // pred_check
      %p2244 = pneg %p2243
    $region38: #{mlp_classic_forward.3} parent=5 // pred_check_branch
      %2246 = sbr.rel (%p2244) target = $region40
    $region39: #{mlp_classic_forward.3} parent=5 // pred_region
      %s2247 = ssub.s32 %s9, 2
      // Predicated region
      $region41: #{mlp_classic_forward.3} parent=39 // pred_check
        %p2248 = pneg %p106
      $region42: #{mlp_classic_forward.3} parent=39 // pred_check_branch
        %2250 = sbr.rel (%p2248) target = $region44
      $region43: #{mlp_classic_forward.3} parent=39 // pred_region
        %p2251 = scmp.lt.s32.totalorder %s15, 1
        %s2252 = scalar_select %p2251, %s15, 1
        %s2253 = smul.addr %s2252, 8
        %s2254 = smul.addr %s2253, 4
        %s2255 = scalar_lea.vmem %s3, %s2254
      $region44: #{mlp_classic_forward.3} parent=39 // pred_fallthru
        _
    $region40: #{mlp_classic_forward.3} parent=5 // pred_fallthru
      _
  $region6: #{mlp_classic_forward.3} parent=0 // loop_footer
    %s13 = sadd.s32 1, %s9
  $region7: #{mlp_classic_forward.3} parent=0 // loop_footer_branch
    %8 = sbr.rel target = $region3
  $region8: #{mlp_classic_forward.3} parent=0 // loop_exit
    _

</llo_original>
